<compile_context>
chip_gen: v5e
topology: v5e:2x2
jax: 0.10.0
libtpu: 0.0.40
codegen_flags: <defaults>
</compile_context>

<pallas_src>
import functools

import numpy as np
import jax
import jax.numpy as jnp
from jax import lax
from jax.experimental import pallas as pl
from jax.experimental.pallas import tpu as pltpu

TB = 8              # samples per grid step (batch tile), multiple of 8
C1P = 8             # conv1 out channels, padded 6 -> 8
K1P = 32            # conv1 im2col features, padded 25 -> 32
K2 = 5 * 5 * C1P    # 200 conv2 im2col features (multiple of 8)
G1 = 14 * 14 * TB   # 1568 pooled conv1 rows per tile
G2 = 5 * 5 * TB     # 200  pooled conv2 rows per tile


# ----------------------------- Pallas kernels ------------------------------

def _conv_pool_kernel(p_ref, w_ref, b_ref, o_ref, *, g):
    """Fused conv(im2col) + 2x2 max-pool + bias + ReLU.

    p_ref: (4*g, K) patches, rows ordered (pool_pos, j) — pool_pos major.
    w_ref: (K, C)   conv weights as a matmul matrix.
    b_ref: (1, C)   bias.
    o_ref: (g, C)   relu(max_pool(conv) + b).
    """
    y = jnp.dot(p_ref[...], w_ref[...], preferred_element_type=jnp.float32)
    m = jnp.maximum(jnp.maximum(y[0:g], y[g:2 * g]),
                    jnp.maximum(y[2 * g:3 * g], y[3 * g:4 * g]))
    o_ref[...] = jnp.maximum(m + b_ref[...], 0.0)


def _tail_kernel(p_ref, w2_ref, b2_ref, fw1_ref, fb1_ref, fw2_ref, fb2_ref,
                 fw3_ref, fb3_ref, o_ref, flat_scr):
    """conv2 + pool + flatten + fc1 + relu + fc2 + relu + fc3, fully fused.

    p_ref rows are ordered (pool_pos, spatial s, batch b) per tile, so the
    pool-max is a max over 4 aligned row blocks and the flatten is 25
    sublane-aligned row slices scattered into lane slices of a VMEM scratch.
    """
    y = jnp.dot(p_ref[...], w2_ref[...], preferred_element_type=jnp.float32)   # (4*G2, 16)
    m = jnp.maximum(jnp.maximum(y[0:G2], y[G2:2 * G2]),
                    jnp.maximum(y[2 * G2:3 * G2], y[3 * G2:4 * G2]))
    h2 = jnp.maximum(m + b2_ref[...], 0.0)                                     # (G2, 16)

    # flatten (s, b, c) -> (b, s*16 + c); feature order matches fw1's rows.
    for s in range(25):
        flat_scr[:, s * 16:(s + 1) * 16] = h2[s * TB:(s + 1) * TB, :]
    flat = flat_scr[...]                                                       # (TB, 400)

    a = jnp.maximum(
        jnp.dot(flat, fw1_ref[...], preferred_element_type=jnp.float32) + fb1_ref[...], 0.0)
    a = jnp.maximum(
        jnp.dot(a, fw2_ref[...], preferred_element_type=jnp.float32) + fb2_ref[...], 0.0)
    o_ref[...] = jnp.dot(a, fw3_ref[...], preferred_element_type=jnp.float32) + fb3_ref[...]


# ------------------------------ pallas_call wrappers ------------------------

def _fixed(shape):
    """Full-array block that stays resident across the grid."""
    return pl.BlockSpec(shape, lambda i, _nd=len(shape): (0,) * _nd)


def conv1_pool(p1, w1, b1, n_t):
    return pl.pallas_call(
        functools.partial(_conv_pool_kernel, g=G1),
        grid=(n_t,),
        in_specs=[pl.BlockSpec((4 * G1, K1P), lambda i: (i, 0)),
                  _fixed(w1.shape), _fixed(b1.shape)],
        out_specs=pl.BlockSpec((G1, C1P), lambda i: (i, 0)),
        out_shape=jax.ShapeDtypeStruct((n_t * G1, C1P), jnp.float32),
        compiler_params=pltpu.CompilerParams(dimension_semantics=("parallel",)),
    )(p1, w1, b1)


def conv2_mlp(p2, params, n_t):
    ws = (params["w2"], params["b2"], params["fw1"], params["fb1"],
          params["fw2"], params["fb2"], params["fw3"], params["fb3"])
    return pl.pallas_call(
        _tail_kernel,
        grid=(n_t,),
        in_specs=[pl.BlockSpec((4 * G2, K2), lambda i: (i, 0))]
                 + [_fixed(w.shape) for w in ws],
        out_specs=pl.BlockSpec((TB, 10), lambda i: (i, 0)),
        out_shape=jax.ShapeDtypeStruct((n_t * TB, 10), jnp.float32),
        scratch_shapes=[pltpu.VMEM((TB, 400), jnp.float32)],
        compiler_params=pltpu.CompilerParams(dimension_semantics=("parallel",)),
    )(p2, *ws)


# ------------------------------ JAX glue (patch layout) ---------------------

def _conv1_patches(xp, n_t):
    """xp: (B_pad, 32, 32) padded input -> (n_t*4*G1, K1P) patch rows.

    Row order inside each batch tile: (pool_pos=(py,px), b, oy, ox);
    feature order k = kh*5 + kw, zero-padded 25 -> 32.
    """
    cols = [xp[:, kh:kh + 28, kw:kw + 28] for kh in range(5) for kw in range(5)]
    pat = jnp.stack(cols, axis=-1)                                # (B_pad, 28, 28, 25)
    pat = jnp.pad(pat, ((0, 0), (0, 0), (0, 0), (0, K1P - 25)))   # K 25 -> 32
    pat = pat.reshape(n_t, TB, 14, 2, 14, 2, K1P)                 # (i,b,oy,py,ox,px,k)
    pat = pat.transpose(0, 3, 5, 1, 2, 4, 6)                      # (i,py,px,b,oy,ox,k)
    return pat.reshape(n_t * 4 * G1, K1P)


def _conv2_patches(h1, n_t):
    """h1: (B_pad, 14, 14, C1P) -> (n_t*4*G2, K2) patch rows.

    Row order inside each batch tile: (pool_pos, s=(oy,ox), b);
    feature order k = (kh*5 + kw)*C1P + c.
    """
    cols = [h1[:, kh:kh + 10, kw:kw + 10, :] for kh in range(5) for kw in range(5)]
    pat = jnp.stack(cols, axis=3)                                 # (B_pad,10,10,25,C1P)
    pat = pat.reshape(n_t, TB, 5, 2, 5, 2, K2)                    # (i,b,oy,py,ox,px,k)
    pat = pat.transpose(0, 3, 5, 2, 4, 1, 6)                      # (i,py,px,oy,ox,b,k)
    return pat.reshape(n_t * 4 * G2, K2)


def mnistlenet_forward(x, params):
    """x: (B, 1, 28, 28) float32 NCHW (PyTorch convention) -> (B, 10) logits."""
    B = x.shape[0]
    n_t = -(-B // TB)
    B_pad = n_t * TB

    xp = jnp.pad(x[:, 0].astype(jnp.float32),
                 ((0, B_pad - B), (2, 2), (2, 2)))                # (B_pad, 32, 32)

    # conv1 (1->6, 5x5, pad 2) + relu + 2x2 maxpool
    p1 = _conv1_patches(xp, n_t)                                  # (n_t*6272, 32)
    h1 = conv1_pool(p1, params["w1"], params["b1"], n_t)          # (B_pad*196, 8)
    h1 = h1.reshape(B_pad, 14, 14, C1P)

    # conv2 (6->16, 5x5) + relu + pool + flatten + fc1/fc2/fc3, fused
    p2 = _conv2_patches(h1, n_t)                                  # (n_t*800, 200)
    logits = conv2_mlp(p2, params, n_t)                           # (B_pad, 10)
    return logits[:B]


# ------------------------------ parameters ----------------------------------

def init_params(key):
    """LeNet params stored directly as aligned matmul matrices.

    conv weights: (K, C) with feature order (kh, kw[, cin]); conv1 is padded
    to K=32, Cout=8 (zeros); conv2 input channels padded to 8 (zero rows).
    fc1 rows are in (oy, ox, c) order, i.e. the NHWC flatten of (5, 5, 16),
    so no transpose is needed before fc1.
    """
    ks = jax.random.split(key, 10)

    def u(k, shape, fan_in):
        bound = 1.0 / np.sqrt(fan_in)
        return jax.random.uniform(k, shape, jnp.float32, -bound, bound)

    w1 = jnp.zeros((K1P, C1P), jnp.float32).at[:25, :6].set(u(ks[0], (25, 6), 25))
    b1 = jnp.zeros((1, C1P), jnp.float32).at[:, :6].set(u(ks[1], (1, 6), 25))
    w2 = jnp.zeros((25, C1P, 16), jnp.float32).at[:, :6, :].set(u(ks[2], (25, 6, 16), 150))
    w2 = w2.reshape(K2, 16)
    b2 = u(ks[3], (1, 16), 150)
    return {
        "w1": w1, "b1": b1, "w2": w2, "b2": b2,
        "fw1": u(ks[4], (400, 120), 400), "fb1": u(ks[5], (1, 120), 400),
        "fw2": u(ks[6], (120, 84), 120),  "fb2": u(ks[7], (1, 84), 120),
        "fw3": u(ks[8], (84, 10), 84),    "fb3": u(ks[9], (1, 10), 84),
    }


# ------------------------------ pure-JAX reference ---------------------------

def lenet_reference(x, params):
    hp = lax.Precision.HIGHEST
    B = x.shape[0]
    xn = jnp.transpose(x, (0, 2, 3, 1)).astype(jnp.float32)        # NHWC
    w1 = params["w1"][:25, :6].reshape(5, 5, 1, 6)                 # HWIO
    y = lax.conv_general_dilated(xn, w1, (1, 1), ((2, 2), (2, 2)),
                                 dimension_numbers=("NHWC", "HWIO", "NHWC"),
                                 precision=hp)
    y = jnp.maximum(y + params["b1"][0, :6], 0.0)
    y = y.reshape(B, 14, 2, 14, 2, 6).max(axis=(2, 4))
    w2 = params["w2"].reshape(25, C1P, 16)[:, :6, :].reshape(5, 5, 6, 16)
    z = lax.conv_general_dilated(y, w2, (1, 1), "VALID",
                                 dimension_numbers=("NHWC", "HWIO", "NHWC"),
                                 precision=hp)
    z = jnp.maximum(z + params["b2"][0], 0.0)
    z = z.reshape(B, 5, 2, 5, 2, 16).max(axis=(2, 4))
    flat = z.reshape(B, 400)                                        # (oy, ox, c) order
    a = jnp.maximum(jnp.dot(flat, params["fw1"], precision=hp) + params["fb1"], 0.0)
    a = jnp.maximum(jnp.dot(a, params["fw2"], precision=hp) + params["fb2"], 0.0)
    return jnp.dot(a, params["fw3"], precision=hp) + params["fb3"]


# ------------------------------ demo ----------------------------------------

if __name__ == "__main__":
    key = jax.random.PRNGKey(0)
    kx, kp = jax.random.split(key)
    # MNIST-shaped input: batch=2, 1 channel, 28x28 (required by the 16*5*5 fc1).
    x = jax.random.normal(kx, (2, 1, 28, 28), jnp.float32)
    params = init_params(kp)

    out = jax.block_until_ready(jax.jit(mnistlenet_forward)(x, params))
    assert out.shape == (2, 10) and out.dtype == jnp.float32

    ref = jax.block_until_ready(jax.jit(lenet_reference)(x, params))
    np.testing.assert_allclose(np.asarray(out), np.asarray(ref), rtol=2e-2, atol=2e-2)

    print("KERNEL_OK")
</pallas_src>

<mosaic_0001>
module attributes {stable_mosaic.version = 11 : i64} {
  func.func @_conv_pool_kernel(%arg0: i32, %arg1: memref<6272x32xf32, #tpu.memory_space<vmem>>, %arg2: memref<32x8xf32, #tpu.memory_space<vmem>>, %arg3: memref<1x8xf32, #tpu.memory_space<vmem>>, %arg4: memref<1568x8xf32, #tpu.memory_space<vmem>>) attributes {dimension_semantics = [#tpu.dimension_semantics<parallel>], iteration_bounds = array<i64: 1>, scalar_prefetch = 0 : i64, scratch_operands = 0 : i64, tpu.core_type = #tpu.core_type<tc>, window_params = [{transform_indices = @transform_0, window_bounds = array<i64: 6272, 32>}, {pipeline_mode = #tpu.pipeline_mode<synchronous>, transform_indices = @transform_1, window_bounds = array<i64: 32, 8>}, {pipeline_mode = #tpu.pipeline_mode<synchronous>, transform_indices = @transform_2, window_bounds = array<i64: 1, 8>}, {transform_indices = @transform_3, window_bounds = array<i64: 1568, 8>}]} {
    %c0 = arith.constant 0 : index
    %c0_0 = arith.constant 0 : index
    %0 = vector.load %arg1[%c0, %c0_0] : memref<6272x32xf32, #tpu.memory_space<vmem>>, vector<6272x32xf32>
    %c0_1 = arith.constant 0 : index
    %c0_2 = arith.constant 0 : index
    %1 = vector.load %arg2[%c0_1, %c0_2] : memref<32x8xf32, #tpu.memory_space<vmem>>, vector<32x8xf32>
    %cst = arith.constant dense<0.000000e+00> : vector<6272x8xf32>
    %2 = tpu.matmul %0, %1, %cst {dimension_numbers = #tpu.dot_dimension_numbers<[1], [0], [0], [1], [0, 0, 1, 1], [], []>} : vector<6272x32xf32>, vector<32x8xf32>, vector<6272x8xf32> -> vector<6272x8xf32>
    %3 = vector.extract_strided_slice %2 {offsets = [0, 0], sizes = [1568, 8], strides = [1, 1]} : vector<6272x8xf32> to vector<1568x8xf32>
    %4 = vector.extract_strided_slice %2 {offsets = [1568, 0], sizes = [1568, 8], strides = [1, 1]} : vector<6272x8xf32> to vector<1568x8xf32>
    %5 = arith.maximumf %3, %4 : vector<1568x8xf32>
    %6 = vector.extract_strided_slice %2 {offsets = [3136, 0], sizes = [1568, 8], strides = [1, 1]} : vector<6272x8xf32> to vector<1568x8xf32>
    %7 = vector.extract_strided_slice %2 {offsets = [4704, 0], sizes = [1568, 8], strides = [1, 1]} : vector<6272x8xf32> to vector<1568x8xf32>
    %8 = arith.maximumf %6, %7 : vector<1568x8xf32>
    %9 = arith.maximumf %5, %8 : vector<1568x8xf32>
    %c0_3 = arith.constant 0 : index
    %c0_4 = arith.constant 0 : index
    %10 = vector.load %arg3[%c0_3, %c0_4] : memref<1x8xf32, #tpu.memory_space<vmem>>, vector<1x8xf32>
    %11 = vector.broadcast %10 : vector<1x8xf32> to vector<1568x8xf32>
    %12 = arith.addf %9, %11 : vector<1568x8xf32>
    %cst_5 = arith.constant 0.000000e+00 : f32
    %13 = vector.broadcast %cst_5 : f32 to vector<1568x8xf32>
    %14 = arith.maximumf %12, %13 : vector<1568x8xf32>
    %c0_6 = arith.constant 0 : index
    %c0_7 = arith.constant 0 : index
    %15 = vector.load %arg4[%c0_6, %c0_7] : memref<1568x8xf32, #tpu.memory_space<vmem>>, vector<1568x8xf32>
    tpu.vector_store %arg4[%c0_6, %c0_7], %14 {strides = array<i32>} : memref<1568x8xf32, #tpu.memory_space<vmem>>, vector<1568x8xf32>,
    return
  }
  func.func @transform_0(%arg0: i32) -> (i32, i32) {
    %c0_i32 = arith.constant 0 : i32
    %c0_i32_0 = arith.constant 0 : i32
    return %arg0, %c0_i32 : i32, i32
  }
  func.func @transform_1(%arg0: i32) -> (i32, i32) {
    %c0_i32 = arith.constant 0 : i32
    %c0_i32_0 = arith.constant 0 : i32
    %c0_i32_1 = arith.constant 0 : i32
    return %c0_i32, %c0_i32_0 : i32, i32
  }
  func.func @transform_2(%arg0: i32) -> (i32, i32) {
    %c0_i32 = arith.constant 0 : i32
    %c0_i32_0 = arith.constant 0 : i32
    %c0_i32_1 = arith.constant 0 : i32
    return %c0_i32, %c0_i32_0 : i32, i32
  }
  func.func @transform_3(%arg0: i32) -> (i32, i32) {
    %c0_i32 = arith.constant 0 : i32
    %c0_i32_0 = arith.constant 0 : i32
    return %arg0, %c0_i32 : i32, i32
  }
}

module attributes {stable_mosaic.version = 11 : i64} {
  func.func @_tail_kernel(%arg0: i32, %arg1: memref<800x200xf32, #tpu.memory_space<vmem>>, %arg2: memref<200x16xf32, #tpu.memory_space<vmem>>, %arg3: memref<1x16xf32, #tpu.memory_space<vmem>>, %arg4: memref<400x120xf32, #tpu.memory_space<vmem>>, %arg5: memref<1x120xf32, #tpu.memory_space<vmem>>, %arg6: memref<120x84xf32, #tpu.memory_space<vmem>>, %arg7: memref<1x84xf32, #tpu.memory_space<vmem>>, %arg8: memref<84x10xf32, #tpu.memory_space<vmem>>, %arg9: memref<1x10xf32, #tpu.memory_space<vmem>>, %arg10: memref<8x10xf32, #tpu.memory_space<vmem>>, %arg11: memref<8x400xf32, #tpu.memory_space<vmem>>) attributes {dimension_semantics = [#tpu.dimension_semantics<parallel>], iteration_bounds = array<i64: 1>, scalar_prefetch = 0 : i64, scratch_operands = 1 : i64, tpu.core_type = #tpu.core_type<tc>, window_params = [{transform_indices = @transform_0, window_bounds = array<i64: 800, 200>}, {pipeline_mode = #tpu.pipeline_mode<synchronous>, transform_indices = @transform_1, window_bounds = array<i64: 200, 16>}, {pipeline_mode = #tpu.pipeline_mode<synchronous>, transform_indices = @transform_2, window_bounds = array<i64: 1, 16>}, {pipeline_mode = #tpu.pipeline_mode<synchronous>, transform_indices = @transform_3, window_bounds = array<i64: 400, 120>}, {pipeline_mode = #tpu.pipeline_mode<synchronous>, transform_indices = @transform_4, window_bounds = array<i64: 1, 120>}, {pipeline_mode = #tpu.pipeline_mode<synchronous>, transform_indices = @transform_5, window_bounds = array<i64: 120, 84>}, {pipeline_mode = #tpu.pipeline_mode<synchronous>, transform_indices = @transform_6, window_bounds = array<i64: 1, 84>}, {pipeline_mode = #tpu.pipeline_mode<synchronous>, transform_indices = @transform_7, window_bounds = array<i64: 84, 10>}, {pipeline_mode = #tpu.pipeline_mode<synchronous>, transform_indices = @transform_8, window_bounds = array<i64: 1, 10>}, {transform_indices = @transform_9, window_bounds = array<i64: 8, 10>}]} {
    %c0 = arith.constant 0 : index
    %c0_0 = arith.constant 0 : index
    %0 = vector.load %arg1[%c0, %c0_0] : memref<800x200xf32, #tpu.memory_space<vmem>>, vector<800x200xf32>
    %c0_1 = arith.constant 0 : index
    %c0_2 = arith.constant 0 : index
    %1 = vector.load %arg2[%c0_1, %c0_2] : memref<200x16xf32, #tpu.memory_space<vmem>>, vector<200x16xf32>
    %cst = arith.constant dense<0.000000e+00> : vector<800x16xf32>
    %2 = tpu.matmul %0, %1, %cst {dimension_numbers = #tpu.dot_dimension_numbers<[1], [0], [0], [1], [0, 0, 1, 1], [], []>} : vector<800x200xf32>, vector<200x16xf32>, vector<800x16xf32> -> vector<800x16xf32>
    %3 = vector.extract_strided_slice %2 {offsets = [0, 0], sizes = [200, 16], strides = [1, 1]} : vector<800x16xf32> to vector<200x16xf32>
    %4 = vector.extract_strided_slice %2 {offsets = [200, 0], sizes = [200, 16], strides = [1, 1]} : vector<800x16xf32> to vector<200x16xf32>
    %5 = arith.maximumf %3, %4 : vector<200x16xf32>
    %6 = vector.extract_strided_slice %2 {offsets = [400, 0], sizes = [200, 16], strides = [1, 1]} : vector<800x16xf32> to vector<200x16xf32>
    %7 = vector.extract_strided_slice %2 {offsets = [600, 0], sizes = [200, 16], strides = [1, 1]} : vector<800x16xf32> to vector<200x16xf32>
    %8 = arith.maximumf %6, %7 : vector<200x16xf32>
    %9 = arith.maximumf %5, %8 : vector<200x16xf32>
    %c0_3 = arith.constant 0 : index
    %c0_4 = arith.constant 0 : index
    %10 = vector.load %arg3[%c0_3, %c0_4] : memref<1x16xf32, #tpu.memory_space<vmem>>, vector<1x16xf32>
    %11 = vector.broadcast %10 : vector<1x16xf32> to vector<200x16xf32>
    %12 = arith.addf %9, %11 : vector<200x16xf32>
    %cst_5 = arith.constant 0.000000e+00 : f32
    %13 = vector.broadcast %cst_5 : f32 to vector<200x16xf32>
    %14 = arith.maximumf %12, %13 : vector<200x16xf32>
    %15 = vector.extract_strided_slice %14 {offsets = [0, 0], sizes = [8, 16], strides = [1, 1]} : vector<200x16xf32> to vector<8x16xf32>
    %c0_6 = arith.constant 0 : index
    %c0_7 = arith.constant 0 : index
    %16 = vector.load %arg11[%c0_6, %c0_7] : memref<8x400xf32, #tpu.memory_space<vmem>>, vector<8x16xf32>
    tpu.vector_store %arg11[%c0_6, %c0_7], %15 {strides = array<i32>} : memref<8x400xf32, #tpu.memory_space<vmem>>, vector<8x16xf32>,
    %17 = vector.extract_strided_slice %14 {offsets = [8, 0], sizes = [8, 16], strides = [1, 1]} : vector<200x16xf32> to vector<8x16xf32>
    %c0_8 = arith.constant 0 : index
    %c16 = arith.constant 16 : index
    %18 = vector.load %arg11[%c0_8, %c16] : memref<8x400xf32, #tpu.memory_space<vmem>>, vector<8x16xf32>
    tpu.vector_store %arg11[%c0_8, %c16], %17 {strides = array<i32>} : memref<8x400xf32, #tpu.memory_space<vmem>>, vector<8x16xf32>,
    %19 = vector.extract_strided_slice %14 {offsets = [16, 0], sizes = [8, 16], strides = [1, 1]} : vector<200x16xf32> to vector<8x16xf32>
    %c0_9 = arith.constant 0 : index
    %c32 = arith.constant 32 : index
    %20 = vector.load %arg11[%c0_9, %c32] : memref<8x400xf32, #tpu.memory_space<vmem>>, vector<8x16xf32>
    tpu.vector_store %arg11[%c0_9, %c32], %19 {strides = array<i32>} : memref<8x400xf32, #tpu.memory_space<vmem>>, vector<8x16xf32>,
    %21 = vector.extract_strided_slice %14 {offsets = [24, 0], sizes = [8, 16], strides = [1, 1]} : vector<200x16xf32> to vector<8x16xf32>
    %c0_10 = arith.constant 0 : index
    %c48 = arith.constant 48 : index
    %22 = vector.load %arg11[%c0_10, %c48] : memref<8x400xf32, #tpu.memory_space<vmem>>, vector<8x16xf32>
    tpu.vector_store %arg11[%c0_10, %c48], %21 {strides = array<i32>} : memref<8x400xf32, #tpu.memory_space<vmem>>, vector<8x16xf32>,
    %23 = vector.extract_strided_slice %14 {offsets = [32, 0], sizes = [8, 16], strides = [1, 1]} : vector<200x16xf32> to vector<8x16xf32>
    %c0_11 = arith.constant 0 : index
    %c64 = arith.constant 64 : index
    %24 = vector.load %arg11[%c0_11, %c64] : memref<8x400xf32, #tpu.memory_space<vmem>>, vector<8x16xf32>
    tpu.vector_store %arg11[%c0_11, %c64], %23 {strides = array<i32>} : memref<8x400xf32, #tpu.memory_space<vmem>>, vector<8x16xf32>,
    %25 = vector.extract_strided_slice %14 {offsets = [40, 0], sizes = [8, 16], strides = [1, 1]} : vector<200x16xf32> to vector<8x16xf32>
    %c0_12 = arith.constant 0 : index
    %c80 = arith.constant 80 : index
    %26 = vector.load %arg11[%c0_12, %c80] : memref<8x400xf32, #tpu.memory_space<vmem>>, vector<8x16xf32>
    tpu.vector_store %arg11[%c0_12, %c80], %25 {strides = array<i32>} : memref<8x400xf32, #tpu.memory_space<vmem>>, vector<8x16xf32>,
    %27 = vector.extract_strided_slice %14 {offsets = [48, 0], sizes = [8, 16], strides = [1, 1]} : vector<200x16xf32> to vector<8x16xf32>
    %c0_13 = arith.constant 0 : index
    %c96 = arith.constant 96 : index
    %28 = vector.load %arg11[%c0_13, %c96] : memref<8x400xf32, #tpu.memory_space<vmem>>, vector<8x16xf32>
    tpu.vector_store %arg11[%c0_13, %c96], %27 {strides = array<i32>} : memref<8x400xf32, #tpu.memory_space<vmem>>, vector<8x16xf32>,
    %29 = vector.extract_strided_slice %14 {offsets = [56, 0], sizes = [8, 16], strides = [1, 1]} : vector<200x16xf32> to vector<8x16xf32>
    %c0_14 = arith.constant 0 : index
    %c112 = arith.constant 112 : index
    %30 = vector.load %arg11[%c0_14, %c112] : memref<8x400xf32, #tpu.memory_space<vmem>>, vector<8x16xf32>
    tpu.vector_store %arg11[%c0_14, %c112], %29 {strides = array<i32>} : memref<8x400xf32, #tpu.memory_space<vmem>>, vector<8x16xf32>,
    %31 = vector.extract_strided_slice %14 {offsets = [64, 0], sizes = [8, 16], strides = [1, 1]} : vector<200x16xf32> to vector<8x16xf32>
    %c0_15 = arith.constant 0 : index
    %c128 = arith.constant 128 : index
    %32 = vector.load %arg11[%c0_15, %c128] : memref<8x400xf32, #tpu.memory_space<vmem>>, vector<8x16xf32>
    tpu.vector_store %arg11[%c0_15, %c128], %31 {strides = array<i32>} : memref<8x400xf32, #tpu.memory_space<vmem>>, vector<8x16xf32>,
    %33 = vector.extract_strided_slice %14 {offsets = [72, 0], sizes = [8, 16], strides = [1, 1]} : vector<200x16xf32> to vector<8x16xf32>
    %c0_16 = arith.constant 0 : index
    %c144 = arith.constant 144 : index
    %34 = vector.load %arg11[%c0_16, %c144] : memref<8x400xf32, #tpu.memory_space<vmem>>, vector<8x16xf32>
    tpu.vector_store %arg11[%c0_16, %c144], %33 {strides = array<i32>} : memref<8x400xf32, #tpu.memory_space<vmem>>, vector<8x16xf32>,
    %35 = vector.extract_strided_slice %14 {offsets = [80, 0], sizes = [8, 16], strides = [1, 1]} : vector<200x16xf32> to vector<8x16xf32>
    %c0_17 = arith.constant 0 : index
    %c160 = arith.constant 160 : index
    %36 = vector.load %arg11[%c0_17, %c160] : memref<8x400xf32, #tpu.memory_space<vmem>>, vector<8x16xf32>
    tpu.vector_store %arg11[%c0_17, %c160], %35 {strides = array<i32>} : memref<8x400xf32, #tpu.memory_space<vmem>>, vector<8x16xf32>,
    %37 = vector.extract_strided_slice %14 {offsets = [88, 0], sizes = [8, 16], strides = [1, 1]} : vector<200x16xf32> to vector<8x16xf32>
    %c0_18 = arith.constant 0 : index
    %c176 = arith.constant 176 : index
    %38 = vector.load %arg11[%c0_18, %c176] : memref<8x400xf32, #tpu.memory_space<vmem>>, vector<8x16xf32>
    tpu.vector_store %arg11[%c0_18, %c176], %37 {strides = array<i32>} : memref<8x400xf32, #tpu.memory_space<vmem>>, vector<8x16xf32>,
    %39 = vector.extract_strided_slice %14 {offsets = [96, 0], sizes = [8, 16], strides = [1, 1]} : vector<200x16xf32> to vector<8x16xf32>
    %c0_19 = arith.constant 0 : index
    %c192 = arith.constant 192 : index
    %40 = vector.load %arg11[%c0_19, %c192] : memref<8x400xf32, #tpu.memory_space<vmem>>, vector<8x16xf32>
    tpu.vector_store %arg11[%c0_19, %c192], %39 {strides = array<i32>} : memref<8x400xf32, #tpu.memory_space<vmem>>, vector<8x16xf32>,
    %41 = vector.extract_strided_slice %14 {offsets = [104, 0], sizes = [8, 16], strides = [1, 1]} : vector<200x16xf32> to vector<8x16xf32>
    %c0_20 = arith.constant 0 : index
    %c208 = arith.constant 208 : index
    %42 = vector.load %arg11[%c0_20, %c208] : memref<8x400xf32, #tpu.memory_space<vmem>>, vector<8x16xf32>
    tpu.vector_store %arg11[%c0_20, %c208], %41 {strides = array<i32>} : memref<8x400xf32, #tpu.memory_space<vmem>>, vector<8x16xf32>,
    %43 = vector.extract_strided_slice %14 {offsets = [112, 0], sizes = [8, 16], strides = [1, 1]} : vector<200x16xf32> to vector<8x16xf32>
    %c0_21 = arith.constant 0 : index
    %c224 = arith.constant 224 : index
    %44 = vector.load %arg11[%c0_21, %c224] : memref<8x400xf32, #tpu.memory_space<vmem>>, vector<8x16xf32>
    tpu.vector_store %arg11[%c0_21, %c224], %43 {strides = array<i32>} : memref<8x400xf32, #tpu.memory_space<vmem>>, vector<8x16xf32>,
    %45 = vector.extract_strided_slice %14 {offsets = [120, 0], sizes = [8, 16], strides = [1, 1]} : vector<200x16xf32> to vector<8x16xf32>
    %c0_22 = arith.constant 0 : index
    %c240 = arith.constant 240 : index
    %46 = vector.load %arg11[%c0_22, %c240] : memref<8x400xf32, #tpu.memory_space<vmem>>, vector<8x16xf32>
    tpu.vector_store %arg11[%c0_22, %c240], %45 {strides = array<i32>} : memref<8x400xf32, #tpu.memory_space<vmem>>, vector<8x16xf32>,
    %47 = vector.extract_strided_slice %14 {offsets = [128, 0], sizes = [8, 16], strides = [1, 1]} : vector<200x16xf32> to vector<8x16xf32>
    %c0_23 = arith.constant 0 : index
    %c256 = arith.constant 256 : index
    %48 = vector.load %arg11[%c0_23, %c256] : memref<8x400xf32, #tpu.memory_space<vmem>>, vector<8x16xf32>
    tpu.vector_store %arg11[%c0_23, %c256], %47 {strides = array<i32>} : memref<8x400xf32, #tpu.memory_space<vmem>>, vector<8x16xf32>,
    %49 = vector.extract_strided_slice %14 {offsets = [136, 0], sizes = [8, 16], strides = [1, 1]} : vector<200x16xf32> to vector<8x16xf32>
    %c0_24 = arith.constant 0 : index
    %c272 = arith.constant 272 : index
    %50 = vector.load %arg11[%c0_24, %c272] : memref<8x400xf32, #tpu.memory_space<vmem>>, vector<8x16xf32>
    tpu.vector_store %arg11[%c0_24, %c272], %49 {strides = array<i32>} : memref<8x400xf32, #tpu.memory_space<vmem>>, vector<8x16xf32>,
    %51 = vector.extract_strided_slice %14 {offsets = [144, 0], sizes = [8, 16], strides = [1, 1]} : vector<200x16xf32> to vector<8x16xf32>
    %c0_25 = arith.constant 0 : index
    %c288 = arith.constant 288 : index
    %52 = vector.load %arg11[%c0_25, %c288] : memref<8x400xf32, #tpu.memory_space<vmem>>, vector<8x16xf32>
    tpu.vector_store %arg11[%c0_25, %c288], %51 {strides = array<i32>} : memref<8x400xf32, #tpu.memory_space<vmem>>, vector<8x16xf32>,
    %53 = vector.extract_strided_slice %14 {offsets = [152, 0], sizes = [8, 16], strides = [1, 1]} : vector<200x16xf32> to vector<8x16xf32>
    %c0_26 = arith.constant 0 : index
    %c304 = arith.constant 304 : index
    %54 = vector.load %arg11[%c0_26, %c304] : memref<8x400xf32, #tpu.memory_space<vmem>>, vector<8x16xf32>
    tpu.vector_store %arg11[%c0_26, %c304], %53 {strides = array<i32>} : memref<8x400xf32, #tpu.memory_space<vmem>>, vector<8x16xf32>,
    %55 = vector.extract_strided_slice %14 {offsets = [160, 0], sizes = [8, 16], strides = [1, 1]} : vector<200x16xf32> to vector<8x16xf32>
    %c0_27 = arith.constant 0 : index
    %c320 = arith.constant 320 : index
    %56 = vector.load %arg11[%c0_27, %c320] : memref<8x400xf32, #tpu.memory_space<vmem>>, vector<8x16xf32>
    tpu.vector_store %arg11[%c0_27, %c320], %55 {strides = array<i32>} : memref<8x400xf32, #tpu.memory_space<vmem>>, vector<8x16xf32>,
    %57 = vector.extract_strided_slice %14 {offsets = [168, 0], sizes = [8, 16], strides = [1, 1]} : vector<200x16xf32> to vector<8x16xf32>
    %c0_28 = arith.constant 0 : index
    %c336 = arith.constant 336 : index
    %58 = vector.load %arg11[%c0_28, %c336] : memref<8x400xf32, #tpu.memory_space<vmem>>, vector<8x16xf32>
    tpu.vector_store %arg11[%c0_28, %c336], %57 {strides = array<i32>} : memref<8x400xf32, #tpu.memory_space<vmem>>, vector<8x16xf32>,
    %59 = vector.extract_strided_slice %14 {offsets = [176, 0], sizes = [8, 16], strides = [1, 1]} : vector<200x16xf32> to vector<8x16xf32>
    %c0_29 = arith.constant 0 : index
    %c352 = arith.constant 352 : index
    %60 = vector.load %arg11[%c0_29, %c352] : memref<8x400xf32, #tpu.memory_space<vmem>>, vector<8x16xf32>
    tpu.vector_store %arg11[%c0_29, %c352], %59 {strides = array<i32>} : memref<8x400xf32, #tpu.memory_space<vmem>>, vector<8x16xf32>,
    %61 = vector.extract_strided_slice %14 {offsets = [184, 0], sizes = [8, 16], strides = [1, 1]} : vector<200x16xf32> to vector<8x16xf32>
    %c0_30 = arith.constant 0 : index
    %c368 = arith.constant 368 : index
    %62 = vector.load %arg11[%c0_30, %c368] : memref<8x400xf32, #tpu.memory_space<vmem>>, vector<8x16xf32>
    tpu.vector_store %arg11[%c0_30, %c368], %61 {strides = array<i32>} : memref<8x400xf32, #tpu.memory_space<vmem>>, vector<8x16xf32>,
    %63 = vector.extract_strided_slice %14 {offsets = [192, 0], sizes = [8, 16], strides = [1, 1]} : vector<200x16xf32> to vector<8x16xf32>
    %c0_31 = arith.constant 0 : index
    %c384 = arith.constant 384 : index
    %64 = vector.load %arg11[%c0_31, %c384] : memref<8x400xf32, #tpu.memory_space<vmem>>, vector<8x16xf32>
    tpu.vector_store %arg11[%c0_31, %c384], %63 {strides = array<i32>} : memref<8x400xf32, #tpu.memory_space<vmem>>, vector<8x16xf32>,
    %c0_32 = arith.constant 0 : index
    %c0_33 = arith.constant 0 : index
    %65 = vector.load %arg11[%c0_32, %c0_33] : memref<8x400xf32, #tpu.memory_space<vmem>>, vector<8x400xf32>
    %c0_34 = arith.constant 0 : index
    %c0_35 = arith.constant 0 : index
    %66 = vector.load %arg4[%c0_34, %c0_35] : memref<400x120xf32, #tpu.memory_space<vmem>>, vector<400x120xf32>
    %cst_36 = arith.constant dense<0.000000e+00> : vector<8x120xf32>
    %67 = tpu.matmul %65, %66, %cst_36 {dimension_numbers = #tpu.dot_dimension_numbers<[1], [0], [0], [1], [0, 0, 1, 1], [], []>} : vector<8x400xf32>, vector<400x120xf32>, vector<8x120xf32> -> vector<8x120xf32>
    %c0_37 = arith.constant 0 : index
    %c0_38 = arith.constant 0 : index
    %68 = vector.load %arg5[%c0_37, %c0_38] : memref<1x120xf32, #tpu.memory_space<vmem>>, vector<1x120xf32>
    %69 = vector.broadcast %68 : vector<1x120xf32> to vector<8x120xf32>
    %70 = arith.addf %67, %69 : vector<8x120xf32>
    %cst_39 = arith.constant 0.000000e+00 : f32
    %71 = vector.broadcast %cst_39 : f32 to vector<8x120xf32>
    %72 = arith.maximumf %70, %71 : vector<8x120xf32>
    %c0_40 = arith.constant 0 : index
    %c0_41 = arith.constant 0 : index
    %73 = vector.load %arg6[%c0_40, %c0_41] : memref<120x84xf32, #tpu.memory_space<vmem>>, vector<120x84xf32>
    %cst_42 = arith.constant dense<0.000000e+00> : vector<8x84xf32>
    %74 = tpu.matmul %72, %73, %cst_42 {dimension_numbers = #tpu.dot_dimension_numbers<[1], [0], [0], [1], [0, 0, 1, 1], [], []>} : vector<8x120xf32>, vector<120x84xf32>, vector<8x84xf32> -> vector<8x84xf32>
    %c0_43 = arith.constant 0 : index
    %c0_44 = arith.constant 0 : index
    %75 = vector.load %arg7[%c0_43, %c0_44] : memref<1x84xf32, #tpu.memory_space<vmem>>, vector<1x84xf32>
    %76 = vector.broadcast %75 : vector<1x84xf32> to vector<8x84xf32>
    %77 = arith.addf %74, %76 : vector<8x84xf32>
    %cst_45 = arith.constant 0.000000e+00 : f32
    %78 = vector.broadcast %cst_45 : f32 to vector<8x84xf32>
    %79 = arith.maximumf %77, %78 : vector<8x84xf32>
    %c0_46 = arith.constant 0 : index
    %c0_47 = arith.constant 0 : index
    %80 = vector.load %arg8[%c0_46, %c0_47] : memref<84x10xf32, #tpu.memory_space<vmem>>, vector<84x10xf32>
    %cst_48 = arith.constant dense<0.000000e+00> : vector<8x10xf32>
    %81 = tpu.matmul %79, %80, %cst_48 {dimension_numbers = #tpu.dot_dimension_numbers<[1], [0], [0], [1], [0, 0, 1, 1], [], []>} : vector<8x84xf32>, vector<84x10xf32>, vector<8x10xf32> -> vector<8x10xf32>
    %c0_49 = arith.constant 0 : index
    %c0_50 = arith.constant 0 : index
    %82 = vector.load %arg9[%c0_49, %c0_50] : memref<1x10xf32, #tpu.memory_space<vmem>>, vector<1x10xf32>
    %83 = vector.broadcast %82 : vector<1x10xf32> to vector<8x10xf32>
    %84 = arith.addf %81, %83 : vector<8x10xf32>
    %c0_51 = arith.constant 0 : index
    %c0_52 = arith.constant 0 : index
    %85 = vector.load %arg10[%c0_51, %c0_52] : memref<8x10xf32, #tpu.memory_space<vmem>>, vector<8x10xf32>
    tpu.vector_store %arg10[%c0_51, %c0_52], %84 {strides = array<i32>} : memref<8x10xf32, #tpu.memory_space<vmem>>, vector<8x10xf32>,
    return
  }
  func.func @transform_0(%arg0: i32) -> (i32, i32) {
    %c0_i32 = arith.constant 0 : i32
    %c0_i32_0 = arith.constant 0 : i32
    return %arg0, %c0_i32 : i32, i32
  }
  func.func @transform_1(%arg0: i32) -> (i32, i32) {
    %c0_i32 = arith.constant 0 : i32
    %c0_i32_0 = arith.constant 0 : i32
    %c0_i32_1 = arith.constant 0 : i32
    return %c0_i32, %c0_i32_0 : i32, i32
  }
  func.func @transform_2(%arg0: i32) -> (i32, i32) {
    %c0_i32 = arith.constant 0 : i32
    %c0_i32_0 = arith.constant 0 : i32
    %c0_i32_1 = arith.constant 0 : i32
    return %c0_i32, %c0_i32_0 : i32, i32
  }
  func.func @transform_3(%arg0: i32) -> (i32, i32) {
    %c0_i32 = arith.constant 0 : i32
    %c0_i32_0 = arith.constant 0 : i32
    %c0_i32_1 = arith.constant 0 : i32
    return %c0_i32, %c0_i32_0 : i32, i32
  }
  func.func @transform_4(%arg0: i32) -> (i32, i32) {
    %c0_i32 = arith.constant 0 : i32
    %c0_i32_0 = arith.constant 0 : i32
    %c0_i32_1 = arith.constant 0 : i32
    return %c0_i32, %c0_i32_0 : i32, i32
  }
  func.func @transform_5(%arg0: i32) -> (i32, i32) {
    %c0_i32 = arith.constant 0 : i32
    %c0_i32_0 = arith.constant 0 : i32
    %c0_i32_1 = arith.constant 0 : i32
    return %c0_i32, %c0_i32_0 : i32, i32
  }
  func.func @transform_6(%arg0: i32) -> (i32, i32) {
    %c0_i32 = arith.constant 0 : i32
    %c0_i32_0 = arith.constant 0 : i32
    %c0_i32_1 = arith.constant 0 : i32
    return %c0_i32, %c0_i32_0 : i32, i32
  }
  func.func @transform_7(%arg0: i32) -> (i32, i32) {
    %c0_i32 = arith.constant 0 : i32
    %c0_i32_0 = arith.constant 0 : i32
    %c0_i32_1 = arith.constant 0 : i32
    return %c0_i32, %c0_i32_0 : i32, i32
  }
  func.func @transform_8(%arg0: i32) -> (i32, i32) {
    %c0_i32 = arith.constant 0 : i32
    %c0_i32_0 = arith.constant 0 : i32
    %c0_i32_1 = arith.constant 0 : i32
    return %c0_i32, %c0_i32_0 : i32, i32
  }
  func.func @transform_9(%arg0: i32) -> (i32, i32) {
    %c0_i32 = arith.constant 0 : i32
    %c0_i32_0 = arith.constant 0 : i32
    return %arg0, %c0_i32 : i32, i32
  }
}

</mosaic_0001>

<llo_original>
// kernel: mnistlenet_forward.2
$region0: #{mnistlenet_forward.2}
  #allocation0 [shape = 'u32[]', space=smem, size = 0x4, offset = 0x4, fixed_abs, tag = 'smem constant byte address 0x4 - core index']
  #allocation1 [shape = 'u32[72,128]{1,0:T(1,128)}', space=vmem, size = 0x9000, scoped, tag = 'internal scratch']
  %s0 = inlined_call_operand.vmem [shape: f32[6272,32], index: 0, kind: input, shape index: {}]
  %s1 = inlined_call_operand.vmem [shape: f32[32,8], index: 1, kind: input, shape index: {}]
  %s2 = inlined_call_operand.vmem [shape: f32[1,8], index: 2, kind: input, shape index: {}]
  %s3 = inlined_call_operand.vmem [shape: f32[1568,8], index: 3, kind: output, shape index: {}]
  %s4 = sld [smem:[#allocation0]]
  $region22: #{mnistlenet_forward.2} parent=0
    _
  %s6 = ssub.s32 1, %s4
  %s7 = scalar_select 0, %s6, %s4
  // Predicated region
  $region2: #{mnistlenet_forward.2} parent=0 // pred_check
    _
  $region3: #{mnistlenet_forward.2} parent=0 // pred_check_branch
    %9 = sbr.rel (0) target = $region5
  $region4: #{mnistlenet_forward.2} parent=0 // pred_region
    _
  $region5: #{mnistlenet_forward.2} parent=0 // pred_fallthru
    _
  // Predicated region
  $region6: #{mnistlenet_forward.2} parent=0 // pred_check
    _
  $region7: #{mnistlenet_forward.2} parent=0 // pred_check_branch
    %11 = sbr.rel (0) target = $region9
  $region8: #{mnistlenet_forward.2} parent=0 // pred_region
    _
  $region9: #{mnistlenet_forward.2} parent=0 // pred_fallthru
    _
  // Predicated region
  $region10: #{mnistlenet_forward.2} parent=0 // pred_check
    _
  $region11: #{mnistlenet_forward.2} parent=0 // pred_check_branch
    %13 = sbr.rel (0) target = $region13
  $region12: #{mnistlenet_forward.2} parent=0 // pred_region
    _
  $region13: #{mnistlenet_forward.2} parent=0 // pred_fallthru
    _
  %v14 = vld [vmem:[%s0] sm:$0xff]
  %v15 = vld [vmem:[%s0 + $0x8] sm:$0xff]
  %v16 = vld [vmem:[%s0 + $0x10] sm:$0xff]
  %v17 = vld [vmem:[%s0 + $0x18] sm:$0xff]
  %v18 = vld [vmem:[%s0 + $0x20] sm:$0xff]
  %v19 = vld [vmem:[%s0 + $0x28] sm:$0xff]
  %v20 = vld [vmem:[%s0 + $0x30] sm:$0xff]
  %v21 = vld [vmem:[%s0 + $0x38] sm:$0xff]
  %v22 = vld [vmem:[%s0 + $0x40] sm:$0xff]
  %v23 = vld [vmem:[%s0 + $0x48] sm:$0xff]
  %v24 = vld [vmem:[%s0 + $0x50] sm:$0xff]
  %v25 = vld [vmem:[%s0 + $0x58] sm:$0xff]
  %v26 = vld [vmem:[%s0 + $0x60] sm:$0xff]
  %v27 = vld [vmem:[%s0 + $0x68] sm:$0xff]
  %v28 = vld [vmem:[%s0 + $0x70] sm:$0xff]
  %v29 = vld [vmem:[%s0 + $0x78] sm:$0xff]
  %v30 = vld [vmem:[%s0 + $0x80] sm:$0xff]
  %v31 = vld [vmem:[%s0 + $0x88] sm:$0xff]
  %v32 = vld [vmem:[%s0 + $0x90] sm:$0xff]
  %v33 = vld [vmem:[%s0 + $0x98] sm:$0xff]
  %v34 = vld [vmem:[%s0 + $0xa0] sm:$0xff]
  %v35 = vld [vmem:[%s0 + $0xa8] sm:$0xff]
  %v36 = vld [vmem:[%s0 + $0xb0] sm:$0xff]
  %v37 = vld [vmem:[%s0 + $0xb8] sm:$0xff]
  %v38 = vld [vmem:[%s0 + $0xc0] sm:$0xff]
  %v39 = vld [vmem:[%s0 + $0xc8] sm:$0xff]
  %v40 = vld [vmem:[%s0 + $0xd0] sm:$0xff]
  %v41 = vld [vmem:[%s0 + $0xd8] sm:$0xff]
  %v42 = vld [vmem:[%s0 + $0xe0] sm:$0xff]
  %v43 = vld [vmem:[%s0 + $0xe8] sm:$0xff]
  %v44 = vld [vmem:[%s0 + $0xf0] sm:$0xff]
  %v45 = vld [vmem:[%s0 + $0xf8] sm:$0xff]
  %v46 = vld [vmem:[%s0 + $0x100] sm:$0xff]
  %v47 = vld [vmem:[%s0 + $0x108] sm:$0xff]
  %v48 = vld [vmem:[%s0 + $0x110] sm:$0xff]
  %v49 = vld [vmem:[%s0 + $0x118] sm:$0xff]
  %v50 = vld [vmem:[%s0 + $0x120] sm:$0xff]
  %v51 = vld [vmem:[%s0 + $0x128] sm:$0xff]
  %v52 = vld [vmem:[%s0 + $0x130] sm:$0xff]
  %v53 = vld [vmem:[%s0 + $0x138] sm:$0xff]
  %v54 = vld [vmem:[%s0 + $0x140] sm:$0xff]
  %v55 = vld [vmem:[%s0 + $0x148] sm:$0xff]
  %v56 = vld [vmem:[%s0 + $0x150] sm:$0xff]
  %v57 = vld [vmem:[%s0 + $0x158] sm:$0xff]
  %v58 = vld [vmem:[%s0 + $0x160] sm:$0xff]
  %v59 = vld [vmem:[%s0 + $0x168] sm:$0xff]
  %v60 = vld [vmem:[%s0 + $0x170] sm:$0xff]
  %v61 = vld [vmem:[%s0 + $0x178] sm:$0xff]
  %v62 = vld [vmem:[%s0 + $0x180] sm:$0xff]
  %v63 = vld [vmem:[%s0 + $0x188] sm:$0xff]
  %v64 = vld [vmem:[%s0 + $0x190] sm:$0xff]
  %v65 = vld [vmem:[%s0 + $0x198] sm:$0xff]
  %v66 = vld [vmem:[%s0 + $0x1a0] sm:$0xff]
  %v67 = vld [vmem:[%s0 + $0x1a8] sm:$0xff]
  %v68 = vld [vmem:[%s0 + $0x1b0] sm:$0xff]
  %v69 = vld [vmem:[%s0 + $0x1b8] sm:$0xff]
  %v70 = vld [vmem:[%s0 + $0x1c0] sm:$0xff]
  %v71 = vld [vmem:[%s0 + $0x1c8] sm:$0xff]
  %v72 = vld [vmem:[%s0 + $0x1d0] sm:$0xff]
  %v73 = vld [vmem:[%s0 + $0x1d8] sm:$0xff]
  %v74 = vld [vmem:[%s0 + $0x1e0] sm:$0xff]
  %v75 = vld [vmem:[%s0 + $0x1e8] sm:$0xff]
  %v76 = vld [vmem:[%s0 + $0x1f0] sm:$0xff]
  %v77 = vld [vmem:[%s0 + $0x1f8] sm:$0xff]
  %v78 = vld [vmem:[%s0 + $0x200] sm:$0xff]
  %v79 = vld [vmem:[%s0 + $0x208] sm:$0xff]
  %v80 = vld [vmem:[%s0 + $0x210] sm:$0xff]
  %v81 = vld [vmem:[%s0 + $0x218] sm:$0xff]
  %v82 = vld [vmem:[%s0 + $0x220] sm:$0xff]
  %v83 = vld [vmem:[%s0 + $0x228] sm:$0xff]
  %v84 = vld [vmem:[%s0 + $0x230] sm:$0xff]
  %v85 = vld [vmem:[%s0 + $0x238] sm:$0xff]
  %v86 = vld [vmem:[%s0 + $0x240] sm:$0xff]
  %v87 = vld [vmem:[%s0 + $0x248] sm:$0xff]
  %v88 = vld [vmem:[%s0 + $0x250] sm:$0xff]
  %v89 = vld [vmem:[%s0 + $0x258] sm:$0xff]
  %v90 = vld [vmem:[%s0 + $0x260] sm:$0xff]
  %v91 = vld [vmem:[%s0 + $0x268] sm:$0xff]
  %v92 = vld [vmem:[%s0 + $0x270] sm:$0xff]
  %v93 = vld [vmem:[%s0 + $0x278] sm:$0xff]
  %v94 = vld [vmem:[%s0 + $0x280] sm:$0xff]
  %v95 = vld [vmem:[%s0 + $0x288] sm:$0xff]
  %v96 = vld [vmem:[%s0 + $0x290] sm:$0xff]
  %v97 = vld [vmem:[%s0 + $0x298] sm:$0xff]
  %v98 = vld [vmem:[%s0 + $0x2a0] sm:$0xff]
  %v99 = vld [vmem:[%s0 + $0x2a8] sm:$0xff]
  %v100 = vld [vmem:[%s0 + $0x2b0] sm:$0xff]
  %v101 = vld [vmem:[%s0 + $0x2b8] sm:$0xff]
  %v102 = vld [vmem:[%s0 + $0x2c0] sm:$0xff]
  %v103 = vld [vmem:[%s0 + $0x2c8] sm:$0xff]
  %v104 = vld [vmem:[%s0 + $0x2d0] sm:$0xff]
  %v105 = vld [vmem:[%s0 + $0x2d8] sm:$0xff]
  %v106 = vld [vmem:[%s0 + $0x2e0] sm:$0xff]
  %v107 = vld [vmem:[%s0 + $0x2e8] sm:$0xff]
  %v108 = vld [vmem:[%s0 + $0x2f0] sm:$0xff]
  %v109 = vld [vmem:[%s0 + $0x2f8] sm:$0xff]
  %v110 = vld [vmem:[%s0 + $0x300] sm:$0xff]
  %v111 = vld [vmem:[%s0 + $0x308] sm:$0xff]
  %v112 = vld [vmem:[%s0 + $0x310] sm:$0xff]
  %v113 = vld [vmem:[%s0 + $0x318] sm:$0xff]
  %v114 = vld [vmem:[%s0 + $0x320] sm:$0xff]
  %v115 = vld [vmem:[%s0 + $0x328] sm:$0xff]
  %v116 = vld [vmem:[%s0 + $0x330] sm:$0xff]
  %v117 = vld [vmem:[%s0 + $0x338] sm:$0xff]
  %v118 = vld [vmem:[%s0 + $0x340] sm:$0xff]
  %v119 = vld [vmem:[%s0 + $0x348] sm:$0xff]
  %v120 = vld [vmem:[%s0 + $0x350] sm:$0xff]
  %v121 = vld [vmem:[%s0 + $0x358] sm:$0xff]
  %v122 = vld [vmem:[%s0 + $0x360] sm:$0xff]
  %v123 = vld [vmem:[%s0 + $0x368] sm:$0xff]
  %v124 = vld [vmem:[%s0 + $0x370] sm:$0xff]
  %v125 = vld [vmem:[%s0 + $0x378] sm:$0xff]
  %v126 = vld [vmem:[%s0 + $0x380] sm:$0xff]
  %v127 = vld [vmem:[%s0 + $0x388] sm:$0xff]
  %v128 = vld [vmem:[%s0 + $0x390] sm:$0xff]
  %v129 = vld [vmem:[%s0 + $0x398] sm:$0xff]
  %v130 = vld [vmem:[%s0 + $0x3a0] sm:$0xff]
  %v131 = vld [vmem:[%s0 + $0x3a8] sm:$0xff]
  %v132 = vld [vmem:[%s0 + $0x3b0] sm:$0xff]
  %v133 = vld [vmem:[%s0 + $0x3b8] sm:$0xff]
  %v134 = vld [vmem:[%s0 + $0x3c0] sm:$0xff]
  %v135 = vld [vmem:[%s0 + $0x3c8] sm:$0xff]
  %v136 = vld [vmem:[%s0 + $0x3d0] sm:$0xff]
  %v137 = vld [vmem:[%s0 + $0x3d8] sm:$0xff]
  %v138 = vld [vmem:[%s0 + $0x3e0] sm:$0xff]
  %v139 = vld [vmem:[%s0 + $0x3e8] sm:$0xff]
  %v140 = vld [vmem:[%s0 + $0x3f0] sm:$0xff]
  %v141 = vld [vmem:[%s0 + $0x3f8] sm:$0xff]
  %v142 = vld [vmem:[%s0 + $0x400] sm:$0xff]
  %v143 = vld [vmem:[%s0 + $0x408] sm:$0xff]
  %v144 = vld [vmem:[%s0 + $0x410] sm:$0xff]
  %v145 = vld [vmem:[%s0 + $0x418] sm:$0xff]
  %v146 = vld [vmem:[%s0 + $0x420] sm:$0xff]
  %v147 = vld [vmem:[%s0 + $0x428] sm:$0xff]
  %v148 = vld [vmem:[%s0 + $0x430] sm:$0xff]
  %v149 = vld [vmem:[%s0 + $0x438] sm:$0xff]
  %v150 = vld [vmem:[%s0 + $0x440] sm:$0xff]
  %v151 = vld [vmem:[%s0 + $0x448] sm:$0xff]
  %v152 = vld [vmem:[%s0 + $0x450] sm:$0xff]
  %v153 = vld [vmem:[%s0 + $0x458] sm:$0xff]
  %v154 = vld [vmem:[%s0 + $0x460] sm:$0xff]
  %v155 = vld [vmem:[%s0 + $0x468] sm:$0xff]
  %v156 = vld [vmem:[%s0 + $0x470] sm:$0xff]
  %v157 = vld [vmem:[%s0 + $0x478] sm:$0xff]
  %v158 = vld [vmem:[%s0 + $0x480] sm:$0xff]
  %v159 = vld [vmem:[%s0 + $0x488] sm:$0xff]
  %v160 = vld [vmem:[%s0 + $0x490] sm:$0xff]
  %v161 = vld [vmem:[%s0 + $0x498] sm:$0xff]
  %v162 = vld [vmem:[%s0 + $0x4a0] sm:$0xff]
  %v163 = vld [vmem:[%s0 + $0x4a8] sm:$0xff]
  %v164 = vld [vmem:[%s0 + $0x4b0] sm:$0xff]
  %v165 = vld [vmem:[%s0 + $0x4b8] sm:$0xff]
  %v166 = vld [vmem:[%s0 + $0x4c0] sm:$0xff]
  %v167 = vld [vmem:[%s0 + $0x4c8] sm:$0xff]
  %v168 = vld [vmem:[%s0 + $0x4d0] sm:$0xff]
  %v169 = vld [vmem:[%s0 + $0x4d8] sm:$0xff]
  %v170 = vld [vmem:[%s0 + $0x4e0] sm:$0xff]
  %v171 = vld [vmem:[%s0 + $0x4e8] sm:$0xff]
  %v172 = vld [vmem:[%s0 + $0x4f0] sm:$0xff]
  %v173 = vld [vmem:[%s0 + $0x4f8] sm:$0xff]
  %v174 = vld [vmem:[%s0 + $0x500] sm:$0xff]
  %v175 = vld [vmem:[%s0 + $0x508] sm:$0xff]
  %v176 = vld [vmem:[%s0 + $0x510] sm:$0xff]
  %v177 = vld [vmem:[%s0 + $0x518] sm:$0xff]
  %v178 = vld [vmem:[%s0 + $0x520] sm:$0xff]
  %v179 = vld [vmem:[%s0 + $0x528] sm:$0xff]
  %v180 = vld [vmem:[%s0 + $0x530] sm:$0xff]
  %v181 = vld [vmem:[%s0 + $0x538] sm:$0xff]
  %v182 = vld [vmem:[%s0 + $0x540] sm:$0xff]
  %v183 = vld [vmem:[%s0 + $0x548] sm:$0xff]
  %v184 = vld [vmem:[%s0 + $0x550] sm:$0xff]
  %v185 = vld [vmem:[%s0 + $0x558] sm:$0xff]
  %v186 = vld [vmem:[%s0 + $0x560] sm:$0xff]
  %v187 = vld [vmem:[%s0 + $0x568] sm:$0xff]
  %v188 = vld [vmem:[%s0 + $0x570] sm:$0xff]
  %v189 = vld [vmem:[%s0 + $0x578] sm:$0xff]
  %v190 = vld [vmem:[%s0 + $0x580] sm:$0xff]
  %v191 = vld [vmem:[%s0 + $0x588] sm:$0xff]
  %v192 = vld [vmem:[%s0 + $0x590] sm:$0xff]
  %v193 = vld [vmem:[%s0 + $0x598] sm:$0xff]
  %v194 = vld [vmem:[%s0 + $0x5a0] sm:$0xff]
  %v195 = vld [vmem:[%s0 + $0x5a8] sm:$0xff]
  %v196 = vld [vmem:[%s0 + $0x5b0] sm:$0xff]
  %v197 = vld [vmem:[%s0 + $0x5b8] sm:$0xff]
  %v198 = vld [vmem:[%s0 + $0x5c0] sm:$0xff]
  %v199 = vld [vmem:[%s0 + $0x5c8] sm:$0xff]
  %v200 = vld [vmem:[%s0 + $0x5d0] sm:$0xff]
  %v201 = vld [vmem:[%s0 + $0x5d8] sm:$0xff]
  %v202 = vld [vmem:[%s0 + $0x5e0] sm:$0xff]
  %v203 = vld [vmem:[%s0 + $0x5e8] sm:$0xff]
  %v204 = vld [vmem:[%s0 + $0x5f0] sm:$0xff]
  %v205 = vld [vmem:[%s0 + $0x5f8] sm:$0xff]
  %v206 = vld [vmem:[%s0 + $0x600] sm:$0xff]
  %v207 = vld [vmem:[%s0 + $0x608] sm:$0xff]
  %v208 = vld [vmem:[%s0 + $0x610] sm:$0xff]
  %v209 = vld [vmem:[%s0 + $0x618] sm:$0xff]
  %v210 = vld [vmem:[%s0 + $0x620] sm:$0xff]
  %v211 = vld [vmem:[%s0 + $0x628] sm:$0xff]
  %v212 = vld [vmem:[%s0 + $0x630] sm:$0xff]
  %v213 = vld [vmem:[%s0 + $0x638] sm:$0xff]
  %v214 = vld [vmem:[%s0 + $0x640] sm:$0xff]
  %v215 = vld [vmem:[%s0 + $0x648] sm:$0xff]
  %v216 = vld [vmem:[%s0 + $0x650] sm:$0xff]
  %v217 = vld [vmem:[%s0 + $0x658] sm:$0xff]
  %v218 = vld [vmem:[%s0 + $0x660] sm:$0xff]
  %v219 = vld [vmem:[%s0 + $0x668] sm:$0xff]
  %v220 = vld [vmem:[%s0 + $0x670] sm:$0xff]
  %v221 = vld [vmem:[%s0 + $0x678] sm:$0xff]
  %v222 = vld [vmem:[%s0 + $0x680] sm:$0xff]
  %v223 = vld [vmem:[%s0 + $0x688] sm:$0xff]
  %v224 = vld [vmem:[%s0 + $0x690] sm:$0xff]
  %v225 = vld [vmem:[%s0 + $0x698] sm:$0xff]
  %v226 = vld [vmem:[%s0 + $0x6a0] sm:$0xff]
  %v227 = vld [vmem:[%s0 + $0x6a8] sm:$0xff]
  %v228 = vld [vmem:[%s0 + $0x6b0] sm:$0xff]
  %v229 = vld [vmem:[%s0 + $0x6b8] sm:$0xff]
  %v230 = vld [vmem:[%s0 + $0x6c0] sm:$0xff]
  %v231 = vld [vmem:[%s0 + $0x6c8] sm:$0xff]
  %v232 = vld [vmem:[%s0 + $0x6d0] sm:$0xff]
  %v233 = vld [vmem:[%s0 + $0x6d8] sm:$0xff]
  %v234 = vld [vmem:[%s0 + $0x6e0] sm:$0xff]
  %v235 = vld [vmem:[%s0 + $0x6e8] sm:$0xff]
  %v236 = vld [vmem:[%s0 + $0x6f0] sm:$0xff]
  %v237 = vld [vmem:[%s0 + $0x6f8] sm:$0xff]
  %v238 = vld [vmem:[%s0 + $0x700] sm:$0xff]
  %v239 = vld [vmem:[%s0 + $0x708] sm:$0xff]
  %v240 = vld [vmem:[%s0 + $0x710] sm:$0xff]
  %v241 = vld [vmem:[%s0 + $0x718] sm:$0xff]
  %v242 = vld [vmem:[%s0 + $0x720] sm:$0xff]
  %v243 = vld [vmem:[%s0 + $0x728] sm:$0xff]
  %v244 = vld [vmem:[%s0 + $0x730] sm:$0xff]
  %v245 = vld [vmem:[%s0 + $0x738] sm:$0xff]
  %v246 = vld [vmem:[%s0 + $0x740] sm:$0xff]
  %v247 = vld [vmem:[%s0 + $0x748] sm:$0xff]
  %v248 = vld [vmem:[%s0 + $0x750] sm:$0xff]
  %v249 = vld [vmem:[%s0 + $0x758] sm:$0xff]
  %v250 = vld [vmem:[%s0 + $0x760] sm:$0xff]
  %v251 = vld [vmem:[%s0 + $0x768] sm:$0xff]
  %v252 = vld [vmem:[%s0 + $0x770] sm:$0xff]
  %v253 = vld [vmem:[%s0 + $0x778] sm:$0xff]
  %v254 = vld [vmem:[%s0 + $0x780] sm:$0xff]
  %v255 = vld [vmem:[%s0 + $0x788] sm:$0xff]
  %v256 = vld [vmem:[%s0 + $0x790] sm:$0xff]
  %v257 = vld [vmem:[%s0 + $0x798] sm:$0xff]
  %v258 = vld [vmem:[%s0 + $0x7a0] sm:$0xff]
  %v259 = vld [vmem:[%s0 + $0x7a8] sm:$0xff]
  %v260 = vld [vmem:[%s0 + $0x7b0] sm:$0xff]
  %v261 = vld [vmem:[%s0 + $0x7b8] sm:$0xff]
  %v262 = vld [vmem:[%s0 + $0x7c0] sm:$0xff]
  %v263 = vld [vmem:[%s0 + $0x7c8] sm:$0xff]
  %v264 = vld [vmem:[%s0 + $0x7d0] sm:$0xff]
  %v265 = vld [vmem:[%s0 + $0x7d8] sm:$0xff]
  %v266 = vld [vmem:[%s0 + $0x7e0] sm:$0xff]
  %v267 = vld [vmem:[%s0 + $0x7e8] sm:$0xff]
  %v268 = vld [vmem:[%s0 + $0x7f0] sm:$0xff]
  %v269 = vld [vmem:[%s0 + $0x7f8] sm:$0xff]
  %v270 = vld [vmem:[%s0 + $0x800] sm:$0xff]
  %v271 = vld [vmem:[%s0 + $0x808] sm:$0xff]
  %v272 = vld [vmem:[%s0 + $0x810] sm:$0xff]
  %v273 = vld [vmem:[%s0 + $0x818] sm:$0xff]
  %v274 = vld [vmem:[%s0 + $0x820] sm:$0xff]
  %v275 = vld [vmem:[%s0 + $0x828] sm:$0xff]
  %v276 = vld [vmem:[%s0 + $0x830] sm:$0xff]
  %v277 = vld [vmem:[%s0 + $0x838] sm:$0xff]
  %v278 = vld [vmem:[%s0 + $0x840] sm:$0xff]
  %v279 = vld [vmem:[%s0 + $0x848] sm:$0xff]
  %v280 = vld [vmem:[%s0 + $0x850] sm:$0xff]
  %v281 = vld [vmem:[%s0 + $0x858] sm:$0xff]
  %v282 = vld [vmem:[%s0 + $0x860] sm:$0xff]
  %v283 = vld [vmem:[%s0 + $0x868] sm:$0xff]
  %v284 = vld [vmem:[%s0 + $0x870] sm:$0xff]
  %v285 = vld [vmem:[%s0 + $0x878] sm:$0xff]
  %v286 = vld [vmem:[%s0 + $0x880] sm:$0xff]
  %v287 = vld [vmem:[%s0 + $0x888] sm:$0xff]
  %v288 = vld [vmem:[%s0 + $0x890] sm:$0xff]
  %v289 = vld [vmem:[%s0 + $0x898] sm:$0xff]
  %v290 = vld [vmem:[%s0 + $0x8a0] sm:$0xff]
  %v291 = vld [vmem:[%s0 + $0x8a8] sm:$0xff]
  %v292 = vld [vmem:[%s0 + $0x8b0] sm:$0xff]
  %v293 = vld [vmem:[%s0 + $0x8b8] sm:$0xff]
  %v294 = vld [vmem:[%s0 + $0x8c0] sm:$0xff]
  %v295 = vld [vmem:[%s0 + $0x8c8] sm:$0xff]
  %v296 = vld [vmem:[%s0 + $0x8d0] sm:$0xff]
  %v297 = vld [vmem:[%s0 + $0x8d8] sm:$0xff]
  %v298 = vld [vmem:[%s0 + $0x8e0] sm:$0xff]
  %v299 = vld [vmem:[%s0 + $0x8e8] sm:$0xff]
  %v300 = vld [vmem:[%s0 + $0x8f0] sm:$0xff]
  %v301 = vld [vmem:[%s0 + $0x8f8] sm:$0xff]
  %v302 = vld [vmem:[%s0 + $0x900] sm:$0xff]
  %v303 = vld [vmem:[%s0 + $0x908] sm:$0xff]
  %v304 = vld [vmem:[%s0 + $0x910] sm:$0xff]
  %v305 = vld [vmem:[%s0 + $0x918] sm:$0xff]
  %v306 = vld [vmem:[%s0 + $0x920] sm:$0xff]
  %v307 = vld [vmem:[%s0 + $0x928] sm:$0xff]
  %v308 = vld [vmem:[%s0 + $0x930] sm:$0xff]
  %v309 = vld [vmem:[%s0 + $0x938] sm:$0xff]
  %v310 = vld [vmem:[%s0 + $0x940] sm:$0xff]
  %v311 = vld [vmem:[%s0 + $0x948] sm:$0xff]
  %v312 = vld [vmem:[%s0 + $0x950] sm:$0xff]
  %v313 = vld [vmem:[%s0 + $0x958] sm:$0xff]
  %v314 = vld [vmem:[%s0 + $0x960] sm:$0xff]
  %v315 = vld [vmem:[%s0 + $0x968] sm:$0xff]
  %v316 = vld [vmem:[%s0 + $0x970] sm:$0xff]
  %v317 = vld [vmem:[%s0 + $0x978] sm:$0xff]
  %v318 = vld [vmem:[%s0 + $0x980] sm:$0xff]
  %v319 = vld [vmem:[%s0 + $0x988] sm:$0xff]
  %v320 = vld [vmem:[%s0 + $0x990] sm:$0xff]
  %v321 = vld [vmem:[%s0 + $0x998] sm:$0xff]
  %v322 = vld [vmem:[%s0 + $0x9a0] sm:$0xff]
  %v323 = vld [vmem:[%s0 + $0x9a8] sm:$0xff]
  %v324 = vld [vmem:[%s0 + $0x9b0] sm:$0xff]
  %v325 = vld [vmem:[%s0 + $0x9b8] sm:$0xff]
  %v326 = vld [vmem:[%s0 + $0x9c0] sm:$0xff]
  %v327 = vld [vmem:[%s0 + $0x9c8] sm:$0xff]
  %v328 = vld [vmem:[%s0 + $0x9d0] sm:$0xff]
  %v329 = vld [vmem:[%s0 + $0x9d8] sm:$0xff]
  %v330 = vld [vmem:[%s0 + $0x9e0] sm:$0xff]
  %v331 = vld [vmem:[%s0 + $0x9e8] sm:$0xff]
  %v332 = vld [vmem:[%s0 + $0x9f0] sm:$0xff]
  %v333 = vld [vmem:[%s0 + $0x9f8] sm:$0xff]
  %v334 = vld [vmem:[%s0 + $0xa00] sm:$0xff]
  %v335 = vld [vmem:[%s0 + $0xa08] sm:$0xff]
  %v336 = vld [vmem:[%s0 + $0xa10] sm:$0xff]
  %v337 = vld [vmem:[%s0 + $0xa18] sm:$0xff]
  %v338 = vld [vmem:[%s0 + $0xa20] sm:$0xff]
  %v339 = vld [vmem:[%s0 + $0xa28] sm:$0xff]
  %v340 = vld [vmem:[%s0 + $0xa30] sm:$0xff]
  %v341 = vld [vmem:[%s0 + $0xa38] sm:$0xff]
  %v342 = vld [vmem:[%s0 + $0xa40] sm:$0xff]
  %v343 = vld [vmem:[%s0 + $0xa48] sm:$0xff]
  %v344 = vld [vmem:[%s0 + $0xa50] sm:$0xff]
  %v345 = vld [vmem:[%s0 + $0xa58] sm:$0xff]
  %v346 = vld [vmem:[%s0 + $0xa60] sm:$0xff]
  %v347 = vld [vmem:[%s0 + $0xa68] sm:$0xff]
  %v348 = vld [vmem:[%s0 + $0xa70] sm:$0xff]
  %v349 = vld [vmem:[%s0 + $0xa78] sm:$0xff]
  %v350 = vld [vmem:[%s0 + $0xa80] sm:$0xff]
  %v351 = vld [vmem:[%s0 + $0xa88] sm:$0xff]
  %v352 = vld [vmem:[%s0 + $0xa90] sm:$0xff]
  %v353 = vld [vmem:[%s0 + $0xa98] sm:$0xff]
  %v354 = vld [vmem:[%s0 + $0xaa0] sm:$0xff]
  %v355 = vld [vmem:[%s0 + $0xaa8] sm:$0xff]
  %v356 = vld [vmem:[%s0 + $0xab0] sm:$0xff]
  %v357 = vld [vmem:[%s0 + $0xab8] sm:$0xff]
  %v358 = vld [vmem:[%s0 + $0xac0] sm:$0xff]
  %v359 = vld [vmem:[%s0 + $0xac8] sm:$0xff]
  %v360 = vld [vmem:[%s0 + $0xad0] sm:$0xff]
  %v361 = vld [vmem:[%s0 + $0xad8] sm:$0xff]
  %v362 = vld [vmem:[%s0 + $0xae0] sm:$0xff]
  %v363 = vld [vmem:[%s0 + $0xae8] sm:$0xff]
  %v364 = vld [vmem:[%s0 + $0xaf0] sm:$0xff]
  %v365 = vld [vmem:[%s0 + $0xaf8] sm:$0xff]
  %v366 = vld [vmem:[%s0 + $0xb00] sm:$0xff]
  %v367 = vld [vmem:[%s0 + $0xb08] sm:$0xff]
  %v368 = vld [vmem:[%s0 + $0xb10] sm:$0xff]
  %v369 = vld [vmem:[%s0 + $0xb18] sm:$0xff]
  %v370 = vld [vmem:[%s0 + $0xb20] sm:$0xff]
  %v371 = vld [vmem:[%s0 + $0xb28] sm:$0xff]
  %v372 = vld [vmem:[%s0 + $0xb30] sm:$0xff]
  %v373 = vld [vmem:[%s0 + $0xb38] sm:$0xff]
  %v374 = vld [vmem:[%s0 + $0xb40] sm:$0xff]
  %v375 = vld [vmem:[%s0 + $0xb48] sm:$0xff]
  %v376 = vld [vmem:[%s0 + $0xb50] sm:$0xff]
  %v377 = vld [vmem:[%s0 + $0xb58] sm:$0xff]
  %v378 = vld [vmem:[%s0 + $0xb60] sm:$0xff]
  %v379 = vld [vmem:[%s0 + $0xb68] sm:$0xff]
  %v380 = vld [vmem:[%s0 + $0xb70] sm:$0xff]
  %v381 = vld [vmem:[%s0 + $0xb78] sm:$0xff]
  %v382 = vld [vmem:[%s0 + $0xb80] sm:$0xff]
  %v383 = vld [vmem:[%s0 + $0xb88] sm:$0xff]
  %v384 = vld [vmem:[%s0 + $0xb90] sm:$0xff]
  %v385 = vld [vmem:[%s0 + $0xb98] sm:$0xff]
  %v386 = vld [vmem:[%s0 + $0xba0] sm:$0xff]
  %v387 = vld [vmem:[%s0 + $0xba8] sm:$0xff]
  %v388 = vld [vmem:[%s0 + $0xbb0] sm:$0xff]
  %v389 = vld [vmem:[%s0 + $0xbb8] sm:$0xff]
  %v390 = vld [vmem:[%s0 + $0xbc0] sm:$0xff]
  %v391 = vld [vmem:[%s0 + $0xbc8] sm:$0xff]
  %v392 = vld [vmem:[%s0 + $0xbd0] sm:$0xff]
  %v393 = vld [vmem:[%s0 + $0xbd8] sm:$0xff]
  %v394 = vld [vmem:[%s0 + $0xbe0] sm:$0xff]
  %v395 = vld [vmem:[%s0 + $0xbe8] sm:$0xff]
  %v396 = vld [vmem:[%s0 + $0xbf0] sm:$0xff]
  %v397 = vld [vmem:[%s0 + $0xbf8] sm:$0xff]
  %v398 = vld [vmem:[%s0 + $0xc00] sm:$0xff]
  %v399 = vld [vmem:[%s0 + $0xc08] sm:$0xff]
  %v400 = vld [vmem:[%s0 + $0xc10] sm:$0xff]
  %v401 = vld [vmem:[%s0 + $0xc18] sm:$0xff]
  %v402 = vld [vmem:[%s0 + $0xc20] sm:$0xff]
  %v403 = vld [vmem:[%s0 + $0xc28] sm:$0xff]
  %v404 = vld [vmem:[%s0 + $0xc30] sm:$0xff]
  %v405 = vld [vmem:[%s0 + $0xc38] sm:$0xff]
  %v406 = vld [vmem:[%s0 + $0xc40] sm:$0xff]
  %v407 = vld [vmem:[%s0 + $0xc48] sm:$0xff]
  %v408 = vld [vmem:[%s0 + $0xc50] sm:$0xff]
  %v409 = vld [vmem:[%s0 + $0xc58] sm:$0xff]
  %v410 = vld [vmem:[%s0 + $0xc60] sm:$0xff]
  %v411 = vld [vmem:[%s0 + $0xc68] sm:$0xff]
  %v412 = vld [vmem:[%s0 + $0xc70] sm:$0xff]
  %v413 = vld [vmem:[%s0 + $0xc78] sm:$0xff]
  %v414 = vld [vmem:[%s0 + $0xc80] sm:$0xff]
  %v415 = vld [vmem:[%s0 + $0xc88] sm:$0xff]
  %v416 = vld [vmem:[%s0 + $0xc90] sm:$0xff]
  %v417 = vld [vmem:[%s0 + $0xc98] sm:$0xff]
  %v418 = vld [vmem:[%s0 + $0xca0] sm:$0xff]
  %v419 = vld [vmem:[%s0 + $0xca8] sm:$0xff]
  %v420 = vld [vmem:[%s0 + $0xcb0] sm:$0xff]
  %v421 = vld [vmem:[%s0 + $0xcb8] sm:$0xff]
  %v422 = vld [vmem:[%s0 + $0xcc0] sm:$0xff]
  %v423 = vld [vmem:[%s0 + $0xcc8] sm:$0xff]
  %v424 = vld [vmem:[%s0 + $0xcd0] sm:$0xff]
  %v425 = vld [vmem:[%s0 + $0xcd8] sm:$0xff]
  %v426 = vld [vmem:[%s0 + $0xce0] sm:$0xff]
  %v427 = vld [vmem:[%s0 + $0xce8] sm:$0xff]
  %v428 = vld [vmem:[%s0 + $0xcf0] sm:$0xff]
  %v429 = vld [vmem:[%s0 + $0xcf8] sm:$0xff]
  %v430 = vld [vmem:[%s0 + $0xd00] sm:$0xff]
  %v431 = vld [vmem:[%s0 + $0xd08] sm:$0xff]
  %v432 = vld [vmem:[%s0 + $0xd10] sm:$0xff]
  %v433 = vld [vmem:[%s0 + $0xd18] sm:$0xff]
  %v434 = vld [vmem:[%s0 + $0xd20] sm:$0xff]
  %v435 = vld [vmem:[%s0 + $0xd28] sm:$0xff]
  %v436 = vld [vmem:[%s0 + $0xd30] sm:$0xff]
  %v437 = vld [vmem:[%s0 + $0xd38] sm:$0xff]
  %v438 = vld [vmem:[%s0 + $0xd40] sm:$0xff]
  %v439 = vld [vmem:[%s0 + $0xd48] sm:$0xff]
  %v440 = vld [vmem:[%s0 + $0xd50] sm:$0xff]
  %v441 = vld [vmem:[%s0 + $0xd58] sm:$0xff]
  %v442 = vld [vmem:[%s0 + $0xd60] sm:$0xff]
  %v443 = vld [vmem:[%s0 + $0xd68] sm:$0xff]
  %v444 = vld [vmem:[%s0 + $0xd70] sm:$0xff]
  %v445 = vld [vmem:[%s0 + $0xd78] sm:$0xff]
  %v446 = vld [vmem:[%s0 + $0xd80] sm:$0xff]
  %v447 = vld [vmem:[%s0 + $0xd88] sm:$0xff]
  %v448 = vld [vmem:[%s0 + $0xd90] sm:$0xff]
  %v449 = vld [vmem:[%s0 + $0xd98] sm:$0xff]
  %v450 = vld [vmem:[%s0 + $0xda0] sm:$0xff]
  %v451 = vld [vmem:[%s0 + $0xda8] sm:$0xff]
  %v452 = vld [vmem:[%s0 + $0xdb0] sm:$0xff]
  %v453 = vld [vmem:[%s0 + $0xdb8] sm:$0xff]
  %v454 = vld [vmem:[%s0 + $0xdc0] sm:$0xff]
  %v455 = vld [vmem:[%s0 + $0xdc8] sm:$0xff]
  %v456 = vld [vmem:[%s0 + $0xdd0] sm:$0xff]
  %v457 = vld [vmem:[%s0 + $0xdd8] sm:$0xff]
  %v458 = vld [vmem:[%s0 + $0xde0] sm:$0xff]
  %v459 = vld [vmem:[%s0 + $0xde8] sm:$0xff]
  %v460 = vld [vmem:[%s0 + $0xdf0] sm:$0xff]
  %v461 = vld [vmem:[%s0 + $0xdf8] sm:$0xff]
  %v462 = vld [vmem:[%s0 + $0xe00] sm:$0xff]
  %v463 = vld [vmem:[%s0 + $0xe08] sm:$0xff]
  %v464 = vld [vmem:[%s0 + $0xe10] sm:$0xff]
  %v465 = vld [vmem:[%s0 + $0xe18] sm:$0xff]
  %v466 = vld [vmem:[%s0 + $0xe20] sm:$0xff]
  %v467 = vld [vmem:[%s0 + $0xe28] sm:$0xff]
  %v468 = vld [vmem:[%s0 + $0xe30] sm:$0xff]
  %v469 = vld [vmem:[%s0 + $0xe38] sm:$0xff]
  %v470 = vld [vmem:[%s0 + $0xe40] sm:$0xff]
  %v471 = vld [vmem:[%s0 + $0xe48] sm:$0xff]
  %v472 = vld [vmem:[%s0 + $0xe50] sm:$0xff]
  %v473 = vld [vmem:[%s0 + $0xe58] sm:$0xff]
  %v474 = vld [vmem:[%s0 + $0xe60] sm:$0xff]
  %v475 = vld [vmem:[%s0 + $0xe68] sm:$0xff]
  %v476 = vld [vmem:[%s0 + $0xe70] sm:$0xff]
  %v477 = vld [vmem:[%s0 + $0xe78] sm:$0xff]
  %v478 = vld [vmem:[%s0 + $0xe80] sm:$0xff]
  %v479 = vld [vmem:[%s0 + $0xe88] sm:$0xff]
  %v480 = vld [vmem:[%s0 + $0xe90] sm:$0xff]
  %v481 = vld [vmem:[%s0 + $0xe98] sm:$0xff]
  %v482 = vld [vmem:[%s0 + $0xea0] sm:$0xff]
  %v483 = vld [vmem:[%s0 + $0xea8] sm:$0xff]
  %v484 = vld [vmem:[%s0 + $0xeb0] sm:$0xff]
  %v485 = vld [vmem:[%s0 + $0xeb8] sm:$0xff]
  %v486 = vld [vmem:[%s0 + $0xec0] sm:$0xff]
  %v487 = vld [vmem:[%s0 + $0xec8] sm:$0xff]
  %v488 = vld [vmem:[%s0 + $0xed0] sm:$0xff]
  %v489 = vld [vmem:[%s0 + $0xed8] sm:$0xff]
  %v490 = vld [vmem:[%s0 + $0xee0] sm:$0xff]
  %v491 = vld [vmem:[%s0 + $0xee8] sm:$0xff]
  %v492 = vld [vmem:[%s0 + $0xef0] sm:$0xff]
  %v493 = vld [vmem:[%s0 + $0xef8] sm:$0xff]
  %v494 = vld [vmem:[%s0 + $0xf00] sm:$0xff]
  %v495 = vld [vmem:[%s0 + $0xf08] sm:$0xff]
  %v496 = vld [vmem:[%s0 + $0xf10] sm:$0xff]
  %v497 = vld [vmem:[%s0 + $0xf18] sm:$0xff]
  %v498 = vld [vmem:[%s0 + $0xf20] sm:$0xff]
  %v499 = vld [vmem:[%s0 + $0xf28] sm:$0xff]
  %v500 = vld [vmem:[%s0 + $0xf30] sm:$0xff]
  %v501 = vld [vmem:[%s0 + $0xf38] sm:$0xff]
  %v502 = vld [vmem:[%s0 + $0xf40] sm:$0xff]
  %v503 = vld [vmem:[%s0 + $0xf48] sm:$0xff]
  %v504 = vld [vmem:[%s0 + $0xf50] sm:$0xff]
  %v505 = vld [vmem:[%s0 + $0xf58] sm:$0xff]
  %v506 = vld [vmem:[%s0 + $0xf60] sm:$0xff]
  %v507 = vld [vmem:[%s0 + $0xf68] sm:$0xff]
  %v508 = vld [vmem:[%s0 + $0xf70] sm:$0xff]
  %v509 = vld [vmem:[%s0 + $0xf78] sm:$0xff]
  %v510 = vld [vmem:[%s0 + $0xf80] sm:$0xff]
  %v511 = vld [vmem:[%s0 + $0xf88] sm:$0xff]
  %v512 = vld [vmem:[%s0 + $0xf90] sm:$0xff]
  %v513 = vld [vmem:[%s0 + $0xf98] sm:$0xff]
  %v514 = vld [vmem:[%s0 + $0xfa0] sm:$0xff]
  %v515 = vld [vmem:[%s0 + $0xfa8] sm:$0xff]
  %v516 = vld [vmem:[%s0 + $0xfb0] sm:$0xff]
  %v517 = vld [vmem:[%s0 + $0xfb8] sm:$0xff]
  %v518 = vld [vmem:[%s0 + $0xfc0] sm:$0xff]
  %v519 = vld [vmem:[%s0 + $0xfc8] sm:$0xff]
  %v520 = vld [vmem:[%s0 + $0xfd0] sm:$0xff]
  %v521 = vld [vmem:[%s0 + $0xfd8] sm:$0xff]
  %v522 = vld [vmem:[%s0 + $0xfe0] sm:$0xff]
  %v523 = vld [vmem:[%s0 + $0xfe8] sm:$0xff]
  %v524 = vld [vmem:[%s0 + $0xff0] sm:$0xff]
  %v525 = vld [vmem:[%s0 + $0xff8] sm:$0xff]
  %v526 = vld [vmem:[%s0 + $0x1000] sm:$0xff]
  %v527 = vld [vmem:[%s0 + $0x1008] sm:$0xff]
  %v528 = vld [vmem:[%s0 + $0x1010] sm:$0xff]
  %v529 = vld [vmem:[%s0 + $0x1018] sm:$0xff]
  %v530 = vld [vmem:[%s0 + $0x1020] sm:$0xff]
  %v531 = vld [vmem:[%s0 + $0x1028] sm:$0xff]
  %v532 = vld [vmem:[%s0 + $0x1030] sm:$0xff]
  %v533 = vld [vmem:[%s0 + $0x1038] sm:$0xff]
  %v534 = vld [vmem:[%s0 + $0x1040] sm:$0xff]
  %v535 = vld [vmem:[%s0 + $0x1048] sm:$0xff]
  %v536 = vld [vmem:[%s0 + $0x1050] sm:$0xff]
  %v537 = vld [vmem:[%s0 + $0x1058] sm:$0xff]
  %v538 = vld [vmem:[%s0 + $0x1060] sm:$0xff]
  %v539 = vld [vmem:[%s0 + $0x1068] sm:$0xff]
  %v540 = vld [vmem:[%s0 + $0x1070] sm:$0xff]
  %v541 = vld [vmem:[%s0 + $0x1078] sm:$0xff]
  %v542 = vld [vmem:[%s0 + $0x1080] sm:$0xff]
  %v543 = vld [vmem:[%s0 + $0x1088] sm:$0xff]
  %v544 = vld [vmem:[%s0 + $0x1090] sm:$0xff]
  %v545 = vld [vmem:[%s0 + $0x1098] sm:$0xff]
  %v546 = vld [vmem:[%s0 + $0x10a0] sm:$0xff]
  %v547 = vld [vmem:[%s0 + $0x10a8] sm:$0xff]
  %v548 = vld [vmem:[%s0 + $0x10b0] sm:$0xff]
  %v549 = vld [vmem:[%s0 + $0x10b8] sm:$0xff]
  %v550 = vld [vmem:[%s0 + $0x10c0] sm:$0xff]
  %v551 = vld [vmem:[%s0 + $0x10c8] sm:$0xff]
  %v552 = vld [vmem:[%s0 + $0x10d0] sm:$0xff]
  %v553 = vld [vmem:[%s0 + $0x10d8] sm:$0xff]
  %v554 = vld [vmem:[%s0 + $0x10e0] sm:$0xff]
  %v555 = vld [vmem:[%s0 + $0x10e8] sm:$0xff]
  %v556 = vld [vmem:[%s0 + $0x10f0] sm:$0xff]
  %v557 = vld [vmem:[%s0 + $0x10f8] sm:$0xff]
  %v558 = vld [vmem:[%s0 + $0x1100] sm:$0xff]
  %v559 = vld [vmem:[%s0 + $0x1108] sm:$0xff]
  %v560 = vld [vmem:[%s0 + $0x1110] sm:$0xff]
  %v561 = vld [vmem:[%s0 + $0x1118] sm:$0xff]
  %v562 = vld [vmem:[%s0 + $0x1120] sm:$0xff]
  %v563 = vld [vmem:[%s0 + $0x1128] sm:$0xff]
  %v564 = vld [vmem:[%s0 + $0x1130] sm:$0xff]
  %v565 = vld [vmem:[%s0 + $0x1138] sm:$0xff]
  %v566 = vld [vmem:[%s0 + $0x1140] sm:$0xff]
  %v567 = vld [vmem:[%s0 + $0x1148] sm:$0xff]
  %v568 = vld [vmem:[%s0 + $0x1150] sm:$0xff]
  %v569 = vld [vmem:[%s0 + $0x1158] sm:$0xff]
  %v570 = vld [vmem:[%s0 + $0x1160] sm:$0xff]
  %v571 = vld [vmem:[%s0 + $0x1168] sm:$0xff]
  %v572 = vld [vmem:[%s0 + $0x1170] sm:$0xff]
  %v573 = vld [vmem:[%s0 + $0x1178] sm:$0xff]
  %v574 = vld [vmem:[%s0 + $0x1180] sm:$0xff]
  %v575 = vld [vmem:[%s0 + $0x1188] sm:$0xff]
  %v576 = vld [vmem:[%s0 + $0x1190] sm:$0xff]
  %v577 = vld [vmem:[%s0 + $0x1198] sm:$0xff]
  %v578 = vld [vmem:[%s0 + $0x11a0] sm:$0xff]
  %v579 = vld [vmem:[%s0 + $0x11a8] sm:$0xff]
  %v580 = vld [vmem:[%s0 + $0x11b0] sm:$0xff]
  %v581 = vld [vmem:[%s0 + $0x11b8] sm:$0xff]
  %v582 = vld [vmem:[%s0 + $0x11c0] sm:$0xff]
  %v583 = vld [vmem:[%s0 + $0x11c8] sm:$0xff]
  %v584 = vld [vmem:[%s0 + $0x11d0] sm:$0xff]
  %v585 = vld [vmem:[%s0 + $0x11d8] sm:$0xff]
  %v586 = vld [vmem:[%s0 + $0x11e0] sm:$0xff]
  %v587 = vld [vmem:[%s0 + $0x11e8] sm:$0xff]
  %v588 = vld [vmem:[%s0 + $0x11f0] sm:$0xff]
  %v589 = vld [vmem:[%s0 + $0x11f8] sm:$0xff]
  %v590 = vld [vmem:[%s0 + $0x1200] sm:$0xff]
  %v591 = vld [vmem:[%s0 + $0x1208] sm:$0xff]
  %v592 = vld [vmem:[%s0 + $0x1210] sm:$0xff]
  %v593 = vld [vmem:[%s0 + $0x1218] sm:$0xff]
  %v594 = vld [vmem:[%s0 + $0x1220] sm:$0xff]
  %v595 = vld [vmem:[%s0 + $0x1228] sm:$0xff]
  %v596 = vld [vmem:[%s0 + $0x1230] sm:$0xff]
  %v597 = vld [vmem:[%s0 + $0x1238] sm:$0xff]
  %v598 = vld [vmem:[%s0 + $0x1240] sm:$0xff]
  %v599 = vld [vmem:[%s0 + $0x1248] sm:$0xff]
  %v600 = vld [vmem:[%s0 + $0x1250] sm:$0xff]
  %v601 = vld [vmem:[%s0 + $0x1258] sm:$0xff]
  %v602 = vld [vmem:[%s0 + $0x1260] sm:$0xff]
  %v603 = vld [vmem:[%s0 + $0x1268] sm:$0xff]
  %v604 = vld [vmem:[%s0 + $0x1270] sm:$0xff]
  %v605 = vld [vmem:[%s0 + $0x1278] sm:$0xff]
  %v606 = vld [vmem:[%s0 + $0x1280] sm:$0xff]
  %v607 = vld [vmem:[%s0 + $0x1288] sm:$0xff]
  %v608 = vld [vmem:[%s0 + $0x1290] sm:$0xff]
  %v609 = vld [vmem:[%s0 + $0x1298] sm:$0xff]
  %v610 = vld [vmem:[%s0 + $0x12a0] sm:$0xff]
  %v611 = vld [vmem:[%s0 + $0x12a8] sm:$0xff]
  %v612 = vld [vmem:[%s0 + $0x12b0] sm:$0xff]
  %v613 = vld [vmem:[%s0 + $0x12b8] sm:$0xff]
  %v614 = vld [vmem:[%s0 + $0x12c0] sm:$0xff]
  %v615 = vld [vmem:[%s0 + $0x12c8] sm:$0xff]
  %v616 = vld [vmem:[%s0 + $0x12d0] sm:$0xff]
  %v617 = vld [vmem:[%s0 + $0x12d8] sm:$0xff]
  %v618 = vld [vmem:[%s0 + $0x12e0] sm:$0xff]
  %v619 = vld [vmem:[%s0 + $0x12e8] sm:$0xff]
  %v620 = vld [vmem:[%s0 + $0x12f0] sm:$0xff]
  %v621 = vld [vmem:[%s0 + $0x12f8] sm:$0xff]
  %v622 = vld [vmem:[%s0 + $0x1300] sm:$0xff]
  %v623 = vld [vmem:[%s0 + $0x1308] sm:$0xff]
  %v624 = vld [vmem:[%s0 + $0x1310] sm:$0xff]
  %v625 = vld [vmem:[%s0 + $0x1318] sm:$0xff]
  %v626 = vld [vmem:[%s0 + $0x1320] sm:$0xff]
  %v627 = vld [vmem:[%s0 + $0x1328] sm:$0xff]
  %v628 = vld [vmem:[%s0 + $0x1330] sm:$0xff]
  %v629 = vld [vmem:[%s0 + $0x1338] sm:$0xff]
  %v630 = vld [vmem:[%s0 + $0x1340] sm:$0xff]
  %v631 = vld [vmem:[%s0 + $0x1348] sm:$0xff]
  %v632 = vld [vmem:[%s0 + $0x1350] sm:$0xff]
  %v633 = vld [vmem:[%s0 + $0x1358] sm:$0xff]
  %v634 = vld [vmem:[%s0 + $0x1360] sm:$0xff]
  %v635 = vld [vmem:[%s0 + $0x1368] sm:$0xff]
  %v636 = vld [vmem:[%s0 + $0x1370] sm:$0xff]
  %v637 = vld [vmem:[%s0 + $0x1378] sm:$0xff]
  %v638 = vld [vmem:[%s0 + $0x1380] sm:$0xff]
  %v639 = vld [vmem:[%s0 + $0x1388] sm:$0xff]
  %v640 = vld [vmem:[%s0 + $0x1390] sm:$0xff]
  %v641 = vld [vmem:[%s0 + $0x1398] sm:$0xff]
  %v642 = vld [vmem:[%s0 + $0x13a0] sm:$0xff]
  %v643 = vld [vmem:[%s0 + $0x13a8] sm:$0xff]
  %v644 = vld [vmem:[%s0 + $0x13b0] sm:$0xff]
  %v645 = vld [vmem:[%s0 + $0x13b8] sm:$0xff]
  %v646 = vld [vmem:[%s0 + $0x13c0] sm:$0xff]
  %v647 = vld [vmem:[%s0 + $0x13c8] sm:$0xff]
  %v648 = vld [vmem:[%s0 + $0x13d0] sm:$0xff]
  %v649 = vld [vmem:[%s0 + $0x13d8] sm:$0xff]
  %v650 = vld [vmem:[%s0 + $0x13e0] sm:$0xff]
  %v651 = vld [vmem:[%s0 + $0x13e8] sm:$0xff]
  %v652 = vld [vmem:[%s0 + $0x13f0] sm:$0xff]
  %v653 = vld [vmem:[%s0 + $0x13f8] sm:$0xff]
  %v654 = vld [vmem:[%s0 + $0x1400] sm:$0xff]
  %v655 = vld [vmem:[%s0 + $0x1408] sm:$0xff]
  %v656 = vld [vmem:[%s0 + $0x1410] sm:$0xff]
  %v657 = vld [vmem:[%s0 + $0x1418] sm:$0xff]
  %v658 = vld [vmem:[%s0 + $0x1420] sm:$0xff]
  %v659 = vld [vmem:[%s0 + $0x1428] sm:$0xff]
  %v660 = vld [vmem:[%s0 + $0x1430] sm:$0xff]
  %v661 = vld [vmem:[%s0 + $0x1438] sm:$0xff]
  %v662 = vld [vmem:[%s0 + $0x1440] sm:$0xff]
  %v663 = vld [vmem:[%s0 + $0x1448] sm:$0xff]
  %v664 = vld [vmem:[%s0 + $0x1450] sm:$0xff]
  %v665 = vld [vmem:[%s0 + $0x1458] sm:$0xff]
  %v666 = vld [vmem:[%s0 + $0x1460] sm:$0xff]
  %v667 = vld [vmem:[%s0 + $0x1468] sm:$0xff]
  %v668 = vld [vmem:[%s0 + $0x1470] sm:$0xff]
  %v669 = vld [vmem:[%s0 + $0x1478] sm:$0xff]
  %v670 = vld [vmem:[%s0 + $0x1480] sm:$0xff]
  %v671 = vld [vmem:[%s0 + $0x1488] sm:$0xff]
  %v672 = vld [vmem:[%s0 + $0x1490] sm:$0xff]
  %v673 = vld [vmem:[%s0 + $0x1498] sm:$0xff]
  %v674 = vld [vmem:[%s0 + $0x14a0] sm:$0xff]
  %v675 = vld [vmem:[%s0 + $0x14a8] sm:$0xff]
  %v676 = vld [vmem:[%s0 + $0x14b0] sm:$0xff]
  %v677 = vld [vmem:[%s0 + $0x14b8] sm:$0xff]
  %v678 = vld [vmem:[%s0 + $0x14c0] sm:$0xff]
  %v679 = vld [vmem:[%s0 + $0x14c8] sm:$0xff]
  %v680 = vld [vmem:[%s0 + $0x14d0] sm:$0xff]
  %v681 = vld [vmem:[%s0 + $0x14d8] sm:$0xff]
  %v682 = vld [vmem:[%s0 + $0x14e0] sm:$0xff]
  %v683 = vld [vmem:[%s0 + $0x14e8] sm:$0xff]
  %v684 = vld [vmem:[%s0 + $0x14f0] sm:$0xff]
  %v685 = vld [vmem:[%s0 + $0x14f8] sm:$0xff]
  %v686 = vld [vmem:[%s0 + $0x1500] sm:$0xff]
  %v687 = vld [vmem:[%s0 + $0x1508] sm:$0xff]
  %v688 = vld [vmem:[%s0 + $0x1510] sm:$0xff]
  %v689 = vld [vmem:[%s0 + $0x1518] sm:$0xff]
  %v690 = vld [vmem:[%s0 + $0x1520] sm:$0xff]
  %v691 = vld [vmem:[%s0 + $0x1528] sm:$0xff]
  %v692 = vld [vmem:[%s0 + $0x1530] sm:$0xff]
  %v693 = vld [vmem:[%s0 + $0x1538] sm:$0xff]
  %v694 = vld [vmem:[%s0 + $0x1540] sm:$0xff]
  %v695 = vld [vmem:[%s0 + $0x1548] sm:$0xff]
  %v696 = vld [vmem:[%s0 + $0x1550] sm:$0xff]
  %v697 = vld [vmem:[%s0 + $0x1558] sm:$0xff]
  %v698 = vld [vmem:[%s0 + $0x1560] sm:$0xff]
  %v699 = vld [vmem:[%s0 + $0x1568] sm:$0xff]
  %v700 = vld [vmem:[%s0 + $0x1570] sm:$0xff]
  %v701 = vld [vmem:[%s0 + $0x1578] sm:$0xff]
  %v702 = vld [vmem:[%s0 + $0x1580] sm:$0xff]
  %v703 = vld [vmem:[%s0 + $0x1588] sm:$0xff]
  %v704 = vld [vmem:[%s0 + $0x1590] sm:$0xff]
  %v705 = vld [vmem:[%s0 + $0x1598] sm:$0xff]
  %v706 = vld [vmem:[%s0 + $0x15a0] sm:$0xff]
  %v707 = vld [vmem:[%s0 + $0x15a8] sm:$0xff]
  %v708 = vld [vmem:[%s0 + $0x15b0] sm:$0xff]
  %v709 = vld [vmem:[%s0 + $0x15b8] sm:$0xff]
  %v710 = vld [vmem:[%s0 + $0x15c0] sm:$0xff]
  %v711 = vld [vmem:[%s0 + $0x15c8] sm:$0xff]
  %v712 = vld [vmem:[%s0 + $0x15d0] sm:$0xff]
  %v713 = vld [vmem:[%s0 + $0x15d8] sm:$0xff]
  %v714 = vld [vmem:[%s0 + $0x15e0] sm:$0xff]
  %v715 = vld [vmem:[%s0 + $0x15e8] sm:$0xff]
  %v716 = vld [vmem:[%s0 + $0x15f0] sm:$0xff]
  %v717 = vld [vmem:[%s0 + $0x15f8] sm:$0xff]
  %v718 = vld [vmem:[%s0 + $0x1600] sm:$0xff]
  %v719 = vld [vmem:[%s0 + $0x1608] sm:$0xff]
  %v720 = vld [vmem:[%s0 + $0x1610] sm:$0xff]
  %v721 = vld [vmem:[%s0 + $0x1618] sm:$0xff]
  %v722 = vld [vmem:[%s0 + $0x1620] sm:$0xff]
  %v723 = vld [vmem:[%s0 + $0x1628] sm:$0xff]
  %v724 = vld [vmem:[%s0 + $0x1630] sm:$0xff]
  %v725 = vld [vmem:[%s0 + $0x1638] sm:$0xff]
  %v726 = vld [vmem:[%s0 + $0x1640] sm:$0xff]
  %v727 = vld [vmem:[%s0 + $0x1648] sm:$0xff]
  %v728 = vld [vmem:[%s0 + $0x1650] sm:$0xff]
  %v729 = vld [vmem:[%s0 + $0x1658] sm:$0xff]
  %v730 = vld [vmem:[%s0 + $0x1660] sm:$0xff]
  %v731 = vld [vmem:[%s0 + $0x1668] sm:$0xff]
  %v732 = vld [vmem:[%s0 + $0x1670] sm:$0xff]
  %v733 = vld [vmem:[%s0 + $0x1678] sm:$0xff]
  %v734 = vld [vmem:[%s0 + $0x1680] sm:$0xff]
  %v735 = vld [vmem:[%s0 + $0x1688] sm:$0xff]
  %v736 = vld [vmem:[%s0 + $0x1690] sm:$0xff]
  %v737 = vld [vmem:[%s0 + $0x1698] sm:$0xff]
  %v738 = vld [vmem:[%s0 + $0x16a0] sm:$0xff]
  %v739 = vld [vmem:[%s0 + $0x16a8] sm:$0xff]
  %v740 = vld [vmem:[%s0 + $0x16b0] sm:$0xff]
  %v741 = vld [vmem:[%s0 + $0x16b8] sm:$0xff]
  %v742 = vld [vmem:[%s0 + $0x16c0] sm:$0xff]
  %v743 = vld [vmem:[%s0 + $0x16c8] sm:$0xff]
  %v744 = vld [vmem:[%s0 + $0x16d0] sm:$0xff]
  %v745 = vld [vmem:[%s0 + $0x16d8] sm:$0xff]
  %v746 = vld [vmem:[%s0 + $0x16e0] sm:$0xff]
  %v747 = vld [vmem:[%s0 + $0x16e8] sm:$0xff]
  %v748 = vld [vmem:[%s0 + $0x16f0] sm:$0xff]
  %v749 = vld [vmem:[%s0 + $0x16f8] sm:$0xff]
  %v750 = vld [vmem:[%s0 + $0x1700] sm:$0xff]
  %v751 = vld [vmem:[%s0 + $0x1708] sm:$0xff]
  %v752 = vld [vmem:[%s0 + $0x1710] sm:$0xff]
  %v753 = vld [vmem:[%s0 + $0x1718] sm:$0xff]
  %v754 = vld [vmem:[%s0 + $0x1720] sm:$0xff]
  %v755 = vld [vmem:[%s0 + $0x1728] sm:$0xff]
  %v756 = vld [vmem:[%s0 + $0x1730] sm:$0xff]
  %v757 = vld [vmem:[%s0 + $0x1738] sm:$0xff]
  %v758 = vld [vmem:[%s0 + $0x1740] sm:$0xff]
  %v759 = vld [vmem:[%s0 + $0x1748] sm:$0xff]
  %v760 = vld [vmem:[%s0 + $0x1750] sm:$0xff]
  %v761 = vld [vmem:[%s0 + $0x1758] sm:$0xff]
  %v762 = vld [vmem:[%s0 + $0x1760] sm:$0xff]
  %v763 = vld [vmem:[%s0 + $0x1768] sm:$0xff]
  %v764 = vld [vmem:[%s0 + $0x1770] sm:$0xff]
  %v765 = vld [vmem:[%s0 + $0x1778] sm:$0xff]
  %v766 = vld [vmem:[%s0 + $0x1780] sm:$0xff]
  %v767 = vld [vmem:[%s0 + $0x1788] sm:$0xff]
  %v768 = vld [vmem:[%s0 + $0x1790] sm:$0xff]
  %v769 = vld [vmem:[%s0 + $0x1798] sm:$0xff]
  %v770 = vld [vmem:[%s0 + $0x17a0] sm:$0xff]
  %v771 = vld [vmem:[%s0 + $0x17a8] sm:$0xff]
  %v772 = vld [vmem:[%s0 + $0x17b0] sm:$0xff]
  %v773 = vld [vmem:[%s0 + $0x17b8] sm:$0xff]
  %v774 = vld [vmem:[%s0 + $0x17c0] sm:$0xff]
  %v775 = vld [vmem:[%s0 + $0x17c8] sm:$0xff]
  %v776 = vld [vmem:[%s0 + $0x17d0] sm:$0xff]
  %v777 = vld [vmem:[%s0 + $0x17d8] sm:$0xff]
  %v778 = vld [vmem:[%s0 + $0x17e0] sm:$0xff]
  %v779 = vld [vmem:[%s0 + $0x17e8] sm:$0xff]
  %v780 = vld [vmem:[%s0 + $0x17f0] sm:$0xff]
  %v781 = vld [vmem:[%s0 + $0x17f8] sm:$0xff]
  %v782 = vld [vmem:[%s0 + $0x1800] sm:$0xff]
  %v783 = vld [vmem:[%s0 + $0x1808] sm:$0xff]
  %v784 = vld [vmem:[%s0 + $0x1810] sm:$0xff]
  %v785 = vld [vmem:[%s0 + $0x1818] sm:$0xff]
  %v786 = vld [vmem:[%s0 + $0x1820] sm:$0xff]
  %v787 = vld [vmem:[%s0 + $0x1828] sm:$0xff]
  %v788 = vld [vmem:[%s0 + $0x1830] sm:$0xff]
  %v789 = vld [vmem:[%s0 + $0x1838] sm:$0xff]
  %v790 = vld [vmem:[%s0 + $0x1840] sm:$0xff]
  %v791 = vld [vmem:[%s0 + $0x1848] sm:$0xff]
  %v792 = vld [vmem:[%s0 + $0x1850] sm:$0xff]
  %v793 = vld [vmem:[%s0 + $0x1858] sm:$0xff]
  %v794 = vld [vmem:[%s0 + $0x1860] sm:$0xff]
  %v795 = vld [vmem:[%s0 + $0x1868] sm:$0xff]
  %v796 = vld [vmem:[%s0 + $0x1870] sm:$0xff]
  %v797 = vld [vmem:[%s0 + $0x1878] sm:$0xff]
  %v798 = vld [vmem:[%s1] sm:$0xff]
  %v799 = vld [vmem:[%s1 + $0x8] sm:$0xff]
  %v800 = vld [vmem:[%s1 + $0x10] sm:$0xff]
  %v801 = vld [vmem:[%s1 + $0x18] sm:$0xff]
  %vm802 = vcmask 261120
  %v804 = vsel %vm802, %v14, 0
  %v807 = vsel %vm802, %v15, 0
  %v810 = vsel %vm802, %v16, 0
  %v813 = vsel %vm802, %v17, 0
  %v816 = vsel %vm802, %v18, 0
  %v819 = vsel %vm802, %v19, 0
  %v822 = vsel %vm802, %v20, 0
  %v825 = vsel %vm802, %v21, 0
  %v828 = vsel %vm802, %v22, 0
  %v831 = vsel %vm802, %v23, 0
  %v834 = vsel %vm802, %v24, 0
  %v837 = vsel %vm802, %v25, 0
  %v840 = vsel %vm802, %v26, 0
  %v843 = vsel %vm802, %v27, 0
  %v846 = vsel %vm802, %v28, 0
  %v849 = vsel %vm802, %v29, 0
  %v852 = vsel %vm802, %v30, 0
  %v855 = vsel %vm802, %v31, 0
  %v858 = vsel %vm802, %v32, 0
  %v861 = vsel %vm802, %v33, 0
  %v864 = vsel %vm802, %v34, 0
  %v867 = vsel %vm802, %v35, 0
  %v870 = vsel %vm802, %v36, 0
  %v873 = vsel %vm802, %v37, 0
  %v876 = vsel %vm802, %v38, 0
  %v879 = vsel %vm802, %v39, 0
  %v882 = vsel %vm802, %v40, 0
  %v885 = vsel %vm802, %v41, 0
  %v888 = vsel %vm802, %v42, 0
  %v891 = vsel %vm802, %v43, 0
  %v894 = vsel %vm802, %v44, 0
  %v897 = vsel %vm802, %v45, 0
  %v900 = vsel %vm802, %v46, 0
  %v903 = vsel %vm802, %v47, 0
  %v906 = vsel %vm802, %v48, 0
  %v909 = vsel %vm802, %v49, 0
  %v912 = vsel %vm802, %v50, 0
  %v915 = vsel %vm802, %v51, 0
  %v918 = vsel %vm802, %v52, 0
  %v921 = vsel %vm802, %v53, 0
  %v924 = vsel %vm802, %v54, 0
  %v927 = vsel %vm802, %v55, 0
  %v930 = vsel %vm802, %v56, 0
  %v933 = vsel %vm802, %v57, 0
  %v936 = vsel %vm802, %v58, 0
  %v939 = vsel %vm802, %v59, 0
  %v942 = vsel %vm802, %v60, 0
  %v945 = vsel %vm802, %v61, 0
  %v948 = vsel %vm802, %v62, 0
  %v951 = vsel %vm802, %v63, 0
  %v954 = vsel %vm802, %v64, 0
  %v957 = vsel %vm802, %v65, 0
  %v960 = vsel %vm802, %v66, 0
  %v963 = vsel %vm802, %v67, 0
  %v966 = vsel %vm802, %v68, 0
  %v969 = vsel %vm802, %v69, 0
  %v972 = vsel %vm802, %v70, 0
  %v975 = vsel %vm802, %v71, 0
  %v978 = vsel %vm802, %v72, 0
  %v981 = vsel %vm802, %v73, 0
  %v984 = vsel %vm802, %v74, 0
  %v987 = vsel %vm802, %v75, 0
  %v990 = vsel %vm802, %v76, 0
  %v993 = vsel %vm802, %v77, 0
  %v996 = vsel %vm802, %v78, 0
  %v999 = vsel %vm802, %v79, 0
  %v1002 = vsel %vm802, %v80, 0
  %v1005 = vsel %vm802, %v81, 0
  %v1008 = vsel %vm802, %v82, 0
  %v1011 = vsel %vm802, %v83, 0
  %v1014 = vsel %vm802, %v84, 0
  %v1017 = vsel %vm802, %v85, 0
  %v1020 = vsel %vm802, %v86, 0
  %v1023 = vsel %vm802, %v87, 0
  %v1026 = vsel %vm802, %v88, 0
  %v1029 = vsel %vm802, %v89, 0
  %v1032 = vsel %vm802, %v90, 0
  %v1035 = vsel %vm802, %v91, 0
  %v1038 = vsel %vm802, %v92, 0
  %v1041 = vsel %vm802, %v93, 0
  %v1044 = vsel %vm802, %v94, 0
  %v1047 = vsel %vm802, %v95, 0
  %v1050 = vsel %vm802, %v96, 0
  %v1053 = vsel %vm802, %v97, 0
  %v1056 = vsel %vm802, %v98, 0
  %v1059 = vsel %vm802, %v99, 0
  %v1062 = vsel %vm802, %v100, 0
  %v1065 = vsel %vm802, %v101, 0
  %v1068 = vsel %vm802, %v102, 0
  %v1071 = vsel %vm802, %v103, 0
  %v1074 = vsel %vm802, %v104, 0
  %v1077 = vsel %vm802, %v105, 0
  %v1080 = vsel %vm802, %v106, 0
  %v1083 = vsel %vm802, %v107, 0
  %v1086 = vsel %vm802, %v108, 0
  %v1089 = vsel %vm802, %v109, 0
  %v1092 = vsel %vm802, %v110, 0
  %v1095 = vsel %vm802, %v111, 0
  %v1098 = vsel %vm802, %v112, 0
  %v1101 = vsel %vm802, %v113, 0
  %v1104 = vsel %vm802, %v114, 0
  %v1107 = vsel %vm802, %v115, 0
  %v1110 = vsel %vm802, %v116, 0
  %v1113 = vsel %vm802, %v117, 0
  %v1116 = vsel %vm802, %v118, 0
  %v1119 = vsel %vm802, %v119, 0
  %v1122 = vsel %vm802, %v120, 0
  %v1125 = vsel %vm802, %v121, 0
  %v1128 = vsel %vm802, %v122, 0
  %v1131 = vsel %vm802, %v123, 0
  %v1134 = vsel %vm802, %v124, 0
  %v1137 = vsel %vm802, %v125, 0
  %v1140 = vsel %vm802, %v126, 0
  %v1143 = vsel %vm802, %v127, 0
  %v1146 = vsel %vm802, %v128, 0
  %v1149 = vsel %vm802, %v129, 0
  %v1152 = vsel %vm802, %v130, 0
  %v1155 = vsel %vm802, %v131, 0
  %v1158 = vsel %vm802, %v132, 0
  %v1161 = vsel %vm802, %v133, 0
  %v1164 = vsel %vm802, %v134, 0
  %v1167 = vsel %vm802, %v135, 0
  %v1170 = vsel %vm802, %v136, 0
  %v1173 = vsel %vm802, %v137, 0
  %v1176 = vsel %vm802, %v138, 0
  %v1179 = vsel %vm802, %v139, 0
  %v1182 = vsel %vm802, %v140, 0
  %v1185 = vsel %vm802, %v141, 0
  %v1188 = vsel %vm802, %v142, 0
  %v1191 = vsel %vm802, %v143, 0
  %v1194 = vsel %vm802, %v144, 0
  %v1197 = vsel %vm802, %v145, 0
  %v1200 = vsel %vm802, %v146, 0
  %v1203 = vsel %vm802, %v147, 0
  %v1206 = vsel %vm802, %v148, 0
  %v1209 = vsel %vm802, %v149, 0
  %v1212 = vsel %vm802, %v150, 0
  %v1215 = vsel %vm802, %v151, 0
  %v1218 = vsel %vm802, %v152, 0
  %v1221 = vsel %vm802, %v153, 0
  %v1224 = vsel %vm802, %v154, 0
  %v1227 = vsel %vm802, %v155, 0
  %v1230 = vsel %vm802, %v156, 0
  %v1233 = vsel %vm802, %v157, 0
  %v1236 = vsel %vm802, %v158, 0
  %v1239 = vsel %vm802, %v159, 0
  %v1242 = vsel %vm802, %v160, 0
  %v1245 = vsel %vm802, %v161, 0
  %v1248 = vsel %vm802, %v162, 0
  %v1251 = vsel %vm802, %v163, 0
  %v1254 = vsel %vm802, %v164, 0
  %v1257 = vsel %vm802, %v165, 0
  %v1260 = vsel %vm802, %v166, 0
  %v1263 = vsel %vm802, %v167, 0
  %v1266 = vsel %vm802, %v168, 0
  %v1269 = vsel %vm802, %v169, 0
  %v1272 = vsel %vm802, %v170, 0
  %v1275 = vsel %vm802, %v171, 0
  %v1278 = vsel %vm802, %v172, 0
  %v1281 = vsel %vm802, %v173, 0
  %v1284 = vsel %vm802, %v174, 0
  %v1287 = vsel %vm802, %v175, 0
  %v1290 = vsel %vm802, %v176, 0
  %v1293 = vsel %vm802, %v177, 0
  %v1296 = vsel %vm802, %v178, 0
  %v1299 = vsel %vm802, %v179, 0
  %v1302 = vsel %vm802, %v180, 0
  %v1305 = vsel %vm802, %v181, 0
  %v1308 = vsel %vm802, %v182, 0
  %v1311 = vsel %vm802, %v183, 0
  %v1314 = vsel %vm802, %v184, 0
  %v1317 = vsel %vm802, %v185, 0
  %v1320 = vsel %vm802, %v186, 0
  %v1323 = vsel %vm802, %v187, 0
  %v1326 = vsel %vm802, %v188, 0
  %v1329 = vsel %vm802, %v189, 0
  %v1332 = vsel %vm802, %v190, 0
  %v1335 = vsel %vm802, %v191, 0
  %v1338 = vsel %vm802, %v192, 0
  %v1341 = vsel %vm802, %v193, 0
  %v1344 = vsel %vm802, %v194, 0
  %v1347 = vsel %vm802, %v195, 0
  %v1350 = vsel %vm802, %v196, 0
  %v1353 = vsel %vm802, %v197, 0
  %v1356 = vsel %vm802, %v198, 0
  %v1359 = vsel %vm802, %v199, 0
  %v1362 = vsel %vm802, %v200, 0
  %v1365 = vsel %vm802, %v201, 0
  %v1368 = vsel %vm802, %v202, 0
  %v1371 = vsel %vm802, %v203, 0
  %v1374 = vsel %vm802, %v204, 0
  %v1377 = vsel %vm802, %v205, 0
  %v1380 = vsel %vm802, %v206, 0
  %v1383 = vsel %vm802, %v207, 0
  %v1386 = vsel %vm802, %v208, 0
  %v1389 = vsel %vm802, %v209, 0
  %v1392 = vsel %vm802, %v210, 0
  %v1395 = vsel %vm802, %v211, 0
  %v1398 = vsel %vm802, %v212, 0
  %v1401 = vsel %vm802, %v213, 0
  %v1404 = vsel %vm802, %v214, 0
  %v1407 = vsel %vm802, %v215, 0
  %v1410 = vsel %vm802, %v216, 0
  %v1413 = vsel %vm802, %v217, 0
  %v1416 = vsel %vm802, %v218, 0
  %v1419 = vsel %vm802, %v219, 0
  %v1422 = vsel %vm802, %v220, 0
  %v1425 = vsel %vm802, %v221, 0
  %v1428 = vsel %vm802, %v222, 0
  %v1431 = vsel %vm802, %v223, 0
  %v1434 = vsel %vm802, %v224, 0
  %v1437 = vsel %vm802, %v225, 0
  %v1440 = vsel %vm802, %v226, 0
  %v1443 = vsel %vm802, %v227, 0
  %v1446 = vsel %vm802, %v228, 0
  %v1449 = vsel %vm802, %v229, 0
  %v1452 = vsel %vm802, %v230, 0
  %v1455 = vsel %vm802, %v231, 0
  %v1458 = vsel %vm802, %v232, 0
  %v1461 = vsel %vm802, %v233, 0
  %v1464 = vsel %vm802, %v234, 0
  %v1467 = vsel %vm802, %v235, 0
  %v1470 = vsel %vm802, %v236, 0
  %v1473 = vsel %vm802, %v237, 0
  %v1476 = vsel %vm802, %v238, 0
  %v1479 = vsel %vm802, %v239, 0
  %v1482 = vsel %vm802, %v240, 0
  %v1485 = vsel %vm802, %v241, 0
  %v1488 = vsel %vm802, %v242, 0
  %v1491 = vsel %vm802, %v243, 0
  %v1494 = vsel %vm802, %v244, 0
  %v1497 = vsel %vm802, %v245, 0
  %v1500 = vsel %vm802, %v246, 0
  %v1503 = vsel %vm802, %v247, 0
  %v1506 = vsel %vm802, %v248, 0
  %v1509 = vsel %vm802, %v249, 0
  %v1512 = vsel %vm802, %v250, 0
  %v1515 = vsel %vm802, %v251, 0
  %v1518 = vsel %vm802, %v252, 0
  %v1521 = vsel %vm802, %v253, 0
  %v1524 = vsel %vm802, %v254, 0
  %v1527 = vsel %vm802, %v255, 0
  %v1530 = vsel %vm802, %v256, 0
  %v1533 = vsel %vm802, %v257, 0
  %v1536 = vsel %vm802, %v258, 0
  %v1539 = vsel %vm802, %v259, 0
  %v1542 = vsel %vm802, %v260, 0
  %v1545 = vsel %vm802, %v261, 0
  %v1548 = vsel %vm802, %v262, 0
  %v1551 = vsel %vm802, %v263, 0
  %v1554 = vsel %vm802, %v264, 0
  %v1557 = vsel %vm802, %v265, 0
  %v1560 = vsel %vm802, %v266, 0
  %v1563 = vsel %vm802, %v267, 0
  %v1566 = vsel %vm802, %v268, 0
  %v1569 = vsel %vm802, %v269, 0
  %v1572 = vsel %vm802, %v270, 0
  %v1575 = vsel %vm802, %v271, 0
  %v1578 = vsel %vm802, %v272, 0
  %v1581 = vsel %vm802, %v273, 0
  %v1584 = vsel %vm802, %v274, 0
  %v1587 = vsel %vm802, %v275, 0
  %v1590 = vsel %vm802, %v276, 0
  %v1593 = vsel %vm802, %v277, 0
  %v1596 = vsel %vm802, %v278, 0
  %v1599 = vsel %vm802, %v279, 0
  %v1602 = vsel %vm802, %v280, 0
  %v1605 = vsel %vm802, %v281, 0
  %v1608 = vsel %vm802, %v282, 0
  %v1611 = vsel %vm802, %v283, 0
  %v1614 = vsel %vm802, %v284, 0
  %v1617 = vsel %vm802, %v285, 0
  %v1620 = vsel %vm802, %v286, 0
  %v1623 = vsel %vm802, %v287, 0
  %v1626 = vsel %vm802, %v288, 0
  %v1629 = vsel %vm802, %v289, 0
  %v1632 = vsel %vm802, %v290, 0
  %v1635 = vsel %vm802, %v291, 0
  %v1638 = vsel %vm802, %v292, 0
  %v1641 = vsel %vm802, %v293, 0
  %v1644 = vsel %vm802, %v294, 0
  %v1647 = vsel %vm802, %v295, 0
  %v1650 = vsel %vm802, %v296, 0
  %v1653 = vsel %vm802, %v297, 0
  %v1656 = vsel %vm802, %v298, 0
  %v1659 = vsel %vm802, %v299, 0
  %v1662 = vsel %vm802, %v300, 0
  %v1665 = vsel %vm802, %v301, 0
  %v1668 = vsel %vm802, %v302, 0
  %v1671 = vsel %vm802, %v303, 0
  %v1674 = vsel %vm802, %v304, 0
  %v1677 = vsel %vm802, %v305, 0
  %v1680 = vsel %vm802, %v306, 0
  %v1683 = vsel %vm802, %v307, 0
  %v1686 = vsel %vm802, %v308, 0
  %v1689 = vsel %vm802, %v309, 0
  %v1692 = vsel %vm802, %v310, 0
  %v1695 = vsel %vm802, %v311, 0
  %v1698 = vsel %vm802, %v312, 0
  %v1701 = vsel %vm802, %v313, 0
  %v1704 = vsel %vm802, %v314, 0
  %v1707 = vsel %vm802, %v315, 0
  %v1710 = vsel %vm802, %v316, 0
  %v1713 = vsel %vm802, %v317, 0
  %v1716 = vsel %vm802, %v318, 0
  %v1719 = vsel %vm802, %v319, 0
  %v1722 = vsel %vm802, %v320, 0
  %v1725 = vsel %vm802, %v321, 0
  %v1728 = vsel %vm802, %v322, 0
  %v1731 = vsel %vm802, %v323, 0
  %v1734 = vsel %vm802, %v324, 0
  %v1737 = vsel %vm802, %v325, 0
  %v1740 = vsel %vm802, %v326, 0
  %v1743 = vsel %vm802, %v327, 0
  %v1746 = vsel %vm802, %v328, 0
  %v1749 = vsel %vm802, %v329, 0
  %v1752 = vsel %vm802, %v330, 0
  %v1755 = vsel %vm802, %v331, 0
  %v1758 = vsel %vm802, %v332, 0
  %v1761 = vsel %vm802, %v333, 0
  %v1764 = vsel %vm802, %v334, 0
  %v1767 = vsel %vm802, %v335, 0
  %v1770 = vsel %vm802, %v336, 0
  %v1773 = vsel %vm802, %v337, 0
  %v1776 = vsel %vm802, %v338, 0
  %v1779 = vsel %vm802, %v339, 0
  %v1782 = vsel %vm802, %v340, 0
  %v1785 = vsel %vm802, %v341, 0
  %v1788 = vsel %vm802, %v342, 0
  %v1791 = vsel %vm802, %v343, 0
  %v1794 = vsel %vm802, %v344, 0
  %v1797 = vsel %vm802, %v345, 0
  %v1800 = vsel %vm802, %v346, 0
  %v1803 = vsel %vm802, %v347, 0
  %v1806 = vsel %vm802, %v348, 0
  %v1809 = vsel %vm802, %v349, 0
  %v1812 = vsel %vm802, %v350, 0
  %v1815 = vsel %vm802, %v351, 0
  %v1818 = vsel %vm802, %v352, 0
  %v1821 = vsel %vm802, %v353, 0
  %v1824 = vsel %vm802, %v354, 0
  %v1827 = vsel %vm802, %v355, 0
  %v1830 = vsel %vm802, %v356, 0
  %v1833 = vsel %vm802, %v357, 0
  %v1836 = vsel %vm802, %v358, 0
  %v1839 = vsel %vm802, %v359, 0
  %v1842 = vsel %vm802, %v360, 0
  %v1845 = vsel %vm802, %v361, 0
  %v1848 = vsel %vm802, %v362, 0
  %v1851 = vsel %vm802, %v363, 0
  %v1854 = vsel %vm802, %v364, 0
  %v1857 = vsel %vm802, %v365, 0
  %v1860 = vsel %vm802, %v366, 0
  %v1863 = vsel %vm802, %v367, 0
  %v1866 = vsel %vm802, %v368, 0
  %v1869 = vsel %vm802, %v369, 0
  %v1872 = vsel %vm802, %v370, 0
  %v1875 = vsel %vm802, %v371, 0
  %v1878 = vsel %vm802, %v372, 0
  %v1881 = vsel %vm802, %v373, 0
  %v1884 = vsel %vm802, %v374, 0
  %v1887 = vsel %vm802, %v375, 0
  %v1890 = vsel %vm802, %v376, 0
  %v1893 = vsel %vm802, %v377, 0
  %v1896 = vsel %vm802, %v378, 0
  %v1899 = vsel %vm802, %v379, 0
  %v1902 = vsel %vm802, %v380, 0
  %v1905 = vsel %vm802, %v381, 0
  %v1908 = vsel %vm802, %v382, 0
  %v1911 = vsel %vm802, %v383, 0
  %v1914 = vsel %vm802, %v384, 0
  %v1917 = vsel %vm802, %v385, 0
  %v1920 = vsel %vm802, %v386, 0
  %v1923 = vsel %vm802, %v387, 0
  %v1926 = vsel %vm802, %v388, 0
  %v1929 = vsel %vm802, %v389, 0
  %v1932 = vsel %vm802, %v390, 0
  %v1935 = vsel %vm802, %v391, 0
  %v1938 = vsel %vm802, %v392, 0
  %v1941 = vsel %vm802, %v393, 0
  %v1944 = vsel %vm802, %v394, 0
  %v1947 = vsel %vm802, %v395, 0
  %v1950 = vsel %vm802, %v396, 0
  %v1953 = vsel %vm802, %v397, 0
  %v1956 = vsel %vm802, %v398, 0
  %v1959 = vsel %vm802, %v399, 0
  %v1962 = vsel %vm802, %v400, 0
  %v1965 = vsel %vm802, %v401, 0
  %v1968 = vsel %vm802, %v402, 0
  %v1971 = vsel %vm802, %v403, 0
  %v1974 = vsel %vm802, %v404, 0
  %v1977 = vsel %vm802, %v405, 0
  %v1980 = vsel %vm802, %v406, 0
  %v1983 = vsel %vm802, %v407, 0
  %v1986 = vsel %vm802, %v408, 0
  %v1989 = vsel %vm802, %v409, 0
  %v1992 = vsel %vm802, %v410, 0
  %v1995 = vsel %vm802, %v411, 0
  %v1998 = vsel %vm802, %v412, 0
  %v2001 = vsel %vm802, %v413, 0
  %v2004 = vsel %vm802, %v414, 0
  %v2007 = vsel %vm802, %v415, 0
  %v2010 = vsel %vm802, %v416, 0
  %v2013 = vsel %vm802, %v417, 0
  %v2016 = vsel %vm802, %v418, 0
  %v2019 = vsel %vm802, %v419, 0
  %v2022 = vsel %vm802, %v420, 0
  %v2025 = vsel %vm802, %v421, 0
  %v2028 = vsel %vm802, %v422, 0
  %v2031 = vsel %vm802, %v423, 0
  %v2034 = vsel %vm802, %v424, 0
  %v2037 = vsel %vm802, %v425, 0
  %v2040 = vsel %vm802, %v426, 0
  %v2043 = vsel %vm802, %v427, 0
  %v2046 = vsel %vm802, %v428, 0
  %v2049 = vsel %vm802, %v429, 0
  %v2052 = vsel %vm802, %v430, 0
  %v2055 = vsel %vm802, %v431, 0
  %v2058 = vsel %vm802, %v432, 0
  %v2061 = vsel %vm802, %v433, 0
  %v2064 = vsel %vm802, %v434, 0
  %v2067 = vsel %vm802, %v435, 0
  %v2070 = vsel %vm802, %v436, 0
  %v2073 = vsel %vm802, %v437, 0
  %v2076 = vsel %vm802, %v438, 0
  %v2079 = vsel %vm802, %v439, 0
  %v2082 = vsel %vm802, %v440, 0
  %v2085 = vsel %vm802, %v441, 0
  %v2088 = vsel %vm802, %v442, 0
  %v2091 = vsel %vm802, %v443, 0
  %v2094 = vsel %vm802, %v444, 0
  %v2097 = vsel %vm802, %v445, 0
  %v2100 = vsel %vm802, %v446, 0
  %v2103 = vsel %vm802, %v447, 0
  %v2106 = vsel %vm802, %v448, 0
  %v2109 = vsel %vm802, %v449, 0
  %v2112 = vsel %vm802, %v450, 0
  %v2115 = vsel %vm802, %v451, 0
  %v2118 = vsel %vm802, %v452, 0
  %v2121 = vsel %vm802, %v453, 0
  %v2124 = vsel %vm802, %v454, 0
  %v2127 = vsel %vm802, %v455, 0
  %v2130 = vsel %vm802, %v456, 0
  %v2133 = vsel %vm802, %v457, 0
  %v2136 = vsel %vm802, %v458, 0
  %v2139 = vsel %vm802, %v459, 0
  %v2142 = vsel %vm802, %v460, 0
  %v2145 = vsel %vm802, %v461, 0
  %v2148 = vsel %vm802, %v462, 0
  %v2151 = vsel %vm802, %v463, 0
  %v2154 = vsel %vm802, %v464, 0
  %v2157 = vsel %vm802, %v465, 0
  %v2160 = vsel %vm802, %v466, 0
  %v2163 = vsel %vm802, %v467, 0
  %v2166 = vsel %vm802, %v468, 0
  %v2169 = vsel %vm802, %v469, 0
  %v2172 = vsel %vm802, %v470, 0
  %v2175 = vsel %vm802, %v471, 0
  %v2178 = vsel %vm802, %v472, 0
  %v2181 = vsel %vm802, %v473, 0
  %v2184 = vsel %vm802, %v474, 0
  %v2187 = vsel %vm802, %v475, 0
  %v2190 = vsel %vm802, %v476, 0
  %v2193 = vsel %vm802, %v477, 0
  %v2196 = vsel %vm802, %v478, 0
  %v2199 = vsel %vm802, %v479, 0
  %v2202 = vsel %vm802, %v480, 0
  %v2205 = vsel %vm802, %v481, 0
  %v2208 = vsel %vm802, %v482, 0
  %v2211 = vsel %vm802, %v483, 0
  %v2214 = vsel %vm802, %v484, 0
  %v2217 = vsel %vm802, %v485, 0
  %v2220 = vsel %vm802, %v486, 0
  %v2223 = vsel %vm802, %v487, 0
  %v2226 = vsel %vm802, %v488, 0
  %v2229 = vsel %vm802, %v489, 0
  %v2232 = vsel %vm802, %v490, 0
  %v2235 = vsel %vm802, %v491, 0
  %v2238 = vsel %vm802, %v492, 0
  %v2241 = vsel %vm802, %v493, 0
  %v2244 = vsel %vm802, %v494, 0
  %v2247 = vsel %vm802, %v495, 0
  %v2250 = vsel %vm802, %v496, 0
  %v2253 = vsel %vm802, %v497, 0
  %v2256 = vsel %vm802, %v498, 0
  %v2259 = vsel %vm802, %v499, 0
  %v2262 = vsel %vm802, %v500, 0
  %v2265 = vsel %vm802, %v501, 0
  %v2268 = vsel %vm802, %v502, 0
  %v2271 = vsel %vm802, %v503, 0
  %v2274 = vsel %vm802, %v504, 0
  %v2277 = vsel %vm802, %v505, 0
  %v2280 = vsel %vm802, %v506, 0
  %v2283 = vsel %vm802, %v507, 0
  %v2286 = vsel %vm802, %v508, 0
  %v2289 = vsel %vm802, %v509, 0
  %v2292 = vsel %vm802, %v510, 0
  %v2295 = vsel %vm802, %v511, 0
  %v2298 = vsel %vm802, %v512, 0
  %v2301 = vsel %vm802, %v513, 0
  %v2304 = vsel %vm802, %v514, 0
  %v2307 = vsel %vm802, %v515, 0
  %v2310 = vsel %vm802, %v516, 0
  %v2313 = vsel %vm802, %v517, 0
  %v2316 = vsel %vm802, %v518, 0
  %v2319 = vsel %vm802, %v519, 0
  %v2322 = vsel %vm802, %v520, 0
  %v2325 = vsel %vm802, %v521, 0
  %v2328 = vsel %vm802, %v522, 0
  %v2331 = vsel %vm802, %v523, 0
  %v2334 = vsel %vm802, %v524, 0
  %v2337 = vsel %vm802, %v525, 0
  %v2340 = vsel %vm802, %v526, 0
  %v2343 = vsel %vm802, %v527, 0
  %v2346 = vsel %vm802, %v528, 0
  %v2349 = vsel %vm802, %v529, 0
  %v2352 = vsel %vm802, %v530, 0
  %v2355 = vsel %vm802, %v531, 0
  %v2358 = vsel %vm802, %v532, 0
  %v2361 = vsel %vm802, %v533, 0
  %v2364 = vsel %vm802, %v534, 0
  %v2367 = vsel %vm802, %v535, 0
  %v2370 = vsel %vm802, %v536, 0
  %v2373 = vsel %vm802, %v537, 0
  %v2376 = vsel %vm802, %v538, 0
  %v2379 = vsel %vm802, %v539, 0
  %v2382 = vsel %vm802, %v540, 0
  %v2385 = vsel %vm802, %v541, 0
  %v2388 = vsel %vm802, %v542, 0
  %v2391 = vsel %vm802, %v543, 0
  %v2394 = vsel %vm802, %v544, 0
  %v2397 = vsel %vm802, %v545, 0
  %v2400 = vsel %vm802, %v546, 0
  %v2403 = vsel %vm802, %v547, 0
  %v2406 = vsel %vm802, %v548, 0
  %v2409 = vsel %vm802, %v549, 0
  %v2412 = vsel %vm802, %v550, 0
  %v2415 = vsel %vm802, %v551, 0
  %v2418 = vsel %vm802, %v552, 0
  %v2421 = vsel %vm802, %v553, 0
  %v2424 = vsel %vm802, %v554, 0
  %v2427 = vsel %vm802, %v555, 0
  %v2430 = vsel %vm802, %v556, 0
  %v2433 = vsel %vm802, %v557, 0
  %v2436 = vsel %vm802, %v558, 0
  %v2439 = vsel %vm802, %v559, 0
  %v2442 = vsel %vm802, %v560, 0
  %v2445 = vsel %vm802, %v561, 0
  %v2448 = vsel %vm802, %v562, 0
  %v2451 = vsel %vm802, %v563, 0
  %v2454 = vsel %vm802, %v564, 0
  %v2457 = vsel %vm802, %v565, 0
  %v2460 = vsel %vm802, %v566, 0
  %v2463 = vsel %vm802, %v567, 0
  %v2466 = vsel %vm802, %v568, 0
  %v2469 = vsel %vm802, %v569, 0
  %v2472 = vsel %vm802, %v570, 0
  %v2475 = vsel %vm802, %v571, 0
  %v2478 = vsel %vm802, %v572, 0
  %v2481 = vsel %vm802, %v573, 0
  %v2484 = vsel %vm802, %v574, 0
  %v2487 = vsel %vm802, %v575, 0
  %v2490 = vsel %vm802, %v576, 0
  %v2493 = vsel %vm802, %v577, 0
  %v2496 = vsel %vm802, %v578, 0
  %v2499 = vsel %vm802, %v579, 0
  %v2502 = vsel %vm802, %v580, 0
  %v2505 = vsel %vm802, %v581, 0
  %v2508 = vsel %vm802, %v582, 0
  %v2511 = vsel %vm802, %v583, 0
  %v2514 = vsel %vm802, %v584, 0
  %v2517 = vsel %vm802, %v585, 0
  %v2520 = vsel %vm802, %v586, 0
  %v2523 = vsel %vm802, %v587, 0
  %v2526 = vsel %vm802, %v588, 0
  %v2529 = vsel %vm802, %v589, 0
  %v2532 = vsel %vm802, %v590, 0
  %v2535 = vsel %vm802, %v591, 0
  %v2538 = vsel %vm802, %v592, 0
  %v2541 = vsel %vm802, %v593, 0
  %v2544 = vsel %vm802, %v594, 0
  %v2547 = vsel %vm802, %v595, 0
  %v2550 = vsel %vm802, %v596, 0
  %v2553 = vsel %vm802, %v597, 0
  %v2556 = vsel %vm802, %v598, 0
  %v2559 = vsel %vm802, %v599, 0
  %v2562 = vsel %vm802, %v600, 0
  %v2565 = vsel %vm802, %v601, 0
  %v2568 = vsel %vm802, %v602, 0
  %v2571 = vsel %vm802, %v603, 0
  %v2574 = vsel %vm802, %v604, 0
  %v2577 = vsel %vm802, %v605, 0
  %v2580 = vsel %vm802, %v606, 0
  %v2583 = vsel %vm802, %v607, 0
  %v2586 = vsel %vm802, %v608, 0
  %v2589 = vsel %vm802, %v609, 0
  %v2592 = vsel %vm802, %v610, 0
  %v2595 = vsel %vm802, %v611, 0
  %v2598 = vsel %vm802, %v612, 0
  %v2601 = vsel %vm802, %v613, 0
  %v2604 = vsel %vm802, %v614, 0
  %v2607 = vsel %vm802, %v615, 0
  %v2610 = vsel %vm802, %v616, 0
  %v2613 = vsel %vm802, %v617, 0
  %v2616 = vsel %vm802, %v618, 0
  %v2619 = vsel %vm802, %v619, 0
  %v2622 = vsel %vm802, %v620, 0
  %v2625 = vsel %vm802, %v621, 0
  %v2628 = vsel %vm802, %v622, 0
  %v2631 = vsel %vm802, %v623, 0
  %v2634 = vsel %vm802, %v624, 0
  %v2637 = vsel %vm802, %v625, 0
  %v2640 = vsel %vm802, %v626, 0
  %v2643 = vsel %vm802, %v627, 0
  %v2646 = vsel %vm802, %v628, 0
  %v2649 = vsel %vm802, %v629, 0
  %v2652 = vsel %vm802, %v630, 0
  %v2655 = vsel %vm802, %v631, 0
  %v2658 = vsel %vm802, %v632, 0
  %v2661 = vsel %vm802, %v633, 0
  %v2664 = vsel %vm802, %v634, 0
  %v2667 = vsel %vm802, %v635, 0
  %v2670 = vsel %vm802, %v636, 0
  %v2673 = vsel %vm802, %v637, 0
  %v2676 = vsel %vm802, %v638, 0
  %v2679 = vsel %vm802, %v639, 0
  %v2682 = vsel %vm802, %v640, 0
  %v2685 = vsel %vm802, %v641, 0
  %v2688 = vsel %vm802, %v642, 0
  %v2691 = vsel %vm802, %v643, 0
  %v2694 = vsel %vm802, %v644, 0
  %v2697 = vsel %vm802, %v645, 0
  %v2700 = vsel %vm802, %v646, 0
  %v2703 = vsel %vm802, %v647, 0
  %v2706 = vsel %vm802, %v648, 0
  %v2709 = vsel %vm802, %v649, 0
  %v2712 = vsel %vm802, %v650, 0
  %v2715 = vsel %vm802, %v651, 0
  %v2718 = vsel %vm802, %v652, 0
  %v2721 = vsel %vm802, %v653, 0
  %v2724 = vsel %vm802, %v654, 0
  %v2727 = vsel %vm802, %v655, 0
  %v2730 = vsel %vm802, %v656, 0
  %v2733 = vsel %vm802, %v657, 0
  %v2736 = vsel %vm802, %v658, 0
  %v2739 = vsel %vm802, %v659, 0
  %v2742 = vsel %vm802, %v660, 0
  %v2745 = vsel %vm802, %v661, 0
  %v2748 = vsel %vm802, %v662, 0
  %v2751 = vsel %vm802, %v663, 0
  %v2754 = vsel %vm802, %v664, 0
  %v2757 = vsel %vm802, %v665, 0
  %v2760 = vsel %vm802, %v666, 0
  %v2763 = vsel %vm802, %v667, 0
  %v2766 = vsel %vm802, %v668, 0
  %v2769 = vsel %vm802, %v669, 0
  %v2772 = vsel %vm802, %v670, 0
  %v2775 = vsel %vm802, %v671, 0
  %v2778 = vsel %vm802, %v672, 0
  %v2781 = vsel %vm802, %v673, 0
  %v2784 = vsel %vm802, %v674, 0
  %v2787 = vsel %vm802, %v675, 0
  %v2790 = vsel %vm802, %v676, 0
  %v2793 = vsel %vm802, %v677, 0
  %v2796 = vsel %vm802, %v678, 0
  %v2799 = vsel %vm802, %v679, 0
  %v2802 = vsel %vm802, %v680, 0
  %v2805 = vsel %vm802, %v681, 0
  %v2808 = vsel %vm802, %v682, 0
  %v2811 = vsel %vm802, %v683, 0
  %v2814 = vsel %vm802, %v684, 0
  %v2817 = vsel %vm802, %v685, 0
  %v2820 = vsel %vm802, %v686, 0
  %v2823 = vsel %vm802, %v687, 0
  %v2826 = vsel %vm802, %v688, 0
  %v2829 = vsel %vm802, %v689, 0
  %v2832 = vsel %vm802, %v690, 0
  %v2835 = vsel %vm802, %v691, 0
  %v2838 = vsel %vm802, %v692, 0
  %v2841 = vsel %vm802, %v693, 0
  %v2844 = vsel %vm802, %v694, 0
  %v2847 = vsel %vm802, %v695, 0
  %v2850 = vsel %vm802, %v696, 0
  %v2853 = vsel %vm802, %v697, 0
  %v2856 = vsel %vm802, %v698, 0
  %v2859 = vsel %vm802, %v699, 0
  %v2862 = vsel %vm802, %v700, 0
  %v2865 = vsel %vm802, %v701, 0
  %v2868 = vsel %vm802, %v702, 0
  %v2871 = vsel %vm802, %v703, 0
  %v2874 = vsel %vm802, %v704, 0
  %v2877 = vsel %vm802, %v705, 0
  %v2880 = vsel %vm802, %v706, 0
  %v2883 = vsel %vm802, %v707, 0
  %v2886 = vsel %vm802, %v708, 0
  %v2889 = vsel %vm802, %v709, 0
  %v2892 = vsel %vm802, %v710, 0
  %v2895 = vsel %vm802, %v711, 0
  %v2898 = vsel %vm802, %v712, 0
  %v2901 = vsel %vm802, %v713, 0
  %v2904 = vsel %vm802, %v714, 0
  %v2907 = vsel %vm802, %v715, 0
  %v2910 = vsel %vm802, %v716, 0
  %v2913 = vsel %vm802, %v717, 0
  %v2916 = vsel %vm802, %v718, 0
  %v2919 = vsel %vm802, %v719, 0
  %v2922 = vsel %vm802, %v720, 0
  %v2925 = vsel %vm802, %v721, 0
  %v2928 = vsel %vm802, %v722, 0
  %v2931 = vsel %vm802, %v723, 0
  %v2934 = vsel %vm802, %v724, 0
  %v2937 = vsel %vm802, %v725, 0
  %v2940 = vsel %vm802, %v726, 0
  %v2943 = vsel %vm802, %v727, 0
  %v2946 = vsel %vm802, %v728, 0
  %v2949 = vsel %vm802, %v729, 0
  %v2952 = vsel %vm802, %v730, 0
  %v2955 = vsel %vm802, %v731, 0
  %v2958 = vsel %vm802, %v732, 0
  %v2961 = vsel %vm802, %v733, 0
  %v2964 = vsel %vm802, %v734, 0
  %v2967 = vsel %vm802, %v735, 0
  %v2970 = vsel %vm802, %v736, 0
  %v2973 = vsel %vm802, %v737, 0
  %v2976 = vsel %vm802, %v738, 0
  %v2979 = vsel %vm802, %v739, 0
  %v2982 = vsel %vm802, %v740, 0
  %v2985 = vsel %vm802, %v741, 0
  %v2988 = vsel %vm802, %v742, 0
  %v2991 = vsel %vm802, %v743, 0
  %v2994 = vsel %vm802, %v744, 0
  %v2997 = vsel %vm802, %v745, 0
  %v3000 = vsel %vm802, %v746, 0
  %v3003 = vsel %vm802, %v747, 0
  %v3006 = vsel %vm802, %v748, 0
  %v3009 = vsel %vm802, %v749, 0
  %v3012 = vsel %vm802, %v750, 0
  %v3015 = vsel %vm802, %v751, 0
  %v3018 = vsel %vm802, %v752, 0
  %v3021 = vsel %vm802, %v753, 0
  %v3024 = vsel %vm802, %v754, 0
  %v3027 = vsel %vm802, %v755, 0
  %v3030 = vsel %vm802, %v756, 0
  %v3033 = vsel %vm802, %v757, 0
  %v3036 = vsel %vm802, %v758, 0
  %v3039 = vsel %vm802, %v759, 0
  %v3042 = vsel %vm802, %v760, 0
  %v3045 = vsel %vm802, %v761, 0
  %v3048 = vsel %vm802, %v762, 0
  %v3051 = vsel %vm802, %v763, 0
  %v3054 = vsel %vm802, %v764, 0
  %v3057 = vsel %vm802, %v765, 0
  %v3060 = vsel %vm802, %v766, 0
  %v3063 = vsel %vm802, %v767, 0
  %v3066 = vsel %vm802, %v768, 0
  %v3069 = vsel %vm802, %v769, 0
  %v3072 = vsel %vm802, %v770, 0
  %v3075 = vsel %vm802, %v771, 0
  %v3078 = vsel %vm802, %v772, 0
  %v3081 = vsel %vm802, %v773, 0
  %v3084 = vsel %vm802, %v774, 0
  %v3087 = vsel %vm802, %v775, 0
  %v3090 = vsel %vm802, %v776, 0
  %v3093 = vsel %vm802, %v777, 0
  %v3096 = vsel %vm802, %v778, 0
  %v3099 = vsel %vm802, %v779, 0
  %v3102 = vsel %vm802, %v780, 0
  %v3105 = vsel %vm802, %v781, 0
  %v3108 = vsel %vm802, %v782, 0
  %v3111 = vsel %vm802, %v783, 0
  %v3114 = vsel %vm802, %v784, 0
  %v3117 = vsel %vm802, %v785, 0
  %v3120 = vsel %vm802, %v786, 0
  %v3123 = vsel %vm802, %v787, 0
  %v3126 = vsel %vm802, %v788, 0
  %v3129 = vsel %vm802, %v789, 0
  %v3132 = vsel %vm802, %v790, 0
  %v3135 = vsel %vm802, %v791, 0
  %v3138 = vsel %vm802, %v792, 0
  %v3141 = vsel %vm802, %v793, 0
  %v3144 = vsel %vm802, %v794, 0
  %v3147 = vsel %vm802, %v795, 0
  %v3150 = vsel %vm802, %v796, 0
  %v3153 = vsel %vm802, %v797, 0
  %3155 = vmatpush.msra.mxu0 0.0
  %3156 = vmatpush.msra.mxu0 0.0
  %3157 = vmatpush.msra.mxu0 0.0
  %3158 = vmatpush.msra.mxu0 0.0
  %3159 = vmatpush.msra.mxu0 0.0
  %3160 = vmatpush.msra.mxu0 0.0
  %3161 = vmatpush.msra.mxu0 0.0
  %3162 = vmatpush.msra.mxu0 0.0
  %3163 = vmatpush.msra.mxu0 0.0
  %3164 = vmatpush.msra.mxu0 0.0
  %3165 = vmatpush.msra.mxu0 0.0
  %3166 = vmatpush.msra.mxu0 0.0
  %3167 = vmatpush.msra.mxu0 %v801
  %3168 = vmatpush.msra.mxu0 %v800
  %3169 = vmatpush.msra.mxu0 %v799
  %3170 = vmatpush.msra.mxu0 %v798
  %3171 = vmatmul.f32.gmra.mxu0 %v804
  %v3172 = vpop.f32.mrf.mxu0
  %v3173 = vadd.f32 0.0, %v3172
  %3174 = vmatmul.f32.gmra.mxu0 %v807
  %v3175 = vpop.f32.mrf.mxu0
  %v3176 = vadd.f32 0.0, %v3175
  %3177 = vmatmul.f32.gmra.mxu0 %v810
  %v3178 = vpop.f32.mrf.mxu0
  %v3179 = vadd.f32 0.0, %v3178
  %3180 = vmatmul.f32.gmra.mxu0 %v813
  %v3181 = vpop.f32.mrf.mxu0
  %v3182 = vadd.f32 0.0, %v3181
  %3183 = vmatmul.f32.gmra.mxu0 %v816
  %v3184 = vpop.f32.mrf.mxu0
  %v3185 = vadd.f32 0.0, %v3184
  %3186 = vmatmul.f32.gmra.mxu0 %v819
  %v3187 = vpop.f32.mrf.mxu0
  %v3188 = vadd.f32 0.0, %v3187
  %3189 = vmatmul.f32.gmra.mxu0 %v822
  %v3190 = vpop.f32.mrf.mxu0
  %v3191 = vadd.f32 0.0, %v3190
  %3192 = vmatmul.f32.gmra.mxu0 %v825
  %v3193 = vpop.f32.mrf.mxu0
  %v3194 = vadd.f32 0.0, %v3193
  %3195 = vmatmul.f32.gmra.mxu0 %v828
  %v3196 = vpop.f32.mrf.mxu0
  %v3197 = vadd.f32 0.0, %v3196
  %3198 = vmatmul.f32.gmra.mxu0 %v831
  %v3199 = vpop.f32.mrf.mxu0
  %v3200 = vadd.f32 0.0, %v3199
  %3201 = vmatmul.f32.gmra.mxu0 %v834
  %v3202 = vpop.f32.mrf.mxu0
  %v3203 = vadd.f32 0.0, %v3202
  %3204 = vmatmul.f32.gmra.mxu0 %v837
  %v3205 = vpop.f32.mrf.mxu0
  %v3206 = vadd.f32 0.0, %v3205
  %3207 = vmatmul.f32.gmra.mxu0 %v840
  %v3208 = vpop.f32.mrf.mxu0
  %v3209 = vadd.f32 0.0, %v3208
  %3210 = vmatmul.f32.gmra.mxu0 %v843
  %v3211 = vpop.f32.mrf.mxu0
  %v3212 = vadd.f32 0.0, %v3211
  %3213 = vmatmul.f32.gmra.mxu0 %v846
  %v3214 = vpop.f32.mrf.mxu0
  %v3215 = vadd.f32 0.0, %v3214
  %3216 = vmatmul.f32.gmra.mxu0 %v849
  %v3217 = vpop.f32.mrf.mxu0
  %v3218 = vadd.f32 0.0, %v3217
  %3219 = vmatmul.f32.gmra.mxu0 %v852
  %v3220 = vpop.f32.mrf.mxu0
  %v3221 = vadd.f32 0.0, %v3220
  %3222 = vmatmul.f32.gmra.mxu0 %v855
  %v3223 = vpop.f32.mrf.mxu0
  %v3224 = vadd.f32 0.0, %v3223
  %3225 = vmatmul.f32.gmra.mxu0 %v858
  %v3226 = vpop.f32.mrf.mxu0
  %v3227 = vadd.f32 0.0, %v3226
  %3228 = vmatmul.f32.gmra.mxu0 %v861
  %v3229 = vpop.f32.mrf.mxu0
  %v3230 = vadd.f32 0.0, %v3229
  %3231 = vmatmul.f32.gmra.mxu0 %v864
  %v3232 = vpop.f32.mrf.mxu0
  %v3233 = vadd.f32 0.0, %v3232
  %3234 = vmatmul.f32.gmra.mxu0 %v867
  %v3235 = vpop.f32.mrf.mxu0
  %v3236 = vadd.f32 0.0, %v3235
  %3237 = vmatmul.f32.gmra.mxu0 %v870
  %v3238 = vpop.f32.mrf.mxu0
  %v3239 = vadd.f32 0.0, %v3238
  %3240 = vmatmul.f32.gmra.mxu0 %v873
  %v3241 = vpop.f32.mrf.mxu0
  %v3242 = vadd.f32 0.0, %v3241
  %3243 = vmatmul.f32.gmra.mxu0 %v876
  %v3244 = vpop.f32.mrf.mxu0
  %v3245 = vadd.f32 0.0, %v3244
  %3246 = vmatmul.f32.gmra.mxu0 %v879
  %v3247 = vpop.f32.mrf.mxu0
  %v3248 = vadd.f32 0.0, %v3247
  %3249 = vmatmul.f32.gmra.mxu0 %v882
  %v3250 = vpop.f32.mrf.mxu0
  %v3251 = vadd.f32 0.0, %v3250
  %3252 = vmatmul.f32.gmra.mxu0 %v885
  %v3253 = vpop.f32.mrf.mxu0
  %v3254 = vadd.f32 0.0, %v3253
  %3255 = vmatmul.f32.gmra.mxu0 %v888
  %v3256 = vpop.f32.mrf.mxu0
  %v3257 = vadd.f32 0.0, %v3256
  %3258 = vmatmul.f32.gmra.mxu0 %v891
  %v3259 = vpop.f32.mrf.mxu0
  %v3260 = vadd.f32 0.0, %v3259
  %3261 = vmatmul.f32.gmra.mxu0 %v894
  %v3262 = vpop.f32.mrf.mxu0
  %v3263 = vadd.f32 0.0, %v3262
  %3264 = vmatmul.f32.gmra.mxu0 %v897
  %v3265 = vpop.f32.mrf.mxu0
  %v3266 = vadd.f32 0.0, %v3265
  %3267 = vmatmul.f32.gmra.mxu0 %v900
  %v3268 = vpop.f32.mrf.mxu0
  %v3269 = vadd.f32 0.0, %v3268
  %3270 = vmatmul.f32.gmra.mxu0 %v903
  %v3271 = vpop.f32.mrf.mxu0
  %v3272 = vadd.f32 0.0, %v3271
  %3273 = vmatmul.f32.gmra.mxu0 %v906
  %v3274 = vpop.f32.mrf.mxu0
  %v3275 = vadd.f32 0.0, %v3274
  %3276 = vmatmul.f32.gmra.mxu0 %v909
  %v3277 = vpop.f32.mrf.mxu0
  %v3278 = vadd.f32 0.0, %v3277
  %3279 = vmatmul.f32.gmra.mxu0 %v912
  %v3280 = vpop.f32.mrf.mxu0
  %v3281 = vadd.f32 0.0, %v3280
  %3282 = vmatmul.f32.gmra.mxu0 %v915
  %v3283 = vpop.f32.mrf.mxu0
  %v3284 = vadd.f32 0.0, %v3283
  %3285 = vmatmul.f32.gmra.mxu0 %v918
  %v3286 = vpop.f32.mrf.mxu0
  %v3287 = vadd.f32 0.0, %v3286
  %3288 = vmatmul.f32.gmra.mxu0 %v921
  %v3289 = vpop.f32.mrf.mxu0
  %v3290 = vadd.f32 0.0, %v3289
  %3291 = vmatmul.f32.gmra.mxu0 %v924
  %v3292 = vpop.f32.mrf.mxu0
  %v3293 = vadd.f32 0.0, %v3292
  %3294 = vmatmul.f32.gmra.mxu0 %v927
  %v3295 = vpop.f32.mrf.mxu0
  %v3296 = vadd.f32 0.0, %v3295
  %3297 = vmatmul.f32.gmra.mxu0 %v930
  %v3298 = vpop.f32.mrf.mxu0
  %v3299 = vadd.f32 0.0, %v3298
  %3300 = vmatmul.f32.gmra.mxu0 %v933
  %v3301 = vpop.f32.mrf.mxu0
  %v3302 = vadd.f32 0.0, %v3301
  %3303 = vmatmul.f32.gmra.mxu0 %v936
  %v3304 = vpop.f32.mrf.mxu0
  %v3305 = vadd.f32 0.0, %v3304
  %3306 = vmatmul.f32.gmra.mxu0 %v939
  %v3307 = vpop.f32.mrf.mxu0
  %v3308 = vadd.f32 0.0, %v3307
  %3309 = vmatmul.f32.gmra.mxu0 %v942
  %v3310 = vpop.f32.mrf.mxu0
  %v3311 = vadd.f32 0.0, %v3310
  %3312 = vmatmul.f32.gmra.mxu0 %v945
  %v3313 = vpop.f32.mrf.mxu0
  %v3314 = vadd.f32 0.0, %v3313
  %3315 = vmatmul.f32.gmra.mxu0 %v948
  %v3316 = vpop.f32.mrf.mxu0
  %v3317 = vadd.f32 0.0, %v3316
  %3318 = vmatmul.f32.gmra.mxu0 %v951
  %v3319 = vpop.f32.mrf.mxu0
  %v3320 = vadd.f32 0.0, %v3319
  %3321 = vmatmul.f32.gmra.mxu0 %v954
  %v3322 = vpop.f32.mrf.mxu0
  %v3323 = vadd.f32 0.0, %v3322
  %3324 = vmatmul.f32.gmra.mxu0 %v957
  %v3325 = vpop.f32.mrf.mxu0
  %v3326 = vadd.f32 0.0, %v3325
  %3327 = vmatmul.f32.gmra.mxu0 %v960
  %v3328 = vpop.f32.mrf.mxu0
  %v3329 = vadd.f32 0.0, %v3328
  %3330 = vmatmul.f32.gmra.mxu0 %v963
  %v3331 = vpop.f32.mrf.mxu0
  %v3332 = vadd.f32 0.0, %v3331
  %3333 = vmatmul.f32.gmra.mxu0 %v966
  %v3334 = vpop.f32.mrf.mxu0
  %v3335 = vadd.f32 0.0, %v3334
  %3336 = vmatmul.f32.gmra.mxu0 %v969
  %v3337 = vpop.f32.mrf.mxu0
  %v3338 = vadd.f32 0.0, %v3337
  %3339 = vmatmul.f32.gmra.mxu0 %v972
  %v3340 = vpop.f32.mrf.mxu0
  %v3341 = vadd.f32 0.0, %v3340
  %3342 = vmatmul.f32.gmra.mxu0 %v975
  %v3343 = vpop.f32.mrf.mxu0
  %v3344 = vadd.f32 0.0, %v3343
  %3345 = vmatmul.f32.gmra.mxu0 %v978
  %v3346 = vpop.f32.mrf.mxu0
  %v3347 = vadd.f32 0.0, %v3346
  %3348 = vmatmul.f32.gmra.mxu0 %v981
  %v3349 = vpop.f32.mrf.mxu0
  %v3350 = vadd.f32 0.0, %v3349
  %3351 = vmatmul.f32.gmra.mxu0 %v984
  %v3352 = vpop.f32.mrf.mxu0
  %v3353 = vadd.f32 0.0, %v3352
  %3354 = vmatmul.f32.gmra.mxu0 %v987
  %v3355 = vpop.f32.mrf.mxu0
  %v3356 = vadd.f32 0.0, %v3355
  %3357 = vmatmul.f32.gmra.mxu0 %v990
  %v3358 = vpop.f32.mrf.mxu0
  %v3359 = vadd.f32 0.0, %v3358
  %3360 = vmatmul.f32.gmra.mxu0 %v993
  %v3361 = vpop.f32.mrf.mxu0
  %v3362 = vadd.f32 0.0, %v3361
  %3363 = vmatmul.f32.gmra.mxu0 %v996
  %v3364 = vpop.f32.mrf.mxu0
  %v3365 = vadd.f32 0.0, %v3364
  %3366 = vmatmul.f32.gmra.mxu0 %v999
  %v3367 = vpop.f32.mrf.mxu0
  %v3368 = vadd.f32 0.0, %v3367
  %3369 = vmatmul.f32.gmra.mxu0 %v1002
  %v3370 = vpop.f32.mrf.mxu0
  %v3371 = vadd.f32 0.0, %v3370
  %3372 = vmatmul.f32.gmra.mxu0 %v1005
  %v3373 = vpop.f32.mrf.mxu0
  %v3374 = vadd.f32 0.0, %v3373
  %3375 = vmatmul.f32.gmra.mxu0 %v1008
  %v3376 = vpop.f32.mrf.mxu0
  %v3377 = vadd.f32 0.0, %v3376
  %3378 = vmatmul.f32.gmra.mxu0 %v1011
  %v3379 = vpop.f32.mrf.mxu0
  %v3380 = vadd.f32 0.0, %v3379
  %3381 = vmatmul.f32.gmra.mxu0 %v1014
  %v3382 = vpop.f32.mrf.mxu0
  %v3383 = vadd.f32 0.0, %v3382
  %3384 = vmatmul.f32.gmra.mxu0 %v1017
  %v3385 = vpop.f32.mrf.mxu0
  %v3386 = vadd.f32 0.0, %v3385
  %3387 = vmatmul.f32.gmra.mxu0 %v1020
  %v3388 = vpop.f32.mrf.mxu0
  %v3389 = vadd.f32 0.0, %v3388
  %3390 = vmatmul.f32.gmra.mxu0 %v1023
  %v3391 = vpop.f32.mrf.mxu0
  %v3392 = vadd.f32 0.0, %v3391
  %3393 = vmatmul.f32.gmra.mxu0 %v1026
  %v3394 = vpop.f32.mrf.mxu0
  %v3395 = vadd.f32 0.0, %v3394
  %3396 = vmatmul.f32.gmra.mxu0 %v1029
  %v3397 = vpop.f32.mrf.mxu0
  %v3398 = vadd.f32 0.0, %v3397
  %3399 = vmatmul.f32.gmra.mxu0 %v1032
  %v3400 = vpop.f32.mrf.mxu0
  %v3401 = vadd.f32 0.0, %v3400
  %3402 = vmatmul.f32.gmra.mxu0 %v1035
  %v3403 = vpop.f32.mrf.mxu0
  %v3404 = vadd.f32 0.0, %v3403
  %3405 = vmatmul.f32.gmra.mxu0 %v1038
  %v3406 = vpop.f32.mrf.mxu0
  %v3407 = vadd.f32 0.0, %v3406
  %3408 = vmatmul.f32.gmra.mxu0 %v1041
  %v3409 = vpop.f32.mrf.mxu0
  %v3410 = vadd.f32 0.0, %v3409
  %3411 = vmatmul.f32.gmra.mxu0 %v1044
  %v3412 = vpop.f32.mrf.mxu0
  %v3413 = vadd.f32 0.0, %v3412
  %3414 = vmatmul.f32.gmra.mxu0 %v1047
  %v3415 = vpop.f32.mrf.mxu0
  %v3416 = vadd.f32 0.0, %v3415
  %3417 = vmatmul.f32.gmra.mxu0 %v1050
  %v3418 = vpop.f32.mrf.mxu0
  %v3419 = vadd.f32 0.0, %v3418
  %3420 = vmatmul.f32.gmra.mxu0 %v1053
  %v3421 = vpop.f32.mrf.mxu0
  %v3422 = vadd.f32 0.0, %v3421
  %3423 = vmatmul.f32.gmra.mxu0 %v1056
  %v3424 = vpop.f32.mrf.mxu0
  %v3425 = vadd.f32 0.0, %v3424
  %3426 = vmatmul.f32.gmra.mxu0 %v1059
  %v3427 = vpop.f32.mrf.mxu0
  %v3428 = vadd.f32 0.0, %v3427
  %3429 = vmatmul.f32.gmra.mxu0 %v1062
  %v3430 = vpop.f32.mrf.mxu0
  %v3431 = vadd.f32 0.0, %v3430
  %3432 = vmatmul.f32.gmra.mxu0 %v1065
  %v3433 = vpop.f32.mrf.mxu0
  %v3434 = vadd.f32 0.0, %v3433
  %3435 = vmatmul.f32.gmra.mxu0 %v1068
  %v3436 = vpop.f32.mrf.mxu0
  %v3437 = vadd.f32 0.0, %v3436
  %3438 = vmatmul.f32.gmra.mxu0 %v1071
  %v3439 = vpop.f32.mrf.mxu0
  %v3440 = vadd.f32 0.0, %v3439
  %3441 = vmatmul.f32.gmra.mxu0 %v1074
  %v3442 = vpop.f32.mrf.mxu0
  %v3443 = vadd.f32 0.0, %v3442
  %3444 = vmatmul.f32.gmra.mxu0 %v1077
  %v3445 = vpop.f32.mrf.mxu0
  %v3446 = vadd.f32 0.0, %v3445
  %3447 = vmatmul.f32.gmra.mxu0 %v1080
  %v3448 = vpop.f32.mrf.mxu0
  %v3449 = vadd.f32 0.0, %v3448
  %3450 = vmatmul.f32.gmra.mxu0 %v1083
  %v3451 = vpop.f32.mrf.mxu0
  %v3452 = vadd.f32 0.0, %v3451
  %3453 = vmatmul.f32.gmra.mxu0 %v1086
  %v3454 = vpop.f32.mrf.mxu0
  %v3455 = vadd.f32 0.0, %v3454
  %3456 = vmatmul.f32.gmra.mxu0 %v1089
  %v3457 = vpop.f32.mrf.mxu0
  %v3458 = vadd.f32 0.0, %v3457
  %3459 = vmatmul.f32.gmra.mxu0 %v1092
  %v3460 = vpop.f32.mrf.mxu0
  %v3461 = vadd.f32 0.0, %v3460
  %3462 = vmatmul.f32.gmra.mxu0 %v1095
  %v3463 = vpop.f32.mrf.mxu0
  %v3464 = vadd.f32 0.0, %v3463
  %3465 = vmatmul.f32.gmra.mxu0 %v1098
  %v3466 = vpop.f32.mrf.mxu0
  %v3467 = vadd.f32 0.0, %v3466
  %3468 = vmatmul.f32.gmra.mxu0 %v1101
  %v3469 = vpop.f32.mrf.mxu0
  %v3470 = vadd.f32 0.0, %v3469
  %3471 = vmatmul.f32.gmra.mxu0 %v1104
  %v3472 = vpop.f32.mrf.mxu0
  %v3473 = vadd.f32 0.0, %v3472
  %3474 = vmatmul.f32.gmra.mxu0 %v1107
  %v3475 = vpop.f32.mrf.mxu0
  %v3476 = vadd.f32 0.0, %v3475
  %3477 = vmatmul.f32.gmra.mxu0 %v1110
  %v3478 = vpop.f32.mrf.mxu0
  %v3479 = vadd.f32 0.0, %v3478
  %3480 = vmatmul.f32.gmra.mxu0 %v1113
  %v3481 = vpop.f32.mrf.mxu0
  %v3482 = vadd.f32 0.0, %v3481
  %3483 = vmatmul.f32.gmra.mxu0 %v1116
  %v3484 = vpop.f32.mrf.mxu0
  %v3485 = vadd.f32 0.0, %v3484
  %3486 = vmatmul.f32.gmra.mxu0 %v1119
  %v3487 = vpop.f32.mrf.mxu0
  %v3488 = vadd.f32 0.0, %v3487
  %3489 = vmatmul.f32.gmra.mxu0 %v1122
  %v3490 = vpop.f32.mrf.mxu0
  %v3491 = vadd.f32 0.0, %v3490
  %3492 = vmatmul.f32.gmra.mxu0 %v1125
  %v3493 = vpop.f32.mrf.mxu0
  %v3494 = vadd.f32 0.0, %v3493
  %3495 = vmatmul.f32.gmra.mxu0 %v1128
  %v3496 = vpop.f32.mrf.mxu0
  %v3497 = vadd.f32 0.0, %v3496
  %3498 = vmatmul.f32.gmra.mxu0 %v1131
  %v3499 = vpop.f32.mrf.mxu0
  %v3500 = vadd.f32 0.0, %v3499
  %3501 = vmatmul.f32.gmra.mxu0 %v1134
  %v3502 = vpop.f32.mrf.mxu0
  %v3503 = vadd.f32 0.0, %v3502
  %3504 = vmatmul.f32.gmra.mxu0 %v1137
  %v3505 = vpop.f32.mrf.mxu0
  %v3506 = vadd.f32 0.0, %v3505
  %3507 = vmatmul.f32.gmra.mxu0 %v1140
  %v3508 = vpop.f32.mrf.mxu0
  %v3509 = vadd.f32 0.0, %v3508
  %3510 = vmatmul.f32.gmra.mxu0 %v1143
  %v3511 = vpop.f32.mrf.mxu0
  %v3512 = vadd.f32 0.0, %v3511
  %3513 = vmatmul.f32.gmra.mxu0 %v1146
  %v3514 = vpop.f32.mrf.mxu0
  %v3515 = vadd.f32 0.0, %v3514
  %3516 = vmatmul.f32.gmra.mxu0 %v1149
  %v3517 = vpop.f32.mrf.mxu0
  %v3518 = vadd.f32 0.0, %v3517
  %3519 = vmatmul.f32.gmra.mxu0 %v1152
  %v3520 = vpop.f32.mrf.mxu0
  %v3521 = vadd.f32 0.0, %v3520
  %3522 = vmatmul.f32.gmra.mxu0 %v1155
  %v3523 = vpop.f32.mrf.mxu0
  %v3524 = vadd.f32 0.0, %v3523
  %3525 = vmatmul.f32.gmra.mxu0 %v1158
  %v3526 = vpop.f32.mrf.mxu0
  %v3527 = vadd.f32 0.0, %v3526
  %3528 = vmatmul.f32.gmra.mxu0 %v1161
  %v3529 = vpop.f32.mrf.mxu0
  %v3530 = vadd.f32 0.0, %v3529
  %3531 = vmatmul.f32.gmra.mxu0 %v1164
  %v3532 = vpop.f32.mrf.mxu0
  %v3533 = vadd.f32 0.0, %v3532
  %3534 = vmatmul.f32.gmra.mxu0 %v1167
  %v3535 = vpop.f32.mrf.mxu0
  %v3536 = vadd.f32 0.0, %v3535
  %3537 = vmatmul.f32.gmra.mxu0 %v1170
  %v3538 = vpop.f32.mrf.mxu0
  %v3539 = vadd.f32 0.0, %v3538
  %3540 = vmatmul.f32.gmra.mxu0 %v1173
  %v3541 = vpop.f32.mrf.mxu0
  %v3542 = vadd.f32 0.0, %v3541
  %3543 = vmatmul.f32.gmra.mxu0 %v1176
  %v3544 = vpop.f32.mrf.mxu0
  %v3545 = vadd.f32 0.0, %v3544
  %3546 = vmatmul.f32.gmra.mxu0 %v1179
  %v3547 = vpop.f32.mrf.mxu0
  %v3548 = vadd.f32 0.0, %v3547
  %3549 = vmatmul.f32.gmra.mxu0 %v1182
  %v3550 = vpop.f32.mrf.mxu0
  %v3551 = vadd.f32 0.0, %v3550
  %3552 = vmatmul.f32.gmra.mxu0 %v1185
  %v3553 = vpop.f32.mrf.mxu0
  %v3554 = vadd.f32 0.0, %v3553
  %3555 = vmatmul.f32.gmra.mxu0 %v1188
  %v3556 = vpop.f32.mrf.mxu0
  %v3557 = vadd.f32 0.0, %v3556
  %3558 = vmatmul.f32.gmra.mxu0 %v1191
  %v3559 = vpop.f32.mrf.mxu0
  %v3560 = vadd.f32 0.0, %v3559
  %3561 = vmatmul.f32.gmra.mxu0 %v1194
  %v3562 = vpop.f32.mrf.mxu0
  %v3563 = vadd.f32 0.0, %v3562
  %3564 = vmatmul.f32.gmra.mxu0 %v1197
  %v3565 = vpop.f32.mrf.mxu0
  %v3566 = vadd.f32 0.0, %v3565
  %3567 = vmatmul.f32.gmra.mxu0 %v1200
  %v3568 = vpop.f32.mrf.mxu0
  %v3569 = vadd.f32 0.0, %v3568
  %3570 = vmatmul.f32.gmra.mxu0 %v1203
  %v3571 = vpop.f32.mrf.mxu0
  %v3572 = vadd.f32 0.0, %v3571
  %3573 = vmatmul.f32.gmra.mxu0 %v1206
  %v3574 = vpop.f32.mrf.mxu0
  %v3575 = vadd.f32 0.0, %v3574
  %3576 = vmatmul.f32.gmra.mxu0 %v1209
  %v3577 = vpop.f32.mrf.mxu0
  %v3578 = vadd.f32 0.0, %v3577
  %3579 = vmatmul.f32.gmra.mxu0 %v1212
  %v3580 = vpop.f32.mrf.mxu0
  %v3581 = vadd.f32 0.0, %v3580
  %3582 = vmatmul.f32.gmra.mxu0 %v1215
  %v3583 = vpop.f32.mrf.mxu0
  %v3584 = vadd.f32 0.0, %v3583
  %3585 = vmatmul.f32.gmra.mxu0 %v1218
  %v3586 = vpop.f32.mrf.mxu0
  %v3587 = vadd.f32 0.0, %v3586
  %3588 = vmatmul.f32.gmra.mxu0 %v1221
  %v3589 = vpop.f32.mrf.mxu0
  %v3590 = vadd.f32 0.0, %v3589
  %3591 = vmatmul.f32.gmra.mxu0 %v1224
  %v3592 = vpop.f32.mrf.mxu0
  %v3593 = vadd.f32 0.0, %v3592
  %3594 = vmatmul.f32.gmra.mxu0 %v1227
  %v3595 = vpop.f32.mrf.mxu0
  %v3596 = vadd.f32 0.0, %v3595
  %3597 = vmatmul.f32.gmra.mxu0 %v1230
  %v3598 = vpop.f32.mrf.mxu0
  %v3599 = vadd.f32 0.0, %v3598
  %3600 = vmatmul.f32.gmra.mxu0 %v1233
  %v3601 = vpop.f32.mrf.mxu0
  %v3602 = vadd.f32 0.0, %v3601
  %3603 = vmatmul.f32.gmra.mxu0 %v1236
  %v3604 = vpop.f32.mrf.mxu0
  %v3605 = vadd.f32 0.0, %v3604
  %3606 = vmatmul.f32.gmra.mxu0 %v1239
  %v3607 = vpop.f32.mrf.mxu0
  %v3608 = vadd.f32 0.0, %v3607
  %3609 = vmatmul.f32.gmra.mxu0 %v1242
  %v3610 = vpop.f32.mrf.mxu0
  %v3611 = vadd.f32 0.0, %v3610
  %3612 = vmatmul.f32.gmra.mxu0 %v1245
  %v3613 = vpop.f32.mrf.mxu0
  %v3614 = vadd.f32 0.0, %v3613
  %3615 = vmatmul.f32.gmra.mxu0 %v1248
  %v3616 = vpop.f32.mrf.mxu0
  %v3617 = vadd.f32 0.0, %v3616
  %3618 = vmatmul.f32.gmra.mxu0 %v1251
  %v3619 = vpop.f32.mrf.mxu0
  %v3620 = vadd.f32 0.0, %v3619
  %3621 = vmatmul.f32.gmra.mxu0 %v1254
  %v3622 = vpop.f32.mrf.mxu0
  %v3623 = vadd.f32 0.0, %v3622
  %3624 = vmatmul.f32.gmra.mxu0 %v1257
  %v3625 = vpop.f32.mrf.mxu0
  %v3626 = vadd.f32 0.0, %v3625
  %3627 = vmatmul.f32.gmra.mxu0 %v1260
  %v3628 = vpop.f32.mrf.mxu0
  %v3629 = vadd.f32 0.0, %v3628
  %3630 = vmatmul.f32.gmra.mxu0 %v1263
  %v3631 = vpop.f32.mrf.mxu0
  %v3632 = vadd.f32 0.0, %v3631
  %3633 = vmatmul.f32.gmra.mxu0 %v1266
  %v3634 = vpop.f32.mrf.mxu0
  %v3635 = vadd.f32 0.0, %v3634
  %3636 = vmatmul.f32.gmra.mxu0 %v1269
  %v3637 = vpop.f32.mrf.mxu0
  %v3638 = vadd.f32 0.0, %v3637
  %3639 = vmatmul.f32.gmra.mxu0 %v1272
  %v3640 = vpop.f32.mrf.mxu0
  %v3641 = vadd.f32 0.0, %v3640
  %3642 = vmatmul.f32.gmra.mxu0 %v1275
  %v3643 = vpop.f32.mrf.mxu0
  %v3644 = vadd.f32 0.0, %v3643
  %3645 = vmatmul.f32.gmra.mxu0 %v1278
  %v3646 = vpop.f32.mrf.mxu0
  %v3647 = vadd.f32 0.0, %v3646
  %3648 = vmatmul.f32.gmra.mxu0 %v1281
  %v3649 = vpop.f32.mrf.mxu0
  %v3650 = vadd.f32 0.0, %v3649
  %3651 = vmatmul.f32.gmra.mxu0 %v1284
  %v3652 = vpop.f32.mrf.mxu0
  %v3653 = vadd.f32 0.0, %v3652
  %3654 = vmatmul.f32.gmra.mxu0 %v1287
  %v3655 = vpop.f32.mrf.mxu0
  %v3656 = vadd.f32 0.0, %v3655
  %3657 = vmatmul.f32.gmra.mxu0 %v1290
  %v3658 = vpop.f32.mrf.mxu0
  %v3659 = vadd.f32 0.0, %v3658
  %3660 = vmatmul.f32.gmra.mxu0 %v1293
  %v3661 = vpop.f32.mrf.mxu0
  %v3662 = vadd.f32 0.0, %v3661
  %3663 = vmatmul.f32.gmra.mxu0 %v1296
  %v3664 = vpop.f32.mrf.mxu0
  %v3665 = vadd.f32 0.0, %v3664
  %3666 = vmatmul.f32.gmra.mxu0 %v1299
  %v3667 = vpop.f32.mrf.mxu0
  %v3668 = vadd.f32 0.0, %v3667
  %3669 = vmatmul.f32.gmra.mxu0 %v1302
  %v3670 = vpop.f32.mrf.mxu0
  %v3671 = vadd.f32 0.0, %v3670
  %3672 = vmatmul.f32.gmra.mxu0 %v1305
  %v3673 = vpop.f32.mrf.mxu0
  %v3674 = vadd.f32 0.0, %v3673
  %3675 = vmatmul.f32.gmra.mxu0 %v1308
  %v3676 = vpop.f32.mrf.mxu0
  %v3677 = vadd.f32 0.0, %v3676
  %3678 = vmatmul.f32.gmra.mxu0 %v1311
  %v3679 = vpop.f32.mrf.mxu0
  %v3680 = vadd.f32 0.0, %v3679
  %3681 = vmatmul.f32.gmra.mxu0 %v1314
  %v3682 = vpop.f32.mrf.mxu0
  %v3683 = vadd.f32 0.0, %v3682
  %3684 = vmatmul.f32.gmra.mxu0 %v1317
  %v3685 = vpop.f32.mrf.mxu0
  %v3686 = vadd.f32 0.0, %v3685
  %3687 = vmatmul.f32.gmra.mxu0 %v1320
  %v3688 = vpop.f32.mrf.mxu0
  %v3689 = vadd.f32 0.0, %v3688
  %3690 = vmatmul.f32.gmra.mxu0 %v1323
  %v3691 = vpop.f32.mrf.mxu0
  %v3692 = vadd.f32 0.0, %v3691
  %3693 = vmatmul.f32.gmra.mxu0 %v1326
  %v3694 = vpop.f32.mrf.mxu0
  %v3695 = vadd.f32 0.0, %v3694
  %3696 = vmatmul.f32.gmra.mxu0 %v1329
  %v3697 = vpop.f32.mrf.mxu0
  %v3698 = vadd.f32 0.0, %v3697
  %3699 = vmatmul.f32.gmra.mxu0 %v1332
  %v3700 = vpop.f32.mrf.mxu0
  %v3701 = vadd.f32 0.0, %v3700
  %3702 = vmatmul.f32.gmra.mxu0 %v1335
  %v3703 = vpop.f32.mrf.mxu0
  %v3704 = vadd.f32 0.0, %v3703
  %3705 = vmatmul.f32.gmra.mxu0 %v1338
  %v3706 = vpop.f32.mrf.mxu0
  %v3707 = vadd.f32 0.0, %v3706
  %3708 = vmatmul.f32.gmra.mxu0 %v1341
  %v3709 = vpop.f32.mrf.mxu0
  %v3710 = vadd.f32 0.0, %v3709
  %3711 = vmatmul.f32.gmra.mxu0 %v1344
  %v3712 = vpop.f32.mrf.mxu0
  %v3713 = vadd.f32 0.0, %v3712
  %3714 = vmatmul.f32.gmra.mxu0 %v1347
  %v3715 = vpop.f32.mrf.mxu0
  %v3716 = vadd.f32 0.0, %v3715
  %3717 = vmatmul.f32.gmra.mxu0 %v1350
  %v3718 = vpop.f32.mrf.mxu0
  %v3719 = vadd.f32 0.0, %v3718
  %3720 = vmatmul.f32.gmra.mxu0 %v1353
  %v3721 = vpop.f32.mrf.mxu0
  %v3722 = vadd.f32 0.0, %v3721
  %3723 = vmatmul.f32.gmra.mxu0 %v1356
  %v3724 = vpop.f32.mrf.mxu0
  %v3725 = vadd.f32 0.0, %v3724
  %3726 = vmatmul.f32.gmra.mxu0 %v1359
  %v3727 = vpop.f32.mrf.mxu0
  %v3728 = vadd.f32 0.0, %v3727
  %3729 = vmatmul.f32.gmra.mxu0 %v1362
  %v3730 = vpop.f32.mrf.mxu0
  %v3731 = vadd.f32 0.0, %v3730
  %3732 = vmatmul.f32.gmra.mxu0 %v1365
  %v3733 = vpop.f32.mrf.mxu0
  %v3734 = vadd.f32 0.0, %v3733
  %3735 = vmatmul.f32.gmra.mxu0 %v1368
  %v3736 = vpop.f32.mrf.mxu0
  %v3737 = vadd.f32 0.0, %v3736
  %3738 = vmatmul.f32.gmra.mxu0 %v1371
  %v3739 = vpop.f32.mrf.mxu0
  %v3740 = vadd.f32 0.0, %v3739
  %3741 = vmatmul.f32.gmra.mxu0 %v1374
  %v3742 = vpop.f32.mrf.mxu0
  %v3743 = vadd.f32 0.0, %v3742
  %3744 = vmatmul.f32.gmra.mxu0 %v1377
  %v3745 = vpop.f32.mrf.mxu0
  %v3746 = vadd.f32 0.0, %v3745
  %3747 = vmatmul.f32.gmra.mxu0 %v1380
  %v3748 = vpop.f32.mrf.mxu0
  %v3749 = vadd.f32 0.0, %v3748
  %3750 = vmatmul.f32.gmra.mxu0 %v1383
  %v3751 = vpop.f32.mrf.mxu0
  %v3752 = vadd.f32 0.0, %v3751
  %3753 = vmatmul.f32.gmra.mxu0 %v1386
  %v3754 = vpop.f32.mrf.mxu0
  %v3755 = vadd.f32 0.0, %v3754
  %3756 = vmatmul.f32.gmra.mxu0 %v1389
  %v3757 = vpop.f32.mrf.mxu0
  %v3758 = vadd.f32 0.0, %v3757
  %3759 = vmatmul.f32.gmra.mxu0 %v1392
  %v3760 = vpop.f32.mrf.mxu0
  %v3761 = vadd.f32 0.0, %v3760
  %3762 = vmatmul.f32.gmra.mxu0 %v1395
  %v3763 = vpop.f32.mrf.mxu0
  %v3764 = vadd.f32 0.0, %v3763
  %3765 = vmatmul.f32.gmra.mxu0 %v1398
  %v3766 = vpop.f32.mrf.mxu0
  %v3767 = vadd.f32 0.0, %v3766
  %3768 = vmatmul.f32.gmra.mxu0 %v1401
  %v3769 = vpop.f32.mrf.mxu0
  %v3770 = vadd.f32 0.0, %v3769
  %3771 = vmatmul.f32.gmra.mxu0 %v1404
  %v3772 = vpop.f32.mrf.mxu0
  %v3773 = vadd.f32 0.0, %v3772
  %3774 = vmatmul.f32.gmra.mxu0 %v1407
  %v3775 = vpop.f32.mrf.mxu0
  %v3776 = vadd.f32 0.0, %v3775
  %3777 = vmatmul.f32.gmra.mxu0 %v1410
  %v3778 = vpop.f32.mrf.mxu0
  %v3779 = vadd.f32 0.0, %v3778
  %3780 = vmatmul.f32.gmra.mxu0 %v1413
  %v3781 = vpop.f32.mrf.mxu0
  %v3782 = vadd.f32 0.0, %v3781
  %3783 = vmatmul.f32.gmra.mxu0 %v1416
  %v3784 = vpop.f32.mrf.mxu0
  %v3785 = vadd.f32 0.0, %v3784
  %3786 = vmatmul.f32.gmra.mxu0 %v1419
  %v3787 = vpop.f32.mrf.mxu0
  %v3788 = vadd.f32 0.0, %v3787
  %3789 = vmatmul.f32.gmra.mxu0 %v1422
  %v3790 = vpop.f32.mrf.mxu0
  %v3791 = vadd.f32 0.0, %v3790
  %3792 = vmatmul.f32.gmra.mxu0 %v1425
  %v3793 = vpop.f32.mrf.mxu0
  %v3794 = vadd.f32 0.0, %v3793
  %3795 = vmatmul.f32.gmra.mxu0 %v1428
  %v3796 = vpop.f32.mrf.mxu0
  %v3797 = vadd.f32 0.0, %v3796
  %3798 = vmatmul.f32.gmra.mxu0 %v1431
  %v3799 = vpop.f32.mrf.mxu0
  %v3800 = vadd.f32 0.0, %v3799
  %3801 = vmatmul.f32.gmra.mxu0 %v1434
  %v3802 = vpop.f32.mrf.mxu0
  %v3803 = vadd.f32 0.0, %v3802
  %3804 = vmatmul.f32.gmra.mxu0 %v1437
  %v3805 = vpop.f32.mrf.mxu0
  %v3806 = vadd.f32 0.0, %v3805
  %3807 = vmatmul.f32.gmra.mxu0 %v1440
  %v3808 = vpop.f32.mrf.mxu0
  %v3809 = vadd.f32 0.0, %v3808
  %3810 = vmatmul.f32.gmra.mxu0 %v1443
  %v3811 = vpop.f32.mrf.mxu0
  %v3812 = vadd.f32 0.0, %v3811
  %3813 = vmatmul.f32.gmra.mxu0 %v1446
  %v3814 = vpop.f32.mrf.mxu0
  %v3815 = vadd.f32 0.0, %v3814
  %3816 = vmatmul.f32.gmra.mxu0 %v1449
  %v3817 = vpop.f32.mrf.mxu0
  %v3818 = vadd.f32 0.0, %v3817
  %3819 = vmatmul.f32.gmra.mxu0 %v1452
  %v3820 = vpop.f32.mrf.mxu0
  %v3821 = vadd.f32 0.0, %v3820
  %3822 = vmatmul.f32.gmra.mxu0 %v1455
  %v3823 = vpop.f32.mrf.mxu0
  %v3824 = vadd.f32 0.0, %v3823
  %3825 = vmatmul.f32.gmra.mxu0 %v1458
  %v3826 = vpop.f32.mrf.mxu0
  %v3827 = vadd.f32 0.0, %v3826
  %3828 = vmatmul.f32.gmra.mxu0 %v1461
  %v3829 = vpop.f32.mrf.mxu0
  %v3830 = vadd.f32 0.0, %v3829
  %3831 = vmatmul.f32.gmra.mxu0 %v1464
  %v3832 = vpop.f32.mrf.mxu0
  %v3833 = vadd.f32 0.0, %v3832
  %3834 = vmatmul.f32.gmra.mxu0 %v1467
  %v3835 = vpop.f32.mrf.mxu0
  %v3836 = vadd.f32 0.0, %v3835
  %3837 = vmatmul.f32.gmra.mxu0 %v1470
  %v3838 = vpop.f32.mrf.mxu0
  %v3839 = vadd.f32 0.0, %v3838
  %3840 = vmatmul.f32.gmra.mxu0 %v1473
  %v3841 = vpop.f32.mrf.mxu0
  %v3842 = vadd.f32 0.0, %v3841
  %3843 = vmatmul.f32.gmra.mxu0 %v1476
  %v3844 = vpop.f32.mrf.mxu0
  %v3845 = vadd.f32 0.0, %v3844
  %3846 = vmatmul.f32.gmra.mxu0 %v1479
  %v3847 = vpop.f32.mrf.mxu0
  %v3848 = vadd.f32 0.0, %v3847
  %3849 = vmatmul.f32.gmra.mxu0 %v1482
  %v3850 = vpop.f32.mrf.mxu0
  %v3851 = vadd.f32 0.0, %v3850
  %3852 = vmatmul.f32.gmra.mxu0 %v1485
  %v3853 = vpop.f32.mrf.mxu0
  %v3854 = vadd.f32 0.0, %v3853
  %3855 = vmatmul.f32.gmra.mxu0 %v1488
  %v3856 = vpop.f32.mrf.mxu0
  %v3857 = vadd.f32 0.0, %v3856
  %3858 = vmatmul.f32.gmra.mxu0 %v1491
  %v3859 = vpop.f32.mrf.mxu0
  %v3860 = vadd.f32 0.0, %v3859
  %3861 = vmatmul.f32.gmra.mxu0 %v1494
  %v3862 = vpop.f32.mrf.mxu0
  %v3863 = vadd.f32 0.0, %v3862
  %3864 = vmatmul.f32.gmra.mxu0 %v1497
  %v3865 = vpop.f32.mrf.mxu0
  %v3866 = vadd.f32 0.0, %v3865
  %3867 = vmatmul.f32.gmra.mxu0 %v1500
  %v3868 = vpop.f32.mrf.mxu0
  %v3869 = vadd.f32 0.0, %v3868
  %3870 = vmatmul.f32.gmra.mxu0 %v1503
  %v3871 = vpop.f32.mrf.mxu0
  %v3872 = vadd.f32 0.0, %v3871
  %3873 = vmatmul.f32.gmra.mxu0 %v1506
  %v3874 = vpop.f32.mrf.mxu0
  %v3875 = vadd.f32 0.0, %v3874
  %3876 = vmatmul.f32.gmra.mxu0 %v1509
  %v3877 = vpop.f32.mrf.mxu0
  %v3878 = vadd.f32 0.0, %v3877
  %3879 = vmatmul.f32.gmra.mxu0 %v1512
  %v3880 = vpop.f32.mrf.mxu0
  %v3881 = vadd.f32 0.0, %v3880
  %3882 = vmatmul.f32.gmra.mxu0 %v1515
  %v3883 = vpop.f32.mrf.mxu0
  %v3884 = vadd.f32 0.0, %v3883
  %3885 = vmatmul.f32.gmra.mxu0 %v1518
  %v3886 = vpop.f32.mrf.mxu0
  %v3887 = vadd.f32 0.0, %v3886
  %3888 = vmatmul.f32.gmra.mxu0 %v1521
  %v3889 = vpop.f32.mrf.mxu0
  %v3890 = vadd.f32 0.0, %v3889
  %3891 = vmatmul.f32.gmra.mxu0 %v1524
  %v3892 = vpop.f32.mrf.mxu0
  %v3893 = vadd.f32 0.0, %v3892
  %3894 = vmatmul.f32.gmra.mxu0 %v1527
  %v3895 = vpop.f32.mrf.mxu0
  %v3896 = vadd.f32 0.0, %v3895
  %3897 = vmatmul.f32.gmra.mxu0 %v1530
  %v3898 = vpop.f32.mrf.mxu0
  %v3899 = vadd.f32 0.0, %v3898
  %3900 = vmatmul.f32.gmra.mxu0 %v1533
  %v3901 = vpop.f32.mrf.mxu0
  %v3902 = vadd.f32 0.0, %v3901
  %3903 = vmatmul.f32.gmra.mxu0 %v1536
  %v3904 = vpop.f32.mrf.mxu0
  %v3905 = vadd.f32 0.0, %v3904
  %3906 = vmatmul.f32.gmra.mxu0 %v1539
  %v3907 = vpop.f32.mrf.mxu0
  %v3908 = vadd.f32 0.0, %v3907
  %3909 = vmatmul.f32.gmra.mxu0 %v1542
  %v3910 = vpop.f32.mrf.mxu0
  %v3911 = vadd.f32 0.0, %v3910
  %3912 = vmatmul.f32.gmra.mxu0 %v1545
  %v3913 = vpop.f32.mrf.mxu0
  %v3914 = vadd.f32 0.0, %v3913
  %3915 = vmatmul.f32.gmra.mxu0 %v1548
  %v3916 = vpop.f32.mrf.mxu0
  %v3917 = vadd.f32 0.0, %v3916
  %3918 = vmatmul.f32.gmra.mxu0 %v1551
  %v3919 = vpop.f32.mrf.mxu0
  %v3920 = vadd.f32 0.0, %v3919
  %3921 = vmatmul.f32.gmra.mxu0 %v1554
  %v3922 = vpop.f32.mrf.mxu0
  %v3923 = vadd.f32 0.0, %v3922
  %3924 = vmatmul.f32.gmra.mxu0 %v1557
  %v3925 = vpop.f32.mrf.mxu0
  %v3926 = vadd.f32 0.0, %v3925
  %3927 = vmatmul.f32.gmra.mxu0 %v1560
  %v3928 = vpop.f32.mrf.mxu0
  %v3929 = vadd.f32 0.0, %v3928
  %3930 = vmatmul.f32.gmra.mxu0 %v1563
  %v3931 = vpop.f32.mrf.mxu0
  %v3932 = vadd.f32 0.0, %v3931
  %3933 = vmatmul.f32.gmra.mxu0 %v1566
  %v3934 = vpop.f32.mrf.mxu0
  %v3935 = vadd.f32 0.0, %v3934
  %3936 = vmatmul.f32.gmra.mxu0 %v1569
  %v3937 = vpop.f32.mrf.mxu0
  %v3938 = vadd.f32 0.0, %v3937
  %3939 = vmatmul.f32.gmra.mxu0 %v1572
  %v3940 = vpop.f32.mrf.mxu0
  %v3941 = vadd.f32 0.0, %v3940
  %3942 = vmatmul.f32.gmra.mxu0 %v1575
  %v3943 = vpop.f32.mrf.mxu0
  %v3944 = vadd.f32 0.0, %v3943
  %3945 = vmatmul.f32.gmra.mxu0 %v1578
  %v3946 = vpop.f32.mrf.mxu0
  %v3947 = vadd.f32 0.0, %v3946
  %3948 = vmatmul.f32.gmra.mxu0 %v1581
  %v3949 = vpop.f32.mrf.mxu0
  %v3950 = vadd.f32 0.0, %v3949
  %3951 = vmatmul.f32.gmra.mxu0 %v1584
  %v3952 = vpop.f32.mrf.mxu0
  %v3953 = vadd.f32 0.0, %v3952
  %3954 = vmatmul.f32.gmra.mxu0 %v1587
  %v3955 = vpop.f32.mrf.mxu0
  %v3956 = vadd.f32 0.0, %v3955
  %3957 = vmatmul.f32.gmra.mxu0 %v1590
  %v3958 = vpop.f32.mrf.mxu0
  %v3959 = vadd.f32 0.0, %v3958
  %3960 = vmatmul.f32.gmra.mxu0 %v1593
  %v3961 = vpop.f32.mrf.mxu0
  %v3962 = vadd.f32 0.0, %v3961
  %3963 = vmatmul.f32.gmra.mxu0 %v1596
  %v3964 = vpop.f32.mrf.mxu0
  %v3965 = vadd.f32 0.0, %v3964
  %3966 = vmatmul.f32.gmra.mxu0 %v1599
  %v3967 = vpop.f32.mrf.mxu0
  %v3968 = vadd.f32 0.0, %v3967
  %3969 = vmatmul.f32.gmra.mxu0 %v1602
  %v3970 = vpop.f32.mrf.mxu0
  %v3971 = vadd.f32 0.0, %v3970
  %3972 = vmatmul.f32.gmra.mxu0 %v1605
  %v3973 = vpop.f32.mrf.mxu0
  %v3974 = vadd.f32 0.0, %v3973
  %3975 = vmatmul.f32.gmra.mxu0 %v1608
  %v3976 = vpop.f32.mrf.mxu0
  %v3977 = vadd.f32 0.0, %v3976
  %3978 = vmatmul.f32.gmra.mxu0 %v1611
  %v3979 = vpop.f32.mrf.mxu0
  %v3980 = vadd.f32 0.0, %v3979
  %3981 = vmatmul.f32.gmra.mxu0 %v1614
  %v3982 = vpop.f32.mrf.mxu0
  %v3983 = vadd.f32 0.0, %v3982
  %3984 = vmatmul.f32.gmra.mxu0 %v1617
  %v3985 = vpop.f32.mrf.mxu0
  %v3986 = vadd.f32 0.0, %v3985
  %3987 = vmatmul.f32.gmra.mxu0 %v1620
  %v3988 = vpop.f32.mrf.mxu0
  %v3989 = vadd.f32 0.0, %v3988
  %3990 = vmatmul.f32.gmra.mxu0 %v1623
  %v3991 = vpop.f32.mrf.mxu0
  %v3992 = vadd.f32 0.0, %v3991
  %3993 = vmatmul.f32.gmra.mxu0 %v1626
  %v3994 = vpop.f32.mrf.mxu0
  %v3995 = vadd.f32 0.0, %v3994
  %3996 = vmatmul.f32.gmra.mxu0 %v1629
  %v3997 = vpop.f32.mrf.mxu0
  %v3998 = vadd.f32 0.0, %v3997
  %3999 = vmatmul.f32.gmra.mxu0 %v1632
  %v4000 = vpop.f32.mrf.mxu0
  %v4001 = vadd.f32 0.0, %v4000
  %4002 = vmatmul.f32.gmra.mxu0 %v1635
  %v4003 = vpop.f32.mrf.mxu0
  %v4004 = vadd.f32 0.0, %v4003
  %4005 = vmatmul.f32.gmra.mxu0 %v1638
  %v4006 = vpop.f32.mrf.mxu0
  %v4007 = vadd.f32 0.0, %v4006
  %4008 = vmatmul.f32.gmra.mxu0 %v1641
  %v4009 = vpop.f32.mrf.mxu0
  %v4010 = vadd.f32 0.0, %v4009
  %4011 = vmatmul.f32.gmra.mxu0 %v1644
  %v4012 = vpop.f32.mrf.mxu0
  %v4013 = vadd.f32 0.0, %v4012
  %4014 = vmatmul.f32.gmra.mxu0 %v1647
  %v4015 = vpop.f32.mrf.mxu0
  %v4016 = vadd.f32 0.0, %v4015
  %4017 = vmatmul.f32.gmra.mxu0 %v1650
  %v4018 = vpop.f32.mrf.mxu0
  %v4019 = vadd.f32 0.0, %v4018
  %4020 = vmatmul.f32.gmra.mxu0 %v1653
  %v4021 = vpop.f32.mrf.mxu0
  %v4022 = vadd.f32 0.0, %v4021
  %4023 = vmatmul.f32.gmra.mxu0 %v1656
  %v4024 = vpop.f32.mrf.mxu0
  %v4025 = vadd.f32 0.0, %v4024
  %4026 = vmatmul.f32.gmra.mxu0 %v1659
  %v4027 = vpop.f32.mrf.mxu0
  %v4028 = vadd.f32 0.0, %v4027
  %4029 = vmatmul.f32.gmra.mxu0 %v1662
  %v4030 = vpop.f32.mrf.mxu0
  %v4031 = vadd.f32 0.0, %v4030
  %4032 = vmatmul.f32.gmra.mxu0 %v1665
  %v4033 = vpop.f32.mrf.mxu0
  %v4034 = vadd.f32 0.0, %v4033
  %4035 = vmatmul.f32.gmra.mxu0 %v1668
  %v4036 = vpop.f32.mrf.mxu0
  %v4037 = vadd.f32 0.0, %v4036
  %4038 = vmatmul.f32.gmra.mxu0 %v1671
  %v4039 = vpop.f32.mrf.mxu0
  %v4040 = vadd.f32 0.0, %v4039
  %4041 = vmatmul.f32.gmra.mxu0 %v1674
  %v4042 = vpop.f32.mrf.mxu0
  %v4043 = vadd.f32 0.0, %v4042
  %4044 = vmatmul.f32.gmra.mxu0 %v1677
  %v4045 = vpop.f32.mrf.mxu0
  %v4046 = vadd.f32 0.0, %v4045
  %4047 = vmatmul.f32.gmra.mxu0 %v1680
  %v4048 = vpop.f32.mrf.mxu0
  %v4049 = vadd.f32 0.0, %v4048
  %4050 = vmatmul.f32.gmra.mxu0 %v1683
  %v4051 = vpop.f32.mrf.mxu0
  %v4052 = vadd.f32 0.0, %v4051
  %4053 = vmatmul.f32.gmra.mxu0 %v1686
  %v4054 = vpop.f32.mrf.mxu0
  %v4055 = vadd.f32 0.0, %v4054
  %4056 = vmatmul.f32.gmra.mxu0 %v1689
  %v4057 = vpop.f32.mrf.mxu0
  %v4058 = vadd.f32 0.0, %v4057
  %4059 = vmatmul.f32.gmra.mxu0 %v1692
  %v4060 = vpop.f32.mrf.mxu0
  %v4061 = vadd.f32 0.0, %v4060
  %4062 = vmatmul.f32.gmra.mxu0 %v1695
  %v4063 = vpop.f32.mrf.mxu0
  %v4064 = vadd.f32 0.0, %v4063
  %4065 = vmatmul.f32.gmra.mxu0 %v1698
  %v4066 = vpop.f32.mrf.mxu0
  %v4067 = vadd.f32 0.0, %v4066
  %4068 = vmatmul.f32.gmra.mxu0 %v1701
  %v4069 = vpop.f32.mrf.mxu0
  %v4070 = vadd.f32 0.0, %v4069
  %4071 = vmatmul.f32.gmra.mxu0 %v1704
  %v4072 = vpop.f32.mrf.mxu0
  %v4073 = vadd.f32 0.0, %v4072
  %4074 = vmatmul.f32.gmra.mxu0 %v1707
  %v4075 = vpop.f32.mrf.mxu0
  %v4076 = vadd.f32 0.0, %v4075
  %4077 = vmatmul.f32.gmra.mxu0 %v1710
  %v4078 = vpop.f32.mrf.mxu0
  %v4079 = vadd.f32 0.0, %v4078
  %4080 = vmatmul.f32.gmra.mxu0 %v1713
  %v4081 = vpop.f32.mrf.mxu0
  %v4082 = vadd.f32 0.0, %v4081
  %4083 = vmatmul.f32.gmra.mxu0 %v1716
  %v4084 = vpop.f32.mrf.mxu0
  %v4085 = vadd.f32 0.0, %v4084
  %4086 = vmatmul.f32.gmra.mxu0 %v1719
  %v4087 = vpop.f32.mrf.mxu0
  %v4088 = vadd.f32 0.0, %v4087
  %4089 = vmatmul.f32.gmra.mxu0 %v1722
  %v4090 = vpop.f32.mrf.mxu0
  %v4091 = vadd.f32 0.0, %v4090
  %4092 = vmatmul.f32.gmra.mxu0 %v1725
  %v4093 = vpop.f32.mrf.mxu0
  %v4094 = vadd.f32 0.0, %v4093
  %4095 = vmatmul.f32.gmra.mxu0 %v1728
  %v4096 = vpop.f32.mrf.mxu0
  %v4097 = vadd.f32 0.0, %v4096
  %4098 = vmatmul.f32.gmra.mxu0 %v1731
  %v4099 = vpop.f32.mrf.mxu0
  %v4100 = vadd.f32 0.0, %v4099
  %4101 = vmatmul.f32.gmra.mxu0 %v1734
  %v4102 = vpop.f32.mrf.mxu0
  %v4103 = vadd.f32 0.0, %v4102
  %4104 = vmatmul.f32.gmra.mxu0 %v1737
  %v4105 = vpop.f32.mrf.mxu0
  %v4106 = vadd.f32 0.0, %v4105
  %4107 = vmatmul.f32.gmra.mxu0 %v1740
  %v4108 = vpop.f32.mrf.mxu0
  %v4109 = vadd.f32 0.0, %v4108
  %4110 = vmatmul.f32.gmra.mxu0 %v1743
  %v4111 = vpop.f32.mrf.mxu0
  %v4112 = vadd.f32 0.0, %v4111
  %4113 = vmatmul.f32.gmra.mxu0 %v1746
  %v4114 = vpop.f32.mrf.mxu0
  %v4115 = vadd.f32 0.0, %v4114
  %4116 = vmatmul.f32.gmra.mxu0 %v1749
  %v4117 = vpop.f32.mrf.mxu0
  %v4118 = vadd.f32 0.0, %v4117
  %4119 = vmatmul.f32.gmra.mxu0 %v1752
  %v4120 = vpop.f32.mrf.mxu0
  %v4121 = vadd.f32 0.0, %v4120
  %4122 = vmatmul.f32.gmra.mxu0 %v1755
  %v4123 = vpop.f32.mrf.mxu0
  %v4124 = vadd.f32 0.0, %v4123
  %4125 = vmatmul.f32.gmra.mxu0 %v1758
  %v4126 = vpop.f32.mrf.mxu0
  %v4127 = vadd.f32 0.0, %v4126
  %4128 = vmatmul.f32.gmra.mxu0 %v1761
  %v4129 = vpop.f32.mrf.mxu0
  %v4130 = vadd.f32 0.0, %v4129
  %4131 = vmatmul.f32.gmra.mxu0 %v1764
  %v4132 = vpop.f32.mrf.mxu0
  %v4133 = vadd.f32 0.0, %v4132
  %4134 = vmatmul.f32.gmra.mxu0 %v1767
  %v4135 = vpop.f32.mrf.mxu0
  %v4136 = vadd.f32 0.0, %v4135
  %4137 = vmatmul.f32.gmra.mxu0 %v1770
  %v4138 = vpop.f32.mrf.mxu0
  %v4139 = vadd.f32 0.0, %v4138
  %4140 = vmatmul.f32.gmra.mxu0 %v1773
  %v4141 = vpop.f32.mrf.mxu0
  %v4142 = vadd.f32 0.0, %v4141
  %4143 = vmatmul.f32.gmra.mxu0 %v1776
  %v4144 = vpop.f32.mrf.mxu0
  %v4145 = vadd.f32 0.0, %v4144
  %4146 = vmatmul.f32.gmra.mxu0 %v1779
  %v4147 = vpop.f32.mrf.mxu0
  %v4148 = vadd.f32 0.0, %v4147
  %4149 = vmatmul.f32.gmra.mxu0 %v1782
  %v4150 = vpop.f32.mrf.mxu0
  %v4151 = vadd.f32 0.0, %v4150
  %4152 = vmatmul.f32.gmra.mxu0 %v1785
  %v4153 = vpop.f32.mrf.mxu0
  %v4154 = vadd.f32 0.0, %v4153
  %4155 = vmatmul.f32.gmra.mxu0 %v1788
  %v4156 = vpop.f32.mrf.mxu0
  %v4157 = vadd.f32 0.0, %v4156
  %4158 = vmatmul.f32.gmra.mxu0 %v1791
  %v4159 = vpop.f32.mrf.mxu0
  %v4160 = vadd.f32 0.0, %v4159
  %4161 = vmatmul.f32.gmra.mxu0 %v1794
  %v4162 = vpop.f32.mrf.mxu0
  %v4163 = vadd.f32 0.0, %v4162
  %4164 = vmatmul.f32.gmra.mxu0 %v1797
  %v4165 = vpop.f32.mrf.mxu0
  %v4166 = vadd.f32 0.0, %v4165
  %4167 = vmatmul.f32.gmra.mxu0 %v1800
  %v4168 = vpop.f32.mrf.mxu0
  %v4169 = vadd.f32 0.0, %v4168
  %4170 = vmatmul.f32.gmra.mxu0 %v1803
  %v4171 = vpop.f32.mrf.mxu0
  %v4172 = vadd.f32 0.0, %v4171
  %4173 = vmatmul.f32.gmra.mxu0 %v1806
  %v4174 = vpop.f32.mrf.mxu0
  %v4175 = vadd.f32 0.0, %v4174
  %4176 = vmatmul.f32.gmra.mxu0 %v1809
  %v4177 = vpop.f32.mrf.mxu0
  %v4178 = vadd.f32 0.0, %v4177
  %4179 = vmatmul.f32.gmra.mxu0 %v1812
  %v4180 = vpop.f32.mrf.mxu0
  %v4181 = vadd.f32 0.0, %v4180
  %4182 = vmatmul.f32.gmra.mxu0 %v1815
  %v4183 = vpop.f32.mrf.mxu0
  %v4184 = vadd.f32 0.0, %v4183
  %4185 = vmatmul.f32.gmra.mxu0 %v1818
  %v4186 = vpop.f32.mrf.mxu0
  %v4187 = vadd.f32 0.0, %v4186
  %4188 = vmatmul.f32.gmra.mxu0 %v1821
  %v4189 = vpop.f32.mrf.mxu0
  %v4190 = vadd.f32 0.0, %v4189
  %4191 = vmatmul.f32.gmra.mxu0 %v1824
  %v4192 = vpop.f32.mrf.mxu0
  %v4193 = vadd.f32 0.0, %v4192
  %4194 = vmatmul.f32.gmra.mxu0 %v1827
  %v4195 = vpop.f32.mrf.mxu0
  %v4196 = vadd.f32 0.0, %v4195
  %4197 = vmatmul.f32.gmra.mxu0 %v1830
  %v4198 = vpop.f32.mrf.mxu0
  %v4199 = vadd.f32 0.0, %v4198
  %4200 = vmatmul.f32.gmra.mxu0 %v1833
  %v4201 = vpop.f32.mrf.mxu0
  %v4202 = vadd.f32 0.0, %v4201
  %4203 = vmatmul.f32.gmra.mxu0 %v1836
  %v4204 = vpop.f32.mrf.mxu0
  %v4205 = vadd.f32 0.0, %v4204
  %4206 = vmatmul.f32.gmra.mxu0 %v1839
  %v4207 = vpop.f32.mrf.mxu0
  %v4208 = vadd.f32 0.0, %v4207
  %4209 = vmatmul.f32.gmra.mxu0 %v1842
  %v4210 = vpop.f32.mrf.mxu0
  %v4211 = vadd.f32 0.0, %v4210
  %4212 = vmatmul.f32.gmra.mxu0 %v1845
  %v4213 = vpop.f32.mrf.mxu0
  %v4214 = vadd.f32 0.0, %v4213
  %4215 = vmatmul.f32.gmra.mxu0 %v1848
  %v4216 = vpop.f32.mrf.mxu0
  %v4217 = vadd.f32 0.0, %v4216
  %4218 = vmatmul.f32.gmra.mxu0 %v1851
  %v4219 = vpop.f32.mrf.mxu0
  %v4220 = vadd.f32 0.0, %v4219
  %4221 = vmatmul.f32.gmra.mxu0 %v1854
  %v4222 = vpop.f32.mrf.mxu0
  %v4223 = vadd.f32 0.0, %v4222
  %4224 = vmatmul.f32.gmra.mxu0 %v1857
  %v4225 = vpop.f32.mrf.mxu0
  %v4226 = vadd.f32 0.0, %v4225
  %4227 = vmatmul.f32.gmra.mxu0 %v1860
  %v4228 = vpop.f32.mrf.mxu0
  %v4229 = vadd.f32 0.0, %v4228
  %4230 = vmatmul.f32.gmra.mxu0 %v1863
  %v4231 = vpop.f32.mrf.mxu0
  %v4232 = vadd.f32 0.0, %v4231
  %4233 = vmatmul.f32.gmra.mxu0 %v1866
  %v4234 = vpop.f32.mrf.mxu0
  %v4235 = vadd.f32 0.0, %v4234
  %4236 = vmatmul.f32.gmra.mxu0 %v1869
  %v4237 = vpop.f32.mrf.mxu0
  %v4238 = vadd.f32 0.0, %v4237
  %4239 = vmatmul.f32.gmra.mxu0 %v1872
  %v4240 = vpop.f32.mrf.mxu0
  %v4241 = vadd.f32 0.0, %v4240
  %4242 = vmatmul.f32.gmra.mxu0 %v1875
  %v4243 = vpop.f32.mrf.mxu0
  %v4244 = vadd.f32 0.0, %v4243
  %4245 = vmatmul.f32.gmra.mxu0 %v1878
  %v4246 = vpop.f32.mrf.mxu0
  %v4247 = vadd.f32 0.0, %v4246
  %4248 = vmatmul.f32.gmra.mxu0 %v1881
  %v4249 = vpop.f32.mrf.mxu0
  %v4250 = vadd.f32 0.0, %v4249
  %4251 = vmatmul.f32.gmra.mxu0 %v1884
  %v4252 = vpop.f32.mrf.mxu0
  %v4253 = vadd.f32 0.0, %v4252
  %4254 = vmatmul.f32.gmra.mxu0 %v1887
  %v4255 = vpop.f32.mrf.mxu0
  %v4256 = vadd.f32 0.0, %v4255
  %4257 = vmatmul.f32.gmra.mxu0 %v1890
  %v4258 = vpop.f32.mrf.mxu0
  %v4259 = vadd.f32 0.0, %v4258
  %4260 = vmatmul.f32.gmra.mxu0 %v1893
  %v4261 = vpop.f32.mrf.mxu0
  %v4262 = vadd.f32 0.0, %v4261
  %4263 = vmatmul.f32.gmra.mxu0 %v1896
  %v4264 = vpop.f32.mrf.mxu0
  %v4265 = vadd.f32 0.0, %v4264
  %4266 = vmatmul.f32.gmra.mxu0 %v1899
  %v4267 = vpop.f32.mrf.mxu0
  %v4268 = vadd.f32 0.0, %v4267
  %4269 = vmatmul.f32.gmra.mxu0 %v1902
  %v4270 = vpop.f32.mrf.mxu0
  %v4271 = vadd.f32 0.0, %v4270
  %4272 = vmatmul.f32.gmra.mxu0 %v1905
  %v4273 = vpop.f32.mrf.mxu0
  %v4274 = vadd.f32 0.0, %v4273
  %4275 = vmatmul.f32.gmra.mxu0 %v1908
  %v4276 = vpop.f32.mrf.mxu0
  %v4277 = vadd.f32 0.0, %v4276
  %4278 = vmatmul.f32.gmra.mxu0 %v1911
  %v4279 = vpop.f32.mrf.mxu0
  %v4280 = vadd.f32 0.0, %v4279
  %4281 = vmatmul.f32.gmra.mxu0 %v1914
  %v4282 = vpop.f32.mrf.mxu0
  %v4283 = vadd.f32 0.0, %v4282
  %4284 = vmatmul.f32.gmra.mxu0 %v1917
  %v4285 = vpop.f32.mrf.mxu0
  %v4286 = vadd.f32 0.0, %v4285
  %4287 = vmatmul.f32.gmra.mxu0 %v1920
  %v4288 = vpop.f32.mrf.mxu0
  %v4289 = vadd.f32 0.0, %v4288
  %4290 = vmatmul.f32.gmra.mxu0 %v1923
  %v4291 = vpop.f32.mrf.mxu0
  %v4292 = vadd.f32 0.0, %v4291
  %4293 = vmatmul.f32.gmra.mxu0 %v1926
  %v4294 = vpop.f32.mrf.mxu0
  %v4295 = vadd.f32 0.0, %v4294
  %4296 = vmatmul.f32.gmra.mxu0 %v1929
  %v4297 = vpop.f32.mrf.mxu0
  %v4298 = vadd.f32 0.0, %v4297
  %4299 = vmatmul.f32.gmra.mxu0 %v1932
  %v4300 = vpop.f32.mrf.mxu0
  %v4301 = vadd.f32 0.0, %v4300
  %4302 = vmatmul.f32.gmra.mxu0 %v1935
  %v4303 = vpop.f32.mrf.mxu0
  %v4304 = vadd.f32 0.0, %v4303
  %4305 = vmatmul.f32.gmra.mxu0 %v1938
  %v4306 = vpop.f32.mrf.mxu0
  %v4307 = vadd.f32 0.0, %v4306
  %4308 = vmatmul.f32.gmra.mxu0 %v1941
  %v4309 = vpop.f32.mrf.mxu0
  %v4310 = vadd.f32 0.0, %v4309
  %4311 = vmatmul.f32.gmra.mxu0 %v1944
  %v4312 = vpop.f32.mrf.mxu0
  %v4313 = vadd.f32 0.0, %v4312
  %4314 = vmatmul.f32.gmra.mxu0 %v1947
  %v4315 = vpop.f32.mrf.mxu0
  %v4316 = vadd.f32 0.0, %v4315
  %4317 = vmatmul.f32.gmra.mxu0 %v1950
  %v4318 = vpop.f32.mrf.mxu0
  %v4319 = vadd.f32 0.0, %v4318
  %4320 = vmatmul.f32.gmra.mxu0 %v1953
  %v4321 = vpop.f32.mrf.mxu0
  %v4322 = vadd.f32 0.0, %v4321
  %4323 = vmatmul.f32.gmra.mxu0 %v1956
  %v4324 = vpop.f32.mrf.mxu0
  %v4325 = vadd.f32 0.0, %v4324
  %4326 = vmatmul.f32.gmra.mxu0 %v1959
  %v4327 = vpop.f32.mrf.mxu0
  %v4328 = vadd.f32 0.0, %v4327
  %4329 = vmatmul.f32.gmra.mxu0 %v1962
  %v4330 = vpop.f32.mrf.mxu0
  %v4331 = vadd.f32 0.0, %v4330
  %4332 = vmatmul.f32.gmra.mxu0 %v1965
  %v4333 = vpop.f32.mrf.mxu0
  %v4334 = vadd.f32 0.0, %v4333
  %4335 = vmatmul.f32.gmra.mxu0 %v1968
  %v4336 = vpop.f32.mrf.mxu0
  %v4337 = vadd.f32 0.0, %v4336
  %4338 = vmatmul.f32.gmra.mxu0 %v1971
  %v4339 = vpop.f32.mrf.mxu0
  %v4340 = vadd.f32 0.0, %v4339
  %4341 = vmatmul.f32.gmra.mxu0 %v1974
  %v4342 = vpop.f32.mrf.mxu0
  %v4343 = vadd.f32 0.0, %v4342
  %4344 = vmatmul.f32.gmra.mxu0 %v1977
  %v4345 = vpop.f32.mrf.mxu0
  %v4346 = vadd.f32 0.0, %v4345
  %4347 = vmatmul.f32.gmra.mxu0 %v1980
  %v4348 = vpop.f32.mrf.mxu0
  %v4349 = vadd.f32 0.0, %v4348
  %4350 = vmatmul.f32.gmra.mxu0 %v1983
  %v4351 = vpop.f32.mrf.mxu0
  %v4352 = vadd.f32 0.0, %v4351
  %4353 = vmatmul.f32.gmra.mxu0 %v1986
  %v4354 = vpop.f32.mrf.mxu0
  %v4355 = vadd.f32 0.0, %v4354
  %4356 = vmatmul.f32.gmra.mxu0 %v1989
  %v4357 = vpop.f32.mrf.mxu0
  %v4358 = vadd.f32 0.0, %v4357
  %4359 = vmatmul.f32.gmra.mxu0 %v1992
  %v4360 = vpop.f32.mrf.mxu0
  %v4361 = vadd.f32 0.0, %v4360
  %4362 = vmatmul.f32.gmra.mxu0 %v1995
  %v4363 = vpop.f32.mrf.mxu0
  %v4364 = vadd.f32 0.0, %v4363
  %4365 = vmatmul.f32.gmra.mxu0 %v1998
  %v4366 = vpop.f32.mrf.mxu0
  %v4367 = vadd.f32 0.0, %v4366
  %4368 = vmatmul.f32.gmra.mxu0 %v2001
  %v4369 = vpop.f32.mrf.mxu0
  %v4370 = vadd.f32 0.0, %v4369
  %4371 = vmatmul.f32.gmra.mxu0 %v2004
  %v4372 = vpop.f32.mrf.mxu0
  %v4373 = vadd.f32 0.0, %v4372
  %4374 = vmatmul.f32.gmra.mxu0 %v2007
  %v4375 = vpop.f32.mrf.mxu0
  %v4376 = vadd.f32 0.0, %v4375
  %4377 = vmatmul.f32.gmra.mxu0 %v2010
  %v4378 = vpop.f32.mrf.mxu0
  %v4379 = vadd.f32 0.0, %v4378
  %4380 = vmatmul.f32.gmra.mxu0 %v2013
  %v4381 = vpop.f32.mrf.mxu0
  %v4382 = vadd.f32 0.0, %v4381
  %4383 = vmatmul.f32.gmra.mxu0 %v2016
  %v4384 = vpop.f32.mrf.mxu0
  %v4385 = vadd.f32 0.0, %v4384
  %4386 = vmatmul.f32.gmra.mxu0 %v2019
  %v4387 = vpop.f32.mrf.mxu0
  %v4388 = vadd.f32 0.0, %v4387
  %4389 = vmatmul.f32.gmra.mxu0 %v2022
  %v4390 = vpop.f32.mrf.mxu0
  %v4391 = vadd.f32 0.0, %v4390
  %4392 = vmatmul.f32.gmra.mxu0 %v2025
  %v4393 = vpop.f32.mrf.mxu0
  %v4394 = vadd.f32 0.0, %v4393
  %4395 = vmatmul.f32.gmra.mxu0 %v2028
  %v4396 = vpop.f32.mrf.mxu0
  %v4397 = vadd.f32 0.0, %v4396
  %4398 = vmatmul.f32.gmra.mxu0 %v2031
  %v4399 = vpop.f32.mrf.mxu0
  %v4400 = vadd.f32 0.0, %v4399
  %4401 = vmatmul.f32.gmra.mxu0 %v2034
  %v4402 = vpop.f32.mrf.mxu0
  %v4403 = vadd.f32 0.0, %v4402
  %4404 = vmatmul.f32.gmra.mxu0 %v2037
  %v4405 = vpop.f32.mrf.mxu0
  %v4406 = vadd.f32 0.0, %v4405
  %4407 = vmatmul.f32.gmra.mxu0 %v2040
  %v4408 = vpop.f32.mrf.mxu0
  %v4409 = vadd.f32 0.0, %v4408
  %4410 = vmatmul.f32.gmra.mxu0 %v2043
  %v4411 = vpop.f32.mrf.mxu0
  %v4412 = vadd.f32 0.0, %v4411
  %4413 = vmatmul.f32.gmra.mxu0 %v2046
  %v4414 = vpop.f32.mrf.mxu0
  %v4415 = vadd.f32 0.0, %v4414
  %4416 = vmatmul.f32.gmra.mxu0 %v2049
  %v4417 = vpop.f32.mrf.mxu0
  %v4418 = vadd.f32 0.0, %v4417
  %4419 = vmatmul.f32.gmra.mxu0 %v2052
  %v4420 = vpop.f32.mrf.mxu0
  %v4421 = vadd.f32 0.0, %v4420
  %4422 = vmatmul.f32.gmra.mxu0 %v2055
  %v4423 = vpop.f32.mrf.mxu0
  %v4424 = vadd.f32 0.0, %v4423
  %4425 = vmatmul.f32.gmra.mxu0 %v2058
  %v4426 = vpop.f32.mrf.mxu0
  %v4427 = vadd.f32 0.0, %v4426
  %4428 = vmatmul.f32.gmra.mxu0 %v2061
  %v4429 = vpop.f32.mrf.mxu0
  %v4430 = vadd.f32 0.0, %v4429
  %4431 = vmatmul.f32.gmra.mxu0 %v2064
  %v4432 = vpop.f32.mrf.mxu0
  %v4433 = vadd.f32 0.0, %v4432
  %4434 = vmatmul.f32.gmra.mxu0 %v2067
  %v4435 = vpop.f32.mrf.mxu0
  %v4436 = vadd.f32 0.0, %v4435
  %4437 = vmatmul.f32.gmra.mxu0 %v2070
  %v4438 = vpop.f32.mrf.mxu0
  %v4439 = vadd.f32 0.0, %v4438
  %4440 = vmatmul.f32.gmra.mxu0 %v2073
  %v4441 = vpop.f32.mrf.mxu0
  %v4442 = vadd.f32 0.0, %v4441
  %4443 = vmatmul.f32.gmra.mxu0 %v2076
  %v4444 = vpop.f32.mrf.mxu0
  %v4445 = vadd.f32 0.0, %v4444
  %4446 = vmatmul.f32.gmra.mxu0 %v2079
  %v4447 = vpop.f32.mrf.mxu0
  %v4448 = vadd.f32 0.0, %v4447
  %4449 = vmatmul.f32.gmra.mxu0 %v2082
  %v4450 = vpop.f32.mrf.mxu0
  %v4451 = vadd.f32 0.0, %v4450
  %4452 = vmatmul.f32.gmra.mxu0 %v2085
  %v4453 = vpop.f32.mrf.mxu0
  %v4454 = vadd.f32 0.0, %v4453
  %4455 = vmatmul.f32.gmra.mxu0 %v2088
  %v4456 = vpop.f32.mrf.mxu0
  %v4457 = vadd.f32 0.0, %v4456
  %4458 = vmatmul.f32.gmra.mxu0 %v2091
  %v4459 = vpop.f32.mrf.mxu0
  %v4460 = vadd.f32 0.0, %v4459
  %4461 = vmatmul.f32.gmra.mxu0 %v2094
  %v4462 = vpop.f32.mrf.mxu0
  %v4463 = vadd.f32 0.0, %v4462
  %4464 = vmatmul.f32.gmra.mxu0 %v2097
  %v4465 = vpop.f32.mrf.mxu0
  %v4466 = vadd.f32 0.0, %v4465
  %4467 = vmatmul.f32.gmra.mxu0 %v2100
  %v4468 = vpop.f32.mrf.mxu0
  %v4469 = vadd.f32 0.0, %v4468
  %4470 = vmatmul.f32.gmra.mxu0 %v2103
  %v4471 = vpop.f32.mrf.mxu0
  %v4472 = vadd.f32 0.0, %v4471
  %4473 = vmatmul.f32.gmra.mxu0 %v2106
  %v4474 = vpop.f32.mrf.mxu0
  %v4475 = vadd.f32 0.0, %v4474
  %4476 = vmatmul.f32.gmra.mxu0 %v2109
  %v4477 = vpop.f32.mrf.mxu0
  %v4478 = vadd.f32 0.0, %v4477
  %4479 = vmatmul.f32.gmra.mxu0 %v2112
  %v4480 = vpop.f32.mrf.mxu0
  %v4481 = vadd.f32 0.0, %v4480
  %4482 = vmatmul.f32.gmra.mxu0 %v2115
  %v4483 = vpop.f32.mrf.mxu0
  %v4484 = vadd.f32 0.0, %v4483
  %4485 = vmatmul.f32.gmra.mxu0 %v2118
  %v4486 = vpop.f32.mrf.mxu0
  %v4487 = vadd.f32 0.0, %v4486
  %4488 = vmatmul.f32.gmra.mxu0 %v2121
  %v4489 = vpop.f32.mrf.mxu0
  %v4490 = vadd.f32 0.0, %v4489
  %4491 = vmatmul.f32.gmra.mxu0 %v2124
  %v4492 = vpop.f32.mrf.mxu0
  %v4493 = vadd.f32 0.0, %v4492
  %4494 = vmatmul.f32.gmra.mxu0 %v2127
  %v4495 = vpop.f32.mrf.mxu0
  %v4496 = vadd.f32 0.0, %v4495
  %4497 = vmatmul.f32.gmra.mxu0 %v2130
  %v4498 = vpop.f32.mrf.mxu0
  %v4499 = vadd.f32 0.0, %v4498
  %4500 = vmatmul.f32.gmra.mxu0 %v2133
  %v4501 = vpop.f32.mrf.mxu0
  %v4502 = vadd.f32 0.0, %v4501
  %4503 = vmatmul.f32.gmra.mxu0 %v2136
  %v4504 = vpop.f32.mrf.mxu0
  %v4505 = vadd.f32 0.0, %v4504
  %4506 = vmatmul.f32.gmra.mxu0 %v2139
  %v4507 = vpop.f32.mrf.mxu0
  %v4508 = vadd.f32 0.0, %v4507
  %4509 = vmatmul.f32.gmra.mxu0 %v2142
  %v4510 = vpop.f32.mrf.mxu0
  %v4511 = vadd.f32 0.0, %v4510
  %4512 = vmatmul.f32.gmra.mxu0 %v2145
  %v4513 = vpop.f32.mrf.mxu0
  %v4514 = vadd.f32 0.0, %v4513
  %4515 = vmatmul.f32.gmra.mxu0 %v2148
  %v4516 = vpop.f32.mrf.mxu0
  %v4517 = vadd.f32 0.0, %v4516
  %4518 = vmatmul.f32.gmra.mxu0 %v2151
  %v4519 = vpop.f32.mrf.mxu0
  %v4520 = vadd.f32 0.0, %v4519
  %4521 = vmatmul.f32.gmra.mxu0 %v2154
  %v4522 = vpop.f32.mrf.mxu0
  %v4523 = vadd.f32 0.0, %v4522
  %4524 = vmatmul.f32.gmra.mxu0 %v2157
  %v4525 = vpop.f32.mrf.mxu0
  %v4526 = vadd.f32 0.0, %v4525
  %4527 = vmatmul.f32.gmra.mxu0 %v2160
  %v4528 = vpop.f32.mrf.mxu0
  %v4529 = vadd.f32 0.0, %v4528
  %4530 = vmatmul.f32.gmra.mxu0 %v2163
  %v4531 = vpop.f32.mrf.mxu0
  %v4532 = vadd.f32 0.0, %v4531
  %4533 = vmatmul.f32.gmra.mxu0 %v2166
  %v4534 = vpop.f32.mrf.mxu0
  %v4535 = vadd.f32 0.0, %v4534
  %4536 = vmatmul.f32.gmra.mxu0 %v2169
  %v4537 = vpop.f32.mrf.mxu0
  %v4538 = vadd.f32 0.0, %v4537
  %4539 = vmatmul.f32.gmra.mxu0 %v2172
  %v4540 = vpop.f32.mrf.mxu0
  %v4541 = vadd.f32 0.0, %v4540
  %4542 = vmatmul.f32.gmra.mxu0 %v2175
  %v4543 = vpop.f32.mrf.mxu0
  %v4544 = vadd.f32 0.0, %v4543
  %4545 = vmatmul.f32.gmra.mxu0 %v2178
  %v4546 = vpop.f32.mrf.mxu0
  %v4547 = vadd.f32 0.0, %v4546
  %4548 = vmatmul.f32.gmra.mxu0 %v2181
  %v4549 = vpop.f32.mrf.mxu0
  %v4550 = vadd.f32 0.0, %v4549
  %4551 = vmatmul.f32.gmra.mxu0 %v2184
  %v4552 = vpop.f32.mrf.mxu0
  %v4553 = vadd.f32 0.0, %v4552
  %4554 = vmatmul.f32.gmra.mxu0 %v2187
  %v4555 = vpop.f32.mrf.mxu0
  %v4556 = vadd.f32 0.0, %v4555
  %4557 = vmatmul.f32.gmra.mxu0 %v2190
  %v4558 = vpop.f32.mrf.mxu0
  %v4559 = vadd.f32 0.0, %v4558
  %4560 = vmatmul.f32.gmra.mxu0 %v2193
  %v4561 = vpop.f32.mrf.mxu0
  %v4562 = vadd.f32 0.0, %v4561
  %4563 = vmatmul.f32.gmra.mxu0 %v2196
  %v4564 = vpop.f32.mrf.mxu0
  %v4565 = vadd.f32 0.0, %v4564
  %4566 = vmatmul.f32.gmra.mxu0 %v2199
  %v4567 = vpop.f32.mrf.mxu0
  %v4568 = vadd.f32 0.0, %v4567
  %4569 = vmatmul.f32.gmra.mxu0 %v2202
  %v4570 = vpop.f32.mrf.mxu0
  %v4571 = vadd.f32 0.0, %v4570
  %4572 = vmatmul.f32.gmra.mxu0 %v2205
  %v4573 = vpop.f32.mrf.mxu0
  %v4574 = vadd.f32 0.0, %v4573
  %4575 = vmatmul.f32.gmra.mxu0 %v2208
  %v4576 = vpop.f32.mrf.mxu0
  %v4577 = vadd.f32 0.0, %v4576
  %4578 = vmatmul.f32.gmra.mxu0 %v2211
  %v4579 = vpop.f32.mrf.mxu0
  %v4580 = vadd.f32 0.0, %v4579
  %4581 = vmatmul.f32.gmra.mxu0 %v2214
  %v4582 = vpop.f32.mrf.mxu0
  %v4583 = vadd.f32 0.0, %v4582
  %4584 = vmatmul.f32.gmra.mxu0 %v2217
  %v4585 = vpop.f32.mrf.mxu0
  %v4586 = vadd.f32 0.0, %v4585
  %4587 = vmatmul.f32.gmra.mxu0 %v2220
  %v4588 = vpop.f32.mrf.mxu0
  %v4589 = vadd.f32 0.0, %v4588
  %4590 = vmatmul.f32.gmra.mxu0 %v2223
  %v4591 = vpop.f32.mrf.mxu0
  %v4592 = vadd.f32 0.0, %v4591
  %4593 = vmatmul.f32.gmra.mxu0 %v2226
  %v4594 = vpop.f32.mrf.mxu0
  %v4595 = vadd.f32 0.0, %v4594
  %4596 = vmatmul.f32.gmra.mxu0 %v2229
  %v4597 = vpop.f32.mrf.mxu0
  %v4598 = vadd.f32 0.0, %v4597
  %4599 = vmatmul.f32.gmra.mxu0 %v2232
  %v4600 = vpop.f32.mrf.mxu0
  %v4601 = vadd.f32 0.0, %v4600
  %4602 = vmatmul.f32.gmra.mxu0 %v2235
  %v4603 = vpop.f32.mrf.mxu0
  %v4604 = vadd.f32 0.0, %v4603
  %4605 = vmatmul.f32.gmra.mxu0 %v2238
  %v4606 = vpop.f32.mrf.mxu0
  %v4607 = vadd.f32 0.0, %v4606
  %4608 = vmatmul.f32.gmra.mxu0 %v2241
  %v4609 = vpop.f32.mrf.mxu0
  %v4610 = vadd.f32 0.0, %v4609
  %4611 = vmatmul.f32.gmra.mxu0 %v2244
  %v4612 = vpop.f32.mrf.mxu0
  %v4613 = vadd.f32 0.0, %v4612
  %4614 = vmatmul.f32.gmra.mxu0 %v2247
  %v4615 = vpop.f32.mrf.mxu0
  %v4616 = vadd.f32 0.0, %v4615
  %4617 = vmatmul.f32.gmra.mxu0 %v2250
  %v4618 = vpop.f32.mrf.mxu0
  %v4619 = vadd.f32 0.0, %v4618
  %4620 = vmatmul.f32.gmra.mxu0 %v2253
  %v4621 = vpop.f32.mrf.mxu0
  %v4622 = vadd.f32 0.0, %v4621
  %4623 = vmatmul.f32.gmra.mxu0 %v2256
  %v4624 = vpop.f32.mrf.mxu0
  %v4625 = vadd.f32 0.0, %v4624
  %4626 = vmatmul.f32.gmra.mxu0 %v2259
  %v4627 = vpop.f32.mrf.mxu0
  %v4628 = vadd.f32 0.0, %v4627
  %4629 = vmatmul.f32.gmra.mxu0 %v2262
  %v4630 = vpop.f32.mrf.mxu0
  %v4631 = vadd.f32 0.0, %v4630
  %4632 = vmatmul.f32.gmra.mxu0 %v2265
  %v4633 = vpop.f32.mrf.mxu0
  %v4634 = vadd.f32 0.0, %v4633
  %4635 = vmatmul.f32.gmra.mxu0 %v2268
  %v4636 = vpop.f32.mrf.mxu0
  %v4637 = vadd.f32 0.0, %v4636
  %4638 = vmatmul.f32.gmra.mxu0 %v2271
  %v4639 = vpop.f32.mrf.mxu0
  %v4640 = vadd.f32 0.0, %v4639
  %4641 = vmatmul.f32.gmra.mxu0 %v2274
  %v4642 = vpop.f32.mrf.mxu0
  %v4643 = vadd.f32 0.0, %v4642
  %4644 = vmatmul.f32.gmra.mxu0 %v2277
  %v4645 = vpop.f32.mrf.mxu0
  %v4646 = vadd.f32 0.0, %v4645
  %4647 = vmatmul.f32.gmra.mxu0 %v2280
  %v4648 = vpop.f32.mrf.mxu0
  %v4649 = vadd.f32 0.0, %v4648
  %4650 = vmatmul.f32.gmra.mxu0 %v2283
  %v4651 = vpop.f32.mrf.mxu0
  %v4652 = vadd.f32 0.0, %v4651
  %4653 = vmatmul.f32.gmra.mxu0 %v2286
  %v4654 = vpop.f32.mrf.mxu0
  %v4655 = vadd.f32 0.0, %v4654
  %4656 = vmatmul.f32.gmra.mxu0 %v2289
  %v4657 = vpop.f32.mrf.mxu0
  %v4658 = vadd.f32 0.0, %v4657
  %4659 = vmatmul.f32.gmra.mxu0 %v2292
  %v4660 = vpop.f32.mrf.mxu0
  %v4661 = vadd.f32 0.0, %v4660
  %4662 = vmatmul.f32.gmra.mxu0 %v2295
  %v4663 = vpop.f32.mrf.mxu0
  %v4664 = vadd.f32 0.0, %v4663
  %4665 = vmatmul.f32.gmra.mxu0 %v2298
  %v4666 = vpop.f32.mrf.mxu0
  %v4667 = vadd.f32 0.0, %v4666
  %4668 = vmatmul.f32.gmra.mxu0 %v2301
  %v4669 = vpop.f32.mrf.mxu0
  %v4670 = vadd.f32 0.0, %v4669
  %4671 = vmatmul.f32.gmra.mxu0 %v2304
  %v4672 = vpop.f32.mrf.mxu0
  %v4673 = vadd.f32 0.0, %v4672
  %4674 = vmatmul.f32.gmra.mxu0 %v2307
  %v4675 = vpop.f32.mrf.mxu0
  %v4676 = vadd.f32 0.0, %v4675
  %4677 = vmatmul.f32.gmra.mxu0 %v2310
  %v4678 = vpop.f32.mrf.mxu0
  %v4679 = vadd.f32 0.0, %v4678
  %4680 = vmatmul.f32.gmra.mxu0 %v2313
  %v4681 = vpop.f32.mrf.mxu0
  %v4682 = vadd.f32 0.0, %v4681
  %4683 = vmatmul.f32.gmra.mxu0 %v2316
  %v4684 = vpop.f32.mrf.mxu0
  %v4685 = vadd.f32 0.0, %v4684
  %4686 = vmatmul.f32.gmra.mxu0 %v2319
  %v4687 = vpop.f32.mrf.mxu0
  %v4688 = vadd.f32 0.0, %v4687
  %4689 = vmatmul.f32.gmra.mxu0 %v2322
  %v4690 = vpop.f32.mrf.mxu0
  %v4691 = vadd.f32 0.0, %v4690
  %4692 = vmatmul.f32.gmra.mxu0 %v2325
  %v4693 = vpop.f32.mrf.mxu0
  %v4694 = vadd.f32 0.0, %v4693
  %4695 = vmatmul.f32.gmra.mxu0 %v2328
  %v4696 = vpop.f32.mrf.mxu0
  %v4697 = vadd.f32 0.0, %v4696
  %4698 = vmatmul.f32.gmra.mxu0 %v2331
  %v4699 = vpop.f32.mrf.mxu0
  %v4700 = vadd.f32 0.0, %v4699
  %4701 = vmatmul.f32.gmra.mxu0 %v2334
  %v4702 = vpop.f32.mrf.mxu0
  %v4703 = vadd.f32 0.0, %v4702
  %4704 = vmatmul.f32.gmra.mxu0 %v2337
  %v4705 = vpop.f32.mrf.mxu0
  %v4706 = vadd.f32 0.0, %v4705
  %4707 = vmatmul.f32.gmra.mxu0 %v2340
  %v4708 = vpop.f32.mrf.mxu0
  %v4709 = vadd.f32 0.0, %v4708
  %4710 = vmatmul.f32.gmra.mxu0 %v2343
  %v4711 = vpop.f32.mrf.mxu0
  %v4712 = vadd.f32 0.0, %v4711
  %4713 = vmatmul.f32.gmra.mxu0 %v2346
  %v4714 = vpop.f32.mrf.mxu0
  %v4715 = vadd.f32 0.0, %v4714
  %4716 = vmatmul.f32.gmra.mxu0 %v2349
  %v4717 = vpop.f32.mrf.mxu0
  %v4718 = vadd.f32 0.0, %v4717
  %4719 = vmatmul.f32.gmra.mxu0 %v2352
  %v4720 = vpop.f32.mrf.mxu0
  %v4721 = vadd.f32 0.0, %v4720
  %4722 = vmatmul.f32.gmra.mxu0 %v2355
  %v4723 = vpop.f32.mrf.mxu0
  %v4724 = vadd.f32 0.0, %v4723
  %4725 = vmatmul.f32.gmra.mxu0 %v2358
  %v4726 = vpop.f32.mrf.mxu0
  %v4727 = vadd.f32 0.0, %v4726
  %4728 = vmatmul.f32.gmra.mxu0 %v2361
  %v4729 = vpop.f32.mrf.mxu0
  %v4730 = vadd.f32 0.0, %v4729
  %4731 = vmatmul.f32.gmra.mxu0 %v2364
  %v4732 = vpop.f32.mrf.mxu0
  %v4733 = vadd.f32 0.0, %v4732
  %4734 = vmatmul.f32.gmra.mxu0 %v2367
  %v4735 = vpop.f32.mrf.mxu0
  %v4736 = vadd.f32 0.0, %v4735
  %4737 = vmatmul.f32.gmra.mxu0 %v2370
  %v4738 = vpop.f32.mrf.mxu0
  %v4739 = vadd.f32 0.0, %v4738
  %4740 = vmatmul.f32.gmra.mxu0 %v2373
  %v4741 = vpop.f32.mrf.mxu0
  %v4742 = vadd.f32 0.0, %v4741
  %4743 = vmatmul.f32.gmra.mxu0 %v2376
  %v4744 = vpop.f32.mrf.mxu0
  %v4745 = vadd.f32 0.0, %v4744
  %4746 = vmatmul.f32.gmra.mxu0 %v2379
  %v4747 = vpop.f32.mrf.mxu0
  %v4748 = vadd.f32 0.0, %v4747
  %4749 = vmatmul.f32.gmra.mxu0 %v2382
  %v4750 = vpop.f32.mrf.mxu0
  %v4751 = vadd.f32 0.0, %v4750
  %4752 = vmatmul.f32.gmra.mxu0 %v2385
  %v4753 = vpop.f32.mrf.mxu0
  %v4754 = vadd.f32 0.0, %v4753
  %4755 = vmatmul.f32.gmra.mxu0 %v2388
  %v4756 = vpop.f32.mrf.mxu0
  %v4757 = vadd.f32 0.0, %v4756
  %4758 = vmatmul.f32.gmra.mxu0 %v2391
  %v4759 = vpop.f32.mrf.mxu0
  %v4760 = vadd.f32 0.0, %v4759
  %4761 = vmatmul.f32.gmra.mxu0 %v2394
  %v4762 = vpop.f32.mrf.mxu0
  %v4763 = vadd.f32 0.0, %v4762
  %4764 = vmatmul.f32.gmra.mxu0 %v2397
  %v4765 = vpop.f32.mrf.mxu0
  %v4766 = vadd.f32 0.0, %v4765
  %4767 = vmatmul.f32.gmra.mxu0 %v2400
  %v4768 = vpop.f32.mrf.mxu0
  %v4769 = vadd.f32 0.0, %v4768
  %4770 = vmatmul.f32.gmra.mxu0 %v2403
  %v4771 = vpop.f32.mrf.mxu0
  %v4772 = vadd.f32 0.0, %v4771
  %4773 = vmatmul.f32.gmra.mxu0 %v2406
  %v4774 = vpop.f32.mrf.mxu0
  %v4775 = vadd.f32 0.0, %v4774
  %4776 = vmatmul.f32.gmra.mxu0 %v2409
  %v4777 = vpop.f32.mrf.mxu0
  %v4778 = vadd.f32 0.0, %v4777
  %4779 = vmatmul.f32.gmra.mxu0 %v2412
  %v4780 = vpop.f32.mrf.mxu0
  %v4781 = vadd.f32 0.0, %v4780
  %4782 = vmatmul.f32.gmra.mxu0 %v2415
  %v4783 = vpop.f32.mrf.mxu0
  %v4784 = vadd.f32 0.0, %v4783
  %4785 = vmatmul.f32.gmra.mxu0 %v2418
  %v4786 = vpop.f32.mrf.mxu0
  %v4787 = vadd.f32 0.0, %v4786
  %4788 = vmatmul.f32.gmra.mxu0 %v2421
  %v4789 = vpop.f32.mrf.mxu0
  %v4790 = vadd.f32 0.0, %v4789
  %4791 = vmatmul.f32.gmra.mxu0 %v2424
  %v4792 = vpop.f32.mrf.mxu0
  %v4793 = vadd.f32 0.0, %v4792
  %4794 = vmatmul.f32.gmra.mxu0 %v2427
  %v4795 = vpop.f32.mrf.mxu0
  %v4796 = vadd.f32 0.0, %v4795
  %4797 = vmatmul.f32.gmra.mxu0 %v2430
  %v4798 = vpop.f32.mrf.mxu0
  %v4799 = vadd.f32 0.0, %v4798
  %4800 = vmatmul.f32.gmra.mxu0 %v2433
  %v4801 = vpop.f32.mrf.mxu0
  %v4802 = vadd.f32 0.0, %v4801
  %4803 = vmatmul.f32.gmra.mxu0 %v2436
  %v4804 = vpop.f32.mrf.mxu0
  %v4805 = vadd.f32 0.0, %v4804
  %4806 = vmatmul.f32.gmra.mxu0 %v2439
  %v4807 = vpop.f32.mrf.mxu0
  %v4808 = vadd.f32 0.0, %v4807
  %4809 = vmatmul.f32.gmra.mxu0 %v2442
  %v4810 = vpop.f32.mrf.mxu0
  %v4811 = vadd.f32 0.0, %v4810
  %4812 = vmatmul.f32.gmra.mxu0 %v2445
  %v4813 = vpop.f32.mrf.mxu0
  %v4814 = vadd.f32 0.0, %v4813
  %4815 = vmatmul.f32.gmra.mxu0 %v2448
  %v4816 = vpop.f32.mrf.mxu0
  %v4817 = vadd.f32 0.0, %v4816
  %4818 = vmatmul.f32.gmra.mxu0 %v2451
  %v4819 = vpop.f32.mrf.mxu0
  %v4820 = vadd.f32 0.0, %v4819
  %4821 = vmatmul.f32.gmra.mxu0 %v2454
  %v4822 = vpop.f32.mrf.mxu0
  %v4823 = vadd.f32 0.0, %v4822
  %4824 = vmatmul.f32.gmra.mxu0 %v2457
  %v4825 = vpop.f32.mrf.mxu0
  %v4826 = vadd.f32 0.0, %v4825
  %4827 = vmatmul.f32.gmra.mxu0 %v2460
  %v4828 = vpop.f32.mrf.mxu0
  %v4829 = vadd.f32 0.0, %v4828
  %4830 = vmatmul.f32.gmra.mxu0 %v2463
  %v4831 = vpop.f32.mrf.mxu0
  %v4832 = vadd.f32 0.0, %v4831
  %4833 = vmatmul.f32.gmra.mxu0 %v2466
  %v4834 = vpop.f32.mrf.mxu0
  %v4835 = vadd.f32 0.0, %v4834
  %4836 = vmatmul.f32.gmra.mxu0 %v2469
  %v4837 = vpop.f32.mrf.mxu0
  %v4838 = vadd.f32 0.0, %v4837
  %4839 = vmatmul.f32.gmra.mxu0 %v2472
  %v4840 = vpop.f32.mrf.mxu0
  %v4841 = vadd.f32 0.0, %v4840
  %4842 = vmatmul.f32.gmra.mxu0 %v2475
  %v4843 = vpop.f32.mrf.mxu0
  %v4844 = vadd.f32 0.0, %v4843
  %4845 = vmatmul.f32.gmra.mxu0 %v2478
  %v4846 = vpop.f32.mrf.mxu0
  %v4847 = vadd.f32 0.0, %v4846
  %4848 = vmatmul.f32.gmra.mxu0 %v2481
  %v4849 = vpop.f32.mrf.mxu0
  %v4850 = vadd.f32 0.0, %v4849
  %4851 = vmatmul.f32.gmra.mxu0 %v2484
  %v4852 = vpop.f32.mrf.mxu0
  %v4853 = vadd.f32 0.0, %v4852
  %4854 = vmatmul.f32.gmra.mxu0 %v2487
  %v4855 = vpop.f32.mrf.mxu0
  %v4856 = vadd.f32 0.0, %v4855
  %4857 = vmatmul.f32.gmra.mxu0 %v2490
  %v4858 = vpop.f32.mrf.mxu0
  %v4859 = vadd.f32 0.0, %v4858
  %4860 = vmatmul.f32.gmra.mxu0 %v2493
  %v4861 = vpop.f32.mrf.mxu0
  %v4862 = vadd.f32 0.0, %v4861
  %4863 = vmatmul.f32.gmra.mxu0 %v2496
  %v4864 = vpop.f32.mrf.mxu0
  %v4865 = vadd.f32 0.0, %v4864
  %4866 = vmatmul.f32.gmra.mxu0 %v2499
  %v4867 = vpop.f32.mrf.mxu0
  %v4868 = vadd.f32 0.0, %v4867
  %4869 = vmatmul.f32.gmra.mxu0 %v2502
  %v4870 = vpop.f32.mrf.mxu0
  %v4871 = vadd.f32 0.0, %v4870
  %4872 = vmatmul.f32.gmra.mxu0 %v2505
  %v4873 = vpop.f32.mrf.mxu0
  %v4874 = vadd.f32 0.0, %v4873
  %4875 = vmatmul.f32.gmra.mxu0 %v2508
  %v4876 = vpop.f32.mrf.mxu0
  %v4877 = vadd.f32 0.0, %v4876
  %4878 = vmatmul.f32.gmra.mxu0 %v2511
  %v4879 = vpop.f32.mrf.mxu0
  %v4880 = vadd.f32 0.0, %v4879
  %4881 = vmatmul.f32.gmra.mxu0 %v2514
  %v4882 = vpop.f32.mrf.mxu0
  %v4883 = vadd.f32 0.0, %v4882
  %4884 = vmatmul.f32.gmra.mxu0 %v2517
  %v4885 = vpop.f32.mrf.mxu0
  %v4886 = vadd.f32 0.0, %v4885
  %4887 = vmatmul.f32.gmra.mxu0 %v2520
  %v4888 = vpop.f32.mrf.mxu0
  %v4889 = vadd.f32 0.0, %v4888
  %4890 = vmatmul.f32.gmra.mxu0 %v2523
  %v4891 = vpop.f32.mrf.mxu0
  %v4892 = vadd.f32 0.0, %v4891
  %4893 = vmatmul.f32.gmra.mxu0 %v2526
  %v4894 = vpop.f32.mrf.mxu0
  %v4895 = vadd.f32 0.0, %v4894
  %4896 = vmatmul.f32.gmra.mxu0 %v2529
  %v4897 = vpop.f32.mrf.mxu0
  %v4898 = vadd.f32 0.0, %v4897
  %4899 = vmatmul.f32.gmra.mxu0 %v2532
  %v4900 = vpop.f32.mrf.mxu0
  %v4901 = vadd.f32 0.0, %v4900
  %4902 = vmatmul.f32.gmra.mxu0 %v2535
  %v4903 = vpop.f32.mrf.mxu0
  %v4904 = vadd.f32 0.0, %v4903
  %4905 = vmatmul.f32.gmra.mxu0 %v2538
  %v4906 = vpop.f32.mrf.mxu0
  %v4907 = vadd.f32 0.0, %v4906
  %4908 = vmatmul.f32.gmra.mxu0 %v2541
  %v4909 = vpop.f32.mrf.mxu0
  %v4910 = vadd.f32 0.0, %v4909
  %4911 = vmatmul.f32.gmra.mxu0 %v2544
  %v4912 = vpop.f32.mrf.mxu0
  %v4913 = vadd.f32 0.0, %v4912
  %4914 = vmatmul.f32.gmra.mxu0 %v2547
  %v4915 = vpop.f32.mrf.mxu0
  %v4916 = vadd.f32 0.0, %v4915
  %4917 = vmatmul.f32.gmra.mxu0 %v2550
  %v4918 = vpop.f32.mrf.mxu0
  %v4919 = vadd.f32 0.0, %v4918
  %4920 = vmatmul.f32.gmra.mxu0 %v2553
  %v4921 = vpop.f32.mrf.mxu0
  %v4922 = vadd.f32 0.0, %v4921
  %4923 = vmatmul.f32.gmra.mxu0 %v2556
  %v4924 = vpop.f32.mrf.mxu0
  %v4925 = vadd.f32 0.0, %v4924
  %4926 = vmatmul.f32.gmra.mxu0 %v2559
  %v4927 = vpop.f32.mrf.mxu0
  %v4928 = vadd.f32 0.0, %v4927
  %4929 = vmatmul.f32.gmra.mxu0 %v2562
  %v4930 = vpop.f32.mrf.mxu0
  %v4931 = vadd.f32 0.0, %v4930
  %4932 = vmatmul.f32.gmra.mxu0 %v2565
  %v4933 = vpop.f32.mrf.mxu0
  %v4934 = vadd.f32 0.0, %v4933
  %4935 = vmatmul.f32.gmra.mxu0 %v2568
  %v4936 = vpop.f32.mrf.mxu0
  %v4937 = vadd.f32 0.0, %v4936
  %4938 = vmatmul.f32.gmra.mxu0 %v2571
  %v4939 = vpop.f32.mrf.mxu0
  %v4940 = vadd.f32 0.0, %v4939
  %4941 = vmatmul.f32.gmra.mxu0 %v2574
  %v4942 = vpop.f32.mrf.mxu0
  %v4943 = vadd.f32 0.0, %v4942
  %4944 = vmatmul.f32.gmra.mxu0 %v2577
  %v4945 = vpop.f32.mrf.mxu0
  %v4946 = vadd.f32 0.0, %v4945
  %4947 = vmatmul.f32.gmra.mxu0 %v2580
  %v4948 = vpop.f32.mrf.mxu0
  %v4949 = vadd.f32 0.0, %v4948
  %4950 = vmatmul.f32.gmra.mxu0 %v2583
  %v4951 = vpop.f32.mrf.mxu0
  %v4952 = vadd.f32 0.0, %v4951
  %4953 = vmatmul.f32.gmra.mxu0 %v2586
  %v4954 = vpop.f32.mrf.mxu0
  %v4955 = vadd.f32 0.0, %v4954
  %4956 = vmatmul.f32.gmra.mxu0 %v2589
  %v4957 = vpop.f32.mrf.mxu0
  %v4958 = vadd.f32 0.0, %v4957
  %4959 = vmatmul.f32.gmra.mxu0 %v2592
  %v4960 = vpop.f32.mrf.mxu0
  %v4961 = vadd.f32 0.0, %v4960
  %4962 = vmatmul.f32.gmra.mxu0 %v2595
  %v4963 = vpop.f32.mrf.mxu0
  %v4964 = vadd.f32 0.0, %v4963
  %4965 = vmatmul.f32.gmra.mxu0 %v2598
  %v4966 = vpop.f32.mrf.mxu0
  %v4967 = vadd.f32 0.0, %v4966
  %4968 = vmatmul.f32.gmra.mxu0 %v2601
  %v4969 = vpop.f32.mrf.mxu0
  %v4970 = vadd.f32 0.0, %v4969
  %4971 = vmatmul.f32.gmra.mxu0 %v2604
  %v4972 = vpop.f32.mrf.mxu0
  %v4973 = vadd.f32 0.0, %v4972
  %4974 = vmatmul.f32.gmra.mxu0 %v2607
  %v4975 = vpop.f32.mrf.mxu0
  %v4976 = vadd.f32 0.0, %v4975
  %4977 = vmatmul.f32.gmra.mxu0 %v2610
  %v4978 = vpop.f32.mrf.mxu0
  %v4979 = vadd.f32 0.0, %v4978
  %4980 = vmatmul.f32.gmra.mxu0 %v2613
  %v4981 = vpop.f32.mrf.mxu0
  %v4982 = vadd.f32 0.0, %v4981
  %4983 = vmatmul.f32.gmra.mxu0 %v2616
  %v4984 = vpop.f32.mrf.mxu0
  %v4985 = vadd.f32 0.0, %v4984
  %4986 = vmatmul.f32.gmra.mxu0 %v2619
  %v4987 = vpop.f32.mrf.mxu0
  %v4988 = vadd.f32 0.0, %v4987
  %4989 = vmatmul.f32.gmra.mxu0 %v2622
  %v4990 = vpop.f32.mrf.mxu0
  %v4991 = vadd.f32 0.0, %v4990
  %4992 = vmatmul.f32.gmra.mxu0 %v2625
  %v4993 = vpop.f32.mrf.mxu0
  %v4994 = vadd.f32 0.0, %v4993
  %4995 = vmatmul.f32.gmra.mxu0 %v2628
  %v4996 = vpop.f32.mrf.mxu0
  %v4997 = vadd.f32 0.0, %v4996
  %4998 = vmatmul.f32.gmra.mxu0 %v2631
  %v4999 = vpop.f32.mrf.mxu0
  %v5000 = vadd.f32 0.0, %v4999
  %5001 = vmatmul.f32.gmra.mxu0 %v2634
  %v5002 = vpop.f32.mrf.mxu0
  %v5003 = vadd.f32 0.0, %v5002
  %5004 = vmatmul.f32.gmra.mxu0 %v2637
  %v5005 = vpop.f32.mrf.mxu0
  %v5006 = vadd.f32 0.0, %v5005
  %5007 = vmatmul.f32.gmra.mxu0 %v2640
  %v5008 = vpop.f32.mrf.mxu0
  %v5009 = vadd.f32 0.0, %v5008
  %5010 = vmatmul.f32.gmra.mxu0 %v2643
  %v5011 = vpop.f32.mrf.mxu0
  %v5012 = vadd.f32 0.0, %v5011
  %5013 = vmatmul.f32.gmra.mxu0 %v2646
  %v5014 = vpop.f32.mrf.mxu0
  %v5015 = vadd.f32 0.0, %v5014
  %5016 = vmatmul.f32.gmra.mxu0 %v2649
  %v5017 = vpop.f32.mrf.mxu0
  %v5018 = vadd.f32 0.0, %v5017
  %5019 = vmatmul.f32.gmra.mxu0 %v2652
  %v5020 = vpop.f32.mrf.mxu0
  %v5021 = vadd.f32 0.0, %v5020
  %5022 = vmatmul.f32.gmra.mxu0 %v2655
  %v5023 = vpop.f32.mrf.mxu0
  %v5024 = vadd.f32 0.0, %v5023
  %5025 = vmatmul.f32.gmra.mxu0 %v2658
  %v5026 = vpop.f32.mrf.mxu0
  %v5027 = vadd.f32 0.0, %v5026
  %5028 = vmatmul.f32.gmra.mxu0 %v2661
  %v5029 = vpop.f32.mrf.mxu0
  %v5030 = vadd.f32 0.0, %v5029
  %5031 = vmatmul.f32.gmra.mxu0 %v2664
  %v5032 = vpop.f32.mrf.mxu0
  %v5033 = vadd.f32 0.0, %v5032
  %5034 = vmatmul.f32.gmra.mxu0 %v2667
  %v5035 = vpop.f32.mrf.mxu0
  %v5036 = vadd.f32 0.0, %v5035
  %5037 = vmatmul.f32.gmra.mxu0 %v2670
  %v5038 = vpop.f32.mrf.mxu0
  %v5039 = vadd.f32 0.0, %v5038
  %5040 = vmatmul.f32.gmra.mxu0 %v2673
  %v5041 = vpop.f32.mrf.mxu0
  %v5042 = vadd.f32 0.0, %v5041
  %5043 = vmatmul.f32.gmra.mxu0 %v2676
  %v5044 = vpop.f32.mrf.mxu0
  %v5045 = vadd.f32 0.0, %v5044
  %5046 = vmatmul.f32.gmra.mxu0 %v2679
  %v5047 = vpop.f32.mrf.mxu0
  %v5048 = vadd.f32 0.0, %v5047
  %5049 = vmatmul.f32.gmra.mxu0 %v2682
  %v5050 = vpop.f32.mrf.mxu0
  %v5051 = vadd.f32 0.0, %v5050
  %5052 = vmatmul.f32.gmra.mxu0 %v2685
  %v5053 = vpop.f32.mrf.mxu0
  %v5054 = vadd.f32 0.0, %v5053
  %5055 = vmatmul.f32.gmra.mxu0 %v2688
  %v5056 = vpop.f32.mrf.mxu0
  %v5057 = vadd.f32 0.0, %v5056
  %5058 = vmatmul.f32.gmra.mxu0 %v2691
  %v5059 = vpop.f32.mrf.mxu0
  %v5060 = vadd.f32 0.0, %v5059
  %5061 = vmatmul.f32.gmra.mxu0 %v2694
  %v5062 = vpop.f32.mrf.mxu0
  %v5063 = vadd.f32 0.0, %v5062
  %5064 = vmatmul.f32.gmra.mxu0 %v2697
  %v5065 = vpop.f32.mrf.mxu0
  %v5066 = vadd.f32 0.0, %v5065
  %5067 = vmatmul.f32.gmra.mxu0 %v2700
  %v5068 = vpop.f32.mrf.mxu0
  %v5069 = vadd.f32 0.0, %v5068
  %5070 = vmatmul.f32.gmra.mxu0 %v2703
  %v5071 = vpop.f32.mrf.mxu0
  %v5072 = vadd.f32 0.0, %v5071
  %5073 = vmatmul.f32.gmra.mxu0 %v2706
  %v5074 = vpop.f32.mrf.mxu0
  %v5075 = vadd.f32 0.0, %v5074
  %5076 = vmatmul.f32.gmra.mxu0 %v2709
  %v5077 = vpop.f32.mrf.mxu0
  %v5078 = vadd.f32 0.0, %v5077
  %5079 = vmatmul.f32.gmra.mxu0 %v2712
  %v5080 = vpop.f32.mrf.mxu0
  %v5081 = vadd.f32 0.0, %v5080
  %5082 = vmatmul.f32.gmra.mxu0 %v2715
  %v5083 = vpop.f32.mrf.mxu0
  %v5084 = vadd.f32 0.0, %v5083
  %5085 = vmatmul.f32.gmra.mxu0 %v2718
  %v5086 = vpop.f32.mrf.mxu0
  %v5087 = vadd.f32 0.0, %v5086
  %5088 = vmatmul.f32.gmra.mxu0 %v2721
  %v5089 = vpop.f32.mrf.mxu0
  %v5090 = vadd.f32 0.0, %v5089
  %5091 = vmatmul.f32.gmra.mxu0 %v2724
  %v5092 = vpop.f32.mrf.mxu0
  %v5093 = vadd.f32 0.0, %v5092
  %5094 = vmatmul.f32.gmra.mxu0 %v2727
  %v5095 = vpop.f32.mrf.mxu0
  %v5096 = vadd.f32 0.0, %v5095
  %5097 = vmatmul.f32.gmra.mxu0 %v2730
  %v5098 = vpop.f32.mrf.mxu0
  %v5099 = vadd.f32 0.0, %v5098
  %5100 = vmatmul.f32.gmra.mxu0 %v2733
  %v5101 = vpop.f32.mrf.mxu0
  %v5102 = vadd.f32 0.0, %v5101
  %5103 = vmatmul.f32.gmra.mxu0 %v2736
  %v5104 = vpop.f32.mrf.mxu0
  %v5105 = vadd.f32 0.0, %v5104
  %5106 = vmatmul.f32.gmra.mxu0 %v2739
  %v5107 = vpop.f32.mrf.mxu0
  %v5108 = vadd.f32 0.0, %v5107
  %5109 = vmatmul.f32.gmra.mxu0 %v2742
  %v5110 = vpop.f32.mrf.mxu0
  %v5111 = vadd.f32 0.0, %v5110
  %5112 = vmatmul.f32.gmra.mxu0 %v2745
  %v5113 = vpop.f32.mrf.mxu0
  %v5114 = vadd.f32 0.0, %v5113
  %5115 = vmatmul.f32.gmra.mxu0 %v2748
  %v5116 = vpop.f32.mrf.mxu0
  %v5117 = vadd.f32 0.0, %v5116
  %5118 = vmatmul.f32.gmra.mxu0 %v2751
  %v5119 = vpop.f32.mrf.mxu0
  %v5120 = vadd.f32 0.0, %v5119
  %5121 = vmatmul.f32.gmra.mxu0 %v2754
  %v5122 = vpop.f32.mrf.mxu0
  %v5123 = vadd.f32 0.0, %v5122
  %5124 = vmatmul.f32.gmra.mxu0 %v2757
  %v5125 = vpop.f32.mrf.mxu0
  %v5126 = vadd.f32 0.0, %v5125
  %5127 = vmatmul.f32.gmra.mxu0 %v2760
  %v5128 = vpop.f32.mrf.mxu0
  %v5129 = vadd.f32 0.0, %v5128
  %5130 = vmatmul.f32.gmra.mxu0 %v2763
  %v5131 = vpop.f32.mrf.mxu0
  %v5132 = vadd.f32 0.0, %v5131
  %5133 = vmatmul.f32.gmra.mxu0 %v2766
  %v5134 = vpop.f32.mrf.mxu0
  %v5135 = vadd.f32 0.0, %v5134
  %5136 = vmatmul.f32.gmra.mxu0 %v2769
  %v5137 = vpop.f32.mrf.mxu0
  %v5138 = vadd.f32 0.0, %v5137
  %5139 = vmatmul.f32.gmra.mxu0 %v2772
  %v5140 = vpop.f32.mrf.mxu0
  %v5141 = vadd.f32 0.0, %v5140
  %5142 = vmatmul.f32.gmra.mxu0 %v2775
  %v5143 = vpop.f32.mrf.mxu0
  %v5144 = vadd.f32 0.0, %v5143
  %5145 = vmatmul.f32.gmra.mxu0 %v2778
  %v5146 = vpop.f32.mrf.mxu0
  %v5147 = vadd.f32 0.0, %v5146
  %5148 = vmatmul.f32.gmra.mxu0 %v2781
  %v5149 = vpop.f32.mrf.mxu0
  %v5150 = vadd.f32 0.0, %v5149
  %5151 = vmatmul.f32.gmra.mxu0 %v2784
  %v5152 = vpop.f32.mrf.mxu0
  %v5153 = vadd.f32 0.0, %v5152
  %5154 = vmatmul.f32.gmra.mxu0 %v2787
  %v5155 = vpop.f32.mrf.mxu0
  %v5156 = vadd.f32 0.0, %v5155
  %5157 = vmatmul.f32.gmra.mxu0 %v2790
  %v5158 = vpop.f32.mrf.mxu0
  %v5159 = vadd.f32 0.0, %v5158
  %5160 = vmatmul.f32.gmra.mxu0 %v2793
  %v5161 = vpop.f32.mrf.mxu0
  %v5162 = vadd.f32 0.0, %v5161
  %5163 = vmatmul.f32.gmra.mxu0 %v2796
  %v5164 = vpop.f32.mrf.mxu0
  %v5165 = vadd.f32 0.0, %v5164
  %5166 = vmatmul.f32.gmra.mxu0 %v2799
  %v5167 = vpop.f32.mrf.mxu0
  %v5168 = vadd.f32 0.0, %v5167
  %5169 = vmatmul.f32.gmra.mxu0 %v2802
  %v5170 = vpop.f32.mrf.mxu0
  %v5171 = vadd.f32 0.0, %v5170
  %5172 = vmatmul.f32.gmra.mxu0 %v2805
  %v5173 = vpop.f32.mrf.mxu0
  %v5174 = vadd.f32 0.0, %v5173
  %5175 = vmatmul.f32.gmra.mxu0 %v2808
  %v5176 = vpop.f32.mrf.mxu0
  %v5177 = vadd.f32 0.0, %v5176
  %5178 = vmatmul.f32.gmra.mxu0 %v2811
  %v5179 = vpop.f32.mrf.mxu0
  %v5180 = vadd.f32 0.0, %v5179
  %5181 = vmatmul.f32.gmra.mxu0 %v2814
  %v5182 = vpop.f32.mrf.mxu0
  %v5183 = vadd.f32 0.0, %v5182
  %5184 = vmatmul.f32.gmra.mxu0 %v2817
  %v5185 = vpop.f32.mrf.mxu0
  %v5186 = vadd.f32 0.0, %v5185
  %5187 = vmatmul.f32.gmra.mxu0 %v2820
  %v5188 = vpop.f32.mrf.mxu0
  %v5189 = vadd.f32 0.0, %v5188
  %5190 = vmatmul.f32.gmra.mxu0 %v2823
  %v5191 = vpop.f32.mrf.mxu0
  %v5192 = vadd.f32 0.0, %v5191
  %5193 = vmatmul.f32.gmra.mxu0 %v2826
  %v5194 = vpop.f32.mrf.mxu0
  %v5195 = vadd.f32 0.0, %v5194
  %5196 = vmatmul.f32.gmra.mxu0 %v2829
  %v5197 = vpop.f32.mrf.mxu0
  %v5198 = vadd.f32 0.0, %v5197
  %5199 = vmatmul.f32.gmra.mxu0 %v2832
  %v5200 = vpop.f32.mrf.mxu0
  %v5201 = vadd.f32 0.0, %v5200
  %5202 = vmatmul.f32.gmra.mxu0 %v2835
  %v5203 = vpop.f32.mrf.mxu0
  %v5204 = vadd.f32 0.0, %v5203
  %5205 = vmatmul.f32.gmra.mxu0 %v2838
  %v5206 = vpop.f32.mrf.mxu0
  %v5207 = vadd.f32 0.0, %v5206
  %5208 = vmatmul.f32.gmra.mxu0 %v2841
  %v5209 = vpop.f32.mrf.mxu0
  %v5210 = vadd.f32 0.0, %v5209
  %5211 = vmatmul.f32.gmra.mxu0 %v2844
  %v5212 = vpop.f32.mrf.mxu0
  %v5213 = vadd.f32 0.0, %v5212
  %5214 = vmatmul.f32.gmra.mxu0 %v2847
  %v5215 = vpop.f32.mrf.mxu0
  %v5216 = vadd.f32 0.0, %v5215
  %5217 = vmatmul.f32.gmra.mxu0 %v2850
  %v5218 = vpop.f32.mrf.mxu0
  %v5219 = vadd.f32 0.0, %v5218
  %5220 = vmatmul.f32.gmra.mxu0 %v2853
  %v5221 = vpop.f32.mrf.mxu0
  %v5222 = vadd.f32 0.0, %v5221
  %5223 = vmatmul.f32.gmra.mxu0 %v2856
  %v5224 = vpop.f32.mrf.mxu0
  %v5225 = vadd.f32 0.0, %v5224
  %5226 = vmatmul.f32.gmra.mxu0 %v2859
  %v5227 = vpop.f32.mrf.mxu0
  %v5228 = vadd.f32 0.0, %v5227
  %5229 = vmatmul.f32.gmra.mxu0 %v2862
  %v5230 = vpop.f32.mrf.mxu0
  %v5231 = vadd.f32 0.0, %v5230
  %5232 = vmatmul.f32.gmra.mxu0 %v2865
  %v5233 = vpop.f32.mrf.mxu0
  %v5234 = vadd.f32 0.0, %v5233
  %5235 = vmatmul.f32.gmra.mxu0 %v2868
  %v5236 = vpop.f32.mrf.mxu0
  %v5237 = vadd.f32 0.0, %v5236
  %5238 = vmatmul.f32.gmra.mxu0 %v2871
  %v5239 = vpop.f32.mrf.mxu0
  %v5240 = vadd.f32 0.0, %v5239
  %5241 = vmatmul.f32.gmra.mxu0 %v2874
  %v5242 = vpop.f32.mrf.mxu0
  %v5243 = vadd.f32 0.0, %v5242
  %5244 = vmatmul.f32.gmra.mxu0 %v2877
  %v5245 = vpop.f32.mrf.mxu0
  %v5246 = vadd.f32 0.0, %v5245
  %5247 = vmatmul.f32.gmra.mxu0 %v2880
  %v5248 = vpop.f32.mrf.mxu0
  %v5249 = vadd.f32 0.0, %v5248
  %5250 = vmatmul.f32.gmra.mxu0 %v2883
  %v5251 = vpop.f32.mrf.mxu0
  %v5252 = vadd.f32 0.0, %v5251
  %5253 = vmatmul.f32.gmra.mxu0 %v2886
  %v5254 = vpop.f32.mrf.mxu0
  %v5255 = vadd.f32 0.0, %v5254
  %5256 = vmatmul.f32.gmra.mxu0 %v2889
  %v5257 = vpop.f32.mrf.mxu0
  %v5258 = vadd.f32 0.0, %v5257
  %5259 = vmatmul.f32.gmra.mxu0 %v2892
  %v5260 = vpop.f32.mrf.mxu0
  %v5261 = vadd.f32 0.0, %v5260
  %5262 = vmatmul.f32.gmra.mxu0 %v2895
  %v5263 = vpop.f32.mrf.mxu0
  %v5264 = vadd.f32 0.0, %v5263
  %5265 = vmatmul.f32.gmra.mxu0 %v2898
  %v5266 = vpop.f32.mrf.mxu0
  %v5267 = vadd.f32 0.0, %v5266
  %5268 = vmatmul.f32.gmra.mxu0 %v2901
  %v5269 = vpop.f32.mrf.mxu0
  %v5270 = vadd.f32 0.0, %v5269
  %5271 = vmatmul.f32.gmra.mxu0 %v2904
  %v5272 = vpop.f32.mrf.mxu0
  %v5273 = vadd.f32 0.0, %v5272
  %5274 = vmatmul.f32.gmra.mxu0 %v2907
  %v5275 = vpop.f32.mrf.mxu0
  %v5276 = vadd.f32 0.0, %v5275
  %5277 = vmatmul.f32.gmra.mxu0 %v2910
  %v5278 = vpop.f32.mrf.mxu0
  %v5279 = vadd.f32 0.0, %v5278
  %5280 = vmatmul.f32.gmra.mxu0 %v2913
  %v5281 = vpop.f32.mrf.mxu0
  %v5282 = vadd.f32 0.0, %v5281
  %5283 = vmatmul.f32.gmra.mxu0 %v2916
  %v5284 = vpop.f32.mrf.mxu0
  %v5285 = vadd.f32 0.0, %v5284
  %5286 = vmatmul.f32.gmra.mxu0 %v2919
  %v5287 = vpop.f32.mrf.mxu0
  %v5288 = vadd.f32 0.0, %v5287
  %5289 = vmatmul.f32.gmra.mxu0 %v2922
  %v5290 = vpop.f32.mrf.mxu0
  %v5291 = vadd.f32 0.0, %v5290
  %5292 = vmatmul.f32.gmra.mxu0 %v2925
  %v5293 = vpop.f32.mrf.mxu0
  %v5294 = vadd.f32 0.0, %v5293
  %5295 = vmatmul.f32.gmra.mxu0 %v2928
  %v5296 = vpop.f32.mrf.mxu0
  %v5297 = vadd.f32 0.0, %v5296
  %5298 = vmatmul.f32.gmra.mxu0 %v2931
  %v5299 = vpop.f32.mrf.mxu0
  %v5300 = vadd.f32 0.0, %v5299
  %5301 = vmatmul.f32.gmra.mxu0 %v2934
  %v5302 = vpop.f32.mrf.mxu0
  %v5303 = vadd.f32 0.0, %v5302
  %5304 = vmatmul.f32.gmra.mxu0 %v2937
  %v5305 = vpop.f32.mrf.mxu0
  %v5306 = vadd.f32 0.0, %v5305
  %5307 = vmatmul.f32.gmra.mxu0 %v2940
  %v5308 = vpop.f32.mrf.mxu0
  %v5309 = vadd.f32 0.0, %v5308
  %5310 = vmatmul.f32.gmra.mxu0 %v2943
  %v5311 = vpop.f32.mrf.mxu0
  %v5312 = vadd.f32 0.0, %v5311
  %5313 = vmatmul.f32.gmra.mxu0 %v2946
  %v5314 = vpop.f32.mrf.mxu0
  %v5315 = vadd.f32 0.0, %v5314
  %5316 = vmatmul.f32.gmra.mxu0 %v2949
  %v5317 = vpop.f32.mrf.mxu0
  %v5318 = vadd.f32 0.0, %v5317
  %5319 = vmatmul.f32.gmra.mxu0 %v2952
  %v5320 = vpop.f32.mrf.mxu0
  %v5321 = vadd.f32 0.0, %v5320
  %5322 = vmatmul.f32.gmra.mxu0 %v2955
  %v5323 = vpop.f32.mrf.mxu0
  %v5324 = vadd.f32 0.0, %v5323
  %5325 = vmatmul.f32.gmra.mxu0 %v2958
  %v5326 = vpop.f32.mrf.mxu0
  %v5327 = vadd.f32 0.0, %v5326
  %5328 = vmatmul.f32.gmra.mxu0 %v2961
  %v5329 = vpop.f32.mrf.mxu0
  %v5330 = vadd.f32 0.0, %v5329
  %5331 = vmatmul.f32.gmra.mxu0 %v2964
  %v5332 = vpop.f32.mrf.mxu0
  %v5333 = vadd.f32 0.0, %v5332
  %5334 = vmatmul.f32.gmra.mxu0 %v2967
  %v5335 = vpop.f32.mrf.mxu0
  %v5336 = vadd.f32 0.0, %v5335
  %5337 = vmatmul.f32.gmra.mxu0 %v2970
  %v5338 = vpop.f32.mrf.mxu0
  %v5339 = vadd.f32 0.0, %v5338
  %5340 = vmatmul.f32.gmra.mxu0 %v2973
  %v5341 = vpop.f32.mrf.mxu0
  %v5342 = vadd.f32 0.0, %v5341
  %5343 = vmatmul.f32.gmra.mxu0 %v2976
  %v5344 = vpop.f32.mrf.mxu0
  %v5345 = vadd.f32 0.0, %v5344
  %5346 = vmatmul.f32.gmra.mxu0 %v2979
  %v5347 = vpop.f32.mrf.mxu0
  %v5348 = vadd.f32 0.0, %v5347
  %5349 = vmatmul.f32.gmra.mxu0 %v2982
  %v5350 = vpop.f32.mrf.mxu0
  %v5351 = vadd.f32 0.0, %v5350
  %5352 = vmatmul.f32.gmra.mxu0 %v2985
  %v5353 = vpop.f32.mrf.mxu0
  %v5354 = vadd.f32 0.0, %v5353
  %5355 = vmatmul.f32.gmra.mxu0 %v2988
  %v5356 = vpop.f32.mrf.mxu0
  %v5357 = vadd.f32 0.0, %v5356
  %5358 = vmatmul.f32.gmra.mxu0 %v2991
  %v5359 = vpop.f32.mrf.mxu0
  %v5360 = vadd.f32 0.0, %v5359
  %5361 = vmatmul.f32.gmra.mxu0 %v2994
  %v5362 = vpop.f32.mrf.mxu0
  %v5363 = vadd.f32 0.0, %v5362
  %5364 = vmatmul.f32.gmra.mxu0 %v2997
  %v5365 = vpop.f32.mrf.mxu0
  %v5366 = vadd.f32 0.0, %v5365
  %5367 = vmatmul.f32.gmra.mxu0 %v3000
  %v5368 = vpop.f32.mrf.mxu0
  %v5369 = vadd.f32 0.0, %v5368
  %5370 = vmatmul.f32.gmra.mxu0 %v3003
  %v5371 = vpop.f32.mrf.mxu0
  %v5372 = vadd.f32 0.0, %v5371
  %5373 = vmatmul.f32.gmra.mxu0 %v3006
  %v5374 = vpop.f32.mrf.mxu0
  %v5375 = vadd.f32 0.0, %v5374
  %5376 = vmatmul.f32.gmra.mxu0 %v3009
  %v5377 = vpop.f32.mrf.mxu0
  %v5378 = vadd.f32 0.0, %v5377
  %5379 = vmatmul.f32.gmra.mxu0 %v3012
  %v5380 = vpop.f32.mrf.mxu0
  %v5381 = vadd.f32 0.0, %v5380
  %5382 = vmatmul.f32.gmra.mxu0 %v3015
  %v5383 = vpop.f32.mrf.mxu0
  %v5384 = vadd.f32 0.0, %v5383
  %5385 = vmatmul.f32.gmra.mxu0 %v3018
  %v5386 = vpop.f32.mrf.mxu0
  %v5387 = vadd.f32 0.0, %v5386
  %5388 = vmatmul.f32.gmra.mxu0 %v3021
  %v5389 = vpop.f32.mrf.mxu0
  %v5390 = vadd.f32 0.0, %v5389
  %5391 = vmatmul.f32.gmra.mxu0 %v3024
  %v5392 = vpop.f32.mrf.mxu0
  %v5393 = vadd.f32 0.0, %v5392
  %5394 = vmatmul.f32.gmra.mxu0 %v3027
  %v5395 = vpop.f32.mrf.mxu0
  %v5396 = vadd.f32 0.0, %v5395
  %5397 = vmatmul.f32.gmra.mxu0 %v3030
  %v5398 = vpop.f32.mrf.mxu0
  %v5399 = vadd.f32 0.0, %v5398
  %5400 = vmatmul.f32.gmra.mxu0 %v3033
  %v5401 = vpop.f32.mrf.mxu0
  %v5402 = vadd.f32 0.0, %v5401
  %5403 = vmatmul.f32.gmra.mxu0 %v3036
  %v5404 = vpop.f32.mrf.mxu0
  %v5405 = vadd.f32 0.0, %v5404
  %5406 = vmatmul.f32.gmra.mxu0 %v3039
  %v5407 = vpop.f32.mrf.mxu0
  %v5408 = vadd.f32 0.0, %v5407
  %5409 = vmatmul.f32.gmra.mxu0 %v3042
  %v5410 = vpop.f32.mrf.mxu0
  %v5411 = vadd.f32 0.0, %v5410
  %5412 = vmatmul.f32.gmra.mxu0 %v3045
  %v5413 = vpop.f32.mrf.mxu0
  %v5414 = vadd.f32 0.0, %v5413
  %5415 = vmatmul.f32.gmra.mxu0 %v3048
  %v5416 = vpop.f32.mrf.mxu0
  %v5417 = vadd.f32 0.0, %v5416
  %5418 = vmatmul.f32.gmra.mxu0 %v3051
  %v5419 = vpop.f32.mrf.mxu0
  %v5420 = vadd.f32 0.0, %v5419
  %5421 = vmatmul.f32.gmra.mxu0 %v3054
  %v5422 = vpop.f32.mrf.mxu0
  %v5423 = vadd.f32 0.0, %v5422
  %5424 = vmatmul.f32.gmra.mxu0 %v3057
  %v5425 = vpop.f32.mrf.mxu0
  %v5426 = vadd.f32 0.0, %v5425
  %5427 = vmatmul.f32.gmra.mxu0 %v3060
  %v5428 = vpop.f32.mrf.mxu0
  %v5429 = vadd.f32 0.0, %v5428
  %5430 = vmatmul.f32.gmra.mxu0 %v3063
  %v5431 = vpop.f32.mrf.mxu0
  %v5432 = vadd.f32 0.0, %v5431
  %5433 = vmatmul.f32.gmra.mxu0 %v3066
  %v5434 = vpop.f32.mrf.mxu0
  %v5435 = vadd.f32 0.0, %v5434
  %5436 = vmatmul.f32.gmra.mxu0 %v3069
  %v5437 = vpop.f32.mrf.mxu0
  %v5438 = vadd.f32 0.0, %v5437
  %5439 = vmatmul.f32.gmra.mxu0 %v3072
  %v5440 = vpop.f32.mrf.mxu0
  %v5441 = vadd.f32 0.0, %v5440
  %5442 = vmatmul.f32.gmra.mxu0 %v3075
  %v5443 = vpop.f32.mrf.mxu0
  %v5444 = vadd.f32 0.0, %v5443
  %5445 = vmatmul.f32.gmra.mxu0 %v3078
  %v5446 = vpop.f32.mrf.mxu0
  %v5447 = vadd.f32 0.0, %v5446
  %5448 = vmatmul.f32.gmra.mxu0 %v3081
  %v5449 = vpop.f32.mrf.mxu0
  %v5450 = vadd.f32 0.0, %v5449
  %5451 = vmatmul.f32.gmra.mxu0 %v3084
  %v5452 = vpop.f32.mrf.mxu0
  %v5453 = vadd.f32 0.0, %v5452
  %5454 = vmatmul.f32.gmra.mxu0 %v3087
  %v5455 = vpop.f32.mrf.mxu0
  %v5456 = vadd.f32 0.0, %v5455
  %5457 = vmatmul.f32.gmra.mxu0 %v3090
  %v5458 = vpop.f32.mrf.mxu0
  %v5459 = vadd.f32 0.0, %v5458
  %5460 = vmatmul.f32.gmra.mxu0 %v3093
  %v5461 = vpop.f32.mrf.mxu0
  %v5462 = vadd.f32 0.0, %v5461
  %5463 = vmatmul.f32.gmra.mxu0 %v3096
  %v5464 = vpop.f32.mrf.mxu0
  %v5465 = vadd.f32 0.0, %v5464
  %5466 = vmatmul.f32.gmra.mxu0 %v3099
  %v5467 = vpop.f32.mrf.mxu0
  %v5468 = vadd.f32 0.0, %v5467
  %5469 = vmatmul.f32.gmra.mxu0 %v3102
  %v5470 = vpop.f32.mrf.mxu0
  %v5471 = vadd.f32 0.0, %v5470
  %5472 = vmatmul.f32.gmra.mxu0 %v3105
  %v5473 = vpop.f32.mrf.mxu0
  %v5474 = vadd.f32 0.0, %v5473
  %5475 = vmatmul.f32.gmra.mxu0 %v3108
  %v5476 = vpop.f32.mrf.mxu0
  %v5477 = vadd.f32 0.0, %v5476
  %5478 = vmatmul.f32.gmra.mxu0 %v3111
  %v5479 = vpop.f32.mrf.mxu0
  %v5480 = vadd.f32 0.0, %v5479
  %5481 = vmatmul.f32.gmra.mxu0 %v3114
  %v5482 = vpop.f32.mrf.mxu0
  %v5483 = vadd.f32 0.0, %v5482
  %5484 = vmatmul.f32.gmra.mxu0 %v3117
  %v5485 = vpop.f32.mrf.mxu0
  %v5486 = vadd.f32 0.0, %v5485
  %5487 = vmatmul.f32.gmra.mxu0 %v3120
  %v5488 = vpop.f32.mrf.mxu0
  %v5489 = vadd.f32 0.0, %v5488
  %5490 = vmatmul.f32.gmra.mxu0 %v3123
  %v5491 = vpop.f32.mrf.mxu0
  %v5492 = vadd.f32 0.0, %v5491
  %5493 = vmatmul.f32.gmra.mxu0 %v3126
  %v5494 = vpop.f32.mrf.mxu0
  %v5495 = vadd.f32 0.0, %v5494
  %5496 = vmatmul.f32.gmra.mxu0 %v3129
  %v5497 = vpop.f32.mrf.mxu0
  %v5498 = vadd.f32 0.0, %v5497
  %5499 = vmatmul.f32.gmra.mxu0 %v3132
  %v5500 = vpop.f32.mrf.mxu0
  %v5501 = vadd.f32 0.0, %v5500
  %5502 = vmatmul.f32.gmra.mxu0 %v3135
  %v5503 = vpop.f32.mrf.mxu0
  %v5504 = vadd.f32 0.0, %v5503
  %5505 = vmatmul.f32.gmra.mxu0 %v3138
  %v5506 = vpop.f32.mrf.mxu0
  %v5507 = vadd.f32 0.0, %v5506
  %5508 = vmatmul.f32.gmra.mxu0 %v3141
  %v5509 = vpop.f32.mrf.mxu0
  %v5510 = vadd.f32 0.0, %v5509
  %5511 = vmatmul.f32.gmra.mxu0 %v3144
  %v5512 = vpop.f32.mrf.mxu0
  %v5513 = vadd.f32 0.0, %v5512
  %5514 = vmatmul.f32.gmra.mxu0 %v3147
  %v5515 = vpop.f32.mrf.mxu0
  %v5516 = vadd.f32 0.0, %v5515
  %5517 = vmatmul.f32.gmra.mxu0 %v3150
  %v5518 = vpop.f32.mrf.mxu0
  %v5519 = vadd.f32 0.0, %v5518
  %5520 = vmatmul.f32.gmra.mxu0 %v3153
  %v5521 = vpop.f32.mrf.mxu0
  %v5522 = vadd.f32 0.0, %v5521
  %5523 = vdwg.mxu0
  %v5524 = vmax.f32 %v3173, %v3761
  %v5525 = vmax.f32 %v3176, %v3764
  %v5526 = vmax.f32 %v3179, %v3767
  %v5527 = vmax.f32 %v3182, %v3770
  %v5528 = vmax.f32 %v3185, %v3773
  %v5529 = vmax.f32 %v3188, %v3776
  %v5530 = vmax.f32 %v3191, %v3779
  %v5531 = vmax.f32 %v3194, %v3782
  %v5532 = vmax.f32 %v3197, %v3785
  %v5533 = vmax.f32 %v3200, %v3788
  %v5534 = vmax.f32 %v3203, %v3791
  %v5535 = vmax.f32 %v3206, %v3794
  %v5536 = vmax.f32 %v3209, %v3797
  %v5537 = vmax.f32 %v3212, %v3800
  %v5538 = vmax.f32 %v3215, %v3803
  %v5539 = vmax.f32 %v3218, %v3806
  %v5540 = vmax.f32 %v3221, %v3809
  %v5541 = vmax.f32 %v3224, %v3812
  %v5542 = vmax.f32 %v3227, %v3815
  %v5543 = vmax.f32 %v3230, %v3818
  %v5544 = vmax.f32 %v3233, %v3821
  %v5545 = vmax.f32 %v3236, %v3824
  %v5546 = vmax.f32 %v3239, %v3827
  %v5547 = vmax.f32 %v3242, %v3830
  %v5548 = vmax.f32 %v3245, %v3833
  %v5549 = vmax.f32 %v3248, %v3836
  %v5550 = vmax.f32 %v3251, %v3839
  %v5551 = vmax.f32 %v3254, %v3842
  %v5552 = vmax.f32 %v3257, %v3845
  %v5553 = vmax.f32 %v3260, %v3848
  %v5554 = vmax.f32 %v3263, %v3851
  %v5555 = vmax.f32 %v3266, %v3854
  %v5556 = vmax.f32 %v3269, %v3857
  %v5557 = vmax.f32 %v3272, %v3860
  %v5558 = vmax.f32 %v3275, %v3863
  %v5559 = vmax.f32 %v3278, %v3866
  %v5560 = vmax.f32 %v3281, %v3869
  %v5561 = vmax.f32 %v3284, %v3872
  %v5562 = vmax.f32 %v3287, %v3875
  %v5563 = vmax.f32 %v3290, %v3878
  %v5564 = vmax.f32 %v3293, %v3881
  %v5565 = vmax.f32 %v3296, %v3884
  %v5566 = vmax.f32 %v3299, %v3887
  %v5567 = vmax.f32 %v3302, %v3890
  %v5568 = vmax.f32 %v3305, %v3893
  %v5569 = vmax.f32 %v3308, %v3896
  %v5570 = vmax.f32 %v3311, %v3899
  %v5571 = vmax.f32 %v3314, %v3902
  %v5572 = vmax.f32 %v3317, %v3905
  %v5573 = vmax.f32 %v3320, %v3908
  %v5574 = vmax.f32 %v3323, %v3911
  %v5575 = vmax.f32 %v3326, %v3914
  %v5576 = vmax.f32 %v3329, %v3917
  %v5577 = vmax.f32 %v3332, %v3920
  %v5578 = vmax.f32 %v3335, %v3923
  %v5579 = vmax.f32 %v3338, %v3926
  %v5580 = vmax.f32 %v3341, %v3929
  %v5581 = vmax.f32 %v3344, %v3932
  %v5582 = vmax.f32 %v3347, %v3935
  %v5583 = vmax.f32 %v3350, %v3938
  %v5584 = vmax.f32 %v3353, %v3941
  %v5585 = vmax.f32 %v3356, %v3944
  %v5586 = vmax.f32 %v3359, %v3947
  %v5587 = vmax.f32 %v3362, %v3950
  %v5588 = vmax.f32 %v3365, %v3953
  %v5589 = vmax.f32 %v3368, %v3956
  %v5590 = vmax.f32 %v3371, %v3959
  %v5591 = vmax.f32 %v3374, %v3962
  %v5592 = vmax.f32 %v3377, %v3965
  %v5593 = vmax.f32 %v3380, %v3968
  %v5594 = vmax.f32 %v3383, %v3971
  %v5595 = vmax.f32 %v3386, %v3974
  %v5596 = vmax.f32 %v3389, %v3977
  %v5597 = vmax.f32 %v3392, %v3980
  %v5598 = vmax.f32 %v3395, %v3983
  %v5599 = vmax.f32 %v3398, %v3986
  %v5600 = vmax.f32 %v3401, %v3989
  %v5601 = vmax.f32 %v3404, %v3992
  %v5602 = vmax.f32 %v3407, %v3995
  %v5603 = vmax.f32 %v3410, %v3998
  %v5604 = vmax.f32 %v3413, %v4001
  %v5605 = vmax.f32 %v3416, %v4004
  %v5606 = vmax.f32 %v3419, %v4007
  %v5607 = vmax.f32 %v3422, %v4010
  %v5608 = vmax.f32 %v3425, %v4013
  %v5609 = vmax.f32 %v3428, %v4016
  %v5610 = vmax.f32 %v3431, %v4019
  %v5611 = vmax.f32 %v3434, %v4022
  %v5612 = vmax.f32 %v3437, %v4025
  %v5613 = vmax.f32 %v3440, %v4028
  %v5614 = vmax.f32 %v3443, %v4031
  %v5615 = vmax.f32 %v3446, %v4034
  %v5616 = vmax.f32 %v3449, %v4037
  %v5617 = vmax.f32 %v3452, %v4040
  %v5618 = vmax.f32 %v3455, %v4043
  %v5619 = vmax.f32 %v3458, %v4046
  %v5620 = vmax.f32 %v3461, %v4049
  %v5621 = vmax.f32 %v3464, %v4052
  %v5622 = vmax.f32 %v3467, %v4055
  %v5623 = vmax.f32 %v3470, %v4058
  %v5624 = vmax.f32 %v3473, %v4061
  %v5625 = vmax.f32 %v3476, %v4064
  %v5626 = vmax.f32 %v3479, %v4067
  %v5627 = vmax.f32 %v3482, %v4070
  %v5628 = vmax.f32 %v3485, %v4073
  %v5629 = vmax.f32 %v3488, %v4076
  %v5630 = vmax.f32 %v3491, %v4079
  %v5631 = vmax.f32 %v3494, %v4082
  %v5632 = vmax.f32 %v3497, %v4085
  %v5633 = vmax.f32 %v3500, %v4088
  %v5634 = vmax.f32 %v3503, %v4091
  %v5635 = vmax.f32 %v3506, %v4094
  %v5636 = vmax.f32 %v3509, %v4097
  %v5637 = vmax.f32 %v3512, %v4100
  %v5638 = vmax.f32 %v3515, %v4103
  %v5639 = vmax.f32 %v3518, %v4106
  %v5640 = vmax.f32 %v3521, %v4109
  %v5641 = vmax.f32 %v3524, %v4112
  %v5642 = vmax.f32 %v3527, %v4115
  %v5643 = vmax.f32 %v3530, %v4118
  %v5644 = vmax.f32 %v3533, %v4121
  %v5645 = vmax.f32 %v3536, %v4124
  %v5646 = vmax.f32 %v3539, %v4127
  %v5647 = vmax.f32 %v3542, %v4130
  %v5648 = vmax.f32 %v3545, %v4133
  %v5649 = vmax.f32 %v3548, %v4136
  %v5650 = vmax.f32 %v3551, %v4139
  %v5651 = vmax.f32 %v3554, %v4142
  %v5652 = vmax.f32 %v3557, %v4145
  %v5653 = vmax.f32 %v3560, %v4148
  %v5654 = vmax.f32 %v3563, %v4151
  %v5655 = vmax.f32 %v3566, %v4154
  %v5656 = vmax.f32 %v3569, %v4157
  %v5657 = vmax.f32 %v3572, %v4160
  %v5658 = vmax.f32 %v3575, %v4163
  %v5659 = vmax.f32 %v3578, %v4166
  %v5660 = vmax.f32 %v3581, %v4169
  %v5661 = vmax.f32 %v3584, %v4172
  %v5662 = vmax.f32 %v3587, %v4175
  %v5663 = vmax.f32 %v3590, %v4178
  %v5664 = vmax.f32 %v3593, %v4181
  %v5665 = vmax.f32 %v3596, %v4184
  %v5666 = vmax.f32 %v3599, %v4187
  %v5667 = vmax.f32 %v3602, %v4190
  %v5668 = vmax.f32 %v3605, %v4193
  %v5669 = vmax.f32 %v3608, %v4196
  %v5670 = vmax.f32 %v3611, %v4199
  %v5671 = vmax.f32 %v3614, %v4202
  %v5672 = vmax.f32 %v3617, %v4205
  %v5673 = vmax.f32 %v3620, %v4208
  %v5674 = vmax.f32 %v3623, %v4211
  %v5675 = vmax.f32 %v3626, %v4214
  %v5676 = vmax.f32 %v3629, %v4217
  %v5677 = vmax.f32 %v3632, %v4220
  %v5678 = vmax.f32 %v3635, %v4223
  %v5679 = vmax.f32 %v3638, %v4226
  %v5680 = vmax.f32 %v3641, %v4229
  %v5681 = vmax.f32 %v3644, %v4232
  %v5682 = vmax.f32 %v3647, %v4235
  %v5683 = vmax.f32 %v3650, %v4238
  %v5684 = vmax.f32 %v3653, %v4241
  %v5685 = vmax.f32 %v3656, %v4244
  %v5686 = vmax.f32 %v3659, %v4247
  %v5687 = vmax.f32 %v3662, %v4250
  %v5688 = vmax.f32 %v3665, %v4253
  %v5689 = vmax.f32 %v3668, %v4256
  %v5690 = vmax.f32 %v3671, %v4259
  %v5691 = vmax.f32 %v3674, %v4262
  %v5692 = vmax.f32 %v3677, %v4265
  %v5693 = vmax.f32 %v3680, %v4268
  %v5694 = vmax.f32 %v3683, %v4271
  %v5695 = vmax.f32 %v3686, %v4274
  %v5696 = vmax.f32 %v3689, %v4277
  %v5697 = vmax.f32 %v3692, %v4280
  %v5698 = vmax.f32 %v3695, %v4283
  %v5699 = vmax.f32 %v3698, %v4286
  %v5700 = vmax.f32 %v3701, %v4289
  %v5701 = vmax.f32 %v3704, %v4292
  %v5702 = vmax.f32 %v3707, %v4295
  %v5703 = vmax.f32 %v3710, %v4298
  %v5704 = vmax.f32 %v3713, %v4301
  %v5705 = vmax.f32 %v3716, %v4304
  %v5706 = vmax.f32 %v3719, %v4307
  %v5707 = vmax.f32 %v3722, %v4310
  %v5708 = vmax.f32 %v3725, %v4313
  %v5709 = vmax.f32 %v3728, %v4316
  %v5710 = vmax.f32 %v3731, %v4319
  %v5711 = vmax.f32 %v3734, %v4322
  %v5712 = vmax.f32 %v3737, %v4325
  %v5713 = vmax.f32 %v3740, %v4328
  %v5714 = vmax.f32 %v3743, %v4331
  %v5715 = vmax.f32 %v3746, %v4334
  %v5716 = vmax.f32 %v3749, %v4337
  %v5717 = vmax.f32 %v3752, %v4340
  %v5718 = vmax.f32 %v3755, %v4343
  %v5719 = vmax.f32 %v3758, %v4346
  %v5720 = vmax.f32 %v4349, %v4937
  %v5721 = vmax.f32 %v4352, %v4940
  %v5722 = vmax.f32 %v4355, %v4943
  %v5723 = vmax.f32 %v4358, %v4946
  %v5724 = vmax.f32 %v4361, %v4949
  %v5725 = vmax.f32 %v4364, %v4952
  %v5726 = vmax.f32 %v4367, %v4955
  %v5727 = vmax.f32 %v4370, %v4958
  %v5728 = vmax.f32 %v4373, %v4961
  %v5729 = vmax.f32 %v4376, %v4964
  %v5730 = vmax.f32 %v4379, %v4967
  %v5731 = vmax.f32 %v4382, %v4970
  %v5732 = vmax.f32 %v4385, %v4973
  %v5733 = vmax.f32 %v4388, %v4976
  %v5734 = vmax.f32 %v4391, %v4979
  %v5735 = vmax.f32 %v4394, %v4982
  %v5736 = vmax.f32 %v4397, %v4985
  %v5737 = vmax.f32 %v4400, %v4988
  %v5738 = vmax.f32 %v4403, %v4991
  %v5739 = vmax.f32 %v4406, %v4994
  %v5740 = vmax.f32 %v4409, %v4997
  %v5741 = vmax.f32 %v4412, %v5000
  %v5742 = vmax.f32 %v4415, %v5003
  %v5743 = vmax.f32 %v4418, %v5006
  %v5744 = vmax.f32 %v4421, %v5009
  %v5745 = vmax.f32 %v4424, %v5012
  %v5746 = vmax.f32 %v4427, %v5015
  %v5747 = vmax.f32 %v4430, %v5018
  %v5748 = vmax.f32 %v4433, %v5021
  %v5749 = vmax.f32 %v4436, %v5024
  %v5750 = vmax.f32 %v4439, %v5027
  %v5751 = vmax.f32 %v4442, %v5030
  %v5752 = vmax.f32 %v4445, %v5033
  %v5753 = vmax.f32 %v4448, %v5036
  %v5754 = vmax.f32 %v4451, %v5039
  %v5755 = vmax.f32 %v4454, %v5042
  %v5756 = vmax.f32 %v4457, %v5045
  %v5757 = vmax.f32 %v4460, %v5048
  %v5758 = vmax.f32 %v4463, %v5051
  %v5759 = vmax.f32 %v4466, %v5054
  %v5760 = vmax.f32 %v4469, %v5057
  %v5761 = vmax.f32 %v4472, %v5060
  %v5762 = vmax.f32 %v4475, %v5063
  %v5763 = vmax.f32 %v4478, %v5066
  %v5764 = vmax.f32 %v4481, %v5069
  %v5765 = vmax.f32 %v4484, %v5072
  %v5766 = vmax.f32 %v4487, %v5075
  %v5767 = vmax.f32 %v4490, %v5078
  %v5768 = vmax.f32 %v4493, %v5081
  %v5769 = vmax.f32 %v4496, %v5084
  %v5770 = vmax.f32 %v4499, %v5087
  %v5771 = vmax.f32 %v4502, %v5090
  %v5772 = vmax.f32 %v4505, %v5093
  %v5773 = vmax.f32 %v4508, %v5096
  %v5774 = vmax.f32 %v4511, %v5099
  %v5775 = vmax.f32 %v4514, %v5102
  %v5776 = vmax.f32 %v4517, %v5105
  %v5777 = vmax.f32 %v4520, %v5108
  %v5778 = vmax.f32 %v4523, %v5111
  %v5779 = vmax.f32 %v4526, %v5114
  %v5780 = vmax.f32 %v4529, %v5117
  %v5781 = vmax.f32 %v4532, %v5120
  %v5782 = vmax.f32 %v4535, %v5123
  %v5783 = vmax.f32 %v4538, %v5126
  %v5784 = vmax.f32 %v4541, %v5129
  %v5785 = vmax.f32 %v4544, %v5132
  %v5786 = vmax.f32 %v4547, %v5135
  %v5787 = vmax.f32 %v4550, %v5138
  %v5788 = vmax.f32 %v4553, %v5141
  %v5789 = vmax.f32 %v4556, %v5144
  %v5790 = vmax.f32 %v4559, %v5147
  %v5791 = vmax.f32 %v4562, %v5150
  %v5792 = vmax.f32 %v4565, %v5153
  %v5793 = vmax.f32 %v4568, %v5156
  %v5794 = vmax.f32 %v4571, %v5159
  %v5795 = vmax.f32 %v4574, %v5162
  %v5796 = vmax.f32 %v4577, %v5165
  %v5797 = vmax.f32 %v4580, %v5168
  %v5798 = vmax.f32 %v4583, %v5171
  %v5799 = vmax.f32 %v4586, %v5174
  %v5800 = vmax.f32 %v4589, %v5177
  %v5801 = vmax.f32 %v4592, %v5180
  %v5802 = vmax.f32 %v4595, %v5183
  %v5803 = vmax.f32 %v4598, %v5186
  %v5804 = vmax.f32 %v4601, %v5189
  %v5805 = vmax.f32 %v4604, %v5192
  %v5806 = vmax.f32 %v4607, %v5195
  %v5807 = vmax.f32 %v4610, %v5198
  %v5808 = vmax.f32 %v4613, %v5201
  %v5809 = vmax.f32 %v4616, %v5204
  %v5810 = vmax.f32 %v4619, %v5207
  %v5811 = vmax.f32 %v4622, %v5210
  %v5812 = vmax.f32 %v4625, %v5213
  %v5813 = vmax.f32 %v4628, %v5216
  %v5814 = vmax.f32 %v4631, %v5219
  %v5815 = vmax.f32 %v4634, %v5222
  %v5816 = vmax.f32 %v4637, %v5225
  %v5817 = vmax.f32 %v4640, %v5228
  %v5818 = vmax.f32 %v4643, %v5231
  %v5819 = vmax.f32 %v4646, %v5234
  %v5820 = vmax.f32 %v4649, %v5237
  %v5821 = vmax.f32 %v4652, %v5240
  %v5822 = vmax.f32 %v4655, %v5243
  %v5823 = vmax.f32 %v4658, %v5246
  %v5824 = vmax.f32 %v4661, %v5249
  %v5825 = vmax.f32 %v4664, %v5252
  %v5826 = vmax.f32 %v4667, %v5255
  %v5827 = vmax.f32 %v4670, %v5258
  %v5828 = vmax.f32 %v4673, %v5261
  %v5829 = vmax.f32 %v4676, %v5264
  %v5830 = vmax.f32 %v4679, %v5267
  %v5831 = vmax.f32 %v4682, %v5270
  %v5832 = vmax.f32 %v4685, %v5273
  %v5833 = vmax.f32 %v4688, %v5276
  %v5834 = vmax.f32 %v4691, %v5279
  %v5835 = vmax.f32 %v4694, %v5282
  %v5836 = vmax.f32 %v4697, %v5285
  %v5837 = vmax.f32 %v4700, %v5288
  %v5838 = vmax.f32 %v4703, %v5291
  %v5839 = vmax.f32 %v4706, %v5294
  %v5840 = vmax.f32 %v4709, %v5297
  %v5841 = vmax.f32 %v4712, %v5300
  %v5842 = vmax.f32 %v4715, %v5303
  %v5843 = vmax.f32 %v4718, %v5306
  %v5844 = vmax.f32 %v4721, %v5309
  %v5845 = vmax.f32 %v4724, %v5312
  %v5846 = vmax.f32 %v4727, %v5315
  %v5847 = vmax.f32 %v4730, %v5318
  %v5848 = vmax.f32 %v4733, %v5321
  %v5849 = vmax.f32 %v4736, %v5324
  %v5850 = vmax.f32 %v4739, %v5327
  %v5851 = vmax.f32 %v4742, %v5330
  %v5852 = vmax.f32 %v4745, %v5333
  %v5853 = vmax.f32 %v4748, %v5336
  %v5854 = vmax.f32 %v4751, %v5339
  %v5855 = vmax.f32 %v4754, %v5342
  %v5856 = vmax.f32 %v4757, %v5345
  %v5857 = vmax.f32 %v4760, %v5348
  %v5858 = vmax.f32 %v4763, %v5351
  %v5859 = vmax.f32 %v4766, %v5354
  %v5860 = vmax.f32 %v4769, %v5357
  %v5861 = vmax.f32 %v4772, %v5360
  %v5862 = vmax.f32 %v4775, %v5363
  %v5863 = vmax.f32 %v4778, %v5366
  %v5864 = vmax.f32 %v4781, %v5369
  %v5865 = vmax.f32 %v4784, %v5372
  %v5866 = vmax.f32 %v4787, %v5375
  %v5867 = vmax.f32 %v4790, %v5378
  %v5868 = vmax.f32 %v4793, %v5381
  %v5869 = vmax.f32 %v4796, %v5384
  %v5870 = vmax.f32 %v4799, %v5387
  %v5871 = vmax.f32 %v4802, %v5390
  %v5872 = vmax.f32 %v4805, %v5393
  %v5873 = vmax.f32 %v4808, %v5396
  %v5874 = vmax.f32 %v4811, %v5399
  %v5875 = vmax.f32 %v4814, %v5402
  %v5876 = vmax.f32 %v4817, %v5405
  %v5877 = vmax.f32 %v4820, %v5408
  %v5878 = vmax.f32 %v4823, %v5411
  %v5879 = vmax.f32 %v4826, %v5414
  %v5880 = vmax.f32 %v4829, %v5417
  %v5881 = vmax.f32 %v4832, %v5420
  %v5882 = vmax.f32 %v4835, %v5423
  %v5883 = vmax.f32 %v4838, %v5426
  %v5884 = vmax.f32 %v4841, %v5429
  %v5885 = vmax.f32 %v4844, %v5432
  %v5886 = vmax.f32 %v4847, %v5435
  %v5887 = vmax.f32 %v4850, %v5438
  %v5888 = vmax.f32 %v4853, %v5441
  %v5889 = vmax.f32 %v4856, %v5444
  %v5890 = vmax.f32 %v4859, %v5447
  %v5891 = vmax.f32 %v4862, %v5450
  %v5892 = vmax.f32 %v4865, %v5453
  %v5893 = vmax.f32 %v4868, %v5456
  %v5894 = vmax.f32 %v4871, %v5459
  %v5895 = vmax.f32 %v4874, %v5462
  %v5896 = vmax.f32 %v4877, %v5465
  %v5897 = vmax.f32 %v4880, %v5468
  %v5898 = vmax.f32 %v4883, %v5471
  %v5899 = vmax.f32 %v4886, %v5474
  %v5900 = vmax.f32 %v4889, %v5477
  %v5901 = vmax.f32 %v4892, %v5480
  %v5902 = vmax.f32 %v4895, %v5483
  %v5903 = vmax.f32 %v4898, %v5486
  %v5904 = vmax.f32 %v4901, %v5489
  %v5905 = vmax.f32 %v4904, %v5492
  %v5906 = vmax.f32 %v4907, %v5495
  %v5907 = vmax.f32 %v4910, %v5498
  %v5908 = vmax.f32 %v4913, %v5501
  %v5909 = vmax.f32 %v4916, %v5504
  %v5910 = vmax.f32 %v4919, %v5507
  %v5911 = vmax.f32 %v4922, %v5510
  %v5912 = vmax.f32 %v4925, %v5513
  %v5913 = vmax.f32 %v4928, %v5516
  %v5914 = vmax.f32 %v4931, %v5519
  %v5915 = vmax.f32 %v4934, %v5522
  %v5916 = vmax.f32 %v5524, %v5720
  %v5917 = vmax.f32 %v5525, %v5721
  %v5918 = vmax.f32 %v5526, %v5722
  %v5919 = vmax.f32 %v5527, %v5723
  %v5920 = vmax.f32 %v5528, %v5724
  %v5921 = vmax.f32 %v5529, %v5725
  %v5922 = vmax.f32 %v5530, %v5726
  %v5923 = vmax.f32 %v5531, %v5727
  %v5924 = vmax.f32 %v5532, %v5728
  %v5925 = vmax.f32 %v5533, %v5729
  %v5926 = vmax.f32 %v5534, %v5730
  %v5927 = vmax.f32 %v5535, %v5731
  %v5928 = vmax.f32 %v5536, %v5732
  %v5929 = vmax.f32 %v5537, %v5733
  %v5930 = vmax.f32 %v5538, %v5734
  %v5931 = vmax.f32 %v5539, %v5735
  %v5932 = vmax.f32 %v5540, %v5736
  %v5933 = vmax.f32 %v5541, %v5737
  %v5934 = vmax.f32 %v5542, %v5738
  %v5935 = vmax.f32 %v5543, %v5739
  %v5936 = vmax.f32 %v5544, %v5740
  %v5937 = vmax.f32 %v5545, %v5741
  %v5938 = vmax.f32 %v5546, %v5742
  %v5939 = vmax.f32 %v5547, %v5743
  %v5940 = vmax.f32 %v5548, %v5744
  %v5941 = vmax.f32 %v5549, %v5745
  %v5942 = vmax.f32 %v5550, %v5746
  %v5943 = vmax.f32 %v5551, %v5747
  %v5944 = vmax.f32 %v5552, %v5748
  %v5945 = vmax.f32 %v5553, %v5749
  %v5946 = vmax.f32 %v5554, %v5750
  %v5947 = vmax.f32 %v5555, %v5751
  %v5948 = vmax.f32 %v5556, %v5752
  %v5949 = vmax.f32 %v5557, %v5753
  %v5950 = vmax.f32 %v5558, %v5754
  %v5951 = vmax.f32 %v5559, %v5755
  %v5952 = vmax.f32 %v5560, %v5756
  %v5953 = vmax.f32 %v5561, %v5757
  %v5954 = vmax.f32 %v5562, %v5758
  %v5955 = vmax.f32 %v5563, %v5759
  %v5956 = vmax.f32 %v5564, %v5760
  %v5957 = vmax.f32 %v5565, %v5761
  %v5958 = vmax.f32 %v5566, %v5762
  %v5959 = vmax.f32 %v5567, %v5763
  %v5960 = vmax.f32 %v5568, %v5764
  %v5961 = vmax.f32 %v5569, %v5765
  %v5962 = vmax.f32 %v5570, %v5766
  %v5963 = vmax.f32 %v5571, %v5767
  %v5964 = vmax.f32 %v5572, %v5768
  %v5965 = vmax.f32 %v5573, %v5769
  %v5966 = vmax.f32 %v5574, %v5770
  %v5967 = vmax.f32 %v5575, %v5771
  %v5968 = vmax.f32 %v5576, %v5772
  %v5969 = vmax.f32 %v5577, %v5773
  %v5970 = vmax.f32 %v5578, %v5774
  %v5971 = vmax.f32 %v5579, %v5775
  %v5972 = vmax.f32 %v5580, %v5776
  %v5973 = vmax.f32 %v5581, %v5777
  %v5974 = vmax.f32 %v5582, %v5778
  %v5975 = vmax.f32 %v5583, %v5779
  %v5976 = vmax.f32 %v5584, %v5780
  %v5977 = vmax.f32 %v5585, %v5781
  %v5978 = vmax.f32 %v5586, %v5782
  %v5979 = vmax.f32 %v5587, %v5783
  %v5980 = vmax.f32 %v5588, %v5784
  %v5981 = vmax.f32 %v5589, %v5785
  %v5982 = vmax.f32 %v5590, %v5786
  %v5983 = vmax.f32 %v5591, %v5787
  %v5984 = vmax.f32 %v5592, %v5788
  %v5985 = vmax.f32 %v5593, %v5789
  %v5986 = vmax.f32 %v5594, %v5790
  %v5987 = vmax.f32 %v5595, %v5791
  %v5988 = vmax.f32 %v5596, %v5792
  %v5989 = vmax.f32 %v5597, %v5793
  %v5990 = vmax.f32 %v5598, %v5794
  %v5991 = vmax.f32 %v5599, %v5795
  %v5992 = vmax.f32 %v5600, %v5796
  %v5993 = vmax.f32 %v5601, %v5797
  %v5994 = vmax.f32 %v5602, %v5798
  %v5995 = vmax.f32 %v5603, %v5799
  %v5996 = vmax.f32 %v5604, %v5800
  %v5997 = vmax.f32 %v5605, %v5801
  %v5998 = vmax.f32 %v5606, %v5802
  %v5999 = vmax.f32 %v5607, %v5803
  %v6000 = vmax.f32 %v5608, %v5804
  %v6001 = vmax.f32 %v5609, %v5805
  %v6002 = vmax.f32 %v5610, %v5806
  %v6003 = vmax.f32 %v5611, %v5807
  %v6004 = vmax.f32 %v5612, %v5808
  %v6005 = vmax.f32 %v5613, %v5809
  %v6006 = vmax.f32 %v5614, %v5810
  %v6007 = vmax.f32 %v5615, %v5811
  %v6008 = vmax.f32 %v5616, %v5812
  %v6009 = vmax.f32 %v5617, %v5813
  %v6010 = vmax.f32 %v5618, %v5814
  %v6011 = vmax.f32 %v5619, %v5815
  %v6012 = vmax.f32 %v5620, %v5816
  %v6013 = vmax.f32 %v5621, %v5817
  %v6014 = vmax.f32 %v5622, %v5818
  %v6015 = vmax.f32 %v5623, %v5819
  %v6016 = vmax.f32 %v5624, %v5820
  %v6017 = vmax.f32 %v5625, %v5821
  %v6018 = vmax.f32 %v5626, %v5822
  %v6019 = vmax.f32 %v5627, %v5823
  %v6020 = vmax.f32 %v5628, %v5824
  %v6021 = vmax.f32 %v5629, %v5825
  %v6022 = vmax.f32 %v5630, %v5826
  %v6023 = vmax.f32 %v5631, %v5827
  %v6024 = vmax.f32 %v5632, %v5828
  %v6025 = vmax.f32 %v5633, %v5829
  %v6026 = vmax.f32 %v5634, %v5830
  %v6027 = vmax.f32 %v5635, %v5831
  %v6028 = vmax.f32 %v5636, %v5832
  %v6029 = vmax.f32 %v5637, %v5833
  %v6030 = vmax.f32 %v5638, %v5834
  %v6031 = vmax.f32 %v5639, %v5835
  %v6032 = vmax.f32 %v5640, %v5836
  %v6033 = vmax.f32 %v5641, %v5837
  %v6034 = vmax.f32 %v5642, %v5838
  %v6035 = vmax.f32 %v5643, %v5839
  %v6036 = vmax.f32 %v5644, %v5840
  %v6037 = vmax.f32 %v5645, %v5841
  %v6038 = vmax.f32 %v5646, %v5842
  %v6039 = vmax.f32 %v5647, %v5843
  %v6040 = vmax.f32 %v5648, %v5844
  %v6041 = vmax.f32 %v5649, %v5845
  %v6042 = vmax.f32 %v5650, %v5846
  %v6043 = vmax.f32 %v5651, %v5847
  %v6044 = vmax.f32 %v5652, %v5848
  %v6045 = vmax.f32 %v5653, %v5849
  %v6046 = vmax.f32 %v5654, %v5850
  %v6047 = vmax.f32 %v5655, %v5851
  %v6048 = vmax.f32 %v5656, %v5852
  %v6049 = vmax.f32 %v5657, %v5853
  %v6050 = vmax.f32 %v5658, %v5854
  %v6051 = vmax.f32 %v5659, %v5855
  %v6052 = vmax.f32 %v5660, %v5856
  %v6053 = vmax.f32 %v5661, %v5857
  %v6054 = vmax.f32 %v5662, %v5858
  %v6055 = vmax.f32 %v5663, %v5859
  %v6056 = vmax.f32 %v5664, %v5860
  %v6057 = vmax.f32 %v5665, %v5861
  %v6058 = vmax.f32 %v5666, %v5862
  %v6059 = vmax.f32 %v5667, %v5863
  %v6060 = vmax.f32 %v5668, %v5864
  %v6061 = vmax.f32 %v5669, %v5865
  %v6062 = vmax.f32 %v5670, %v5866
  %v6063 = vmax.f32 %v5671, %v5867
  %v6064 = vmax.f32 %v5672, %v5868
  %v6065 = vmax.f32 %v5673, %v5869
  %v6066 = vmax.f32 %v5674, %v5870
  %v6067 = vmax.f32 %v5675, %v5871
  %v6068 = vmax.f32 %v5676, %v5872
  %v6069 = vmax.f32 %v5677, %v5873
  %v6070 = vmax.f32 %v5678, %v5874
  %v6071 = vmax.f32 %v5679, %v5875
  %v6072 = vmax.f32 %v5680, %v5876
  %v6073 = vmax.f32 %v5681, %v5877
  %v6074 = vmax.f32 %v5682, %v5878
  %v6075 = vmax.f32 %v5683, %v5879
  %v6076 = vmax.f32 %v5684, %v5880
  %v6077 = vmax.f32 %v5685, %v5881
  %v6078 = vmax.f32 %v5686, %v5882
  %v6079 = vmax.f32 %v5687, %v5883
  %v6080 = vmax.f32 %v5688, %v5884
  %v6081 = vmax.f32 %v5689, %v5885
  %v6082 = vmax.f32 %v5690, %v5886
  %v6083 = vmax.f32 %v5691, %v5887
  %v6084 = vmax.f32 %v5692, %v5888
  %v6085 = vmax.f32 %v5693, %v5889
  %v6086 = vmax.f32 %v5694, %v5890
  %v6087 = vmax.f32 %v5695, %v5891
  %v6088 = vmax.f32 %v5696, %v5892
  %v6089 = vmax.f32 %v5697, %v5893
  %v6090 = vmax.f32 %v5698, %v5894
  %v6091 = vmax.f32 %v5699, %v5895
  %v6092 = vmax.f32 %v5700, %v5896
  %v6093 = vmax.f32 %v5701, %v5897
  %v6094 = vmax.f32 %v5702, %v5898
  %v6095 = vmax.f32 %v5703, %v5899
  %v6096 = vmax.f32 %v5704, %v5900
  %v6097 = vmax.f32 %v5705, %v5901
  %v6098 = vmax.f32 %v5706, %v5902
  %v6099 = vmax.f32 %v5707, %v5903
  %v6100 = vmax.f32 %v5708, %v5904
  %v6101 = vmax.f32 %v5709, %v5905
  %v6102 = vmax.f32 %v5710, %v5906
  %v6103 = vmax.f32 %v5711, %v5907
  %v6104 = vmax.f32 %v5712, %v5908
  %v6105 = vmax.f32 %v5713, %v5909
  %v6106 = vmax.f32 %v5714, %v5910
  %v6107 = vmax.f32 %v5715, %v5911
  %v6108 = vmax.f32 %v5716, %v5912
  %v6109 = vmax.f32 %v5717, %v5913
  %v6110 = vmax.f32 %v5718, %v5914
  %v6111 = vmax.f32 %v5719, %v5915
  %v6112 = vld [vmem:[%s2] sm:$0x1]
  %v6114 = vperm.slane %v6112, 0
  %v6116 = vadd.f32 %v5916, %v6114
  %v6117 = vadd.f32 %v5917, %v6114
  %v6118 = vadd.f32 %v5918, %v6114
  %v6119 = vadd.f32 %v5919, %v6114
  %v6120 = vadd.f32 %v5920, %v6114
  %v6121 = vadd.f32 %v5921, %v6114
  %v6122 = vadd.f32 %v5922, %v6114
  %v6123 = vadd.f32 %v5923, %v6114
  %v6124 = vadd.f32 %v5924, %v6114
  %v6125 = vadd.f32 %v5925, %v6114
  %v6126 = vadd.f32 %v5926, %v6114
  %v6127 = vadd.f32 %v5927, %v6114
  %v6128 = vadd.f32 %v5928, %v6114
  %v6129 = vadd.f32 %v5929, %v6114
  %v6130 = vadd.f32 %v5930, %v6114
  %v6131 = vadd.f32 %v5931, %v6114
  %v6132 = vadd.f32 %v5932, %v6114
  %v6133 = vadd.f32 %v5933, %v6114
  %v6134 = vadd.f32 %v5934, %v6114
  %v6135 = vadd.f32 %v5935, %v6114
  %v6136 = vadd.f32 %v5936, %v6114
  %v6137 = vadd.f32 %v5937, %v6114
  %v6138 = vadd.f32 %v5938, %v6114
  %v6139 = vadd.f32 %v5939, %v6114
  %v6140 = vadd.f32 %v5940, %v6114
  %v6141 = vadd.f32 %v5941, %v6114
  %v6142 = vadd.f32 %v5942, %v6114
  %v6143 = vadd.f32 %v5943, %v6114
  %v6144 = vadd.f32 %v5944, %v6114
  %v6145 = vadd.f32 %v5945, %v6114
  %v6146 = vadd.f32 %v5946, %v6114
  %v6147 = vadd.f32 %v5947, %v6114
  %v6148 = vadd.f32 %v5948, %v6114
  %v6149 = vadd.f32 %v5949, %v6114
  %v6150 = vadd.f32 %v5950, %v6114
  %v6151 = vadd.f32 %v5951, %v6114
  %v6152 = vadd.f32 %v5952, %v6114
  %v6153 = vadd.f32 %v5953, %v6114
  %v6154 = vadd.f32 %v5954, %v6114
  %v6155 = vadd.f32 %v5955, %v6114
  %v6156 = vadd.f32 %v5956, %v6114
  %v6157 = vadd.f32 %v5957, %v6114
  %v6158 = vadd.f32 %v5958, %v6114
  %v6159 = vadd.f32 %v5959, %v6114
  %v6160 = vadd.f32 %v5960, %v6114
  %v6161 = vadd.f32 %v5961, %v6114
  %v6162 = vadd.f32 %v5962, %v6114
  %v6163 = vadd.f32 %v5963, %v6114
  %v6164 = vadd.f32 %v5964, %v6114
  %v6165 = vadd.f32 %v5965, %v6114
  %v6166 = vadd.f32 %v5966, %v6114
  %v6167 = vadd.f32 %v5967, %v6114
  %v6168 = vadd.f32 %v5968, %v6114
  %v6169 = vadd.f32 %v5969, %v6114
  %v6170 = vadd.f32 %v5970, %v6114
  %v6171 = vadd.f32 %v5971, %v6114
  %v6172 = vadd.f32 %v5972, %v6114
  %v6173 = vadd.f32 %v5973, %v6114
  %v6174 = vadd.f32 %v5974, %v6114
  %v6175 = vadd.f32 %v5975, %v6114
  %v6176 = vadd.f32 %v5976, %v6114
  %v6177 = vadd.f32 %v5977, %v6114
  %v6178 = vadd.f32 %v5978, %v6114
  %v6179 = vadd.f32 %v5979, %v6114
  %v6180 = vadd.f32 %v5980, %v6114
  %v6181 = vadd.f32 %v5981, %v6114
  %v6182 = vadd.f32 %v5982, %v6114
  %v6183 = vadd.f32 %v5983, %v6114
  %v6184 = vadd.f32 %v5984, %v6114
  %v6185 = vadd.f32 %v5985, %v6114
  %v6186 = vadd.f32 %v5986, %v6114
  %v6187 = vadd.f32 %v5987, %v6114
  %v6188 = vadd.f32 %v5988, %v6114
  %v6189 = vadd.f32 %v5989, %v6114
  %v6190 = vadd.f32 %v5990, %v6114
  %v6191 = vadd.f32 %v5991, %v6114
  %v6192 = vadd.f32 %v5992, %v6114
  %v6193 = vadd.f32 %v5993, %v6114
  %v6194 = vadd.f32 %v5994, %v6114
  %v6195 = vadd.f32 %v5995, %v6114
  %v6196 = vadd.f32 %v5996, %v6114
  %v6197 = vadd.f32 %v5997, %v6114
  %v6198 = vadd.f32 %v5998, %v6114
  %v6199 = vadd.f32 %v5999, %v6114
  %v6200 = vadd.f32 %v6000, %v6114
  %v6201 = vadd.f32 %v6001, %v6114
  %v6202 = vadd.f32 %v6002, %v6114
  %v6203 = vadd.f32 %v6003, %v6114
  %v6204 = vadd.f32 %v6004, %v6114
  %v6205 = vadd.f32 %v6005, %v6114
  %v6206 = vadd.f32 %v6006, %v6114
  %v6207 = vadd.f32 %v6007, %v6114
  %v6208 = vadd.f32 %v6008, %v6114
  %v6209 = vadd.f32 %v6009, %v6114
  %v6210 = vadd.f32 %v6010, %v6114
  %v6211 = vadd.f32 %v6011, %v6114
  %v6212 = vadd.f32 %v6012, %v6114
  %v6213 = vadd.f32 %v6013, %v6114
  %v6214 = vadd.f32 %v6014, %v6114
  %v6215 = vadd.f32 %v6015, %v6114
  %v6216 = vadd.f32 %v6016, %v6114
  %v6217 = vadd.f32 %v6017, %v6114
  %v6218 = vadd.f32 %v6018, %v6114
  %v6219 = vadd.f32 %v6019, %v6114
  %v6220 = vadd.f32 %v6020, %v6114
  %v6221 = vadd.f32 %v6021, %v6114
  %v6222 = vadd.f32 %v6022, %v6114
  %v6223 = vadd.f32 %v6023, %v6114
  %v6224 = vadd.f32 %v6024, %v6114
  %v6225 = vadd.f32 %v6025, %v6114
  %v6226 = vadd.f32 %v6026, %v6114
  %v6227 = vadd.f32 %v6027, %v6114
  %v6228 = vadd.f32 %v6028, %v6114
  %v6229 = vadd.f32 %v6029, %v6114
  %v6230 = vadd.f32 %v6030, %v6114
  %v6231 = vadd.f32 %v6031, %v6114
  %v6232 = vadd.f32 %v6032, %v6114
  %v6233 = vadd.f32 %v6033, %v6114
  %v6234 = vadd.f32 %v6034, %v6114
  %v6235 = vadd.f32 %v6035, %v6114
  %v6236 = vadd.f32 %v6036, %v6114
  %v6237 = vadd.f32 %v6037, %v6114
  %v6238 = vadd.f32 %v6038, %v6114
  %v6239 = vadd.f32 %v6039, %v6114
  %v6240 = vadd.f32 %v6040, %v6114
  %v6241 = vadd.f32 %v6041, %v6114
  %v6242 = vadd.f32 %v6042, %v6114
  %v6243 = vadd.f32 %v6043, %v6114
  %v6244 = vadd.f32 %v6044, %v6114
  %v6245 = vadd.f32 %v6045, %v6114
  %v6246 = vadd.f32 %v6046, %v6114
  %v6247 = vadd.f32 %v6047, %v6114
  %v6248 = vadd.f32 %v6048, %v6114
  %v6249 = vadd.f32 %v6049, %v6114
  %v6250 = vadd.f32 %v6050, %v6114
  %v6251 = vadd.f32 %v6051, %v6114
  %v6252 = vadd.f32 %v6052, %v6114
  %v6253 = vadd.f32 %v6053, %v6114
  %v6254 = vadd.f32 %v6054, %v6114
  %v6255 = vadd.f32 %v6055, %v6114
  %v6256 = vadd.f32 %v6056, %v6114
  %v6257 = vadd.f32 %v6057, %v6114
  %v6258 = vadd.f32 %v6058, %v6114
  %v6259 = vadd.f32 %v6059, %v6114
  %v6260 = vadd.f32 %v6060, %v6114
  %v6261 = vadd.f32 %v6061, %v6114
  %v6262 = vadd.f32 %v6062, %v6114
  %v6263 = vadd.f32 %v6063, %v6114
  %v6264 = vadd.f32 %v6064, %v6114
  %v6265 = vadd.f32 %v6065, %v6114
  %v6266 = vadd.f32 %v6066, %v6114
  %v6267 = vadd.f32 %v6067, %v6114
  %v6268 = vadd.f32 %v6068, %v6114
  %v6269 = vadd.f32 %v6069, %v6114
  %v6270 = vadd.f32 %v6070, %v6114
  %v6271 = vadd.f32 %v6071, %v6114
  %v6272 = vadd.f32 %v6072, %v6114
  %v6273 = vadd.f32 %v6073, %v6114
  %v6274 = vadd.f32 %v6074, %v6114
  %v6275 = vadd.f32 %v6075, %v6114
  %v6276 = vadd.f32 %v6076, %v6114
  %v6277 = vadd.f32 %v6077, %v6114
  %v6278 = vadd.f32 %v6078, %v6114
  %v6279 = vadd.f32 %v6079, %v6114
  %v6280 = vadd.f32 %v6080, %v6114
  %v6281 = vadd.f32 %v6081, %v6114
  %v6282 = vadd.f32 %v6082, %v6114
  %v6283 = vadd.f32 %v6083, %v6114
  %v6284 = vadd.f32 %v6084, %v6114
  %v6285 = vadd.f32 %v6085, %v6114
  %v6286 = vadd.f32 %v6086, %v6114
  %v6287 = vadd.f32 %v6087, %v6114
  %v6288 = vadd.f32 %v6088, %v6114
  %v6289 = vadd.f32 %v6089, %v6114
  %v6290 = vadd.f32 %v6090, %v6114
  %v6291 = vadd.f32 %v6091, %v6114
  %v6292 = vadd.f32 %v6092, %v6114
  %v6293 = vadd.f32 %v6093, %v6114
  %v6294 = vadd.f32 %v6094, %v6114
  %v6295 = vadd.f32 %v6095, %v6114
  %v6296 = vadd.f32 %v6096, %v6114
  %v6297 = vadd.f32 %v6097, %v6114
  %v6298 = vadd.f32 %v6098, %v6114
  %v6299 = vadd.f32 %v6099, %v6114
  %v6300 = vadd.f32 %v6100, %v6114
  %v6301 = vadd.f32 %v6101, %v6114
  %v6302 = vadd.f32 %v6102, %v6114
  %v6303 = vadd.f32 %v6103, %v6114
  %v6304 = vadd.f32 %v6104, %v6114
  %v6305 = vadd.f32 %v6105, %v6114
  %v6306 = vadd.f32 %v6106, %v6114
  %v6307 = vadd.f32 %v6107, %v6114
  %v6308 = vadd.f32 %v6108, %v6114
  %v6309 = vadd.f32 %v6109, %v6114
  %v6310 = vadd.f32 %v6110, %v6114
  %v6311 = vadd.f32 %v6111, %v6114
  %v6312 = vmax.f32 %v6116, 0.0
  %v6313 = vmax.f32 %v6117, 0.0
  %v6314 = vmax.f32 %v6118, 0.0
  %v6315 = vmax.f32 %v6119, 0.0
  %v6316 = vmax.f32 %v6120, 0.0
  %v6317 = vmax.f32 %v6121, 0.0
  %v6318 = vmax.f32 %v6122, 0.0
  %v6319 = vmax.f32 %v6123, 0.0
  %v6320 = vmax.f32 %v6124, 0.0
  %v6321 = vmax.f32 %v6125, 0.0
  %v6322 = vmax.f32 %v6126, 0.0
  %v6323 = vmax.f32 %v6127, 0.0
  %v6324 = vmax.f32 %v6128, 0.0
  %v6325 = vmax.f32 %v6129, 0.0
  %v6326 = vmax.f32 %v6130, 0.0
  %v6327 = vmax.f32 %v6131, 0.0
  %v6328 = vmax.f32 %v6132, 0.0
  %v6329 = vmax.f32 %v6133, 0.0
  %v6330 = vmax.f32 %v6134, 0.0
  %v6331 = vmax.f32 %v6135, 0.0
  %v6332 = vmax.f32 %v6136, 0.0
  %v6333 = vmax.f32 %v6137, 0.0
  %v6334 = vmax.f32 %v6138, 0.0
  %v6335 = vmax.f32 %v6139, 0.0
  %v6336 = vmax.f32 %v6140, 0.0
  %v6337 = vmax.f32 %v6141, 0.0
  %v6338 = vmax.f32 %v6142, 0.0
  %v6339 = vmax.f32 %v6143, 0.0
  %v6340 = vmax.f32 %v6144, 0.0
  %v6341 = vmax.f32 %v6145, 0.0
  %v6342 = vmax.f32 %v6146, 0.0
  %v6343 = vmax.f32 %v6147, 0.0
  %v6344 = vmax.f32 %v6148, 0.0
  %v6345 = vmax.f32 %v6149, 0.0
  %v6346 = vmax.f32 %v6150, 0.0
  %v6347 = vmax.f32 %v6151, 0.0
  %v6348 = vmax.f32 %v6152, 0.0
  %v6349 = vmax.f32 %v6153, 0.0
  %v6350 = vmax.f32 %v6154, 0.0
  %v6351 = vmax.f32 %v6155, 0.0
  %v6352 = vmax.f32 %v6156, 0.0
  %v6353 = vmax.f32 %v6157, 0.0
  %v6354 = vmax.f32 %v6158, 0.0
  %v6355 = vmax.f32 %v6159, 0.0
  %v6356 = vmax.f32 %v6160, 0.0
  %v6357 = vmax.f32 %v6161, 0.0
  %v6358 = vmax.f32 %v6162, 0.0
  %v6359 = vmax.f32 %v6163, 0.0
  %v6360 = vmax.f32 %v6164, 0.0
  %v6361 = vmax.f32 %v6165, 0.0
  %v6362 = vmax.f32 %v6166, 0.0
  %v6363 = vmax.f32 %v6167, 0.0
  %v6364 = vmax.f32 %v6168, 0.0
  %v6365 = vmax.f32 %v6169, 0.0
  %v6366 = vmax.f32 %v6170, 0.0
  %v6367 = vmax.f32 %v6171, 0.0
  %v6368 = vmax.f32 %v6172, 0.0
  %v6369 = vmax.f32 %v6173, 0.0
  %v6370 = vmax.f32 %v6174, 0.0
  %v6371 = vmax.f32 %v6175, 0.0
  %v6372 = vmax.f32 %v6176, 0.0
  %v6373 = vmax.f32 %v6177, 0.0
  %v6374 = vmax.f32 %v6178, 0.0
  %v6375 = vmax.f32 %v6179, 0.0
  %v6376 = vmax.f32 %v6180, 0.0
  %v6377 = vmax.f32 %v6181, 0.0
  %v6378 = vmax.f32 %v6182, 0.0
  %v6379 = vmax.f32 %v6183, 0.0
  %v6380 = vmax.f32 %v6184, 0.0
  %v6381 = vmax.f32 %v6185, 0.0
  %v6382 = vmax.f32 %v6186, 0.0
  %v6383 = vmax.f32 %v6187, 0.0
  %v6384 = vmax.f32 %v6188, 0.0
  %v6385 = vmax.f32 %v6189, 0.0
  %v6386 = vmax.f32 %v6190, 0.0
  %v6387 = vmax.f32 %v6191, 0.0
  %v6388 = vmax.f32 %v6192, 0.0
  %v6389 = vmax.f32 %v6193, 0.0
  %v6390 = vmax.f32 %v6194, 0.0
  %v6391 = vmax.f32 %v6195, 0.0
  %v6392 = vmax.f32 %v6196, 0.0
  %v6393 = vmax.f32 %v6197, 0.0
  %v6394 = vmax.f32 %v6198, 0.0
  %v6395 = vmax.f32 %v6199, 0.0
  %v6396 = vmax.f32 %v6200, 0.0
  %v6397 = vmax.f32 %v6201, 0.0
  %v6398 = vmax.f32 %v6202, 0.0
  %v6399 = vmax.f32 %v6203, 0.0
  %v6400 = vmax.f32 %v6204, 0.0
  %v6401 = vmax.f32 %v6205, 0.0
  %v6402 = vmax.f32 %v6206, 0.0
  %v6403 = vmax.f32 %v6207, 0.0
  %v6404 = vmax.f32 %v6208, 0.0
  %v6405 = vmax.f32 %v6209, 0.0
  %v6406 = vmax.f32 %v6210, 0.0
  %v6407 = vmax.f32 %v6211, 0.0
  %v6408 = vmax.f32 %v6212, 0.0
  %v6409 = vmax.f32 %v6213, 0.0
  %v6410 = vmax.f32 %v6214, 0.0
  %v6411 = vmax.f32 %v6215, 0.0
  %v6412 = vmax.f32 %v6216, 0.0
  %v6413 = vmax.f32 %v6217, 0.0
  %v6414 = vmax.f32 %v6218, 0.0
  %v6415 = vmax.f32 %v6219, 0.0
  %v6416 = vmax.f32 %v6220, 0.0
  %v6417 = vmax.f32 %v6221, 0.0
  %v6418 = vmax.f32 %v6222, 0.0
  %v6419 = vmax.f32 %v6223, 0.0
  %v6420 = vmax.f32 %v6224, 0.0
  %v6421 = vmax.f32 %v6225, 0.0
  %v6422 = vmax.f32 %v6226, 0.0
  %v6423 = vmax.f32 %v6227, 0.0
  %v6424 = vmax.f32 %v6228, 0.0
  %v6425 = vmax.f32 %v6229, 0.0
  %v6426 = vmax.f32 %v6230, 0.0
  %v6427 = vmax.f32 %v6231, 0.0
  %v6428 = vmax.f32 %v6232, 0.0
  %v6429 = vmax.f32 %v6233, 0.0
  %v6430 = vmax.f32 %v6234, 0.0
  %v6431 = vmax.f32 %v6235, 0.0
  %v6432 = vmax.f32 %v6236, 0.0
  %v6433 = vmax.f32 %v6237, 0.0
  %v6434 = vmax.f32 %v6238, 0.0
  %v6435 = vmax.f32 %v6239, 0.0
  %v6436 = vmax.f32 %v6240, 0.0
  %v6437 = vmax.f32 %v6241, 0.0
  %v6438 = vmax.f32 %v6242, 0.0
  %v6439 = vmax.f32 %v6243, 0.0
  %v6440 = vmax.f32 %v6244, 0.0
  %v6441 = vmax.f32 %v6245, 0.0
  %v6442 = vmax.f32 %v6246, 0.0
  %v6443 = vmax.f32 %v6247, 0.0
  %v6444 = vmax.f32 %v6248, 0.0
  %v6445 = vmax.f32 %v6249, 0.0
  %v6446 = vmax.f32 %v6250, 0.0
  %v6447 = vmax.f32 %v6251, 0.0
  %v6448 = vmax.f32 %v6252, 0.0
  %v6449 = vmax.f32 %v6253, 0.0
  %v6450 = vmax.f32 %v6254, 0.0
  %v6451 = vmax.f32 %v6255, 0.0
  %v6452 = vmax.f32 %v6256, 0.0
  %v6453 = vmax.f32 %v6257, 0.0
  %v6454 = vmax.f32 %v6258, 0.0
  %v6455 = vmax.f32 %v6259, 0.0
  %v6456 = vmax.f32 %v6260, 0.0
  %v6457 = vmax.f32 %v6261, 0.0
  %v6458 = vmax.f32 %v6262, 0.0
  %v6459 = vmax.f32 %v6263, 0.0
  %v6460 = vmax.f32 %v6264, 0.0
  %v6461 = vmax.f32 %v6265, 0.0
  %v6462 = vmax.f32 %v6266, 0.0
  %v6463 = vmax.f32 %v6267, 0.0
  %v6464 = vmax.f32 %v6268, 0.0
  %v6465 = vmax.f32 %v6269, 0.0
  %v6466 = vmax.f32 %v6270, 0.0
  %v6467 = vmax.f32 %v6271, 0.0
  %v6468 = vmax.f32 %v6272, 0.0
  %v6469 = vmax.f32 %v6273, 0.0
  %v6470 = vmax.f32 %v6274, 0.0
  %v6471 = vmax.f32 %v6275, 0.0
  %v6472 = vmax.f32 %v6276, 0.0
  %v6473 = vmax.f32 %v6277, 0.0
  %v6474 = vmax.f32 %v6278, 0.0
  %v6475 = vmax.f32 %v6279, 0.0
  %v6476 = vmax.f32 %v6280, 0.0
  %v6477 = vmax.f32 %v6281, 0.0
  %v6478 = vmax.f32 %v6282, 0.0
  %v6479 = vmax.f32 %v6283, 0.0
  %v6480 = vmax.f32 %v6284, 0.0
  %v6481 = vmax.f32 %v6285, 0.0
  %v6482 = vmax.f32 %v6286, 0.0
  %v6483 = vmax.f32 %v6287, 0.0
  %v6484 = vmax.f32 %v6288, 0.0
  %v6485 = vmax.f32 %v6289, 0.0
  %v6486 = vmax.f32 %v6290, 0.0
  %v6487 = vmax.f32 %v6291, 0.0
  %v6488 = vmax.f32 %v6292, 0.0
  %v6489 = vmax.f32 %v6293, 0.0
  %v6490 = vmax.f32 %v6294, 0.0
  %v6491 = vmax.f32 %v6295, 0.0
  %v6492 = vmax.f32 %v6296, 0.0
  %v6493 = vmax.f32 %v6297, 0.0
  %v6494 = vmax.f32 %v6298, 0.0
  %v6495 = vmax.f32 %v6299, 0.0
  %v6496 = vmax.f32 %v6300, 0.0
  %v6497 = vmax.f32 %v6301, 0.0
  %v6498 = vmax.f32 %v6302, 0.0
  %v6499 = vmax.f32 %v6303, 0.0
  %v6500 = vmax.f32 %v6304, 0.0
  %v6501 = vmax.f32 %v6305, 0.0
  %v6502 = vmax.f32 %v6306, 0.0
  %v6503 = vmax.f32 %v6307, 0.0
  %v6504 = vmax.f32 %v6308, 0.0
  %v6505 = vmax.f32 %v6309, 0.0
  %v6506 = vmax.f32 %v6310, 0.0
  %v6507 = vmax.f32 %v6311, 0.0
  %vm6508 = vcmask 64512
  %6509 = vst.msk [vmem:[%s3] sm:$0xff] %vm6508, %v6312
  %6510 = vst.msk [vmem:[%s3 + $0x8] sm:$0xff] %vm6508, %v6313
  %6511 = vst.msk [vmem:[%s3 + $0x10] sm:$0xff] %vm6508, %v6314
  %6512 = vst.msk [vmem:[%s3 + $0x18] sm:$0xff] %vm6508, %v6315
  %6513 = vst.msk [vmem:[%s3 + $0x20] sm:$0xff] %vm6508, %v6316
  %6514 = vst.msk [vmem:[%s3 + $0x28] sm:$0xff] %vm6508, %v6317
  %6515 = vst.msk [vmem:[%s3 + $0x30] sm:$0xff] %vm6508, %v6318
  %6516 = vst.msk [vmem:[%s3 + $0x38] sm:$0xff] %vm6508, %v6319
  %6517 = vst.msk [vmem:[%s3 + $0x40] sm:$0xff] %vm6508, %v6320
  %6518 = vst.msk [vmem:[%s3 + $0x48] sm:$0xff] %vm6508, %v6321
  %6519 = vst.msk [vmem:[%s3 + $0x50] sm:$0xff] %vm6508, %v6322
  %6520 = vst.msk [vmem:[%s3 + $0x58] sm:$0xff] %vm6508, %v6323
  %6521 = vst.msk [vmem:[%s3 + $0x60] sm:$0xff] %vm6508, %v6324
  %6522 = vst.msk [vmem:[%s3 + $0x68] sm:$0xff] %vm6508, %v6325
  %6523 = vst.msk [vmem:[%s3 + $0x70] sm:$0xff] %vm6508, %v6326
  %6524 = vst.msk [vmem:[%s3 + $0x78] sm:$0xff] %vm6508, %v6327
  %6525 = vst.msk [vmem:[%s3 + $0x80] sm:$0xff] %vm6508, %v6328
  %6526 = vst.msk [vmem:[%s3 + $0x88] sm:$0xff] %vm6508, %v6329
  %6527 = vst.msk [vmem:[%s3 + $0x90] sm:$0xff] %vm6508, %v6330
  %6528 = vst.msk [vmem:[%s3 + $0x98] sm:$0xff] %vm6508, %v6331
  %6529 = vst.msk [vmem:[%s3 + $0xa0] sm:$0xff] %vm6508, %v6332
  %6530 = vst.msk [vmem:[%s3 + $0xa8] sm:$0xff] %vm6508, %v6333
  %6531 = vst.msk [vmem:[%s3 + $0xb0] sm:$0xff] %vm6508, %v6334
  %6532 = vst.msk [vmem:[%s3 + $0xb8] sm:$0xff] %vm6508, %v6335
  %6533 = vst.msk [vmem:[%s3 + $0xc0] sm:$0xff] %vm6508, %v6336
  %6534 = vst.msk [vmem:[%s3 + $0xc8] sm:$0xff] %vm6508, %v6337
  %6535 = vst.msk [vmem:[%s3 + $0xd0] sm:$0xff] %vm6508, %v6338
  %6536 = vst.msk [vmem:[%s3 + $0xd8] sm:$0xff] %vm6508, %v6339
  %6537 = vst.msk [vmem:[%s3 + $0xe0] sm:$0xff] %vm6508, %v6340
  %6538 = vst.msk [vmem:[%s3 + $0xe8] sm:$0xff] %vm6508, %v6341
  %6539 = vst.msk [vmem:[%s3 + $0xf0] sm:$0xff] %vm6508, %v6342
  %6540 = vst.msk [vmem:[%s3 + $0xf8] sm:$0xff] %vm6508, %v6343
  %6541 = vst.msk [vmem:[%s3 + $0x100] sm:$0xff] %vm6508, %v6344
  %6542 = vst.msk [vmem:[%s3 + $0x108] sm:$0xff] %vm6508, %v6345
  %6543 = vst.msk [vmem:[%s3 + $0x110] sm:$0xff] %vm6508, %v6346
  %6544 = vst.msk [vmem:[%s3 + $0x118] sm:$0xff] %vm6508, %v6347
  %6545 = vst.msk [vmem:[%s3 + $0x120] sm:$0xff] %vm6508, %v6348
  %6546 = vst.msk [vmem:[%s3 + $0x128] sm:$0xff] %vm6508, %v6349
  %6547 = vst.msk [vmem:[%s3 + $0x130] sm:$0xff] %vm6508, %v6350
  %6548 = vst.msk [vmem:[%s3 + $0x138] sm:$0xff] %vm6508, %v6351
  %6549 = vst.msk [vmem:[%s3 + $0x140] sm:$0xff] %vm6508, %v6352
  %6550 = vst.msk [vmem:[%s3 + $0x148] sm:$0xff] %vm6508, %v6353
  %6551 = vst.msk [vmem:[%s3 + $0x150] sm:$0xff] %vm6508, %v6354
  %6552 = vst.msk [vmem:[%s3 + $0x158] sm:$0xff] %vm6508, %v6355
  %6553 = vst.msk [vmem:[%s3 + $0x160] sm:$0xff] %vm6508, %v6356
  %6554 = vst.msk [vmem:[%s3 + $0x168] sm:$0xff] %vm6508, %v6357
  %6555 = vst.msk [vmem:[%s3 + $0x170] sm:$0xff] %vm6508, %v6358
  %6556 = vst.msk [vmem:[%s3 + $0x178] sm:$0xff] %vm6508, %v6359
  %6557 = vst.msk [vmem:[%s3 + $0x180] sm:$0xff] %vm6508, %v6360
  %6558 = vst.msk [vmem:[%s3 + $0x188] sm:$0xff] %vm6508, %v6361
  %6559 = vst.msk [vmem:[%s3 + $0x190] sm:$0xff] %vm6508, %v6362
  %6560 = vst.msk [vmem:[%s3 + $0x198] sm:$0xff] %vm6508, %v6363
  %6561 = vst.msk [vmem:[%s3 + $0x1a0] sm:$0xff] %vm6508, %v6364
  %6562 = vst.msk [vmem:[%s3 + $0x1a8] sm:$0xff] %vm6508, %v6365
  %6563 = vst.msk [vmem:[%s3 + $0x1b0] sm:$0xff] %vm6508, %v6366
  %6564 = vst.msk [vmem:[%s3 + $0x1b8] sm:$0xff] %vm6508, %v6367
  %6565 = vst.msk [vmem:[%s3 + $0x1c0] sm:$0xff] %vm6508, %v6368
  %6566 = vst.msk [vmem:[%s3 + $0x1c8] sm:$0xff] %vm6508, %v6369
  %6567 = vst.msk [vmem:[%s3 + $0x1d0] sm:$0xff] %vm6508, %v6370
  %6568 = vst.msk [vmem:[%s3 + $0x1d8] sm:$0xff] %vm6508, %v6371
  %6569 = vst.msk [vmem:[%s3 + $0x1e0] sm:$0xff] %vm6508, %v6372
  %6570 = vst.msk [vmem:[%s3 + $0x1e8] sm:$0xff] %vm6508, %v6373
  %6571 = vst.msk [vmem:[%s3 + $0x1f0] sm:$0xff] %vm6508, %v6374
  %6572 = vst.msk [vmem:[%s3 + $0x1f8] sm:$0xff] %vm6508, %v6375
  %6573 = vst.msk [vmem:[%s3 + $0x200] sm:$0xff] %vm6508, %v6376
  %6574 = vst.msk [vmem:[%s3 + $0x208] sm:$0xff] %vm6508, %v6377
  %6575 = vst.msk [vmem:[%s3 + $0x210] sm:$0xff] %vm6508, %v6378
  %6576 = vst.msk [vmem:[%s3 + $0x218] sm:$0xff] %vm6508, %v6379
  %6577 = vst.msk [vmem:[%s3 + $0x220] sm:$0xff] %vm6508, %v6380
  %6578 = vst.msk [vmem:[%s3 + $0x228] sm:$0xff] %vm6508, %v6381
  %6579 = vst.msk [vmem:[%s3 + $0x230] sm:$0xff] %vm6508, %v6382
  %6580 = vst.msk [vmem:[%s3 + $0x238] sm:$0xff] %vm6508, %v6383
  %6581 = vst.msk [vmem:[%s3 + $0x240] sm:$0xff] %vm6508, %v6384
  %6582 = vst.msk [vmem:[%s3 + $0x248] sm:$0xff] %vm6508, %v6385
  %6583 = vst.msk [vmem:[%s3 + $0x250] sm:$0xff] %vm6508, %v6386
  %6584 = vst.msk [vmem:[%s3 + $0x258] sm:$0xff] %vm6508, %v6387
  %6585 = vst.msk [vmem:[%s3 + $0x260] sm:$0xff] %vm6508, %v6388
  %6586 = vst.msk [vmem:[%s3 + $0x268] sm:$0xff] %vm6508, %v6389
  %6587 = vst.msk [vmem:[%s3 + $0x270] sm:$0xff] %vm6508, %v6390
  %6588 = vst.msk [vmem:[%s3 + $0x278] sm:$0xff] %vm6508, %v6391
  %6589 = vst.msk [vmem:[%s3 + $0x280] sm:$0xff] %vm6508, %v6392
  %6590 = vst.msk [vmem:[%s3 + $0x288] sm:$0xff] %vm6508, %v6393
  %6591 = vst.msk [vmem:[%s3 + $0x290] sm:$0xff] %vm6508, %v6394
  %6592 = vst.msk [vmem:[%s3 + $0x298] sm:$0xff] %vm6508, %v6395
  %6593 = vst.msk [vmem:[%s3 + $0x2a0] sm:$0xff] %vm6508, %v6396
  %6594 = vst.msk [vmem:[%s3 + $0x2a8] sm:$0xff] %vm6508, %v6397
  %6595 = vst.msk [vmem:[%s3 + $0x2b0] sm:$0xff] %vm6508, %v6398
  %6596 = vst.msk [vmem:[%s3 + $0x2b8] sm:$0xff] %vm6508, %v6399
  %6597 = vst.msk [vmem:[%s3 + $0x2c0] sm:$0xff] %vm6508, %v6400
  %6598 = vst.msk [vmem:[%s3 + $0x2c8] sm:$0xff] %vm6508, %v6401
  %6599 = vst.msk [vmem:[%s3 + $0x2d0] sm:$0xff] %vm6508, %v6402
  %6600 = vst.msk [vmem:[%s3 + $0x2d8] sm:$0xff] %vm6508, %v6403
  %6601 = vst.msk [vmem:[%s3 + $0x2e0] sm:$0xff] %vm6508, %v6404
  %6602 = vst.msk [vmem:[%s3 + $0x2e8] sm:$0xff] %vm6508, %v6405
  %6603 = vst.msk [vmem:[%s3 + $0x2f0] sm:$0xff] %vm6508, %v6406
  %6604 = vst.msk [vmem:[%s3 + $0x2f8] sm:$0xff] %vm6508, %v6407
  %6605 = vst.msk [vmem:[%s3 + $0x300] sm:$0xff] %vm6508, %v6408
  %6606 = vst.msk [vmem:[%s3 + $0x308] sm:$0xff] %vm6508, %v6409
  %6607 = vst.msk [vmem:[%s3 + $0x310] sm:$0xff] %vm6508, %v6410
  %6608 = vst.msk [vmem:[%s3 + $0x318] sm:$0xff] %vm6508, %v6411
  %6609 = vst.msk [vmem:[%s3 + $0x320] sm:$0xff] %vm6508, %v6412
  %6610 = vst.msk [vmem:[%s3 + $0x328] sm:$0xff] %vm6508, %v6413
  %6611 = vst.msk [vmem:[%s3 + $0x330] sm:$0xff] %vm6508, %v6414
  %6612 = vst.msk [vmem:[%s3 + $0x338] sm:$0xff] %vm6508, %v6415
  %6613 = vst.msk [vmem:[%s3 + $0x340] sm:$0xff] %vm6508, %v6416
  %6614 = vst.msk [vmem:[%s3 + $0x348] sm:$0xff] %vm6508, %v6417
  %6615 = vst.msk [vmem:[%s3 + $0x350] sm:$0xff] %vm6508, %v6418
  %6616 = vst.msk [vmem:[%s3 + $0x358] sm:$0xff] %vm6508, %v6419
  %6617 = vst.msk [vmem:[%s3 + $0x360] sm:$0xff] %vm6508, %v6420
  %6618 = vst.msk [vmem:[%s3 + $0x368] sm:$0xff] %vm6508, %v6421
  %6619 = vst.msk [vmem:[%s3 + $0x370] sm:$0xff] %vm6508, %v6422
  %6620 = vst.msk [vmem:[%s3 + $0x378] sm:$0xff] %vm6508, %v6423
  %6621 = vst.msk [vmem:[%s3 + $0x380] sm:$0xff] %vm6508, %v6424
  %6622 = vst.msk [vmem:[%s3 + $0x388] sm:$0xff] %vm6508, %v6425
  %6623 = vst.msk [vmem:[%s3 + $0x390] sm:$0xff] %vm6508, %v6426
  %6624 = vst.msk [vmem:[%s3 + $0x398] sm:$0xff] %vm6508, %v6427
  %6625 = vst.msk [vmem:[%s3 + $0x3a0] sm:$0xff] %vm6508, %v6428
  %6626 = vst.msk [vmem:[%s3 + $0x3a8] sm:$0xff] %vm6508, %v6429
  %6627 = vst.msk [vmem:[%s3 + $0x3b0] sm:$0xff] %vm6508, %v6430
  %6628 = vst.msk [vmem:[%s3 + $0x3b8] sm:$0xff] %vm6508, %v6431
  %6629 = vst.msk [vmem:[%s3 + $0x3c0] sm:$0xff] %vm6508, %v6432
  %6630 = vst.msk [vmem:[%s3 + $0x3c8] sm:$0xff] %vm6508, %v6433
  %6631 = vst.msk [vmem:[%s3 + $0x3d0] sm:$0xff] %vm6508, %v6434
  %6632 = vst.msk [vmem:[%s3 + $0x3d8] sm:$0xff] %vm6508, %v6435
  %6633 = vst.msk [vmem:[%s3 + $0x3e0] sm:$0xff] %vm6508, %v6436
  %6634 = vst.msk [vmem:[%s3 + $0x3e8] sm:$0xff] %vm6508, %v6437
  %6635 = vst.msk [vmem:[%s3 + $0x3f0] sm:$0xff] %vm6508, %v6438
  %6636 = vst.msk [vmem:[%s3 + $0x3f8] sm:$0xff] %vm6508, %v6439
  %6637 = vst.msk [vmem:[%s3 + $0x400] sm:$0xff] %vm6508, %v6440
  %6638 = vst.msk [vmem:[%s3 + $0x408] sm:$0xff] %vm6508, %v6441
  %6639 = vst.msk [vmem:[%s3 + $0x410] sm:$0xff] %vm6508, %v6442
  %6640 = vst.msk [vmem:[%s3 + $0x418] sm:$0xff] %vm6508, %v6443
  %6641 = vst.msk [vmem:[%s3 + $0x420] sm:$0xff] %vm6508, %v6444
  %6642 = vst.msk [vmem:[%s3 + $0x428] sm:$0xff] %vm6508, %v6445
  %6643 = vst.msk [vmem:[%s3 + $0x430] sm:$0xff] %vm6508, %v6446
  %6644 = vst.msk [vmem:[%s3 + $0x438] sm:$0xff] %vm6508, %v6447
  %6645 = vst.msk [vmem:[%s3 + $0x440] sm:$0xff] %vm6508, %v6448
  %6646 = vst.msk [vmem:[%s3 + $0x448] sm:$0xff] %vm6508, %v6449
  %6647 = vst.msk [vmem:[%s3 + $0x450] sm:$0xff] %vm6508, %v6450
  %6648 = vst.msk [vmem:[%s3 + $0x458] sm:$0xff] %vm6508, %v6451
  %6649 = vst.msk [vmem:[%s3 + $0x460] sm:$0xff] %vm6508, %v6452
  %6650 = vst.msk [vmem:[%s3 + $0x468] sm:$0xff] %vm6508, %v6453
  %6651 = vst.msk [vmem:[%s3 + $0x470] sm:$0xff] %vm6508, %v6454
  %6652 = vst.msk [vmem:[%s3 + $0x478] sm:$0xff] %vm6508, %v6455
  %6653 = vst.msk [vmem:[%s3 + $0x480] sm:$0xff] %vm6508, %v6456
  %6654 = vst.msk [vmem:[%s3 + $0x488] sm:$0xff] %vm6508, %v6457
  %6655 = vst.msk [vmem:[%s3 + $0x490] sm:$0xff] %vm6508, %v6458
  %6656 = vst.msk [vmem:[%s3 + $0x498] sm:$0xff] %vm6508, %v6459
  %6657 = vst.msk [vmem:[%s3 + $0x4a0] sm:$0xff] %vm6508, %v6460
  %6658 = vst.msk [vmem:[%s3 + $0x4a8] sm:$0xff] %vm6508, %v6461
  %6659 = vst.msk [vmem:[%s3 + $0x4b0] sm:$0xff] %vm6508, %v6462
  %6660 = vst.msk [vmem:[%s3 + $0x4b8] sm:$0xff] %vm6508, %v6463
  %6661 = vst.msk [vmem:[%s3 + $0x4c0] sm:$0xff] %vm6508, %v6464
  %6662 = vst.msk [vmem:[%s3 + $0x4c8] sm:$0xff] %vm6508, %v6465
  %6663 = vst.msk [vmem:[%s3 + $0x4d0] sm:$0xff] %vm6508, %v6466
  %6664 = vst.msk [vmem:[%s3 + $0x4d8] sm:$0xff] %vm6508, %v6467
  %6665 = vst.msk [vmem:[%s3 + $0x4e0] sm:$0xff] %vm6508, %v6468
  %6666 = vst.msk [vmem:[%s3 + $0x4e8] sm:$0xff] %vm6508, %v6469
  %6667 = vst.msk [vmem:[%s3 + $0x4f0] sm:$0xff] %vm6508, %v6470
  %6668 = vst.msk [vmem:[%s3 + $0x4f8] sm:$0xff] %vm6508, %v6471
  %6669 = vst.msk [vmem:[%s3 + $0x500] sm:$0xff] %vm6508, %v6472
  %6670 = vst.msk [vmem:[%s3 + $0x508] sm:$0xff] %vm6508, %v6473
  %6671 = vst.msk [vmem:[%s3 + $0x510] sm:$0xff] %vm6508, %v6474
  %6672 = vst.msk [vmem:[%s3 + $0x518] sm:$0xff] %vm6508, %v6475
  %6673 = vst.msk [vmem:[%s3 + $0x520] sm:$0xff] %vm6508, %v6476
  %6674 = vst.msk [vmem:[%s3 + $0x528] sm:$0xff] %vm6508, %v6477
  %6675 = vst.msk [vmem:[%s3 + $0x530] sm:$0xff] %vm6508, %v6478
  %6676 = vst.msk [vmem:[%s3 + $0x538] sm:$0xff] %vm6508, %v6479
  %6677 = vst.msk [vmem:[%s3 + $0x540] sm:$0xff] %vm6508, %v6480
  %6678 = vst.msk [vmem:[%s3 + $0x548] sm:$0xff] %vm6508, %v6481
  %6679 = vst.msk [vmem:[%s3 + $0x550] sm:$0xff] %vm6508, %v6482
  %6680 = vst.msk [vmem:[%s3 + $0x558] sm:$0xff] %vm6508, %v6483
  %6681 = vst.msk [vmem:[%s3 + $0x560] sm:$0xff] %vm6508, %v6484
  %6682 = vst.msk [vmem:[%s3 + $0x568] sm:$0xff] %vm6508, %v6485
  %6683 = vst.msk [vmem:[%s3 + $0x570] sm:$0xff] %vm6508, %v6486
  %6684 = vst.msk [vmem:[%s3 + $0x578] sm:$0xff] %vm6508, %v6487
  %6685 = vst.msk [vmem:[%s3 + $0x580] sm:$0xff] %vm6508, %v6488
  %6686 = vst.msk [vmem:[%s3 + $0x588] sm:$0xff] %vm6508, %v6489
  %6687 = vst.msk [vmem:[%s3 + $0x590] sm:$0xff] %vm6508, %v6490
  %6688 = vst.msk [vmem:[%s3 + $0x598] sm:$0xff] %vm6508, %v6491
  %6689 = vst.msk [vmem:[%s3 + $0x5a0] sm:$0xff] %vm6508, %v6492
  %6690 = vst.msk [vmem:[%s3 + $0x5a8] sm:$0xff] %vm6508, %v6493
  %6691 = vst.msk [vmem:[%s3 + $0x5b0] sm:$0xff] %vm6508, %v6494
  %6692 = vst.msk [vmem:[%s3 + $0x5b8] sm:$0xff] %vm6508, %v6495
  %6693 = vst.msk [vmem:[%s3 + $0x5c0] sm:$0xff] %vm6508, %v6496
  %6694 = vst.msk [vmem:[%s3 + $0x5c8] sm:$0xff] %vm6508, %v6497
  %6695 = vst.msk [vmem:[%s3 + $0x5d0] sm:$0xff] %vm6508, %v6498
  %6696 = vst.msk [vmem:[%s3 + $0x5d8] sm:$0xff] %vm6508, %v6499
  %6697 = vst.msk [vmem:[%s3 + $0x5e0] sm:$0xff] %vm6508, %v6500
  %6698 = vst.msk [vmem:[%s3 + $0x5e8] sm:$0xff] %vm6508, %v6501
  %6699 = vst.msk [vmem:[%s3 + $0x5f0] sm:$0xff] %vm6508, %v6502
  %6700 = vst.msk [vmem:[%s3 + $0x5f8] sm:$0xff] %vm6508, %v6503
  %6701 = vst.msk [vmem:[%s3 + $0x600] sm:$0xff] %vm6508, %v6504
  %6702 = vst.msk [vmem:[%s3 + $0x608] sm:$0xff] %vm6508, %v6505
  %6703 = vst.msk [vmem:[%s3 + $0x610] sm:$0xff] %vm6508, %v6506
  %6704 = vst.msk [vmem:[%s3 + $0x618] sm:$0xff] %vm6508, %v6507
  // Predicated region
  $region14: #{mnistlenet_forward.2} parent=0 // pred_check
    _
  $region15: #{mnistlenet_forward.2} parent=0 // pred_check_branch
    %6706 = sbr.rel (0) target = $region17
  $region16: #{mnistlenet_forward.2} parent=0 // pred_region
    _
  $region17: #{mnistlenet_forward.2} parent=0 // pred_fallthru
    _
  // Predicated region
  $region18: #{mnistlenet_forward.2} parent=0 // pred_check
    _
  $region19: #{mnistlenet_forward.2} parent=0 // pred_check_branch
    %6708 = sbr.rel (0) target = $region21
  $region20: #{mnistlenet_forward.2} parent=0 // pred_region
    _
  $region21: #{mnistlenet_forward.2} parent=0 // pred_fallthru
    _

// kernel: mnistlenet_forward.3
$region0: #{mnistlenet_forward.3}
  #allocation0 [shape = 'u32[]', space=smem, size = 0x4, offset = 0x4, fixed_abs, tag = 'smem constant byte address 0x4 - core index']
  #allocation1 [shape = 'u32[72,128]{1,0:T(1,128)}', space=vmem, size = 0x9000, scoped, tag = 'internal scratch']
  #allocation2 [shape = 'f32[8,400]{1,0:T(8,128)}', space=vmem, size = 0x4000, scoped, tag = 'scratch operand']
  %s0 = inlined_call_operand.vmem [shape: f32[800,200], index: 0, kind: input, shape index: {}]
  %s1 = inlined_call_operand.vmem [shape: f32[200,16], index: 1, kind: input, shape index: {}]
  %s2 = inlined_call_operand.vmem [shape: f32[1,16], index: 2, kind: input, shape index: {}]
  %s3 = inlined_call_operand.vmem [shape: f32[400,120], index: 3, kind: input, shape index: {}]
  %s4 = inlined_call_operand.vmem [shape: f32[1,120], index: 4, kind: input, shape index: {}]
  %s5 = inlined_call_operand.vmem [shape: f32[120,84], index: 5, kind: input, shape index: {}]
  %s6 = inlined_call_operand.vmem [shape: f32[1,84], index: 6, kind: input, shape index: {}]
  %s7 = inlined_call_operand.vmem [shape: f32[84,10], index: 7, kind: input, shape index: {}]
  %s8 = inlined_call_operand.vmem [shape: f32[1,10], index: 8, kind: input, shape index: {}]
  %s9 = inlined_call_operand.vmem [shape: f32[8,10], index: 9, kind: output, shape index: {}]
  %s10 = sld [smem:[#allocation0]]
  $region46: #{mnistlenet_forward.3} parent=0
    _
  %s12 = ssub.s32 1, %s10
  %s13 = scalar_select 0, %s12, %s10
  // Predicated region
  $region2: #{mnistlenet_forward.3} parent=0 // pred_check
    _
  $region3: #{mnistlenet_forward.3} parent=0 // pred_check_branch
    %15 = sbr.rel (0) target = $region5
  $region4: #{mnistlenet_forward.3} parent=0 // pred_region
    _
  $region5: #{mnistlenet_forward.3} parent=0 // pred_fallthru
    _
  // Predicated region
  $region6: #{mnistlenet_forward.3} parent=0 // pred_check
    _
  $region7: #{mnistlenet_forward.3} parent=0 // pred_check_branch
    %17 = sbr.rel (0) target = $region9
  $region8: #{mnistlenet_forward.3} parent=0 // pred_region
    _
  $region9: #{mnistlenet_forward.3} parent=0 // pred_fallthru
    _
  // Predicated region
  $region10: #{mnistlenet_forward.3} parent=0 // pred_check
    _
  $region11: #{mnistlenet_forward.3} parent=0 // pred_check_branch
    %19 = sbr.rel (0) target = $region13
  $region12: #{mnistlenet_forward.3} parent=0 // pred_region
    _
  $region13: #{mnistlenet_forward.3} parent=0 // pred_fallthru
    _
  // Predicated region
  $region14: #{mnistlenet_forward.3} parent=0 // pred_check
    _
  $region15: #{mnistlenet_forward.3} parent=0 // pred_check_branch
    %21 = sbr.rel (0) target = $region17
  $region16: #{mnistlenet_forward.3} parent=0 // pred_region
    _
  $region17: #{mnistlenet_forward.3} parent=0 // pred_fallthru
    _
  // Predicated region
  $region18: #{mnistlenet_forward.3} parent=0 // pred_check
    _
  $region19: #{mnistlenet_forward.3} parent=0 // pred_check_branch
    %23 = sbr.rel (0) target = $region21
  $region20: #{mnistlenet_forward.3} parent=0 // pred_region
    _
  $region21: #{mnistlenet_forward.3} parent=0 // pred_fallthru
    _
  // Predicated region
  $region22: #{mnistlenet_forward.3} parent=0 // pred_check
    _
  $region23: #{mnistlenet_forward.3} parent=0 // pred_check_branch
    %25 = sbr.rel (0) target = $region25
  $region24: #{mnistlenet_forward.3} parent=0 // pred_region
    _
  $region25: #{mnistlenet_forward.3} parent=0 // pred_fallthru
    _
  // Predicated region
  $region26: #{mnistlenet_forward.3} parent=0 // pred_check
    _
  $region27: #{mnistlenet_forward.3} parent=0 // pred_check_branch
    %27 = sbr.rel (0) target = $region29
  $region28: #{mnistlenet_forward.3} parent=0 // pred_region
    _
  $region29: #{mnistlenet_forward.3} parent=0 // pred_fallthru
    _
  // Predicated region
  $region30: #{mnistlenet_forward.3} parent=0 // pred_check
    _
  $region31: #{mnistlenet_forward.3} parent=0 // pred_check_branch
    %29 = sbr.rel (0) target = $region33
  $region32: #{mnistlenet_forward.3} parent=0 // pred_region
    _
  $region33: #{mnistlenet_forward.3} parent=0 // pred_fallthru
    _
  // Predicated region
  $region34: #{mnistlenet_forward.3} parent=0 // pred_check
    _
  $region35: #{mnistlenet_forward.3} parent=0 // pred_check_branch
    %31 = sbr.rel (0) target = $region37
  $region36: #{mnistlenet_forward.3} parent=0 // pred_region
    _
  $region37: #{mnistlenet_forward.3} parent=0 // pred_fallthru
    _
  %v32 = vld [vmem:[%s0] sm:$0xff]
  %v33 = vld [vmem:[%s0 + $0x8] sm:$0xff]
  %v34 = vld [vmem:[%s0 + $0x10] sm:$0xff]
  %v35 = vld [vmem:[%s0 + $0x18] sm:$0xff]
  %v36 = vld [vmem:[%s0 + $0x20] sm:$0xff]
  %v37 = vld [vmem:[%s0 + $0x28] sm:$0xff]
  %v38 = vld [vmem:[%s0 + $0x30] sm:$0xff]
  %v39 = vld [vmem:[%s0 + $0x38] sm:$0xff]
  %v40 = vld [vmem:[%s0 + $0x40] sm:$0xff]
  %v41 = vld [vmem:[%s0 + $0x48] sm:$0xff]
  %v42 = vld [vmem:[%s0 + $0x50] sm:$0xff]
  %v43 = vld [vmem:[%s0 + $0x58] sm:$0xff]
  %v44 = vld [vmem:[%s0 + $0x60] sm:$0xff]
  %v45 = vld [vmem:[%s0 + $0x68] sm:$0xff]
  %v46 = vld [vmem:[%s0 + $0x70] sm:$0xff]
  %v47 = vld [vmem:[%s0 + $0x78] sm:$0xff]
  %v48 = vld [vmem:[%s0 + $0x80] sm:$0xff]
  %v49 = vld [vmem:[%s0 + $0x88] sm:$0xff]
  %v50 = vld [vmem:[%s0 + $0x90] sm:$0xff]
  %v51 = vld [vmem:[%s0 + $0x98] sm:$0xff]
  %v52 = vld [vmem:[%s0 + $0xa0] sm:$0xff]
  %v53 = vld [vmem:[%s0 + $0xa8] sm:$0xff]
  %v54 = vld [vmem:[%s0 + $0xb0] sm:$0xff]
  %v55 = vld [vmem:[%s0 + $0xb8] sm:$0xff]
  %v56 = vld [vmem:[%s0 + $0xc0] sm:$0xff]
  %v57 = vld [vmem:[%s0 + $0xc8] sm:$0xff]
  %v58 = vld [vmem:[%s0 + $0xd0] sm:$0xff]
  %v59 = vld [vmem:[%s0 + $0xd8] sm:$0xff]
  %v60 = vld [vmem:[%s0 + $0xe0] sm:$0xff]
  %v61 = vld [vmem:[%s0 + $0xe8] sm:$0xff]
  %v62 = vld [vmem:[%s0 + $0xf0] sm:$0xff]
  %v63 = vld [vmem:[%s0 + $0xf8] sm:$0xff]
  %v64 = vld [vmem:[%s0 + $0x100] sm:$0xff]
  %v65 = vld [vmem:[%s0 + $0x108] sm:$0xff]
  %v66 = vld [vmem:[%s0 + $0x110] sm:$0xff]
  %v67 = vld [vmem:[%s0 + $0x118] sm:$0xff]
  %v68 = vld [vmem:[%s0 + $0x120] sm:$0xff]
  %v69 = vld [vmem:[%s0 + $0x128] sm:$0xff]
  %v70 = vld [vmem:[%s0 + $0x130] sm:$0xff]
  %v71 = vld [vmem:[%s0 + $0x138] sm:$0xff]
  %v72 = vld [vmem:[%s0 + $0x140] sm:$0xff]
  %v73 = vld [vmem:[%s0 + $0x148] sm:$0xff]
  %v74 = vld [vmem:[%s0 + $0x150] sm:$0xff]
  %v75 = vld [vmem:[%s0 + $0x158] sm:$0xff]
  %v76 = vld [vmem:[%s0 + $0x160] sm:$0xff]
  %v77 = vld [vmem:[%s0 + $0x168] sm:$0xff]
  %v78 = vld [vmem:[%s0 + $0x170] sm:$0xff]
  %v79 = vld [vmem:[%s0 + $0x178] sm:$0xff]
  %v80 = vld [vmem:[%s0 + $0x180] sm:$0xff]
  %v81 = vld [vmem:[%s0 + $0x188] sm:$0xff]
  %v82 = vld [vmem:[%s0 + $0x190] sm:$0xff]
  %v83 = vld [vmem:[%s0 + $0x198] sm:$0xff]
  %v84 = vld [vmem:[%s0 + $0x1a0] sm:$0xff]
  %v85 = vld [vmem:[%s0 + $0x1a8] sm:$0xff]
  %v86 = vld [vmem:[%s0 + $0x1b0] sm:$0xff]
  %v87 = vld [vmem:[%s0 + $0x1b8] sm:$0xff]
  %v88 = vld [vmem:[%s0 + $0x1c0] sm:$0xff]
  %v89 = vld [vmem:[%s0 + $0x1c8] sm:$0xff]
  %v90 = vld [vmem:[%s0 + $0x1d0] sm:$0xff]
  %v91 = vld [vmem:[%s0 + $0x1d8] sm:$0xff]
  %v92 = vld [vmem:[%s0 + $0x1e0] sm:$0xff]
  %v93 = vld [vmem:[%s0 + $0x1e8] sm:$0xff]
  %v94 = vld [vmem:[%s0 + $0x1f0] sm:$0xff]
  %v95 = vld [vmem:[%s0 + $0x1f8] sm:$0xff]
  %v96 = vld [vmem:[%s0 + $0x200] sm:$0xff]
  %v97 = vld [vmem:[%s0 + $0x208] sm:$0xff]
  %v98 = vld [vmem:[%s0 + $0x210] sm:$0xff]
  %v99 = vld [vmem:[%s0 + $0x218] sm:$0xff]
  %v100 = vld [vmem:[%s0 + $0x220] sm:$0xff]
  %v101 = vld [vmem:[%s0 + $0x228] sm:$0xff]
  %v102 = vld [vmem:[%s0 + $0x230] sm:$0xff]
  %v103 = vld [vmem:[%s0 + $0x238] sm:$0xff]
  %v104 = vld [vmem:[%s0 + $0x240] sm:$0xff]
  %v105 = vld [vmem:[%s0 + $0x248] sm:$0xff]
  %v106 = vld [vmem:[%s0 + $0x250] sm:$0xff]
  %v107 = vld [vmem:[%s0 + $0x258] sm:$0xff]
  %v108 = vld [vmem:[%s0 + $0x260] sm:$0xff]
  %v109 = vld [vmem:[%s0 + $0x268] sm:$0xff]
  %v110 = vld [vmem:[%s0 + $0x270] sm:$0xff]
  %v111 = vld [vmem:[%s0 + $0x278] sm:$0xff]
  %v112 = vld [vmem:[%s0 + $0x280] sm:$0xff]
  %v113 = vld [vmem:[%s0 + $0x288] sm:$0xff]
  %v114 = vld [vmem:[%s0 + $0x290] sm:$0xff]
  %v115 = vld [vmem:[%s0 + $0x298] sm:$0xff]
  %v116 = vld [vmem:[%s0 + $0x2a0] sm:$0xff]
  %v117 = vld [vmem:[%s0 + $0x2a8] sm:$0xff]
  %v118 = vld [vmem:[%s0 + $0x2b0] sm:$0xff]
  %v119 = vld [vmem:[%s0 + $0x2b8] sm:$0xff]
  %v120 = vld [vmem:[%s0 + $0x2c0] sm:$0xff]
  %v121 = vld [vmem:[%s0 + $0x2c8] sm:$0xff]
  %v122 = vld [vmem:[%s0 + $0x2d0] sm:$0xff]
  %v123 = vld [vmem:[%s0 + $0x2d8] sm:$0xff]
  %v124 = vld [vmem:[%s0 + $0x2e0] sm:$0xff]
  %v125 = vld [vmem:[%s0 + $0x2e8] sm:$0xff]
  %v126 = vld [vmem:[%s0 + $0x2f0] sm:$0xff]
  %v127 = vld [vmem:[%s0 + $0x2f8] sm:$0xff]
  %v128 = vld [vmem:[%s0 + $0x300] sm:$0xff]
  %v129 = vld [vmem:[%s0 + $0x308] sm:$0xff]
  %v130 = vld [vmem:[%s0 + $0x310] sm:$0xff]
  %v131 = vld [vmem:[%s0 + $0x318] sm:$0xff]
  %v132 = vld [vmem:[%s0 + $0x320] sm:$0xff]
  %v133 = vld [vmem:[%s0 + $0x328] sm:$0xff]
  %v134 = vld [vmem:[%s0 + $0x330] sm:$0xff]
  %v135 = vld [vmem:[%s0 + $0x338] sm:$0xff]
  %v136 = vld [vmem:[%s0 + $0x340] sm:$0xff]
  %v137 = vld [vmem:[%s0 + $0x348] sm:$0xff]
  %v138 = vld [vmem:[%s0 + $0x350] sm:$0xff]
  %v139 = vld [vmem:[%s0 + $0x358] sm:$0xff]
  %v140 = vld [vmem:[%s0 + $0x360] sm:$0xff]
  %v141 = vld [vmem:[%s0 + $0x368] sm:$0xff]
  %v142 = vld [vmem:[%s0 + $0x370] sm:$0xff]
  %v143 = vld [vmem:[%s0 + $0x378] sm:$0xff]
  %v144 = vld [vmem:[%s0 + $0x380] sm:$0xff]
  %v145 = vld [vmem:[%s0 + $0x388] sm:$0xff]
  %v146 = vld [vmem:[%s0 + $0x390] sm:$0xff]
  %v147 = vld [vmem:[%s0 + $0x398] sm:$0xff]
  %v148 = vld [vmem:[%s0 + $0x3a0] sm:$0xff]
  %v149 = vld [vmem:[%s0 + $0x3a8] sm:$0xff]
  %v150 = vld [vmem:[%s0 + $0x3b0] sm:$0xff]
  %v151 = vld [vmem:[%s0 + $0x3b8] sm:$0xff]
  %v152 = vld [vmem:[%s0 + $0x3c0] sm:$0xff]
  %v153 = vld [vmem:[%s0 + $0x3c8] sm:$0xff]
  %v154 = vld [vmem:[%s0 + $0x3d0] sm:$0xff]
  %v155 = vld [vmem:[%s0 + $0x3d8] sm:$0xff]
  %v156 = vld [vmem:[%s0 + $0x3e0] sm:$0xff]
  %v157 = vld [vmem:[%s0 + $0x3e8] sm:$0xff]
  %v158 = vld [vmem:[%s0 + $0x3f0] sm:$0xff]
  %v159 = vld [vmem:[%s0 + $0x3f8] sm:$0xff]
  %v160 = vld [vmem:[%s0 + $0x400] sm:$0xff]
  %v161 = vld [vmem:[%s0 + $0x408] sm:$0xff]
  %v162 = vld [vmem:[%s0 + $0x410] sm:$0xff]
  %v163 = vld [vmem:[%s0 + $0x418] sm:$0xff]
  %v164 = vld [vmem:[%s0 + $0x420] sm:$0xff]
  %v165 = vld [vmem:[%s0 + $0x428] sm:$0xff]
  %v166 = vld [vmem:[%s0 + $0x430] sm:$0xff]
  %v167 = vld [vmem:[%s0 + $0x438] sm:$0xff]
  %v168 = vld [vmem:[%s0 + $0x440] sm:$0xff]
  %v169 = vld [vmem:[%s0 + $0x448] sm:$0xff]
  %v170 = vld [vmem:[%s0 + $0x450] sm:$0xff]
  %v171 = vld [vmem:[%s0 + $0x458] sm:$0xff]
  %v172 = vld [vmem:[%s0 + $0x460] sm:$0xff]
  %v173 = vld [vmem:[%s0 + $0x468] sm:$0xff]
  %v174 = vld [vmem:[%s0 + $0x470] sm:$0xff]
  %v175 = vld [vmem:[%s0 + $0x478] sm:$0xff]
  %v176 = vld [vmem:[%s0 + $0x480] sm:$0xff]
  %v177 = vld [vmem:[%s0 + $0x488] sm:$0xff]
  %v178 = vld [vmem:[%s0 + $0x490] sm:$0xff]
  %v179 = vld [vmem:[%s0 + $0x498] sm:$0xff]
  %v180 = vld [vmem:[%s0 + $0x4a0] sm:$0xff]
  %v181 = vld [vmem:[%s0 + $0x4a8] sm:$0xff]
  %v182 = vld [vmem:[%s0 + $0x4b0] sm:$0xff]
  %v183 = vld [vmem:[%s0 + $0x4b8] sm:$0xff]
  %v184 = vld [vmem:[%s0 + $0x4c0] sm:$0xff]
  %v185 = vld [vmem:[%s0 + $0x4c8] sm:$0xff]
  %v186 = vld [vmem:[%s0 + $0x4d0] sm:$0xff]
  %v187 = vld [vmem:[%s0 + $0x4d8] sm:$0xff]
  %v188 = vld [vmem:[%s0 + $0x4e0] sm:$0xff]
  %v189 = vld [vmem:[%s0 + $0x4e8] sm:$0xff]
  %v190 = vld [vmem:[%s0 + $0x4f0] sm:$0xff]
  %v191 = vld [vmem:[%s0 + $0x4f8] sm:$0xff]
  %v192 = vld [vmem:[%s0 + $0x500] sm:$0xff]
  %v193 = vld [vmem:[%s0 + $0x508] sm:$0xff]
  %v194 = vld [vmem:[%s0 + $0x510] sm:$0xff]
  %v195 = vld [vmem:[%s0 + $0x518] sm:$0xff]
  %v196 = vld [vmem:[%s0 + $0x520] sm:$0xff]
  %v197 = vld [vmem:[%s0 + $0x528] sm:$0xff]
  %v198 = vld [vmem:[%s0 + $0x530] sm:$0xff]
  %v199 = vld [vmem:[%s0 + $0x538] sm:$0xff]
  %v200 = vld [vmem:[%s0 + $0x540] sm:$0xff]
  %v201 = vld [vmem:[%s0 + $0x548] sm:$0xff]
  %v202 = vld [vmem:[%s0 + $0x550] sm:$0xff]
  %v203 = vld [vmem:[%s0 + $0x558] sm:$0xff]
  %v204 = vld [vmem:[%s0 + $0x560] sm:$0xff]
  %v205 = vld [vmem:[%s0 + $0x568] sm:$0xff]
  %v206 = vld [vmem:[%s0 + $0x570] sm:$0xff]
  %v207 = vld [vmem:[%s0 + $0x578] sm:$0xff]
  %v208 = vld [vmem:[%s0 + $0x580] sm:$0xff]
  %v209 = vld [vmem:[%s0 + $0x588] sm:$0xff]
  %v210 = vld [vmem:[%s0 + $0x590] sm:$0xff]
  %v211 = vld [vmem:[%s0 + $0x598] sm:$0xff]
  %v212 = vld [vmem:[%s0 + $0x5a0] sm:$0xff]
  %v213 = vld [vmem:[%s0 + $0x5a8] sm:$0xff]
  %v214 = vld [vmem:[%s0 + $0x5b0] sm:$0xff]
  %v215 = vld [vmem:[%s0 + $0x5b8] sm:$0xff]
  %v216 = vld [vmem:[%s0 + $0x5c0] sm:$0xff]
  %v217 = vld [vmem:[%s0 + $0x5c8] sm:$0xff]
  %v218 = vld [vmem:[%s0 + $0x5d0] sm:$0xff]
  %v219 = vld [vmem:[%s0 + $0x5d8] sm:$0xff]
  %v220 = vld [vmem:[%s0 + $0x5e0] sm:$0xff]
  %v221 = vld [vmem:[%s0 + $0x5e8] sm:$0xff]
  %v222 = vld [vmem:[%s0 + $0x5f0] sm:$0xff]
  %v223 = vld [vmem:[%s0 + $0x5f8] sm:$0xff]
  %v224 = vld [vmem:[%s0 + $0x600] sm:$0xff]
  %v225 = vld [vmem:[%s0 + $0x608] sm:$0xff]
  %v226 = vld [vmem:[%s0 + $0x610] sm:$0xff]
  %v227 = vld [vmem:[%s0 + $0x618] sm:$0xff]
  %v228 = vld [vmem:[%s0 + $0x620] sm:$0xff]
  %v229 = vld [vmem:[%s0 + $0x628] sm:$0xff]
  %v230 = vld [vmem:[%s0 + $0x630] sm:$0xff]
  %v231 = vld [vmem:[%s0 + $0x638] sm:$0xff]
  %v232 = vld [vmem:[%s1] sm:$0xff]
  %v233 = vld [vmem:[%s1 + $0x8] sm:$0xff]
  %v234 = vld [vmem:[%s1 + $0x10] sm:$0xff]
  %v235 = vld [vmem:[%s1 + $0x18] sm:$0xff]
  %v236 = vld [vmem:[%s1 + $0x20] sm:$0xff]
  %v237 = vld [vmem:[%s1 + $0x28] sm:$0xff]
  %v238 = vld [vmem:[%s1 + $0x30] sm:$0xff]
  %v239 = vld [vmem:[%s1 + $0x38] sm:$0xff]
  %v240 = vld [vmem:[%s1 + $0x40] sm:$0xff]
  %v241 = vld [vmem:[%s1 + $0x48] sm:$0xff]
  %v242 = vld [vmem:[%s1 + $0x50] sm:$0xff]
  %v243 = vld [vmem:[%s1 + $0x58] sm:$0xff]
  %v244 = vld [vmem:[%s1 + $0x60] sm:$0xff]
  %v245 = vld [vmem:[%s1 + $0x68] sm:$0xff]
  %v246 = vld [vmem:[%s1 + $0x70] sm:$0xff]
  %v247 = vld [vmem:[%s1 + $0x78] sm:$0xff]
  %v248 = vld [vmem:[%s1 + $0x80] sm:$0xff]
  %v249 = vld [vmem:[%s1 + $0x88] sm:$0xff]
  %v250 = vld [vmem:[%s1 + $0x90] sm:$0xff]
  %v251 = vld [vmem:[%s1 + $0x98] sm:$0xff]
  %v252 = vld [vmem:[%s1 + $0xa0] sm:$0xff]
  %v253 = vld [vmem:[%s1 + $0xa8] sm:$0xff]
  %v254 = vld [vmem:[%s1 + $0xb0] sm:$0xff]
  %v255 = vld [vmem:[%s1 + $0xb8] sm:$0xff]
  %v256 = vld [vmem:[%s1 + $0xc0] sm:$0xff]
  %vm257 = vcmask 588800
  %v259 = vsel %vm257, %v33, 0
  %v262 = vsel %vm257, %v35, 0
  %v265 = vsel %vm257, %v37, 0
  %v268 = vsel %vm257, %v39, 0
  %v271 = vsel %vm257, %v41, 0
  %v274 = vsel %vm257, %v43, 0
  %v277 = vsel %vm257, %v45, 0
  %v280 = vsel %vm257, %v47, 0
  %v283 = vsel %vm257, %v49, 0
  %v286 = vsel %vm257, %v51, 0
  %v289 = vsel %vm257, %v53, 0
  %v292 = vsel %vm257, %v55, 0
  %v295 = vsel %vm257, %v57, 0
  %v298 = vsel %vm257, %v59, 0
  %v301 = vsel %vm257, %v61, 0
  %v304 = vsel %vm257, %v63, 0
  %v307 = vsel %vm257, %v65, 0
  %v310 = vsel %vm257, %v67, 0
  %v313 = vsel %vm257, %v69, 0
  %v316 = vsel %vm257, %v71, 0
  %v319 = vsel %vm257, %v73, 0
  %v322 = vsel %vm257, %v75, 0
  %v325 = vsel %vm257, %v77, 0
  %v328 = vsel %vm257, %v79, 0
  %v331 = vsel %vm257, %v81, 0
  %v334 = vsel %vm257, %v83, 0
  %v337 = vsel %vm257, %v85, 0
  %v340 = vsel %vm257, %v87, 0
  %v343 = vsel %vm257, %v89, 0
  %v346 = vsel %vm257, %v91, 0
  %v349 = vsel %vm257, %v93, 0
  %v352 = vsel %vm257, %v95, 0
  %v355 = vsel %vm257, %v97, 0
  %v358 = vsel %vm257, %v99, 0
  %v361 = vsel %vm257, %v101, 0
  %v364 = vsel %vm257, %v103, 0
  %v367 = vsel %vm257, %v105, 0
  %v370 = vsel %vm257, %v107, 0
  %v373 = vsel %vm257, %v109, 0
  %v376 = vsel %vm257, %v111, 0
  %v379 = vsel %vm257, %v113, 0
  %v382 = vsel %vm257, %v115, 0
  %v385 = vsel %vm257, %v117, 0
  %v388 = vsel %vm257, %v119, 0
  %v391 = vsel %vm257, %v121, 0
  %v394 = vsel %vm257, %v123, 0
  %v397 = vsel %vm257, %v125, 0
  %v400 = vsel %vm257, %v127, 0
  %v403 = vsel %vm257, %v129, 0
  %v406 = vsel %vm257, %v131, 0
  %v409 = vsel %vm257, %v133, 0
  %v412 = vsel %vm257, %v135, 0
  %v415 = vsel %vm257, %v137, 0
  %v418 = vsel %vm257, %v139, 0
  %v421 = vsel %vm257, %v141, 0
  %v424 = vsel %vm257, %v143, 0
  %v427 = vsel %vm257, %v145, 0
  %v430 = vsel %vm257, %v147, 0
  %v433 = vsel %vm257, %v149, 0
  %v436 = vsel %vm257, %v151, 0
  %v439 = vsel %vm257, %v153, 0
  %v442 = vsel %vm257, %v155, 0
  %v445 = vsel %vm257, %v157, 0
  %v448 = vsel %vm257, %v159, 0
  %v451 = vsel %vm257, %v161, 0
  %v454 = vsel %vm257, %v163, 0
  %v457 = vsel %vm257, %v165, 0
  %v460 = vsel %vm257, %v167, 0
  %v463 = vsel %vm257, %v169, 0
  %v466 = vsel %vm257, %v171, 0
  %v469 = vsel %vm257, %v173, 0
  %v472 = vsel %vm257, %v175, 0
  %v475 = vsel %vm257, %v177, 0
  %v478 = vsel %vm257, %v179, 0
  %v481 = vsel %vm257, %v181, 0
  %v484 = vsel %vm257, %v183, 0
  %v487 = vsel %vm257, %v185, 0
  %v490 = vsel %vm257, %v187, 0
  %v493 = vsel %vm257, %v189, 0
  %v496 = vsel %vm257, %v191, 0
  %v499 = vsel %vm257, %v193, 0
  %v502 = vsel %vm257, %v195, 0
  %v505 = vsel %vm257, %v197, 0
  %v508 = vsel %vm257, %v199, 0
  %v511 = vsel %vm257, %v201, 0
  %v514 = vsel %vm257, %v203, 0
  %v517 = vsel %vm257, %v205, 0
  %v520 = vsel %vm257, %v207, 0
  %v523 = vsel %vm257, %v209, 0
  %v526 = vsel %vm257, %v211, 0
  %v529 = vsel %vm257, %v213, 0
  %v532 = vsel %vm257, %v215, 0
  %v535 = vsel %vm257, %v217, 0
  %v538 = vsel %vm257, %v219, 0
  %v541 = vsel %vm257, %v221, 0
  %v544 = vsel %vm257, %v223, 0
  %v547 = vsel %vm257, %v225, 0
  %v550 = vsel %vm257, %v227, 0
  %v553 = vsel %vm257, %v229, 0
  %v556 = vsel %vm257, %v231, 0
  %558 = vmatpush.msra.mxu0 %v247
  %559 = vmatpush.msra.mxu0 %v246
  %560 = vmatpush.msra.mxu0 %v245
  %561 = vmatpush.msra.mxu0 %v244
  %562 = vmatpush.msra.mxu0 %v243
  %563 = vmatpush.msra.mxu0 %v242
  %564 = vmatpush.msra.mxu0 %v241
  %565 = vmatpush.msra.mxu0 %v240
  %566 = vmatpush.msra.mxu0 %v239
  %567 = vmatpush.msra.mxu0 %v238
  %568 = vmatpush.msra.mxu0 %v237
  %569 = vmatpush.msra.mxu0 %v236
  %570 = vmatpush.msra.mxu0 %v235
  %571 = vmatpush.msra.mxu0 %v234
  %572 = vmatpush.msra.mxu0 %v233
  %573 = vmatpush.msra.mxu0 %v232
  %574 = vmatmul.f32.gmra.mxu0 %v32
  %v575 = vpop.f32.mrf.mxu0
  %v576 = vadd.f32 0.0, %v575
  %577 = vmatmul.f32.gmra.mxu0 %v34
  %v578 = vpop.f32.mrf.mxu0
  %v579 = vadd.f32 0.0, %v578
  %580 = vmatmul.f32.gmra.mxu0 %v36
  %v581 = vpop.f32.mrf.mxu0
  %v582 = vadd.f32 0.0, %v581
  %583 = vmatmul.f32.gmra.mxu0 %v38
  %v584 = vpop.f32.mrf.mxu0
  %v585 = vadd.f32 0.0, %v584
  %586 = vmatmul.f32.gmra.mxu0 %v40
  %v587 = vpop.f32.mrf.mxu0
  %v588 = vadd.f32 0.0, %v587
  %589 = vmatmul.f32.gmra.mxu0 %v42
  %v590 = vpop.f32.mrf.mxu0
  %v591 = vadd.f32 0.0, %v590
  %592 = vmatmul.f32.gmra.mxu0 %v44
  %v593 = vpop.f32.mrf.mxu0
  %v594 = vadd.f32 0.0, %v593
  %595 = vmatmul.f32.gmra.mxu0 %v46
  %v596 = vpop.f32.mrf.mxu0
  %v597 = vadd.f32 0.0, %v596
  %598 = vmatmul.f32.gmra.mxu0 %v48
  %v599 = vpop.f32.mrf.mxu0
  %v600 = vadd.f32 0.0, %v599
  %601 = vmatmul.f32.gmra.mxu0 %v50
  %v602 = vpop.f32.mrf.mxu0
  %v603 = vadd.f32 0.0, %v602
  %604 = vmatmul.f32.gmra.mxu0 %v52
  %v605 = vpop.f32.mrf.mxu0
  %v606 = vadd.f32 0.0, %v605
  %607 = vmatmul.f32.gmra.mxu0 %v54
  %v608 = vpop.f32.mrf.mxu0
  %v609 = vadd.f32 0.0, %v608
  %610 = vmatmul.f32.gmra.mxu0 %v56
  %v611 = vpop.f32.mrf.mxu0
  %v612 = vadd.f32 0.0, %v611
  %613 = vmatmul.f32.gmra.mxu0 %v58
  %v614 = vpop.f32.mrf.mxu0
  %v615 = vadd.f32 0.0, %v614
  %616 = vmatmul.f32.gmra.mxu0 %v60
  %v617 = vpop.f32.mrf.mxu0
  %v618 = vadd.f32 0.0, %v617
  %619 = vmatmul.f32.gmra.mxu0 %v62
  %v620 = vpop.f32.mrf.mxu0
  %v621 = vadd.f32 0.0, %v620
  %622 = vmatmul.f32.gmra.mxu0 %v64
  %v623 = vpop.f32.mrf.mxu0
  %v624 = vadd.f32 0.0, %v623
  %625 = vmatmul.f32.gmra.mxu0 %v66
  %v626 = vpop.f32.mrf.mxu0
  %v627 = vadd.f32 0.0, %v626
  %628 = vmatmul.f32.gmra.mxu0 %v68
  %v629 = vpop.f32.mrf.mxu0
  %v630 = vadd.f32 0.0, %v629
  %631 = vmatmul.f32.gmra.mxu0 %v70
  %v632 = vpop.f32.mrf.mxu0
  %v633 = vadd.f32 0.0, %v632
  %634 = vmatmul.f32.gmra.mxu0 %v72
  %v635 = vpop.f32.mrf.mxu0
  %v636 = vadd.f32 0.0, %v635
  %637 = vmatmul.f32.gmra.mxu0 %v74
  %v638 = vpop.f32.mrf.mxu0
  %v639 = vadd.f32 0.0, %v638
  %640 = vmatmul.f32.gmra.mxu0 %v76
  %v641 = vpop.f32.mrf.mxu0
  %v642 = vadd.f32 0.0, %v641
  %643 = vmatmul.f32.gmra.mxu0 %v78
  %v644 = vpop.f32.mrf.mxu0
  %v645 = vadd.f32 0.0, %v644
  %646 = vmatmul.f32.gmra.mxu0 %v80
  %v647 = vpop.f32.mrf.mxu0
  %v648 = vadd.f32 0.0, %v647
  %649 = vmatmul.f32.gmra.mxu0 %v82
  %v650 = vpop.f32.mrf.mxu0
  %v651 = vadd.f32 0.0, %v650
  %652 = vmatmul.f32.gmra.mxu0 %v84
  %v653 = vpop.f32.mrf.mxu0
  %v654 = vadd.f32 0.0, %v653
  %655 = vmatmul.f32.gmra.mxu0 %v86
  %v656 = vpop.f32.mrf.mxu0
  %v657 = vadd.f32 0.0, %v656
  %658 = vmatmul.f32.gmra.mxu0 %v88
  %v659 = vpop.f32.mrf.mxu0
  %v660 = vadd.f32 0.0, %v659
  %661 = vmatmul.f32.gmra.mxu0 %v90
  %v662 = vpop.f32.mrf.mxu0
  %v663 = vadd.f32 0.0, %v662
  %664 = vmatmul.f32.gmra.mxu0 %v92
  %v665 = vpop.f32.mrf.mxu0
  %v666 = vadd.f32 0.0, %v665
  %667 = vmatmul.f32.gmra.mxu0 %v94
  %v668 = vpop.f32.mrf.mxu0
  %v669 = vadd.f32 0.0, %v668
  %670 = vmatmul.f32.gmra.mxu0 %v96
  %v671 = vpop.f32.mrf.mxu0
  %v672 = vadd.f32 0.0, %v671
  %673 = vmatmul.f32.gmra.mxu0 %v98
  %v674 = vpop.f32.mrf.mxu0
  %v675 = vadd.f32 0.0, %v674
  %676 = vmatmul.f32.gmra.mxu0 %v100
  %v677 = vpop.f32.mrf.mxu0
  %v678 = vadd.f32 0.0, %v677
  %679 = vmatmul.f32.gmra.mxu0 %v102
  %v680 = vpop.f32.mrf.mxu0
  %v681 = vadd.f32 0.0, %v680
  %682 = vmatmul.f32.gmra.mxu0 %v104
  %v683 = vpop.f32.mrf.mxu0
  %v684 = vadd.f32 0.0, %v683
  %685 = vmatmul.f32.gmra.mxu0 %v106
  %v686 = vpop.f32.mrf.mxu0
  %v687 = vadd.f32 0.0, %v686
  %688 = vmatmul.f32.gmra.mxu0 %v108
  %v689 = vpop.f32.mrf.mxu0
  %v690 = vadd.f32 0.0, %v689
  %691 = vmatmul.f32.gmra.mxu0 %v110
  %v692 = vpop.f32.mrf.mxu0
  %v693 = vadd.f32 0.0, %v692
  %694 = vmatmul.f32.gmra.mxu0 %v112
  %v695 = vpop.f32.mrf.mxu0
  %v696 = vadd.f32 0.0, %v695
  %697 = vmatmul.f32.gmra.mxu0 %v114
  %v698 = vpop.f32.mrf.mxu0
  %v699 = vadd.f32 0.0, %v698
  %700 = vmatmul.f32.gmra.mxu0 %v116
  %v701 = vpop.f32.mrf.mxu0
  %v702 = vadd.f32 0.0, %v701
  %703 = vmatmul.f32.gmra.mxu0 %v118
  %v704 = vpop.f32.mrf.mxu0
  %v705 = vadd.f32 0.0, %v704
  %706 = vmatmul.f32.gmra.mxu0 %v120
  %v707 = vpop.f32.mrf.mxu0
  %v708 = vadd.f32 0.0, %v707
  %709 = vmatmul.f32.gmra.mxu0 %v122
  %v710 = vpop.f32.mrf.mxu0
  %v711 = vadd.f32 0.0, %v710
  %712 = vmatmul.f32.gmra.mxu0 %v124
  %v713 = vpop.f32.mrf.mxu0
  %v714 = vadd.f32 0.0, %v713
  %715 = vmatmul.f32.gmra.mxu0 %v126
  %v716 = vpop.f32.mrf.mxu0
  %v717 = vadd.f32 0.0, %v716
  %718 = vmatmul.f32.gmra.mxu0 %v128
  %v719 = vpop.f32.mrf.mxu0
  %v720 = vadd.f32 0.0, %v719
  %721 = vmatmul.f32.gmra.mxu0 %v130
  %v722 = vpop.f32.mrf.mxu0
  %v723 = vadd.f32 0.0, %v722
  %724 = vmatmul.f32.gmra.mxu0 %v132
  %v725 = vpop.f32.mrf.mxu0
  %v726 = vadd.f32 0.0, %v725
  %727 = vmatmul.f32.gmra.mxu0 %v134
  %v728 = vpop.f32.mrf.mxu0
  %v729 = vadd.f32 0.0, %v728
  %730 = vmatmul.f32.gmra.mxu0 %v136
  %v731 = vpop.f32.mrf.mxu0
  %v732 = vadd.f32 0.0, %v731
  %733 = vmatmul.f32.gmra.mxu0 %v138
  %v734 = vpop.f32.mrf.mxu0
  %v735 = vadd.f32 0.0, %v734
  %736 = vmatmul.f32.gmra.mxu0 %v140
  %v737 = vpop.f32.mrf.mxu0
  %v738 = vadd.f32 0.0, %v737
  %739 = vmatmul.f32.gmra.mxu0 %v142
  %v740 = vpop.f32.mrf.mxu0
  %v741 = vadd.f32 0.0, %v740
  %742 = vmatmul.f32.gmra.mxu0 %v144
  %v743 = vpop.f32.mrf.mxu0
  %v744 = vadd.f32 0.0, %v743
  %745 = vmatmul.f32.gmra.mxu0 %v146
  %v746 = vpop.f32.mrf.mxu0
  %v747 = vadd.f32 0.0, %v746
  %748 = vmatmul.f32.gmra.mxu0 %v148
  %v749 = vpop.f32.mrf.mxu0
  %v750 = vadd.f32 0.0, %v749
  %751 = vmatmul.f32.gmra.mxu0 %v150
  %v752 = vpop.f32.mrf.mxu0
  %v753 = vadd.f32 0.0, %v752
  %754 = vmatmul.f32.gmra.mxu0 %v152
  %v755 = vpop.f32.mrf.mxu0
  %v756 = vadd.f32 0.0, %v755
  %757 = vmatmul.f32.gmra.mxu0 %v154
  %v758 = vpop.f32.mrf.mxu0
  %v759 = vadd.f32 0.0, %v758
  %760 = vmatmul.f32.gmra.mxu0 %v156
  %v761 = vpop.f32.mrf.mxu0
  %v762 = vadd.f32 0.0, %v761
  %763 = vmatmul.f32.gmra.mxu0 %v158
  %v764 = vpop.f32.mrf.mxu0
  %v765 = vadd.f32 0.0, %v764
  %766 = vmatmul.f32.gmra.mxu0 %v160
  %v767 = vpop.f32.mrf.mxu0
  %v768 = vadd.f32 0.0, %v767
  %769 = vmatmul.f32.gmra.mxu0 %v162
  %v770 = vpop.f32.mrf.mxu0
  %v771 = vadd.f32 0.0, %v770
  %772 = vmatmul.f32.gmra.mxu0 %v164
  %v773 = vpop.f32.mrf.mxu0
  %v774 = vadd.f32 0.0, %v773
  %775 = vmatmul.f32.gmra.mxu0 %v166
  %v776 = vpop.f32.mrf.mxu0
  %v777 = vadd.f32 0.0, %v776
  %778 = vmatmul.f32.gmra.mxu0 %v168
  %v779 = vpop.f32.mrf.mxu0
  %v780 = vadd.f32 0.0, %v779
  %781 = vmatmul.f32.gmra.mxu0 %v170
  %v782 = vpop.f32.mrf.mxu0
  %v783 = vadd.f32 0.0, %v782
  %784 = vmatmul.f32.gmra.mxu0 %v172
  %v785 = vpop.f32.mrf.mxu0
  %v786 = vadd.f32 0.0, %v785
  %787 = vmatmul.f32.gmra.mxu0 %v174
  %v788 = vpop.f32.mrf.mxu0
  %v789 = vadd.f32 0.0, %v788
  %790 = vmatmul.f32.gmra.mxu0 %v176
  %v791 = vpop.f32.mrf.mxu0
  %v792 = vadd.f32 0.0, %v791
  %793 = vmatmul.f32.gmra.mxu0 %v178
  %v794 = vpop.f32.mrf.mxu0
  %v795 = vadd.f32 0.0, %v794
  %796 = vmatmul.f32.gmra.mxu0 %v180
  %v797 = vpop.f32.mrf.mxu0
  %v798 = vadd.f32 0.0, %v797
  %799 = vmatmul.f32.gmra.mxu0 %v182
  %v800 = vpop.f32.mrf.mxu0
  %v801 = vadd.f32 0.0, %v800
  %802 = vmatmul.f32.gmra.mxu0 %v184
  %v803 = vpop.f32.mrf.mxu0
  %v804 = vadd.f32 0.0, %v803
  %805 = vmatmul.f32.gmra.mxu0 %v186
  %v806 = vpop.f32.mrf.mxu0
  %v807 = vadd.f32 0.0, %v806
  %808 = vmatmul.f32.gmra.mxu0 %v188
  %v809 = vpop.f32.mrf.mxu0
  %v810 = vadd.f32 0.0, %v809
  %811 = vmatmul.f32.gmra.mxu0 %v190
  %v812 = vpop.f32.mrf.mxu0
  %v813 = vadd.f32 0.0, %v812
  %814 = vmatmul.f32.gmra.mxu0 %v192
  %v815 = vpop.f32.mrf.mxu0
  %v816 = vadd.f32 0.0, %v815
  %817 = vmatmul.f32.gmra.mxu0 %v194
  %v818 = vpop.f32.mrf.mxu0
  %v819 = vadd.f32 0.0, %v818
  %820 = vmatmul.f32.gmra.mxu0 %v196
  %v821 = vpop.f32.mrf.mxu0
  %v822 = vadd.f32 0.0, %v821
  %823 = vmatmul.f32.gmra.mxu0 %v198
  %v824 = vpop.f32.mrf.mxu0
  %v825 = vadd.f32 0.0, %v824
  %826 = vmatmul.f32.gmra.mxu0 %v200
  %v827 = vpop.f32.mrf.mxu0
  %v828 = vadd.f32 0.0, %v827
  %829 = vmatmul.f32.gmra.mxu0 %v202
  %v830 = vpop.f32.mrf.mxu0
  %v831 = vadd.f32 0.0, %v830
  %832 = vmatmul.f32.gmra.mxu0 %v204
  %v833 = vpop.f32.mrf.mxu0
  %v834 = vadd.f32 0.0, %v833
  %835 = vmatmul.f32.gmra.mxu0 %v206
  %v836 = vpop.f32.mrf.mxu0
  %v837 = vadd.f32 0.0, %v836
  %838 = vmatmul.f32.gmra.mxu0 %v208
  %v839 = vpop.f32.mrf.mxu0
  %v840 = vadd.f32 0.0, %v839
  %841 = vmatmul.f32.gmra.mxu0 %v210
  %v842 = vpop.f32.mrf.mxu0
  %v843 = vadd.f32 0.0, %v842
  %844 = vmatmul.f32.gmra.mxu0 %v212
  %v845 = vpop.f32.mrf.mxu0
  %v846 = vadd.f32 0.0, %v845
  %847 = vmatmul.f32.gmra.mxu0 %v214
  %v848 = vpop.f32.mrf.mxu0
  %v849 = vadd.f32 0.0, %v848
  %850 = vmatmul.f32.gmra.mxu0 %v216
  %v851 = vpop.f32.mrf.mxu0
  %v852 = vadd.f32 0.0, %v851
  %853 = vmatmul.f32.gmra.mxu0 %v218
  %v854 = vpop.f32.mrf.mxu0
  %v855 = vadd.f32 0.0, %v854
  %856 = vmatmul.f32.gmra.mxu0 %v220
  %v857 = vpop.f32.mrf.mxu0
  %v858 = vadd.f32 0.0, %v857
  %859 = vmatmul.f32.gmra.mxu0 %v222
  %v860 = vpop.f32.mrf.mxu0
  %v861 = vadd.f32 0.0, %v860
  %862 = vmatmul.f32.gmra.mxu0 %v224
  %v863 = vpop.f32.mrf.mxu0
  %v864 = vadd.f32 0.0, %v863
  %865 = vmatmul.f32.gmra.mxu0 %v226
  %v866 = vpop.f32.mrf.mxu0
  %v867 = vadd.f32 0.0, %v866
  %868 = vmatmul.f32.gmra.mxu0 %v228
  %v869 = vpop.f32.mrf.mxu0
  %v870 = vadd.f32 0.0, %v869
  %871 = vmatmul.f32.gmra.mxu0 %v230
  %v872 = vpop.f32.mrf.mxu0
  %v873 = vadd.f32 0.0, %v872
  %874 = vdwg.mxu0
  %875 = vmatpush.msra.mxu0 0.0
  %876 = vmatpush.msra.mxu0 0.0
  %877 = vmatpush.msra.mxu0 0.0
  %878 = vmatpush.msra.mxu0 0.0
  %879 = vmatpush.msra.mxu0 0.0
  %880 = vmatpush.msra.mxu0 0.0
  %881 = vmatpush.msra.mxu0 0.0
  %882 = vmatpush.msra.mxu0 %v256
  %883 = vmatpush.msra.mxu0 %v255
  %884 = vmatpush.msra.mxu0 %v254
  %885 = vmatpush.msra.mxu0 %v253
  %886 = vmatpush.msra.mxu0 %v252
  %887 = vmatpush.msra.mxu0 %v251
  %888 = vmatpush.msra.mxu0 %v250
  %889 = vmatpush.msra.mxu0 %v249
  %890 = vmatpush.msra.mxu0 %v248
  %891 = vmatmul.f32.gmra.mxu0 %v259
  %v892 = vpop.f32.mrf.mxu0
  %v893 = vadd.f32 %v576, %v892
  %894 = vmatmul.f32.gmra.mxu0 %v262
  %v895 = vpop.f32.mrf.mxu0
  %v896 = vadd.f32 %v579, %v895
  %897 = vmatmul.f32.gmra.mxu0 %v265
  %v898 = vpop.f32.mrf.mxu0
  %v899 = vadd.f32 %v582, %v898
  %900 = vmatmul.f32.gmra.mxu0 %v268
  %v901 = vpop.f32.mrf.mxu0
  %v902 = vadd.f32 %v585, %v901
  %903 = vmatmul.f32.gmra.mxu0 %v271
  %v904 = vpop.f32.mrf.mxu0
  %v905 = vadd.f32 %v588, %v904
  %906 = vmatmul.f32.gmra.mxu0 %v274
  %v907 = vpop.f32.mrf.mxu0
  %v908 = vadd.f32 %v591, %v907
  %909 = vmatmul.f32.gmra.mxu0 %v277
  %v910 = vpop.f32.mrf.mxu0
  %v911 = vadd.f32 %v594, %v910
  %912 = vmatmul.f32.gmra.mxu0 %v280
  %v913 = vpop.f32.mrf.mxu0
  %v914 = vadd.f32 %v597, %v913
  %915 = vmatmul.f32.gmra.mxu0 %v283
  %v916 = vpop.f32.mrf.mxu0
  %v917 = vadd.f32 %v600, %v916
  %918 = vmatmul.f32.gmra.mxu0 %v286
  %v919 = vpop.f32.mrf.mxu0
  %v920 = vadd.f32 %v603, %v919
  %921 = vmatmul.f32.gmra.mxu0 %v289
  %v922 = vpop.f32.mrf.mxu0
  %v923 = vadd.f32 %v606, %v922
  %924 = vmatmul.f32.gmra.mxu0 %v292
  %v925 = vpop.f32.mrf.mxu0
  %v926 = vadd.f32 %v609, %v925
  %927 = vmatmul.f32.gmra.mxu0 %v295
  %v928 = vpop.f32.mrf.mxu0
  %v929 = vadd.f32 %v612, %v928
  %930 = vmatmul.f32.gmra.mxu0 %v298
  %v931 = vpop.f32.mrf.mxu0
  %v932 = vadd.f32 %v615, %v931
  %933 = vmatmul.f32.gmra.mxu0 %v301
  %v934 = vpop.f32.mrf.mxu0
  %v935 = vadd.f32 %v618, %v934
  %936 = vmatmul.f32.gmra.mxu0 %v304
  %v937 = vpop.f32.mrf.mxu0
  %v938 = vadd.f32 %v621, %v937
  %939 = vmatmul.f32.gmra.mxu0 %v307
  %v940 = vpop.f32.mrf.mxu0
  %v941 = vadd.f32 %v624, %v940
  %942 = vmatmul.f32.gmra.mxu0 %v310
  %v943 = vpop.f32.mrf.mxu0
  %v944 = vadd.f32 %v627, %v943
  %945 = vmatmul.f32.gmra.mxu0 %v313
  %v946 = vpop.f32.mrf.mxu0
  %v947 = vadd.f32 %v630, %v946
  %948 = vmatmul.f32.gmra.mxu0 %v316
  %v949 = vpop.f32.mrf.mxu0
  %v950 = vadd.f32 %v633, %v949
  %951 = vmatmul.f32.gmra.mxu0 %v319
  %v952 = vpop.f32.mrf.mxu0
  %v953 = vadd.f32 %v636, %v952
  %954 = vmatmul.f32.gmra.mxu0 %v322
  %v955 = vpop.f32.mrf.mxu0
  %v956 = vadd.f32 %v639, %v955
  %957 = vmatmul.f32.gmra.mxu0 %v325
  %v958 = vpop.f32.mrf.mxu0
  %v959 = vadd.f32 %v642, %v958
  %960 = vmatmul.f32.gmra.mxu0 %v328
  %v961 = vpop.f32.mrf.mxu0
  %v962 = vadd.f32 %v645, %v961
  %963 = vmatmul.f32.gmra.mxu0 %v331
  %v964 = vpop.f32.mrf.mxu0
  %v965 = vadd.f32 %v648, %v964
  %966 = vmatmul.f32.gmra.mxu0 %v334
  %v967 = vpop.f32.mrf.mxu0
  %v968 = vadd.f32 %v651, %v967
  %969 = vmatmul.f32.gmra.mxu0 %v337
  %v970 = vpop.f32.mrf.mxu0
  %v971 = vadd.f32 %v654, %v970
  %972 = vmatmul.f32.gmra.mxu0 %v340
  %v973 = vpop.f32.mrf.mxu0
  %v974 = vadd.f32 %v657, %v973
  %975 = vmatmul.f32.gmra.mxu0 %v343
  %v976 = vpop.f32.mrf.mxu0
  %v977 = vadd.f32 %v660, %v976
  %978 = vmatmul.f32.gmra.mxu0 %v346
  %v979 = vpop.f32.mrf.mxu0
  %v980 = vadd.f32 %v663, %v979
  %981 = vmatmul.f32.gmra.mxu0 %v349
  %v982 = vpop.f32.mrf.mxu0
  %v983 = vadd.f32 %v666, %v982
  %984 = vmatmul.f32.gmra.mxu0 %v352
  %v985 = vpop.f32.mrf.mxu0
  %v986 = vadd.f32 %v669, %v985
  %987 = vmatmul.f32.gmra.mxu0 %v355
  %v988 = vpop.f32.mrf.mxu0
  %v989 = vadd.f32 %v672, %v988
  %990 = vmatmul.f32.gmra.mxu0 %v358
  %v991 = vpop.f32.mrf.mxu0
  %v992 = vadd.f32 %v675, %v991
  %993 = vmatmul.f32.gmra.mxu0 %v361
  %v994 = vpop.f32.mrf.mxu0
  %v995 = vadd.f32 %v678, %v994
  %996 = vmatmul.f32.gmra.mxu0 %v364
  %v997 = vpop.f32.mrf.mxu0
  %v998 = vadd.f32 %v681, %v997
  %999 = vmatmul.f32.gmra.mxu0 %v367
  %v1000 = vpop.f32.mrf.mxu0
  %v1001 = vadd.f32 %v684, %v1000
  %1002 = vmatmul.f32.gmra.mxu0 %v370
  %v1003 = vpop.f32.mrf.mxu0
  %v1004 = vadd.f32 %v687, %v1003
  %1005 = vmatmul.f32.gmra.mxu0 %v373
  %v1006 = vpop.f32.mrf.mxu0
  %v1007 = vadd.f32 %v690, %v1006
  %1008 = vmatmul.f32.gmra.mxu0 %v376
  %v1009 = vpop.f32.mrf.mxu0
  %v1010 = vadd.f32 %v693, %v1009
  %1011 = vmatmul.f32.gmra.mxu0 %v379
  %v1012 = vpop.f32.mrf.mxu0
  %v1013 = vadd.f32 %v696, %v1012
  %1014 = vmatmul.f32.gmra.mxu0 %v382
  %v1015 = vpop.f32.mrf.mxu0
  %v1016 = vadd.f32 %v699, %v1015
  %1017 = vmatmul.f32.gmra.mxu0 %v385
  %v1018 = vpop.f32.mrf.mxu0
  %v1019 = vadd.f32 %v702, %v1018
  %1020 = vmatmul.f32.gmra.mxu0 %v388
  %v1021 = vpop.f32.mrf.mxu0
  %v1022 = vadd.f32 %v705, %v1021
  %1023 = vmatmul.f32.gmra.mxu0 %v391
  %v1024 = vpop.f32.mrf.mxu0
  %v1025 = vadd.f32 %v708, %v1024
  %1026 = vmatmul.f32.gmra.mxu0 %v394
  %v1027 = vpop.f32.mrf.mxu0
  %v1028 = vadd.f32 %v711, %v1027
  %1029 = vmatmul.f32.gmra.mxu0 %v397
  %v1030 = vpop.f32.mrf.mxu0
  %v1031 = vadd.f32 %v714, %v1030
  %1032 = vmatmul.f32.gmra.mxu0 %v400
  %v1033 = vpop.f32.mrf.mxu0
  %v1034 = vadd.f32 %v717, %v1033
  %1035 = vmatmul.f32.gmra.mxu0 %v403
  %v1036 = vpop.f32.mrf.mxu0
  %v1037 = vadd.f32 %v720, %v1036
  %1038 = vmatmul.f32.gmra.mxu0 %v406
  %v1039 = vpop.f32.mrf.mxu0
  %v1040 = vadd.f32 %v723, %v1039
  %1041 = vmatmul.f32.gmra.mxu0 %v409
  %v1042 = vpop.f32.mrf.mxu0
  %v1043 = vadd.f32 %v726, %v1042
  %1044 = vmatmul.f32.gmra.mxu0 %v412
  %v1045 = vpop.f32.mrf.mxu0
  %v1046 = vadd.f32 %v729, %v1045
  %1047 = vmatmul.f32.gmra.mxu0 %v415
  %v1048 = vpop.f32.mrf.mxu0
  %v1049 = vadd.f32 %v732, %v1048
  %1050 = vmatmul.f32.gmra.mxu0 %v418
  %v1051 = vpop.f32.mrf.mxu0
  %v1052 = vadd.f32 %v735, %v1051
  %1053 = vmatmul.f32.gmra.mxu0 %v421
  %v1054 = vpop.f32.mrf.mxu0
  %v1055 = vadd.f32 %v738, %v1054
  %1056 = vmatmul.f32.gmra.mxu0 %v424
  %v1057 = vpop.f32.mrf.mxu0
  %v1058 = vadd.f32 %v741, %v1057
  %1059 = vmatmul.f32.gmra.mxu0 %v427
  %v1060 = vpop.f32.mrf.mxu0
  %v1061 = vadd.f32 %v744, %v1060
  %1062 = vmatmul.f32.gmra.mxu0 %v430
  %v1063 = vpop.f32.mrf.mxu0
  %v1064 = vadd.f32 %v747, %v1063
  %1065 = vmatmul.f32.gmra.mxu0 %v433
  %v1066 = vpop.f32.mrf.mxu0
  %v1067 = vadd.f32 %v750, %v1066
  %1068 = vmatmul.f32.gmra.mxu0 %v436
  %v1069 = vpop.f32.mrf.mxu0
  %v1070 = vadd.f32 %v753, %v1069
  %1071 = vmatmul.f32.gmra.mxu0 %v439
  %v1072 = vpop.f32.mrf.mxu0
  %v1073 = vadd.f32 %v756, %v1072
  %1074 = vmatmul.f32.gmra.mxu0 %v442
  %v1075 = vpop.f32.mrf.mxu0
  %v1076 = vadd.f32 %v759, %v1075
  %1077 = vmatmul.f32.gmra.mxu0 %v445
  %v1078 = vpop.f32.mrf.mxu0
  %v1079 = vadd.f32 %v762, %v1078
  %1080 = vmatmul.f32.gmra.mxu0 %v448
  %v1081 = vpop.f32.mrf.mxu0
  %v1082 = vadd.f32 %v765, %v1081
  %1083 = vmatmul.f32.gmra.mxu0 %v451
  %v1084 = vpop.f32.mrf.mxu0
  %v1085 = vadd.f32 %v768, %v1084
  %1086 = vmatmul.f32.gmra.mxu0 %v454
  %v1087 = vpop.f32.mrf.mxu0
  %v1088 = vadd.f32 %v771, %v1087
  %1089 = vmatmul.f32.gmra.mxu0 %v457
  %v1090 = vpop.f32.mrf.mxu0
  %v1091 = vadd.f32 %v774, %v1090
  %1092 = vmatmul.f32.gmra.mxu0 %v460
  %v1093 = vpop.f32.mrf.mxu0
  %v1094 = vadd.f32 %v777, %v1093
  %1095 = vmatmul.f32.gmra.mxu0 %v463
  %v1096 = vpop.f32.mrf.mxu0
  %v1097 = vadd.f32 %v780, %v1096
  %1098 = vmatmul.f32.gmra.mxu0 %v466
  %v1099 = vpop.f32.mrf.mxu0
  %v1100 = vadd.f32 %v783, %v1099
  %1101 = vmatmul.f32.gmra.mxu0 %v469
  %v1102 = vpop.f32.mrf.mxu0
  %v1103 = vadd.f32 %v786, %v1102
  %1104 = vmatmul.f32.gmra.mxu0 %v472
  %v1105 = vpop.f32.mrf.mxu0
  %v1106 = vadd.f32 %v789, %v1105
  %1107 = vmatmul.f32.gmra.mxu0 %v475
  %v1108 = vpop.f32.mrf.mxu0
  %v1109 = vadd.f32 %v792, %v1108
  %1110 = vmatmul.f32.gmra.mxu0 %v478
  %v1111 = vpop.f32.mrf.mxu0
  %v1112 = vadd.f32 %v795, %v1111
  %1113 = vmatmul.f32.gmra.mxu0 %v481
  %v1114 = vpop.f32.mrf.mxu0
  %v1115 = vadd.f32 %v798, %v1114
  %1116 = vmatmul.f32.gmra.mxu0 %v484
  %v1117 = vpop.f32.mrf.mxu0
  %v1118 = vadd.f32 %v801, %v1117
  %1119 = vmatmul.f32.gmra.mxu0 %v487
  %v1120 = vpop.f32.mrf.mxu0
  %v1121 = vadd.f32 %v804, %v1120
  %1122 = vmatmul.f32.gmra.mxu0 %v490
  %v1123 = vpop.f32.mrf.mxu0
  %v1124 = vadd.f32 %v807, %v1123
  %1125 = vmatmul.f32.gmra.mxu0 %v493
  %v1126 = vpop.f32.mrf.mxu0
  %v1127 = vadd.f32 %v810, %v1126
  %1128 = vmatmul.f32.gmra.mxu0 %v496
  %v1129 = vpop.f32.mrf.mxu0
  %v1130 = vadd.f32 %v813, %v1129
  %1131 = vmatmul.f32.gmra.mxu0 %v499
  %v1132 = vpop.f32.mrf.mxu0
  %v1133 = vadd.f32 %v816, %v1132
  %1134 = vmatmul.f32.gmra.mxu0 %v502
  %v1135 = vpop.f32.mrf.mxu0
  %v1136 = vadd.f32 %v819, %v1135
  %1137 = vmatmul.f32.gmra.mxu0 %v505
  %v1138 = vpop.f32.mrf.mxu0
  %v1139 = vadd.f32 %v822, %v1138
  %1140 = vmatmul.f32.gmra.mxu0 %v508
  %v1141 = vpop.f32.mrf.mxu0
  %v1142 = vadd.f32 %v825, %v1141
  %1143 = vmatmul.f32.gmra.mxu0 %v511
  %v1144 = vpop.f32.mrf.mxu0
  %v1145 = vadd.f32 %v828, %v1144
  %1146 = vmatmul.f32.gmra.mxu0 %v514
  %v1147 = vpop.f32.mrf.mxu0
  %v1148 = vadd.f32 %v831, %v1147
  %1149 = vmatmul.f32.gmra.mxu0 %v517
  %v1150 = vpop.f32.mrf.mxu0
  %v1151 = vadd.f32 %v834, %v1150
  %1152 = vmatmul.f32.gmra.mxu0 %v520
  %v1153 = vpop.f32.mrf.mxu0
  %v1154 = vadd.f32 %v837, %v1153
  %1155 = vmatmul.f32.gmra.mxu0 %v523
  %v1156 = vpop.f32.mrf.mxu0
  %v1157 = vadd.f32 %v840, %v1156
  %1158 = vmatmul.f32.gmra.mxu0 %v526
  %v1159 = vpop.f32.mrf.mxu0
  %v1160 = vadd.f32 %v843, %v1159
  %1161 = vmatmul.f32.gmra.mxu0 %v529
  %v1162 = vpop.f32.mrf.mxu0
  %v1163 = vadd.f32 %v846, %v1162
  %1164 = vmatmul.f32.gmra.mxu0 %v532
  %v1165 = vpop.f32.mrf.mxu0
  %v1166 = vadd.f32 %v849, %v1165
  %1167 = vmatmul.f32.gmra.mxu0 %v535
  %v1168 = vpop.f32.mrf.mxu0
  %v1169 = vadd.f32 %v852, %v1168
  %1170 = vmatmul.f32.gmra.mxu0 %v538
  %v1171 = vpop.f32.mrf.mxu0
  %v1172 = vadd.f32 %v855, %v1171
  %1173 = vmatmul.f32.gmra.mxu0 %v541
  %v1174 = vpop.f32.mrf.mxu0
  %v1175 = vadd.f32 %v858, %v1174
  %1176 = vmatmul.f32.gmra.mxu0 %v544
  %v1177 = vpop.f32.mrf.mxu0
  %v1178 = vadd.f32 %v861, %v1177
  %1179 = vmatmul.f32.gmra.mxu0 %v547
  %v1180 = vpop.f32.mrf.mxu0
  %v1181 = vadd.f32 %v864, %v1180
  %1182 = vmatmul.f32.gmra.mxu0 %v550
  %v1183 = vpop.f32.mrf.mxu0
  %v1184 = vadd.f32 %v867, %v1183
  %1185 = vmatmul.f32.gmra.mxu0 %v553
  %v1186 = vpop.f32.mrf.mxu0
  %v1187 = vadd.f32 %v870, %v1186
  %1188 = vmatmul.f32.gmra.mxu0 %v556
  %v1189 = vpop.f32.mrf.mxu0
  %v1190 = vadd.f32 %v873, %v1189
  %1191 = vdwg.mxu0
  %v1192 = vmax.f32 %v893, %v968
  %v1193 = vmax.f32 %v896, %v971
  %v1194 = vmax.f32 %v899, %v974
  %v1195 = vmax.f32 %v902, %v977
  %v1196 = vmax.f32 %v905, %v980
  %v1197 = vmax.f32 %v908, %v983
  %v1198 = vmax.f32 %v911, %v986
  %v1199 = vmax.f32 %v914, %v989
  %v1200 = vmax.f32 %v917, %v992
  %v1201 = vmax.f32 %v920, %v995
  %v1202 = vmax.f32 %v923, %v998
  %v1203 = vmax.f32 %v926, %v1001
  %v1204 = vmax.f32 %v929, %v1004
  %v1205 = vmax.f32 %v932, %v1007
  %v1206 = vmax.f32 %v935, %v1010
  %v1207 = vmax.f32 %v938, %v1013
  %v1208 = vmax.f32 %v941, %v1016
  %v1209 = vmax.f32 %v944, %v1019
  %v1210 = vmax.f32 %v947, %v1022
  %v1211 = vmax.f32 %v950, %v1025
  %v1212 = vmax.f32 %v953, %v1028
  %v1213 = vmax.f32 %v956, %v1031
  %v1214 = vmax.f32 %v959, %v1034
  %v1215 = vmax.f32 %v962, %v1037
  %v1216 = vmax.f32 %v965, %v1040
  %v1217 = vmax.f32 %v1043, %v1118
  %v1218 = vmax.f32 %v1046, %v1121
  %v1219 = vmax.f32 %v1049, %v1124
  %v1220 = vmax.f32 %v1052, %v1127
  %v1221 = vmax.f32 %v1055, %v1130
  %v1222 = vmax.f32 %v1058, %v1133
  %v1223 = vmax.f32 %v1061, %v1136
  %v1224 = vmax.f32 %v1064, %v1139
  %v1225 = vmax.f32 %v1067, %v1142
  %v1226 = vmax.f32 %v1070, %v1145
  %v1227 = vmax.f32 %v1073, %v1148
  %v1228 = vmax.f32 %v1076, %v1151
  %v1229 = vmax.f32 %v1079, %v1154
  %v1230 = vmax.f32 %v1082, %v1157
  %v1231 = vmax.f32 %v1085, %v1160
  %v1232 = vmax.f32 %v1088, %v1163
  %v1233 = vmax.f32 %v1091, %v1166
  %v1234 = vmax.f32 %v1094, %v1169
  %v1235 = vmax.f32 %v1097, %v1172
  %v1236 = vmax.f32 %v1100, %v1175
  %v1237 = vmax.f32 %v1103, %v1178
  %v1238 = vmax.f32 %v1106, %v1181
  %v1239 = vmax.f32 %v1109, %v1184
  %v1240 = vmax.f32 %v1112, %v1187
  %v1241 = vmax.f32 %v1115, %v1190
  %v1242 = vmax.f32 %v1192, %v1217
  %v1243 = vmax.f32 %v1193, %v1218
  %v1244 = vmax.f32 %v1194, %v1219
  %v1245 = vmax.f32 %v1195, %v1220
  %v1246 = vmax.f32 %v1196, %v1221
  %v1247 = vmax.f32 %v1197, %v1222
  %v1248 = vmax.f32 %v1198, %v1223
  %v1249 = vmax.f32 %v1199, %v1224
  %v1250 = vmax.f32 %v1200, %v1225
  %v1251 = vmax.f32 %v1201, %v1226
  %v1252 = vmax.f32 %v1202, %v1227
  %v1253 = vmax.f32 %v1203, %v1228
  %v1254 = vmax.f32 %v1204, %v1229
  %v1255 = vmax.f32 %v1205, %v1230
  %v1256 = vmax.f32 %v1206, %v1231
  %v1257 = vmax.f32 %v1207, %v1232
  %v1258 = vmax.f32 %v1208, %v1233
  %v1259 = vmax.f32 %v1209, %v1234
  %v1260 = vmax.f32 %v1210, %v1235
  %v1261 = vmax.f32 %v1211, %v1236
  %v1262 = vmax.f32 %v1212, %v1237
  %v1263 = vmax.f32 %v1213, %v1238
  %v1264 = vmax.f32 %v1214, %v1239
  %v1265 = vmax.f32 %v1215, %v1240
  %v1266 = vmax.f32 %v1216, %v1241
  %v1267 = vld [vmem:[%s2] sm:$0x1]
  %v1269 = vperm.slane %v1267, 0
  %v1271 = vadd.f32 %v1242, %v1269
  %v1272 = vadd.f32 %v1243, %v1269
  %v1273 = vadd.f32 %v1244, %v1269
  %v1274 = vadd.f32 %v1245, %v1269
  %v1275 = vadd.f32 %v1246, %v1269
  %v1276 = vadd.f32 %v1247, %v1269
  %v1277 = vadd.f32 %v1248, %v1269
  %v1278 = vadd.f32 %v1249, %v1269
  %v1279 = vadd.f32 %v1250, %v1269
  %v1280 = vadd.f32 %v1251, %v1269
  %v1281 = vadd.f32 %v1252, %v1269
  %v1282 = vadd.f32 %v1253, %v1269
  %v1283 = vadd.f32 %v1254, %v1269
  %v1284 = vadd.f32 %v1255, %v1269
  %v1285 = vadd.f32 %v1256, %v1269
  %v1286 = vadd.f32 %v1257, %v1269
  %v1287 = vadd.f32 %v1258, %v1269
  %v1288 = vadd.f32 %v1259, %v1269
  %v1289 = vadd.f32 %v1260, %v1269
  %v1290 = vadd.f32 %v1261, %v1269
  %v1291 = vadd.f32 %v1262, %v1269
  %v1292 = vadd.f32 %v1263, %v1269
  %v1293 = vadd.f32 %v1264, %v1269
  %v1294 = vadd.f32 %v1265, %v1269
  %v1295 = vadd.f32 %v1266, %v1269
  %v1296 = vmax.f32 %v1271, 0.0
  %v1297 = vmax.f32 %v1272, 0.0
  %v1298 = vmax.f32 %v1273, 0.0
  %v1299 = vmax.f32 %v1274, 0.0
  %v1300 = vmax.f32 %v1275, 0.0
  %v1301 = vmax.f32 %v1276, 0.0
  %v1302 = vmax.f32 %v1277, 0.0
  %v1303 = vmax.f32 %v1278, 0.0
  %v1304 = vmax.f32 %v1279, 0.0
  %v1305 = vmax.f32 %v1280, 0.0
  %v1306 = vmax.f32 %v1281, 0.0
  %v1307 = vmax.f32 %v1282, 0.0
  %v1308 = vmax.f32 %v1283, 0.0
  %v1309 = vmax.f32 %v1284, 0.0
  %v1310 = vmax.f32 %v1285, 0.0
  %v1311 = vmax.f32 %v1286, 0.0
  %v1312 = vmax.f32 %v1287, 0.0
  %v1313 = vmax.f32 %v1288, 0.0
  %v1314 = vmax.f32 %v1289, 0.0
  %v1315 = vmax.f32 %v1290, 0.0
  %v1316 = vmax.f32 %v1291, 0.0
  %v1317 = vmax.f32 %v1292, 0.0
  %v1318 = vmax.f32 %v1293, 0.0
  %v1319 = vmax.f32 %v1294, 0.0
  %v1320 = vmax.f32 %v1295, 0.0
  %vm1321 = vcmask 130048
  %1322 = vst.msk [vmem:[#allocation2] sm:$0xff] %vm1321, %v1296
  %1324 = vrot.lane.b32.xlu0 %v1297, 16
  %v1325 = vpop.permute.xlu0 %1324
  %vm1327 = vcmask 261248
  %1328 = vst.msk [vmem:[#allocation2] sm:$0xff] %vm1327, %v1325
  %1330 = vrot.lane.b32.xlu0 %v1298, 32
  %v1331 = vpop.permute.xlu0 %1330
  %vm1333 = vcmask 392448
  %1334 = vst.msk [vmem:[#allocation2] sm:$0xff] %vm1333, %v1331
  %1336 = vrot.lane.b32.xlu0 %v1299, 48
  %v1337 = vpop.permute.xlu0 %1336
  %vm1339 = vcmask 523648
  %1340 = vst.msk [vmem:[#allocation2] sm:$0xff] %vm1339, %v1337
  %1342 = vrot.lane.b32.xlu0 %v1300, 64
  %v1343 = vpop.permute.xlu0 %1342
  %vm1345 = vcmask 654848
  %1346 = vst.msk [vmem:[#allocation2] sm:$0xff] %vm1345, %v1343
  %1348 = vrot.lane.b32.xlu0 %v1301, 80
  %v1349 = vpop.permute.xlu0 %1348
  %vm1351 = vcmask 786048
  %1352 = vst.msk [vmem:[#allocation2] sm:$0xff] %vm1351, %v1349
  %1354 = vrot.lane.b32.xlu0 %v1302, 96
  %v1355 = vpop.permute.xlu0 %1354
  %vm1357 = vcmask 917248
  %1358 = vst.msk [vmem:[#allocation2] sm:$0xff] %vm1357, %v1355
  %1360 = vrot.lane.b32.xlu0 %v1303, 112
  %v1361 = vpop.permute.xlu0 %1360
  %vm1363 = vcmask 1048448
  %1364 = vst.msk [vmem:[#allocation2] sm:$0xff] %vm1363, %v1361
  %1365 = vst.msk [vmem:[#allocation2 + $0x8] sm:$0xff] %vm1321, %v1304
  %1367 = vrot.lane.b32.xlu0 %v1305, 16
  %v1368 = vpop.permute.xlu0 %1367
  %1370 = vst.msk [vmem:[#allocation2 + $0x8] sm:$0xff] %vm1327, %v1368
  %1372 = vrot.lane.b32.xlu0 %v1306, 32
  %v1373 = vpop.permute.xlu0 %1372
  %1375 = vst.msk [vmem:[#allocation2 + $0x8] sm:$0xff] %vm1333, %v1373
  %1377 = vrot.lane.b32.xlu0 %v1307, 48
  %v1378 = vpop.permute.xlu0 %1377
  %1380 = vst.msk [vmem:[#allocation2 + $0x8] sm:$0xff] %vm1339, %v1378
  %1382 = vrot.lane.b32.xlu0 %v1308, 64
  %v1383 = vpop.permute.xlu0 %1382
  %1385 = vst.msk [vmem:[#allocation2 + $0x8] sm:$0xff] %vm1345, %v1383
  %1387 = vrot.lane.b32.xlu0 %v1309, 80
  %v1388 = vpop.permute.xlu0 %1387
  %1390 = vst.msk [vmem:[#allocation2 + $0x8] sm:$0xff] %vm1351, %v1388
  %1392 = vrot.lane.b32.xlu0 %v1310, 96
  %v1393 = vpop.permute.xlu0 %1392
  %1395 = vst.msk [vmem:[#allocation2 + $0x8] sm:$0xff] %vm1357, %v1393
  %1397 = vrot.lane.b32.xlu0 %v1311, 112
  %v1398 = vpop.permute.xlu0 %1397
  %1400 = vst.msk [vmem:[#allocation2 + $0x8] sm:$0xff] %vm1363, %v1398
  %1401 = vst.msk [vmem:[#allocation2 + $0x10] sm:$0xff] %vm1321, %v1312
  %1403 = vrot.lane.b32.xlu0 %v1313, 16
  %v1404 = vpop.permute.xlu0 %1403
  %1406 = vst.msk [vmem:[#allocation2 + $0x10] sm:$0xff] %vm1327, %v1404
  %1408 = vrot.lane.b32.xlu0 %v1314, 32
  %v1409 = vpop.permute.xlu0 %1408
  %1411 = vst.msk [vmem:[#allocation2 + $0x10] sm:$0xff] %vm1333, %v1409
  %1413 = vrot.lane.b32.xlu0 %v1315, 48
  %v1414 = vpop.permute.xlu0 %1413
  %1416 = vst.msk [vmem:[#allocation2 + $0x10] sm:$0xff] %vm1339, %v1414
  %1418 = vrot.lane.b32.xlu0 %v1316, 64
  %v1419 = vpop.permute.xlu0 %1418
  %1421 = vst.msk [vmem:[#allocation2 + $0x10] sm:$0xff] %vm1345, %v1419
  %1423 = vrot.lane.b32.xlu0 %v1317, 80
  %v1424 = vpop.permute.xlu0 %1423
  %1426 = vst.msk [vmem:[#allocation2 + $0x10] sm:$0xff] %vm1351, %v1424
  %1428 = vrot.lane.b32.xlu0 %v1318, 96
  %v1429 = vpop.permute.xlu0 %1428
  %1431 = vst.msk [vmem:[#allocation2 + $0x10] sm:$0xff] %vm1357, %v1429
  %1433 = vrot.lane.b32.xlu0 %v1319, 112
  %v1434 = vpop.permute.xlu0 %1433
  %1436 = vst.msk [vmem:[#allocation2 + $0x10] sm:$0xff] %vm1363, %v1434
  %1437 = vst.msk [vmem:[#allocation2 + $0x18] sm:$0xff] %vm1321, %v1320
  %v1438 = vld [vmem:[#allocation2] sm:$0xff]
  %v1439 = vld [vmem:[#allocation2 + $0x8] sm:$0xff]
  %v1440 = vld [vmem:[#allocation2 + $0x10] sm:$0xff]
  %v1441 = vld [vmem:[#allocation2 + $0x18] sm:$0xff]
  %v1442 = vld [vmem:[%s3] sm:$0xff]
  %v1443 = vld [vmem:[%s3 + $0x8] sm:$0xff]
  %v1444 = vld [vmem:[%s3 + $0x10] sm:$0xff]
  %v1445 = vld [vmem:[%s3 + $0x18] sm:$0xff]
  %v1446 = vld [vmem:[%s3 + $0x20] sm:$0xff]
  %v1447 = vld [vmem:[%s3 + $0x28] sm:$0xff]
  %v1448 = vld [vmem:[%s3 + $0x30] sm:$0xff]
  %v1449 = vld [vmem:[%s3 + $0x38] sm:$0xff]
  %v1450 = vld [vmem:[%s3 + $0x40] sm:$0xff]
  %v1451 = vld [vmem:[%s3 + $0x48] sm:$0xff]
  %v1452 = vld [vmem:[%s3 + $0x50] sm:$0xff]
  %v1453 = vld [vmem:[%s3 + $0x58] sm:$0xff]
  %v1454 = vld [vmem:[%s3 + $0x60] sm:$0xff]
  %v1455 = vld [vmem:[%s3 + $0x68] sm:$0xff]
  %v1456 = vld [vmem:[%s3 + $0x70] sm:$0xff]
  %v1457 = vld [vmem:[%s3 + $0x78] sm:$0xff]
  %v1458 = vld [vmem:[%s3 + $0x80] sm:$0xff]
  %v1459 = vld [vmem:[%s3 + $0x88] sm:$0xff]
  %v1460 = vld [vmem:[%s3 + $0x90] sm:$0xff]
  %v1461 = vld [vmem:[%s3 + $0x98] sm:$0xff]
  %v1462 = vld [vmem:[%s3 + $0xa0] sm:$0xff]
  %v1463 = vld [vmem:[%s3 + $0xa8] sm:$0xff]
  %v1464 = vld [vmem:[%s3 + $0xb0] sm:$0xff]
  %v1465 = vld [vmem:[%s3 + $0xb8] sm:$0xff]
  %v1466 = vld [vmem:[%s3 + $0xc0] sm:$0xff]
  %v1467 = vld [vmem:[%s3 + $0xc8] sm:$0xff]
  %v1468 = vld [vmem:[%s3 + $0xd0] sm:$0xff]
  %v1469 = vld [vmem:[%s3 + $0xd8] sm:$0xff]
  %v1470 = vld [vmem:[%s3 + $0xe0] sm:$0xff]
  %v1471 = vld [vmem:[%s3 + $0xe8] sm:$0xff]
  %v1472 = vld [vmem:[%s3 + $0xf0] sm:$0xff]
  %v1473 = vld [vmem:[%s3 + $0xf8] sm:$0xff]
  %v1474 = vld [vmem:[%s3 + $0x100] sm:$0xff]
  %v1475 = vld [vmem:[%s3 + $0x108] sm:$0xff]
  %v1476 = vld [vmem:[%s3 + $0x110] sm:$0xff]
  %v1477 = vld [vmem:[%s3 + $0x118] sm:$0xff]
  %v1478 = vld [vmem:[%s3 + $0x120] sm:$0xff]
  %v1479 = vld [vmem:[%s3 + $0x128] sm:$0xff]
  %v1480 = vld [vmem:[%s3 + $0x130] sm:$0xff]
  %v1481 = vld [vmem:[%s3 + $0x138] sm:$0xff]
  %v1482 = vld [vmem:[%s3 + $0x140] sm:$0xff]
  %v1483 = vld [vmem:[%s3 + $0x148] sm:$0xff]
  %v1484 = vld [vmem:[%s3 + $0x150] sm:$0xff]
  %v1485 = vld [vmem:[%s3 + $0x158] sm:$0xff]
  %v1486 = vld [vmem:[%s3 + $0x160] sm:$0xff]
  %v1487 = vld [vmem:[%s3 + $0x168] sm:$0xff]
  %v1488 = vld [vmem:[%s3 + $0x170] sm:$0xff]
  %v1489 = vld [vmem:[%s3 + $0x178] sm:$0xff]
  %v1490 = vld [vmem:[%s3 + $0x180] sm:$0xff]
  %v1491 = vld [vmem:[%s3 + $0x188] sm:$0xff]
  %v1492 = vld [vmem:[%s4] sm:$0x1]
  %v1494 = vperm.slane %v1492, 0
  %v1497 = vsel %vm1321, %v1441, 0
  %1499 = vmatpush.msra.mxu0 %v1457
  %1500 = vmatpush.msra.mxu0 %v1456
  %1501 = vmatpush.msra.mxu0 %v1455
  %1502 = vmatpush.msra.mxu0 %v1454
  %1503 = vmatpush.msra.mxu0 %v1453
  %1504 = vmatpush.msra.mxu0 %v1452
  %1505 = vmatpush.msra.mxu0 %v1451
  %1506 = vmatpush.msra.mxu0 %v1450
  %1507 = vmatpush.msra.mxu0 %v1449
  %1508 = vmatpush.msra.mxu0 %v1448
  %1509 = vmatpush.msra.mxu0 %v1447
  %1510 = vmatpush.msra.mxu0 %v1446
  %1511 = vmatpush.msra.mxu0 %v1445
  %1512 = vmatpush.msra.mxu0 %v1444
  %1513 = vmatpush.msra.mxu0 %v1443
  %1514 = vmatpush.msra.mxu0 %v1442
  %1515 = vmatmul.f32.gmra.mxu0 %v1438
  %v1516 = vpop.f32.mrf.mxu0
  %v1517 = vadd.f32 %v1494, %v1516
  %1518 = vdwg.mxu0
  %1519 = vmatpush.msra.mxu0 %v1473
  %1520 = vmatpush.msra.mxu0 %v1472
  %1521 = vmatpush.msra.mxu0 %v1471
  %1522 = vmatpush.msra.mxu0 %v1470
  %1523 = vmatpush.msra.mxu0 %v1469
  %1524 = vmatpush.msra.mxu0 %v1468
  %1525 = vmatpush.msra.mxu0 %v1467
  %1526 = vmatpush.msra.mxu0 %v1466
  %1527 = vmatpush.msra.mxu0 %v1465
  %1528 = vmatpush.msra.mxu0 %v1464
  %1529 = vmatpush.msra.mxu0 %v1463
  %1530 = vmatpush.msra.mxu0 %v1462
  %1531 = vmatpush.msra.mxu0 %v1461
  %1532 = vmatpush.msra.mxu0 %v1460
  %1533 = vmatpush.msra.mxu0 %v1459
  %1534 = vmatpush.msra.mxu0 %v1458
  %1535 = vmatmul.f32.gmra.mxu0 %v1439
  %v1536 = vpop.f32.mrf.mxu0
  %v1537 = vadd.f32 %v1517, %v1536
  %1538 = vdwg.mxu0
  %1539 = vmatpush.msra.mxu0 %v1489
  %1540 = vmatpush.msra.mxu0 %v1488
  %1541 = vmatpush.msra.mxu0 %v1487
  %1542 = vmatpush.msra.mxu0 %v1486
  %1543 = vmatpush.msra.mxu0 %v1485
  %1544 = vmatpush.msra.mxu0 %v1484
  %1545 = vmatpush.msra.mxu0 %v1483
  %1546 = vmatpush.msra.mxu0 %v1482
  %1547 = vmatpush.msra.mxu0 %v1481
  %1548 = vmatpush.msra.mxu0 %v1480
  %1549 = vmatpush.msra.mxu0 %v1479
  %1550 = vmatpush.msra.mxu0 %v1478
  %1551 = vmatpush.msra.mxu0 %v1477
  %1552 = vmatpush.msra.mxu0 %v1476
  %1553 = vmatpush.msra.mxu0 %v1475
  %1554 = vmatpush.msra.mxu0 %v1474
  %1555 = vmatmul.f32.gmra.mxu0 %v1440
  %v1556 = vpop.f32.mrf.mxu0
  %v1557 = vadd.f32 %v1537, %v1556
  %1558 = vdwg.mxu0
  %1559 = vmatpush.msra.mxu0 0.0
  %1560 = vmatpush.msra.mxu0 0.0
  %1561 = vmatpush.msra.mxu0 0.0
  %1562 = vmatpush.msra.mxu0 0.0
  %1563 = vmatpush.msra.mxu0 0.0
  %1564 = vmatpush.msra.mxu0 0.0
  %1565 = vmatpush.msra.mxu0 0.0
  %1566 = vmatpush.msra.mxu0 0.0
  %1567 = vmatpush.msra.mxu0 0.0
  %1568 = vmatpush.msra.mxu0 0.0
  %1569 = vmatpush.msra.mxu0 0.0
  %1570 = vmatpush.msra.mxu0 0.0
  %1571 = vmatpush.msra.mxu0 0.0
  %1572 = vmatpush.msra.mxu0 0.0
  %1573 = vmatpush.msra.mxu0 %v1491
  %1574 = vmatpush.msra.mxu0 %v1490
  %1575 = vmatmul.f32.gmra.mxu0 %v1497
  %v1576 = vpop.f32.mrf.mxu0
  %v1577 = vadd.f32 %v1557, %v1576
  %1578 = vdwg.mxu0
  %v1579 = vmax.f32 %v1577, 0.0
  %v1580 = vld [vmem:[%s5] sm:$0xff]
  %v1581 = vld [vmem:[%s5 + $0x8] sm:$0xff]
  %v1582 = vld [vmem:[%s5 + $0x10] sm:$0xff]
  %v1583 = vld [vmem:[%s5 + $0x18] sm:$0xff]
  %v1584 = vld [vmem:[%s5 + $0x20] sm:$0xff]
  %v1585 = vld [vmem:[%s5 + $0x28] sm:$0xff]
  %v1586 = vld [vmem:[%s5 + $0x30] sm:$0xff]
  %v1587 = vld [vmem:[%s5 + $0x38] sm:$0xff]
  %v1588 = vld [vmem:[%s5 + $0x40] sm:$0xff]
  %v1589 = vld [vmem:[%s5 + $0x48] sm:$0xff]
  %v1590 = vld [vmem:[%s5 + $0x50] sm:$0xff]
  %v1591 = vld [vmem:[%s5 + $0x58] sm:$0xff]
  %v1592 = vld [vmem:[%s5 + $0x60] sm:$0xff]
  %v1593 = vld [vmem:[%s5 + $0x68] sm:$0xff]
  %v1594 = vld [vmem:[%s5 + $0x70] sm:$0xff]
  %v1595 = vld [vmem:[%s6] sm:$0x1]
  %v1597 = vperm.slane %v1595, 0
  %vm1599 = vcmask 982016
  %v1601 = vsel %vm1599, %v1579, 0
  %1603 = vmatpush.msra.mxu0 0.0
  %1604 = vmatpush.msra.mxu0 %v1594
  %1605 = vmatpush.msra.mxu0 %v1593
  %1606 = vmatpush.msra.mxu0 %v1592
  %1607 = vmatpush.msra.mxu0 %v1591
  %1608 = vmatpush.msra.mxu0 %v1590
  %1609 = vmatpush.msra.mxu0 %v1589
  %1610 = vmatpush.msra.mxu0 %v1588
  %1611 = vmatpush.msra.mxu0 %v1587
  %1612 = vmatpush.msra.mxu0 %v1586
  %1613 = vmatpush.msra.mxu0 %v1585
  %1614 = vmatpush.msra.mxu0 %v1584
  %1615 = vmatpush.msra.mxu0 %v1583
  %1616 = vmatpush.msra.mxu0 %v1582
  %1617 = vmatpush.msra.mxu0 %v1581
  %1618 = vmatpush.msra.mxu0 %v1580
  %1619 = vmatmul.f32.gmra.mxu0 %v1601
  %v1620 = vpop.f32.mrf.mxu0
  %v1621 = vadd.f32 %v1597, %v1620
  %1622 = vdwg.mxu0
  %v1623 = vmax.f32 %v1621, 0.0
  %v1624 = vld [vmem:[%s7] sm:$0xff]
  %v1625 = vld [vmem:[%s7 + $0x8] sm:$0xff]
  %v1626 = vld [vmem:[%s7 + $0x10] sm:$0xff]
  %v1627 = vld [vmem:[%s7 + $0x18] sm:$0xff]
  %v1628 = vld [vmem:[%s7 + $0x20] sm:$0xff]
  %v1629 = vld [vmem:[%s7 + $0x28] sm:$0xff]
  %v1630 = vld [vmem:[%s7 + $0x30] sm:$0xff]
  %v1631 = vld [vmem:[%s7 + $0x38] sm:$0xff]
  %v1632 = vld [vmem:[%s7 + $0x40] sm:$0xff]
  %v1633 = vld [vmem:[%s7 + $0x48] sm:$0xff]
  %v1634 = vld [vmem:[%s7 + $0x50] sm:$0xf]
  %v1635 = vld [vmem:[%s8] sm:$0x1]
  %v1637 = vperm.slane %v1635, 0
  %vm1639 = vcmask 687104
  %v1641 = vsel %vm1639, %v1623, 0
  %vm1643 = vcmask 1043456
  %v1645 = vsel %vm1643, %v1634, 0
  %1647 = vmatpush.msra.mxu0 0.0
  %1648 = vmatpush.msra.mxu0 0.0
  %1649 = vmatpush.msra.mxu0 0.0
  %1650 = vmatpush.msra.mxu0 0.0
  %1651 = vmatpush.msra.mxu0 0.0
  %1652 = vmatpush.msra.mxu0 %v1645
  %1653 = vmatpush.msra.mxu0 %v1633
  %1654 = vmatpush.msra.mxu0 %v1632
  %1655 = vmatpush.msra.mxu0 %v1631
  %1656 = vmatpush.msra.mxu0 %v1630
  %1657 = vmatpush.msra.mxu0 %v1629
  %1658 = vmatpush.msra.mxu0 %v1628
  %1659 = vmatpush.msra.mxu0 %v1627
  %1660 = vmatpush.msra.mxu0 %v1626
  %1661 = vmatpush.msra.mxu0 %v1625
  %1662 = vmatpush.msra.mxu0 %v1624
  %1663 = vmatmul.f32.gmra.mxu0 %v1641
  %v1664 = vpop.f32.mrf.mxu0
  %v1665 = vadd.f32 %v1637, %v1664
  %1666 = vdwg.mxu0
  %vm1667 = vcmask 80896
  %1668 = vst.msk [vmem:[%s9] sm:$0xff] %vm1667, %v1665
  // Predicated region
  $region38: #{mnistlenet_forward.3} parent=0 // pred_check
    _
  $region39: #{mnistlenet_forward.3} parent=0 // pred_check_branch
    %1670 = sbr.rel (0) target = $region41
  $region40: #{mnistlenet_forward.3} parent=0 // pred_region
    _
  $region41: #{mnistlenet_forward.3} parent=0 // pred_fallthru
    _
  // Predicated region
  $region42: #{mnistlenet_forward.3} parent=0 // pred_check
    _
  $region43: #{mnistlenet_forward.3} parent=0 // pred_check_branch
    %1672 = sbr.rel (0) target = $region45
  $region44: #{mnistlenet_forward.3} parent=0 // pred_region
    _
  $region45: #{mnistlenet_forward.3} parent=0 // pred_fallthru
    _

</llo_original>
